<compile_context>
chip_gen: v7x
topology: tpu7x:2x2x1
jax: 0.10.0
libtpu: 0.0.40
codegen_flags: <defaults>
</compile_context>

<pallas_src>
import functools
import math

import jax
import jax.numpy as jnp
from jax import lax
from jax.experimental import pallas as pl
from jax.experimental.pallas import tpu as pltpu

EPS = 1e-5  # PyTorch LayerNorm default eps


# ----------------------------------------------------------------------------
# Small helpers
# ----------------------------------------------------------------------------
def _tile(dim, limit, align):
    """Largest tile <= limit that is either the full dim or an align-multiple divisor."""
    if dim <= limit:
        return dim
    t = (limit // align) * align
    while t >= align:
        if dim % t == 0:
            return t
        t -= align
    # TODO(synk): pad awkward dims instead of falling back to one huge block.
    return dim


def _block_rows(n, limit):
    """Row-block size for proposal-gridded kernels (multiple of 8, divides n)."""
    if n <= limit:
        return n
    for t in range(limit - (limit % 8), 7, -8):
        if n % t == 0:
            return t
    return n


def _ln(x, g, b):
    """LayerNorm over the last dim, statistics in f32 (g/b broadcast)."""
    xf = x.astype(jnp.float32)
    mu = jnp.mean(xf, axis=-1, keepdims=True)
    var = jnp.mean(jnp.square(xf - mu), axis=-1, keepdims=True)
    return (xf - mu) * lax.rsqrt(var + EPS) * g + b


# ----------------------------------------------------------------------------
# Tiled dense (used for the dynamic-layer parameter projection)
# ----------------------------------------------------------------------------
def _matmul_kernel(x_ref, w_ref, b_ref, o_ref, acc_ref):
    @pl.when(pl.program_id(2) == 0)
    def _():
        acc_ref[...] = jnp.zeros_like(acc_ref)

    acc_ref[...] += jnp.dot(x_ref[...], w_ref[...],
                            preferred_element_type=jnp.float32)

    @pl.when(pl.program_id(2) == pl.num_programs(2) - 1)
    def _():
        o_ref[...] = (acc_ref[...] + b_ref[...]).astype(o_ref.dtype)


def dense(x_bf, w_bf, b_row, out_dtype=jnp.float32):
    """y = x @ w + b.  x:(M,K) bf16, w:(K,N) bf16, b:(1,N) f32 -> (M,N) out_dtype."""
    M, K = x_bf.shape
    N = w_bf.shape[1]
    tm = _tile(M, 256, 8)
    tn = _tile(N, 2048, 128)
    tk = _tile(K, 512, 128)
    grid = (M // tm, N // tn, K // tk)
    return pl.pallas_call(
        _matmul_kernel,
        out_shape=jax.ShapeDtypeStruct((M, N), out_dtype),
        grid=grid,
        in_specs=[
            pl.BlockSpec((tm, tk), lambda i, j, k: (i, k)),
            pl.BlockSpec((tk, tn), lambda i, j, k: (k, j)),
            pl.BlockSpec((1, tn), lambda i, j, k: (0, j)),
        ],
        out_specs=pl.BlockSpec((tm, tn), lambda i, j, k: (i, j)),
        scratch_shapes=[pltpu.VMEM((tm, tn), jnp.float32)],
        compiler_params=pltpu.CompilerParams(
            dimension_semantics=("parallel", "parallel", "arbitrary")),
    )(x_bf, w_bf, b_row)


# ----------------------------------------------------------------------------
# Fused self-attention block: QKV proj + MHA + out-proj + residual + norm1
# ----------------------------------------------------------------------------
def _attn_block_kernel(x_ref, wqkv_ref, bqkv_ref, wo_ref, bo_ref, g_ref, b_ref,
                       o_ref, *, nhead, scale):
    x = x_ref[0]                                            # (nb, d) f32
    d = x.shape[-1]
    hd = d // nhead
    qkv = jnp.dot(x.astype(jnp.bfloat16), wqkv_ref[...],
                  preferred_element_type=jnp.float32) + bqkv_ref[...]   # (nb, 3d)
    heads = []
    for h in range(nhead):                                  # static unroll
        qh = (qkv[:, h * hd:(h + 1) * hd] * scale).astype(jnp.bfloat16)
        kh = qkv[:, d + h * hd: d + (h + 1) * hd].astype(jnp.bfloat16)
        vh = qkv[:, 2 * d + h * hd: 2 * d + (h + 1) * hd].astype(jnp.bfloat16)
        s = lax.dot_general(qh, kh, (((1,), (1,)), ((), ())),
                            preferred_element_type=jnp.float32)         # (nb, nb)
        s = s - jnp.max(s, axis=-1, keepdims=True)
        p = jnp.exp(s)
        p = p * pl.reciprocal(jnp.sum(p, axis=-1, keepdims=True), approx=True)
        heads.append(jnp.dot(p.astype(jnp.bfloat16), vh,
                             preferred_element_type=jnp.float32))
    o = jnp.concatenate(heads, axis=-1)                     # (nb, d)
    y = jnp.dot(o.astype(jnp.bfloat16), wo_ref[...],
                preferred_element_type=jnp.float32) + bo_ref[...]
    o_ref[0] = _ln(x + y, g_ref[...], b_ref[...])


def attn_block(pro, P, nhead):
    B, nb, d = pro.shape
    c2 = lambda b: (0, 0)
    return pl.pallas_call(
        functools.partial(_attn_block_kernel, nhead=nhead,
                          scale=1.0 / math.sqrt(d // nhead)),
        out_shape=jax.ShapeDtypeStruct((B, nb, d), jnp.float32),
        grid=(B,),
        in_specs=[
            pl.BlockSpec((1, nb, d), lambda b: (b, 0, 0)),
            pl.BlockSpec(P["wqkv"].shape, c2),
            pl.BlockSpec(P["bqkv"].shape, c2),
            pl.BlockSpec(P["wo"].shape, c2),
            pl.BlockSpec(P["bo"].shape, c2),
            pl.BlockSpec(P["n1_g"].shape, c2),
            pl.BlockSpec(P["n1_b"].shape, c2),
        ],
        out_specs=pl.BlockSpec((1, nb, d), lambda b: (b, 0, 0)),
        compiler_params=pltpu.CompilerParams(dimension_semantics=("parallel",)),
    )(pro, P["wqkv"], P["bqkv"], P["wo"], P["bo"], P["n1_g"], P["n1_b"])


# ----------------------------------------------------------------------------
# Fused DynamicConv + residual/norm2 + FFN + residual/norm3
# ----------------------------------------------------------------------------
def _dynconv_ffn_kernel(f_ref, p1_ref, p2_ref, res_ref,
                        g1_ref, b1_ref, g2_ref, b2_ref,
                        wo_ref, bo_ref, g3_ref, b3_ref,
                        n2g_ref, n2b_ref,
                        w1_ref, fb1_ref, w2_ref, fb2_ref,
                        n3g_ref, n3b_ref, o_ref, *, roi_size):
    f = f_ref[...]                                           # (bn, R, H) bf16
    p1 = p1_ref[...]                                         # (bn, H, D) bf16
    p2 = p2_ref[...]                                         # (bn, D, H) bf16

    x = jnp.einsum('brh,bhd->brd', f, p1,
                   preferred_element_type=jnp.float32)       # (bn, R, D)
    x = jnp.maximum(_ln(x, g1_ref[...], b1_ref[...]), 0.0)
    x = jnp.einsum('brd,bdh->brh', x.astype(jnp.bfloat16), p2,
                   preferred_element_type=jnp.float32)       # (bn, R, H)
    x = jnp.maximum(_ln(x, g2_ref[...], b2_ref[...]), 0.0)

    # flatten(1) @ out_layer.W^T == sum_r x[:, r, :] @ W^T[r*H:(r+1)*H]
    xb = x.astype(jnp.bfloat16)
    acc = bo_ref[...]                                        # (1, H) broadcasts
    for r in range(roi_size):
        acc = acc + jnp.dot(xb[:, r, :], wo_ref[r],
                            preferred_element_type=jnp.float32)
    y = jnp.maximum(_ln(acc, g3_ref[...], b3_ref[...]), 0.0)  # DynamicConv out

    # RCNNHead: pro + dropout2(y) -> norm2   (dropout = identity in eval)
    obj = _ln(res_ref[...] + y, n2g_ref[...], n2b_ref[...])

    # FFN: obj + linear2(relu(linear1(obj))) -> norm3
    h = jnp.dot(obj.astype(jnp.bfloat16), w1_ref[...],
                preferred_element_type=jnp.float32) + fb1_ref[...]
    h = jnp.maximum(h, 0.0)
    y2 = jnp.dot(h.astype(jnp.bfloat16), w2_ref[...],
                 preferred_element_type=jnp.float32) + fb2_ref[...]
    o_ref[...] = _ln(obj + y2, n3g_ref[...], n3b_ref[...])


def dynconv_ffn(feats_bf, p1, p2, res, P, roi_size):
    """feats:(BN,R,H)bf16 p1:(BN,H,D)bf16 p2:(BN,D,H)bf16 res:(BN,H)f32 -> (BN,H)f32."""
    BN, R, H = feats_bf.shape
    D = p1.shape[-1]
    bnb = _block_rows(BN, 64)        # <=64 keeps VMEM small even on v7x (64 MiB)
    grid = (BN // bnb,)
    c2 = lambda b: (0, 0)
    c3 = lambda b: (0, 0, 0)
    return pl.pallas_call(
        functools.partial(_dynconv_ffn_kernel, roi_size=roi_size),
        out_shape=jax.ShapeDtypeStruct((BN, H), jnp.float32),
        grid=grid,
        in_specs=[
            pl.BlockSpec((bnb, R, H), lambda b: (b, 0, 0)),
            pl.BlockSpec((bnb, H, D), lambda b: (b, 0, 0)),
            pl.BlockSpec((bnb, D, H), lambda b: (b, 0, 0)),
            pl.BlockSpec((bnb, H), lambda b: (b, 0)),
            pl.BlockSpec(P["dc_g1"].shape, c2), pl.BlockSpec(P["dc_b1"].shape, c2),
            pl.BlockSpec(P["dc_g2"].shape, c2), pl.BlockSpec(P["dc_b2"].shape, c2),
            pl.BlockSpec(P["dc_out_w"].shape, c3), pl.BlockSpec(P["dc_out_b"].shape, c2),
            pl.BlockSpec(P["dc_g3"].shape, c2), pl.BlockSpec(P["dc_b3"].shape, c2),
            pl.BlockSpec(P["n2_g"].shape, c2), pl.BlockSpec(P["n2_b"].shape, c2),
            pl.BlockSpec(P["l1_w"].shape, c2), pl.BlockSpec(P["l1_b"].shape, c2),
            pl.BlockSpec(P["l2_w"].shape, c2), pl.BlockSpec(P["l2_b"].shape, c2),
            pl.BlockSpec(P["n3_g"].shape, c2), pl.BlockSpec(P["n3_b"].shape, c2),
        ],
        out_specs=pl.BlockSpec((bnb, H), lambda b: (b, 0)),
        compiler_params=pltpu.CompilerParams(
            dimension_semantics=("parallel",),
            vmem_limit_bytes=64 * 1024 * 1024),
    )(feats_bf, p1, p2, res,
      P["dc_g1"], P["dc_b1"], P["dc_g2"], P["dc_b2"],
      P["dc_out_w"], P["dc_out_b"], P["dc_g3"], P["dc_b3"],
      P["n2_g"], P["n2_b"],
      P["l1_w"], P["l1_b"], P["l2_w"], P["l2_b"], P["n3_g"], P["n3_b"])


# ----------------------------------------------------------------------------
# Fused time scale/shift + cls/reg towers + class logits + bbox deltas + apply_deltas
# ----------------------------------------------------------------------------
def _tower_heads_kernel(obj_ref, te_ref, box_ref,
                        btmw_ref, btmb_ref,
                        clsw_ref, clsg_ref, clsb_ref,
                        regw_ref, regg_ref, regb_ref,
                        clw_ref, clb_ref, bdw_ref, bdb_ref,
                        logit_ref, pbox_ref,
                        *, num_cls, num_reg, d_model, scale_clamp, use_time):
    fc = obj_ref[0]                                          # (nb, d) f32
    d = d_model
    if use_time:
        te = te_ref[0]                                       # (1, 4d)
        s = te / (1.0 + jnp.exp(-te))                        # SiLU
        ss = jnp.dot(s.astype(jnp.bfloat16), btmw_ref[...],
                     preferred_element_type=jnp.float32) + btmb_ref[...]  # (1, 2d)
        scale = ss[:, :d]
        shift = ss[:, d:]
        fc = fc * (scale + 1.0) + shift

    cls_f = fc
    for i in range(num_cls):                                 # static unroll
        y = jnp.dot(cls_f.astype(jnp.bfloat16), clsw_ref[i],
                    preferred_element_type=jnp.float32)
        cls_f = jnp.maximum(_ln(y, clsg_ref[i], clsb_ref[i]), 0.0)
    reg_f = fc
    for i in range(num_reg):
        y = jnp.dot(reg_f.astype(jnp.bfloat16), regw_ref[i],
                    preferred_element_type=jnp.float32)
        reg_f = jnp.maximum(_ln(y, regg_ref[i], regb_ref[i]), 0.0)

    logits = jnp.dot(cls_f.astype(jnp.bfloat16), clw_ref[...],
                     preferred_element_type=jnp.float32) + clb_ref[...]
    deltas = jnp.dot(reg_f.astype(jnp.bfloat16), bdw_ref[...],
                     preferred_element_type=jnp.float32) + bdb_ref[...]

    boxes = box_ref[0]                                       # (nb, 2)
    gc = boxes[:, 0:1]
    gw = boxes[:, 1:2]
    dc = deltas[:, 0:1]
    dw = jnp.minimum(deltas[:, 1:2], scale_clamp)
    logit_ref[0] = logits
    pbox_ref[0] = jnp.concatenate([dc * gw + gc, jnp.exp(dw) * gw], axis=1)


def tower_heads(obj3, te3, boxes3, P, cfg, use_time):
    B, nb, d = obj3.shape
    ncp = P["cl_w"].shape[1]
    kern = functools.partial(_tower_heads_kernel,
                             num_cls=cfg["num_cls"], num_reg=cfg["num_reg"],
                             d_model=d, scale_clamp=cfg["scale_clamp"],
                             use_time=use_time)
    c2 = lambda b: (0, 0)
    c3 = lambda b: (0, 0, 0)
    return pl.pallas_call(
        kern,
        out_shape=(jax.ShapeDtypeStruct((B, nb, ncp), jnp.float32),
                   jax.ShapeDtypeStruct((B, nb, 2), jnp.float32)),
        grid=(B,),
        in_specs=[
            pl.BlockSpec((1, nb, d), lambda b: (b, 0, 0)),
            pl.BlockSpec((1, 1, te3.shape[-1]), lambda b: (b, 0, 0)),
            pl.BlockSpec((1, nb, 2), lambda b: (b, 0, 0)),
            pl.BlockSpec(P["btm_w"].shape, c2), pl.BlockSpec(P["btm_b"].shape, c2),
            pl.BlockSpec(P["cls_w"].shape, c3), pl.BlockSpec(P["cls_g"].shape, c2),
            pl.BlockSpec(P["cls_b"].shape, c2),
            pl.BlockSpec(P["reg_w"].shape, c3), pl.BlockSpec(P["reg_g"].shape, c2),
            pl.BlockSpec(P["reg_b"].shape, c2),
            pl.BlockSpec(P["cl_w"].shape, c2), pl.BlockSpec(P["cl_b"].shape, c2),
            pl.BlockSpec(P["bd_w"].shape, c2), pl.BlockSpec(P["bd_b"].shape, c2),
        ],
        out_specs=(pl.BlockSpec((1, nb, ncp), lambda b: (b, 0, 0)),
                   pl.BlockSpec((1, nb, 2), lambda b: (b, 0, 0))),
        compiler_params=pltpu.CompilerParams(dimension_semantics=("parallel",)),
    )(obj3, te3, boxes3,
      P["btm_w"], P["btm_b"],
      P["cls_w"], P["cls_g"], P["cls_b"],
      P["reg_w"], P["reg_g"], P["reg_b"],
      P["cl_w"], P["cl_b"], P["bd_w"], P["bd_b"])


# ----------------------------------------------------------------------------
# Plain-JAX glue (index math / gathers)
# ----------------------------------------------------------------------------
def to_roi_align_format(rois, T, scale_factor=1.0):
    B, N = rois.shape[:2]
    center = rois[:, :, 0:1]
    size = rois[:, :, 1:2] * scale_factor
    rois_abs = jnp.concatenate([center - size / 2, center + size / 2], axis=2) * T
    rois_abs = jnp.clip(rois_abs, 0.0, float(T))
    batch_ind = jnp.broadcast_to(
        jnp.arange(B, dtype=jnp.float32)[:, None, None], (B, N, 1))
    rois_abs = jnp.concatenate([batch_ind, rois_abs], axis=2)
    return rois_abs.reshape(B * N, 3)


def roi_align_1d(feat_btc, rois, roi_size):
    # TODO(synk): exact external ROIAlign variant unknown; this is a standard
    # 1-D linear-interpolation ROI-align (one sample per bin center).
    B, T, C = feat_btc.shape
    BN = rois.shape[0]
    batch_idx = rois[:, 0].astype(jnp.int32)
    start, end = rois[:, 1], rois[:, 2]
    bin_w = (end - start) / roi_size
    i = jnp.arange(roi_size, dtype=jnp.float32)
    pos = start[:, None] + (i[None, :] + 0.5) * bin_w[:, None] - 0.5     # (BN, R)
    pos = jnp.clip(pos, 0.0, T - 1.0)
    lo = jnp.floor(pos).astype(jnp.int32)
    hi = jnp.minimum(lo + 1, T - 1)
    w_hi = pos - lo.astype(jnp.float32)
    w_lo = 1.0 - w_hi
    per_roi = feat_btc[batch_idx]                                        # (BN, T, C)
    lo_idx = jnp.broadcast_to(lo[:, :, None], (BN, roi_size, C))
    hi_idx = jnp.broadcast_to(hi[:, :, None], (BN, roi_size, C))
    f_lo = jnp.take_along_axis(per_roi, lo_idx, axis=1)
    f_hi = jnp.take_along_axis(per_roi, hi_idx, axis=1)
    return f_lo * w_lo[:, :, None] + f_hi * w_hi[:, :, None]            # (BN, R, C)


# ----------------------------------------------------------------------------
# RCNNHead forward (takes prepared / pre-cast params)
# ----------------------------------------------------------------------------
def rcnn_head_forward(P, features, bboxes, pro_features, time_embed, cfg):
    B, nb = bboxes.shape[:2]
    d = cfg["d_model"]
    R = cfg["roi_size"]
    Ddyn = cfg["dim_dynamic"]
    nc = cfg["num_classes"]
    T = features.shape[1]
    BN = B * nb

    # --- ROI extraction (data-dependent gather: plain JAX) -------------------
    rois = to_roi_align_format(bboxes, T, scale_factor=1.5)              # (BN, 3)
    roi_feats = roi_align_1d(features, rois, R).astype(jnp.bfloat16)     # (BN, R, d)

    # --- fused self-attention block (QKV + MHA + out-proj + res + norm1) -----
    # B-major proposal layout throughout (attention is per-batch over the nb
    # proposals, so no (nb, B) permutes are needed).
    pro1 = attn_block(pro_features, P, cfg["nhead"]).reshape(BN, d)      # (BN, d)
    pro1_bf = pro1.astype(jnp.bfloat16)

    # --- dynamic-layer parameter projection (bf16 out; W split -> free views)-
    p1 = dense(pro1_bf, P["dyn_w1"], P["dyn_b1"],
               out_dtype=jnp.bfloat16).reshape(BN, d, Ddyn)
    p2 = dense(pro1_bf, P["dyn_w2"], P["dyn_b2"],
               out_dtype=jnp.bfloat16).reshape(BN, Ddyn, d)

    # --- fused DynamicConv + res/norm2 + FFN + res/norm3 ----------------------
    obj = dynconv_ffn(roi_feats, p1, p2, pro1, P, R)                     # (BN, d)

    # --- fused time scale/shift + towers + heads + apply_deltas ---------------
    use_time = time_embed is not None
    te = time_embed if use_time else jnp.zeros((B, 4 * d), jnp.float32)
    te3 = te.reshape(B, 1, 4 * d)
    boxes3 = bboxes.astype(jnp.float32)
    logits, pred_boxes = tower_heads(obj.reshape(B, nb, d), te3, boxes3, P,
                                     cfg, use_time)

    return (logits[..., :nc],                 # drop lane-padding columns
            pred_boxes,
            obj.reshape(1, BN, d))


# ----------------------------------------------------------------------------
# Deterministic parameter construction + one-time kernel-ready preparation
# ----------------------------------------------------------------------------
def init_params(key, cfg):
    d = cfg["d_model"]
    ff = cfg["dim_feedforward"]
    Ddyn = cfg["dim_dynamic"]
    R = cfg["roi_size"]
    nc = cfg["num_classes"]

    keys = iter(jax.random.split(key, 64))

    def w(shape, scale=0.05):
        return (scale * jax.random.normal(next(keys), shape)).astype(jnp.float32)

    p = {}
    for n in ("wq", "wk", "wv", "wo"):
        p[n] = w((d, d))
    for n in ("bq", "bk", "bv", "bo"):
        p[n] = w((d,), 0.01)
    for n in ("n1", "n2", "n3"):
        p[n + "_g"] = jnp.ones((d,), jnp.float32)
        p[n + "_b"] = jnp.zeros((d,), jnp.float32)
    p["dyn_w"] = w((d, 2 * d * Ddyn))
    p["dyn_b"] = w((2 * d * Ddyn,), 0.01)
    p["dc_g1"] = jnp.ones((Ddyn,), jnp.float32)
    p["dc_b1"] = jnp.zeros((Ddyn,), jnp.float32)
    p["dc_g2"] = jnp.ones((d,), jnp.float32)
    p["dc_b2"] = jnp.zeros((d,), jnp.float32)
    p["dc_out_w"] = w((R * d, d))          # already W^T layout: (R*d, d)
    p["dc_out_b"] = w((d,), 0.01)
    p["dc_g3"] = jnp.ones((d,), jnp.float32)
    p["dc_b3"] = jnp.zeros((d,), jnp.float32)
    p["l1_w"], p["l1_b"] = w((d, ff)), w((ff,), 0.01)
    p["l2_w"], p["l2_b"] = w((ff, d)), w((d,), 0.01)
    p["btm_w"], p["btm_b"] = w((4 * d, 2 * d)), w((2 * d,), 0.01)
    for i in range(cfg["num_cls"]):
        p[f"cls_w{i}"] = w((d, d))
        p[f"cls_g{i}"] = jnp.ones((d,), jnp.float32)
        p[f"cls_b{i}"] = jnp.zeros((d,), jnp.float32)
    for i in range(cfg["num_reg"]):
        p[f"reg_w{i}"] = w((d, d))
        p[f"reg_g{i}"] = jnp.ones((d,), jnp.float32)
        p[f"reg_b{i}"] = jnp.zeros((d,), jnp.float32)
    p["cl_w"], p["cl_b"] = w((d, nc)), w((nc,), 0.01)
    p["bd_w"], p["bd_b"] = w((d, 2)), w((2,), 0.01)
    return p


def prepare_params(p, cfg):
    """One-time: concat QKV, split dyn weight, cast matmul weights to bf16,
    stack tower weights, pad logits columns to a lane-dense multiple of 128."""
    d = cfg["d_model"]
    R = cfg["roi_size"]
    Ddyn = cfg["dim_dynamic"]
    nc = cfg["num_classes"]
    np_ = d * Ddyn
    bf = jnp.bfloat16
    P = {}
    P["wqkv"] = jnp.concatenate([p["wq"], p["wk"], p["wv"]], axis=1).astype(bf)
    P["bqkv"] = jnp.concatenate([p["bq"], p["bk"], p["bv"]]).reshape(1, 3 * d)
    P["wo"] = p["wo"].astype(bf)
    P["bo"] = p["bo"].reshape(1, d)
    for n in ("n1", "n2", "n3"):
        P[n + "_g"] = p[n + "_g"].reshape(1, d)
        P[n + "_b"] = p[n + "_b"].reshape(1, d)
    P["dyn_w1"] = p["dyn_w"][:, :np_].astype(bf)
    P["dyn_w2"] = p["dyn_w"][:, np_:].astype(bf)
    P["dyn_b1"] = p["dyn_b"][:np_].reshape(1, np_)
    P["dyn_b2"] = p["dyn_b"][np_:].reshape(1, np_)
    P["dc_g1"] = p["dc_g1"].reshape(1, Ddyn)
    P["dc_b1"] = p["dc_b1"].reshape(1, Ddyn)
    P["dc_g2"] = p["dc_g2"].reshape(1, d)
    P["dc_b2"] = p["dc_b2"].reshape(1, d)
    P["dc_out_w"] = p["dc_out_w"].reshape(R, d, d).astype(bf)
    P["dc_out_b"] = p["dc_out_b"].reshape(1, d)
    P["dc_g3"] = p["dc_g3"].reshape(1, d)
    P["dc_b3"] = p["dc_b3"].reshape(1, d)
    P["l1_w"] = p["l1_w"].astype(bf)
    P["l1_b"] = p["l1_b"].reshape(1, -1)
    P["l2_w"] = p["l2_w"].astype(bf)
    P["l2_b"] = p["l2_b"].reshape(1, d)
    P["btm_w"] = p["btm_w"].astype(bf)
    P["btm_b"] = p["btm_b"].reshape(1, 2 * d)
    P["cls_w"] = jnp.stack([p[f"cls_w{i}"] for i in range(cfg["num_cls"])]).astype(bf)
    P["cls_g"] = jnp.stack([p[f"cls_g{i}"] for i in range(cfg["num_cls"])])
    P["cls_b"] = jnp.stack([p[f"cls_b{i}"] for i in range(cfg["num_cls"])])
    P["reg_w"] = jnp.stack([p[f"reg_w{i}"] for i in range(cfg["num_reg"])]).astype(bf)
    P["reg_g"] = jnp.stack([p[f"reg_g{i}"] for i in range(cfg["num_reg"])])
    P["reg_b"] = jnp.stack([p[f"reg_b{i}"] for i in range(cfg["num_reg"])])
    ncp = ((nc + 127) // 128) * 128
    cl_w = jnp.zeros((d, ncp), jnp.float32).at[:, :nc].set(p["cl_w"])
    cl_b = jnp.zeros((ncp,), jnp.float32).at[:nc].set(p["cl_b"])
    P["cl_w"] = cl_w.astype(bf)
    P["cl_b"] = cl_b.reshape(1, ncp)
    P["bd_w"] = p["bd_w"].astype(bf)
    P["bd_b"] = p["bd_b"].reshape(1, 2)
    return P


# ----------------------------------------------------------------------------
if __name__ == "__main__":
    B, nb, T, d = 2, 8, 16, 32
    cfg = dict(d_model=d, nhead=4, roi_size=4, dim_dynamic=8,
               num_cls=1, num_reg=1, num_classes=5, dim_feedforward=64,
               scale_clamp=math.log(100000.0 / 16))

    key = jax.random.PRNGKey(0)
    kp, k1, k2, k3, k4, k5 = jax.random.split(key, 6)
    params = prepare_params(init_params(kp, cfg), cfg)

    features = jax.random.normal(k1, (B, T, d), jnp.float32)             # (B, T, C)
    centers = jax.random.uniform(k2, (B, nb), minval=0.2, maxval=0.8)
    widths = jax.random.uniform(k3, (B, nb), minval=0.05, maxval=0.3)
    bboxes = jnp.stack([centers, widths], axis=-1).astype(jnp.float32)   # (B, nb, 2)
    pro_features = jax.random.normal(k4, (B, nb, d), jnp.float32)
    time_embed = jax.random.normal(k5, (B, 4 * d), jnp.float32)

    fwd = jax.jit(lambda f, bx, pf, te: rcnn_head_forward(params, f, bx, pf, te, cfg))
    out = fwd(features, bboxes, pro_features, time_embed)
    out = jax.block_until_ready(out)
    assert out[0].shape == (B, nb, cfg["num_classes"])
    assert out[1].shape == (B, nb, 2)
    assert out[2].shape == (1, B * nb, d)
    assert all(bool(jnp.all(jnp.isfinite(o))) for o in out)
    print("KERNEL_OK")
</pallas_src>

<mosaic_0001>
module attributes {stable_mosaic.version = 11 : i64} {
  func.func private @main(%arg0: i32) attributes {dimension_semantics = [#tpu.dimension_semantics<core_parallel>], iteration_bounds = array<i64: 2>, tpu.core_type = #tpu.core_type<sc_scalar_subcore>, window_params = []} {
    return
  }
}

module attributes {stable_mosaic.version = 11 : i64} {
  func.func private @main(%arg0: i32) attributes {dimension_semantics = [#tpu.dimension_semantics<core_parallel>], iteration_bounds = array<i64: 2>, tpu.core_type = #tpu.core_type<sc_scalar_subcore>, window_params = []} {
    return
  }
}

module attributes {stable_mosaic.version = 11 : i64} {
  func.func @_attn_block_kernel(%arg0: i32, %arg1: memref<1x8x32xf32, #tpu.memory_space<vmem>>, %arg2: memref<32x96xbf16, #tpu.memory_space<vmem>>, %arg3: memref<1x96xf32, #tpu.memory_space<vmem>>, %arg4: memref<32x32xbf16, #tpu.memory_space<vmem>>, %arg5: memref<1x32xf32, #tpu.memory_space<vmem>>, %arg6: memref<1x32xf32, #tpu.memory_space<vmem>>, %arg7: memref<1x32xf32, #tpu.memory_space<vmem>>, %arg8: memref<1x8x32xf32, #tpu.memory_space<vmem>>) attributes {dimension_semantics = [#tpu.dimension_semantics<parallel>], iteration_bounds = array<i64: 2>, scalar_prefetch = 0 : i64, scratch_operands = 0 : i64, tpu.core_type = #tpu.core_type<tc>, window_params = [{transform_indices = @transform_0, window_bounds = array<i64: 1, 8, 32>}, {pipeline_mode = #tpu.pipeline_mode<synchronous>, transform_indices = @transform_1, window_bounds = array<i64: 32, 96>}, {pipeline_mode = #tpu.pipeline_mode<synchronous>, transform_indices = @transform_2, window_bounds = array<i64: 1, 96>}, {pipeline_mode = #tpu.pipeline_mode<synchronous>, transform_indices = @transform_3, window_bounds = array<i64: 32, 32>}, {pipeline_mode = #tpu.pipeline_mode<synchronous>, transform_indices = @transform_4, window_bounds = array<i64: 1, 32>}, {pipeline_mode = #tpu.pipeline_mode<synchronous>, transform_indices = @transform_5, window_bounds = array<i64: 1, 32>}, {pipeline_mode = #tpu.pipeline_mode<synchronous>, transform_indices = @transform_6, window_bounds = array<i64: 1, 32>}, {transform_indices = @transform_7, window_bounds = array<i64: 1, 8, 32>}]} {
    %c0 = arith.constant 0 : index
    %c0_0 = arith.constant 0 : index
    %c0_1 = arith.constant 0 : index
    %0 = vector.load %arg1[%c0, %c0_0, %c0_1] : memref<1x8x32xf32, #tpu.memory_space<vmem>>, vector<1x8x32xf32>
    %1 = vector.shape_cast %0 : vector<1x8x32xf32> to vector<8x32xf32>
    %2 = arith.truncf %1 : vector<8x32xf32> to vector<8x32xbf16>
    %c0_2 = arith.constant 0 : index
    %c0_3 = arith.constant 0 : index
    %3 = vector.load %arg2[%c0_2, %c0_3] : memref<32x96xbf16, #tpu.memory_space<vmem>>, vector<32x96xbf16>
    %cst = arith.constant dense<0.000000e+00> : vector<8x96xf32>
    %4 = tpu.matmul %2, %3, %cst {dimension_numbers = #tpu.dot_dimension_numbers<[1], [0], [0], [1], [0, 0, 1, 1], [], []>} : vector<8x32xbf16>, vector<32x96xbf16>, vector<8x96xf32> -> vector<8x96xf32>
    %c0_4 = arith.constant 0 : index
    %c0_5 = arith.constant 0 : index
    %5 = vector.load %arg3[%c0_4, %c0_5] : memref<1x96xf32, #tpu.memory_space<vmem>>, vector<1x96xf32>
    %6 = vector.broadcast %5 : vector<1x96xf32> to vector<8x96xf32>
    %7 = arith.addf %4, %6 : vector<8x96xf32>
    %8 = vector.extract_strided_slice %7 {offsets = [0, 0], sizes = [8, 8], strides = [1, 1]} : vector<8x96xf32> to vector<8x8xf32>
    %cst_6 = arith.constant 0.353553385 : f32
    %9 = vector.broadcast %cst_6 : f32 to vector<8x8xf32>
    %10 = arith.mulf %8, %9 : vector<8x8xf32>
    %11 = arith.truncf %10 : vector<8x8xf32> to vector<8x8xbf16>
    %12 = vector.extract_strided_slice %7 {offsets = [0, 32], sizes = [8, 8], strides = [1, 1]} : vector<8x96xf32> to vector<8x8xf32>
    %13 = arith.truncf %12 : vector<8x8xf32> to vector<8x8xbf16>
    %14 = vector.extract_strided_slice %7 {offsets = [0, 64], sizes = [8, 8], strides = [1, 1]} : vector<8x96xf32> to vector<8x8xf32>
    %15 = arith.truncf %14 : vector<8x8xf32> to vector<8x8xbf16>
    %cst_7 = arith.constant dense<0.000000e+00> : vector<8x8xf32>
    %16 = tpu.matmul %11, %13, %cst_7 {dimension_numbers = #tpu.dot_dimension_numbers<[1], [1], [0], [0], [0, 0, 1, 0], [], []>} : vector<8x8xbf16>, vector<8x8xbf16>, vector<8x8xf32> -> vector<8x8xf32>
    %cst_8 = arith.constant dense<0xFF800000> : vector<8xf32>
    %17 = vector.multi_reduction <maximumf>, %16, %cst_8 [1] : vector<8x8xf32> to vector<8xf32>
    %18 = vector.shape_cast %17 : vector<8xf32> to vector<8x1xf32>
    %19 = vector.broadcast %18 : vector<8x1xf32> to vector<8x8xf32>
    %20 = arith.subf %16, %19 : vector<8x8xf32>
    %21 = math.exp %20 : vector<8x8xf32>
    %cst_9 = arith.constant dense<0.000000e+00> : vector<8xf32>
    %22 = vector.multi_reduction <add>, %21, %cst_9 [1] : vector<8x8xf32> to vector<8xf32>
    %23 = vector.shape_cast %22 : vector<8xf32> to vector<8x1xf32>
    %24 = tpu.reciprocal %23 {approx = true} : vector<8x1xf32> -> vector<8x1xf32>
    %25 = vector.broadcast %24 : vector<8x1xf32> to vector<8x8xf32>
    %26 = arith.mulf %21, %25 : vector<8x8xf32>
    %27 = arith.truncf %26 : vector<8x8xf32> to vector<8x8xbf16>
    %cst_10 = arith.constant dense<0.000000e+00> : vector<8x8xf32>
    %28 = tpu.matmul %27, %15, %cst_10 {dimension_numbers = #tpu.dot_dimension_numbers<[1], [0], [0], [1], [0, 0, 1, 1], [], []>} : vector<8x8xbf16>, vector<8x8xbf16>, vector<8x8xf32> -> vector<8x8xf32>
    %29 = vector.extract_strided_slice %7 {offsets = [0, 8], sizes = [8, 8], strides = [1, 1]} : vector<8x96xf32> to vector<8x8xf32>
    %cst_11 = arith.constant 0.353553385 : f32
    %30 = vector.broadcast %cst_11 : f32 to vector<8x8xf32>
    %31 = arith.mulf %29, %30 : vector<8x8xf32>
    %32 = arith.truncf %31 : vector<8x8xf32> to vector<8x8xbf16>
    %33 = vector.extract_strided_slice %7 {offsets = [0, 40], sizes = [8, 8], strides = [1, 1]} : vector<8x96xf32> to vector<8x8xf32>
    %34 = arith.truncf %33 : vector<8x8xf32> to vector<8x8xbf16>
    %35 = vector.extract_strided_slice %7 {offsets = [0, 72], sizes = [8, 8], strides = [1, 1]} : vector<8x96xf32> to vector<8x8xf32>
    %36 = arith.truncf %35 : vector<8x8xf32> to vector<8x8xbf16>
    %cst_12 = arith.constant dense<0.000000e+00> : vector<8x8xf32>
    %37 = tpu.matmul %32, %34, %cst_12 {dimension_numbers = #tpu.dot_dimension_numbers<[1], [1], [0], [0], [0, 0, 1, 0], [], []>} : vector<8x8xbf16>, vector<8x8xbf16>, vector<8x8xf32> -> vector<8x8xf32>
    %cst_13 = arith.constant dense<0xFF800000> : vector<8xf32>
    %38 = vector.multi_reduction <maximumf>, %37, %cst_13 [1] : vector<8x8xf32> to vector<8xf32>
    %39 = vector.shape_cast %38 : vector<8xf32> to vector<8x1xf32>
    %40 = vector.broadcast %39 : vector<8x1xf32> to vector<8x8xf32>
    %41 = arith.subf %37, %40 : vector<8x8xf32>
    %42 = math.exp %41 : vector<8x8xf32>
    %cst_14 = arith.constant dense<0.000000e+00> : vector<8xf32>
    %43 = vector.multi_reduction <add>, %42, %cst_14 [1] : vector<8x8xf32> to vector<8xf32>
    %44 = vector.shape_cast %43 : vector<8xf32> to vector<8x1xf32>
    %45 = tpu.reciprocal %44 {approx = true} : vector<8x1xf32> -> vector<8x1xf32>
    %46 = vector.broadcast %45 : vector<8x1xf32> to vector<8x8xf32>
    %47 = arith.mulf %42, %46 : vector<8x8xf32>
    %48 = arith.truncf %47 : vector<8x8xf32> to vector<8x8xbf16>
    %cst_15 = arith.constant dense<0.000000e+00> : vector<8x8xf32>
    %49 = tpu.matmul %48, %36, %cst_15 {dimension_numbers = #tpu.dot_dimension_numbers<[1], [0], [0], [1], [0, 0, 1, 1], [], []>} : vector<8x8xbf16>, vector<8x8xbf16>, vector<8x8xf32> -> vector<8x8xf32>
    %50 = vector.extract_strided_slice %7 {offsets = [0, 16], sizes = [8, 8], strides = [1, 1]} : vector<8x96xf32> to vector<8x8xf32>
    %cst_16 = arith.constant 0.353553385 : f32
    %51 = vector.broadcast %cst_16 : f32 to vector<8x8xf32>
    %52 = arith.mulf %50, %51 : vector<8x8xf32>
    %53 = arith.truncf %52 : vector<8x8xf32> to vector<8x8xbf16>
    %54 = vector.extract_strided_slice %7 {offsets = [0, 48], sizes = [8, 8], strides = [1, 1]} : vector<8x96xf32> to vector<8x8xf32>
    %55 = arith.truncf %54 : vector<8x8xf32> to vector<8x8xbf16>
    %56 = vector.extract_strided_slice %7 {offsets = [0, 80], sizes = [8, 8], strides = [1, 1]} : vector<8x96xf32> to vector<8x8xf32>
    %57 = arith.truncf %56 : vector<8x8xf32> to vector<8x8xbf16>
    %cst_17 = arith.constant dense<0.000000e+00> : vector<8x8xf32>
    %58 = tpu.matmul %53, %55, %cst_17 {dimension_numbers = #tpu.dot_dimension_numbers<[1], [1], [0], [0], [0, 0, 1, 0], [], []>} : vector<8x8xbf16>, vector<8x8xbf16>, vector<8x8xf32> -> vector<8x8xf32>
    %cst_18 = arith.constant dense<0xFF800000> : vector<8xf32>
    %59 = vector.multi_reduction <maximumf>, %58, %cst_18 [1] : vector<8x8xf32> to vector<8xf32>
    %60 = vector.shape_cast %59 : vector<8xf32> to vector<8x1xf32>
    %61 = vector.broadcast %60 : vector<8x1xf32> to vector<8x8xf32>
    %62 = arith.subf %58, %61 : vector<8x8xf32>
    %63 = math.exp %62 : vector<8x8xf32>
    %cst_19 = arith.constant dense<0.000000e+00> : vector<8xf32>
    %64 = vector.multi_reduction <add>, %63, %cst_19 [1] : vector<8x8xf32> to vector<8xf32>
    %65 = vector.shape_cast %64 : vector<8xf32> to vector<8x1xf32>
    %66 = tpu.reciprocal %65 {approx = true} : vector<8x1xf32> -> vector<8x1xf32>
    %67 = vector.broadcast %66 : vector<8x1xf32> to vector<8x8xf32>
    %68 = arith.mulf %63, %67 : vector<8x8xf32>
    %69 = arith.truncf %68 : vector<8x8xf32> to vector<8x8xbf16>
    %cst_20 = arith.constant dense<0.000000e+00> : vector<8x8xf32>
    %70 = tpu.matmul %69, %57, %cst_20 {dimension_numbers = #tpu.dot_dimension_numbers<[1], [0], [0], [1], [0, 0, 1, 1], [], []>} : vector<8x8xbf16>, vector<8x8xbf16>, vector<8x8xf32> -> vector<8x8xf32>
    %71 = vector.extract_strided_slice %7 {offsets = [0, 24], sizes = [8, 8], strides = [1, 1]} : vector<8x96xf32> to vector<8x8xf32>
    %cst_21 = arith.constant 0.353553385 : f32
    %72 = vector.broadcast %cst_21 : f32 to vector<8x8xf32>
    %73 = arith.mulf %71, %72 : vector<8x8xf32>
    %74 = arith.truncf %73 : vector<8x8xf32> to vector<8x8xbf16>
    %75 = vector.extract_strided_slice %7 {offsets = [0, 56], sizes = [8, 8], strides = [1, 1]} : vector<8x96xf32> to vector<8x8xf32>
    %76 = arith.truncf %75 : vector<8x8xf32> to vector<8x8xbf16>
    %77 = vector.extract_strided_slice %7 {offsets = [0, 88], sizes = [8, 8], strides = [1, 1]} : vector<8x96xf32> to vector<8x8xf32>
    %78 = arith.truncf %77 : vector<8x8xf32> to vector<8x8xbf16>
    %cst_22 = arith.constant dense<0.000000e+00> : vector<8x8xf32>
    %79 = tpu.matmul %74, %76, %cst_22 {dimension_numbers = #tpu.dot_dimension_numbers<[1], [1], [0], [0], [0, 0, 1, 0], [], []>} : vector<8x8xbf16>, vector<8x8xbf16>, vector<8x8xf32> -> vector<8x8xf32>
    %cst_23 = arith.constant dense<0xFF800000> : vector<8xf32>
    %80 = vector.multi_reduction <maximumf>, %79, %cst_23 [1] : vector<8x8xf32> to vector<8xf32>
    %81 = vector.shape_cast %80 : vector<8xf32> to vector<8x1xf32>
    %82 = vector.broadcast %81 : vector<8x1xf32> to vector<8x8xf32>
    %83 = arith.subf %79, %82 : vector<8x8xf32>
    %84 = math.exp %83 : vector<8x8xf32>
    %cst_24 = arith.constant dense<0.000000e+00> : vector<8xf32>
    %85 = vector.multi_reduction <add>, %84, %cst_24 [1] : vector<8x8xf32> to vector<8xf32>
    %86 = vector.shape_cast %85 : vector<8xf32> to vector<8x1xf32>
    %87 = tpu.reciprocal %86 {approx = true} : vector<8x1xf32> -> vector<8x1xf32>
    %88 = vector.broadcast %87 : vector<8x1xf32> to vector<8x8xf32>
    %89 = arith.mulf %84, %88 : vector<8x8xf32>
    %90 = arith.truncf %89 : vector<8x8xf32> to vector<8x8xbf16>
    %cst_25 = arith.constant dense<0.000000e+00> : vector<8x8xf32>
    %91 = tpu.matmul %90, %78, %cst_25 {dimension_numbers = #tpu.dot_dimension_numbers<[1], [0], [0], [1], [0, 0, 1, 1], [], []>} : vector<8x8xbf16>, vector<8x8xbf16>, vector<8x8xf32> -> vector<8x8xf32>
    %92 = tpu.concatenate %28, %49, %70, %91 in 1 : vector<8x8xf32>, vector<8x8xf32>, vector<8x8xf32>, vector<8x8xf32> -> vector<8x32xf32>
    %93 = arith.truncf %92 : vector<8x32xf32> to vector<8x32xbf16>
    %c0_26 = arith.constant 0 : index
    %c0_27 = arith.constant 0 : index
    %94 = vector.load %arg4[%c0_26, %c0_27] : memref<32x32xbf16, #tpu.memory_space<vmem>>, vector<32x32xbf16>
    %cst_28 = arith.constant dense<0.000000e+00> : vector<8x32xf32>
    %95 = tpu.matmul %93, %94, %cst_28 {dimension_numbers = #tpu.dot_dimension_numbers<[1], [0], [0], [1], [0, 0, 1, 1], [], []>} : vector<8x32xbf16>, vector<32x32xbf16>, vector<8x32xf32> -> vector<8x32xf32>
    %c0_29 = arith.constant 0 : index
    %c0_30 = arith.constant 0 : index
    %96 = vector.load %arg5[%c0_29, %c0_30] : memref<1x32xf32, #tpu.memory_space<vmem>>, vector<1x32xf32>
    %97 = vector.broadcast %96 : vector<1x32xf32> to vector<8x32xf32>
    %98 = arith.addf %95, %97 : vector<8x32xf32>
    %99 = arith.addf %1, %98 : vector<8x32xf32>
    %c0_31 = arith.constant 0 : index
    %c0_32 = arith.constant 0 : index
    %100 = vector.load %arg6[%c0_31, %c0_32] : memref<1x32xf32, #tpu.memory_space<vmem>>, vector<1x32xf32>
    %c0_33 = arith.constant 0 : index
    %c0_34 = arith.constant 0 : index
    %101 = vector.load %arg7[%c0_33, %c0_34] : memref<1x32xf32, #tpu.memory_space<vmem>>, vector<1x32xf32>
    %cst_35 = arith.constant dense<0.000000e+00> : vector<8xf32>
    %102 = vector.multi_reduction <add>, %99, %cst_35 [1] : vector<8x32xf32> to vector<8xf32>
    %103 = vector.shape_cast %102 : vector<8xf32> to vector<8x1xf32>
    %cst_36 = arith.constant 3.200000e+01 : f32
    %104 = vector.broadcast %cst_36 : f32 to vector<8x1xf32>
    %105 = arith.divf %103, %104 : vector<8x1xf32>
    %106 = vector.broadcast %105 : vector<8x1xf32> to vector<8x32xf32>
    %107 = arith.subf %99, %106 : vector<8x32xf32>
    %108 = arith.mulf %107, %107 : vector<8x32xf32>
    %cst_37 = arith.constant dense<0.000000e+00> : vector<8xf32>
    %109 = vector.multi_reduction <add>, %108, %cst_37 [1] : vector<8x32xf32> to vector<8xf32>
    %110 = vector.shape_cast %109 : vector<8xf32> to vector<8x1xf32>
    %cst_38 = arith.constant 3.200000e+01 : f32
    %111 = vector.broadcast %cst_38 : f32 to vector<8x1xf32>
    %112 = arith.divf %110, %111 : vector<8x1xf32>
    %113 = vector.broadcast %105 : vector<8x1xf32> to vector<8x32xf32>
    %114 = arith.subf %99, %113 : vector<8x32xf32>
    %cst_39 = arith.constant 9.99999974E-6 : f32
    %115 = vector.broadcast %cst_39 : f32 to vector<8x1xf32>
    %116 = arith.addf %112, %115 : vector<8x1xf32>
    %117 = math.rsqrt %116 : vector<8x1xf32>
    %118 = vector.broadcast %117 : vector<8x1xf32> to vector<8x32xf32>
    %119 = arith.mulf %114, %118 : vector<8x32xf32>
    %120 = vector.broadcast %100 : vector<1x32xf32> to vector<8x32xf32>
    %121 = arith.mulf %119, %120 : vector<8x32xf32>
    %122 = vector.broadcast %101 : vector<1x32xf32> to vector<8x32xf32>
    %123 = arith.addf %121, %122 : vector<8x32xf32>
    %c0_40 = arith.constant 0 : index
    %c0_41 = arith.constant 0 : index
    %c0_42 = arith.constant 0 : index
    %124 = vector.load %arg8[%c0_40, %c0_41, %c0_42] : memref<1x8x32xf32, #tpu.memory_space<vmem>>, vector<1x8x32xf32>
    %125 = vector.shape_cast %124 : vector<1x8x32xf32> to vector<8x32xf32>
    %126 = vector.shape_cast %123 : vector<8x32xf32> to vector<1x8x32xf32>
    tpu.vector_store %arg8[%c0_40, %c0_41, %c0_42], %126 {strides = array<i32>} : memref<1x8x32xf32, #tpu.memory_space<vmem>>, vector<1x8x32xf32>,
    return
  }
  func.func @transform_0(%arg0: i32) -> (i32, i32, i32) {
    %c0_i32 = arith.constant 0 : i32
    %c0_i32_0 = arith.constant 0 : i32
    %c0_i32_1 = arith.constant 0 : i32
    return %arg0, %c0_i32, %c0_i32_0 : i32, i32, i32
  }
  func.func @transform_1(%arg0: i32) -> (i32, i32) {
    %c0_i32 = arith.constant 0 : i32
    %c0_i32_0 = arith.constant 0 : i32
    %c0_i32_1 = arith.constant 0 : i32
    return %c0_i32, %c0_i32_0 : i32, i32
  }
  func.func @transform_2(%arg0: i32) -> (i32, i32) {
    %c0_i32 = arith.constant 0 : i32
    %c0_i32_0 = arith.constant 0 : i32
    %c0_i32_1 = arith.constant 0 : i32
    return %c0_i32, %c0_i32_0 : i32, i32
  }
  func.func @transform_3(%arg0: i32) -> (i32, i32) {
    %c0_i32 = arith.constant 0 : i32
    %c0_i32_0 = arith.constant 0 : i32
    %c0_i32_1 = arith.constant 0 : i32
    return %c0_i32, %c0_i32_0 : i32, i32
  }
  func.func @transform_4(%arg0: i32) -> (i32, i32) {
    %c0_i32 = arith.constant 0 : i32
    %c0_i32_0 = arith.constant 0 : i32
    %c0_i32_1 = arith.constant 0 : i32
    return %c0_i32, %c0_i32_0 : i32, i32
  }
  func.func @transform_5(%arg0: i32) -> (i32, i32) {
    %c0_i32 = arith.constant 0 : i32
    %c0_i32_0 = arith.constant 0 : i32
    %c0_i32_1 = arith.constant 0 : i32
    return %c0_i32, %c0_i32_0 : i32, i32
  }
  func.func @transform_6(%arg0: i32) -> (i32, i32) {
    %c0_i32 = arith.constant 0 : i32
    %c0_i32_0 = arith.constant 0 : i32
    %c0_i32_1 = arith.constant 0 : i32
    return %c0_i32, %c0_i32_0 : i32, i32
  }
  func.func @transform_7(%arg0: i32) -> (i32, i32, i32) {
    %c0_i32 = arith.constant 0 : i32
    %c0_i32_0 = arith.constant 0 : i32
    %c0_i32_1 = arith.constant 0 : i32
    return %arg0, %c0_i32, %c0_i32_0 : i32, i32, i32
  }
}

module attributes {stable_mosaic.version = 11 : i64} {
  func.func @_matmul_kernel(%arg0: i32, %arg1: i32, %arg2: i32, %arg3: memref<16x32xbf16, #tpu.memory_space<vmem>>, %arg4: memref<32x256xbf16, #tpu.memory_space<vmem>>, %arg5: memref<1x256xf32, #tpu.memory_space<vmem>>, %arg6: memref<16x256xbf16, #tpu.memory_space<vmem>>, %arg7: memref<16x256xf32, #tpu.memory_space<vmem>>) attributes {dimension_semantics = [#tpu.dimension_semantics<parallel>, #tpu.dimension_semantics<parallel>, #tpu.dimension_semantics<arbitrary>], iteration_bounds = array<i64: 1, 1, 1>, scalar_prefetch = 0 : i64, scratch_operands = 1 : i64, tpu.core_type = #tpu.core_type<tc>, window_params = [{transform_indices = @transform_0, window_bounds = array<i64: 16, 32>}, {transform_indices = @transform_1, window_bounds = array<i64: 32, 256>}, {transform_indices = @transform_2, window_bounds = array<i64: 1, 256>}, {transform_indices = @transform_3, window_bounds = array<i64: 16, 256>}]} {
    %c0_i32 = arith.constant 0 : i32
    %0 = arith.cmpi eq, %arg2, %c0_i32 : i32
    %1 = arith.extui %0 : i1 to i32
    %c0_i32_0 = arith.constant 0 : i32
    %2 = arith.cmpi ne, %1, %c0_i32_0 : i32
    scf.if %2 {
      %cst_10 = arith.constant 0.000000e+00 : f32
      %12 = vector.broadcast %cst_10 : f32 to vector<16x256xf32>
      %c0_11 = arith.constant 0 : index
      %c0_12 = arith.constant 0 : index
      %13 = vector.load %arg7[%c0_11, %c0_12] : memref<16x256xf32, #tpu.memory_space<vmem>>, vector<16x256xf32>
      tpu.vector_store %arg7[%c0_11, %c0_12], %12 {strides = array<i32>} : memref<16x256xf32, #tpu.memory_space<vmem>>, vector<16x256xf32>,
    } else {
    }
    %c0 = arith.constant 0 : index
    %c0_1 = arith.constant 0 : index
    %3 = vector.load %arg7[%c0, %c0_1] : memref<16x256xf32, #tpu.memory_space<vmem>>, vector<16x256xf32>
    %c0_2 = arith.constant 0 : index
    %c0_3 = arith.constant 0 : index
    %4 = vector.load %arg3[%c0_2, %c0_3] : memref<16x32xbf16, #tpu.memory_space<vmem>>, vector<16x32xbf16>
    %c0_4 = arith.constant 0 : index
    %c0_5 = arith.constant 0 : index
    %5 = vector.load %arg4[%c0_4, %c0_5] : memref<32x256xbf16, #tpu.memory_space<vmem>>, vector<32x256xbf16>
    %cst = arith.constant dense<0.000000e+00> : vector<16x256xf32>
    %6 = tpu.matmul %4, %5, %cst {dimension_numbers = #tpu.dot_dimension_numbers<[1], [0], [0], [1], [0, 0, 1, 1], [], []>} : vector<16x32xbf16>, vector<32x256xbf16>, vector<16x256xf32> -> vector<16x256xf32>
    %7 = arith.addf %3, %6 : vector<16x256xf32>
    %c0_6 = arith.constant 0 : index
    %c0_7 = arith.constant 0 : index
    %8 = vector.load %arg7[%c0_6, %c0_7] : memref<16x256xf32, #tpu.memory_space<vmem>>, vector<16x256xf32>
    tpu.vector_store %arg7[%c0_6, %c0_7], %7 {strides = array<i32>} : memref<16x256xf32, #tpu.memory_space<vmem>>, vector<16x256xf32>,
    %c0_i32_8 = arith.constant 0 : i32
    %9 = arith.cmpi eq, %arg2, %c0_i32_8 : i32
    %10 = arith.extui %9 : i1 to i32
    %c0_i32_9 = arith.constant 0 : i32
    %11 = arith.cmpi ne, %10, %c0_i32_9 : i32
    scf.if %11 {
      %c0_10 = arith.constant 0 : index
      %c0_11 = arith.constant 0 : index
      %12 = vector.load %arg7[%c0_10, %c0_11] : memref<16x256xf32, #tpu.memory_space<vmem>>, vector<16x256xf32>
      %c0_12 = arith.constant 0 : index
      %c0_13 = arith.constant 0 : index
      %13 = vector.load %arg5[%c0_12, %c0_13] : memref<1x256xf32, #tpu.memory_space<vmem>>, vector<1x256xf32>
      %14 = vector.broadcast %13 : vector<1x256xf32> to vector<16x256xf32>
      %15 = arith.addf %12, %14 : vector<16x256xf32>
      %16 = arith.truncf %15 : vector<16x256xf32> to vector<16x256xbf16>
      %c0_14 = arith.constant 0 : index
      %c0_15 = arith.constant 0 : index
      %17 = vector.load %arg6[%c0_14, %c0_15] : memref<16x256xbf16, #tpu.memory_space<vmem>>, vector<16x256xbf16>
      tpu.vector_store %arg6[%c0_14, %c0_15], %16 {strides = array<i32>} : memref<16x256xbf16, #tpu.memory_space<vmem>>, vector<16x256xbf16>,
    } else {
    }
    return
  }
  func.func @transform_0(%arg0: i32, %arg1: i32, %arg2: i32) -> (i32, i32) {
    %c0_i32 = arith.constant 0 : i32
    return %arg0, %arg2 : i32, i32
  }
  func.func @transform_1(%arg0: i32, %arg1: i32, %arg2: i32) -> (i32, i32) {
    %c0_i32 = arith.constant 0 : i32
    return %arg2, %arg1 : i32, i32
  }
  func.func @transform_2(%arg0: i32, %arg1: i32, %arg2: i32) -> (i32, i32) {
    %c0_i32 = arith.constant 0 : i32
    %c0_i32_0 = arith.constant 0 : i32
    return %c0_i32, %arg1 : i32, i32
  }
  func.func @transform_3(%arg0: i32, %arg1: i32, %arg2: i32) -> (i32, i32) {
    %c0_i32 = arith.constant 0 : i32
    return %arg0, %arg1 : i32, i32
  }
}

module attributes {stable_mosaic.version = 11 : i64} {
  func.func @_dynconv_ffn_kernel(%arg0: i32, %arg1: memref<16x4x32xbf16, #tpu.memory_space<vmem>>, %arg2: memref<16x32x8xbf16, #tpu.memory_space<vmem>>, %arg3: memref<16x8x32xbf16, #tpu.memory_space<vmem>>, %arg4: memref<16x32xf32, #tpu.memory_space<vmem>>, %arg5: memref<1x8xf32, #tpu.memory_space<vmem>>, %arg6: memref<1x8xf32, #tpu.memory_space<vmem>>, %arg7: memref<1x32xf32, #tpu.memory_space<vmem>>, %arg8: memref<1x32xf32, #tpu.memory_space<vmem>>, %arg9: memref<4x32x32xbf16, #tpu.memory_space<vmem>>, %arg10: memref<1x32xf32, #tpu.memory_space<vmem>>, %arg11: memref<1x32xf32, #tpu.memory_space<vmem>>, %arg12: memref<1x32xf32, #tpu.memory_space<vmem>>, %arg13: memref<1x32xf32, #tpu.memory_space<vmem>>, %arg14: memref<1x32xf32, #tpu.memory_space<vmem>>, %arg15: memref<32x64xbf16, #tpu.memory_space<vmem>>, %arg16: memref<1x64xf32, #tpu.memory_space<vmem>>, %arg17: memref<64x32xbf16, #tpu.memory_space<vmem>>, %arg18: memref<1x32xf32, #tpu.memory_space<vmem>>, %arg19: memref<1x32xf32, #tpu.memory_space<vmem>>, %arg20: memref<1x32xf32, #tpu.memory_space<vmem>>, %arg21: memref<16x32xf32, #tpu.memory_space<vmem>>) attributes {dimension_semantics = [#tpu.dimension_semantics<parallel>], iteration_bounds = array<i64: 1>, scalar_prefetch = 0 : i64, scratch_operands = 0 : i64, tpu.core_type = #tpu.core_type<tc>, window_params = [{transform_indices = @transform_0, window_bounds = array<i64: 16, 4, 32>}, {transform_indices = @transform_1, window_bounds = array<i64: 16, 32, 8>}, {transform_indices = @transform_2, window_bounds = array<i64: 16, 8, 32>}, {transform_indices = @transform_3, window_bounds = array<i64: 16, 32>}, {pipeline_mode = #tpu.pipeline_mode<synchronous>, transform_indices = @transform_4, window_bounds = array<i64: 1, 8>}, {pipeline_mode = #tpu.pipeline_mode<synchronous>, transform_indices = @transform_5, window_bounds = array<i64: 1, 8>}, {pipeline_mode = #tpu.pipeline_mode<synchronous>, transform_indices = @transform_6, window_bounds = array<i64: 1, 32>}, {pipeline_mode = #tpu.pipeline_mode<synchronous>, transform_indices = @transform_7, window_bounds = array<i64: 1, 32>}, {pipeline_mode = #tpu.pipeline_mode<synchronous>, transform_indices = @transform_8, window_bounds = array<i64: 4, 32, 32>}, {pipeline_mode = #tpu.pipeline_mode<synchronous>, transform_indices = @transform_9, window_bounds = array<i64: 1, 32>}, {pipeline_mode = #tpu.pipeline_mode<synchronous>, transform_indices = @transform_10, window_bounds = array<i64: 1, 32>}, {pipeline_mode = #tpu.pipeline_mode<synchronous>, transform_indices = @transform_11, window_bounds = array<i64: 1, 32>}, {pipeline_mode = #tpu.pipeline_mode<synchronous>, transform_indices = @transform_12, window_bounds = array<i64: 1, 32>}, {pipeline_mode = #tpu.pipeline_mode<synchronous>, transform_indices = @transform_13, window_bounds = array<i64: 1, 32>}, {pipeline_mode = #tpu.pipeline_mode<synchronous>, transform_indices = @transform_14, window_bounds = array<i64: 32, 64>}, {pipeline_mode = #tpu.pipeline_mode<synchronous>, transform_indices = @transform_15, window_bounds = array<i64: 1, 64>}, {pipeline_mode = #tpu.pipeline_mode<synchronous>, transform_indices = @transform_16, window_bounds = array<i64: 64, 32>}, {pipeline_mode = #tpu.pipeline_mode<synchronous>, transform_indices = @transform_17, window_bounds = array<i64: 1, 32>}, {pipeline_mode = #tpu.pipeline_mode<synchronous>, transform_indices = @transform_18, window_bounds = array<i64: 1, 32>}, {pipeline_mode = #tpu.pipeline_mode<synchronous>, transform_indices = @transform_19, window_bounds = array<i64: 1, 32>}, {transform_indices = @transform_20, window_bounds = array<i64: 16, 32>}]} {
    %c0 = arith.constant 0 : index
    %c0_0 = arith.constant 0 : index
    %c0_1 = arith.constant 0 : index
    %0 = vector.load %arg1[%c0, %c0_0, %c0_1] : memref<16x4x32xbf16, #tpu.memory_space<vmem>>, vector<16x4x32xbf16>
    %c0_2 = arith.constant 0 : index
    %c0_3 = arith.constant 0 : index
    %c0_4 = arith.constant 0 : index
    %1 = vector.load %arg2[%c0_2, %c0_3, %c0_4] : memref<16x32x8xbf16, #tpu.memory_space<vmem>>, vector<16x32x8xbf16>
    %c0_5 = arith.constant 0 : index
    %c0_6 = arith.constant 0 : index
    %c0_7 = arith.constant 0 : index
    %2 = vector.load %arg3[%c0_5, %c0_6, %c0_7] : memref<16x8x32xbf16, #tpu.memory_space<vmem>>, vector<16x8x32xbf16>
    "tpu.trace_start"() <{level = 10 : i32, message = "brh,bhd->brd"}> : () -> ()
    %cst = arith.constant dense<0.000000e+00> : vector<16x4x8xf32>
    %3 = tpu.matmul %0, %1, %cst {dimension_numbers = #tpu.dot_dimension_numbers<[2], [1], [1], [2], [0, 0, 0, 1, 1, 2], [0], [0]>} : vector<16x4x32xbf16>, vector<16x32x8xbf16>, vector<16x4x8xf32> -> vector<16x4x8xf32>
    "tpu.trace_stop"() : () -> ()
    %c0_8 = arith.constant 0 : index
    %c0_9 = arith.constant 0 : index
    %4 = vector.load %arg5[%c0_8, %c0_9] : memref<1x8xf32, #tpu.memory_space<vmem>>, vector<1x8xf32>
    %c0_10 = arith.constant 0 : index
    %c0_11 = arith.constant 0 : index
    %5 = vector.load %arg6[%c0_10, %c0_11] : memref<1x8xf32, #tpu.memory_space<vmem>>, vector<1x8xf32>
    %cst_12 = arith.constant dense<0.000000e+00> : vector<16x4xf32>
    %6 = vector.multi_reduction <add>, %3, %cst_12 [2] : vector<16x4x8xf32> to vector<16x4xf32>
    %7 = vector.shape_cast %6 : vector<16x4xf32> to vector<16x4x1xf32>
    %cst_13 = arith.constant 8.000000e+00 : f32
    %8 = vector.broadcast %cst_13 : f32 to vector<16x4x1xf32>
    %9 = arith.divf %7, %8 : vector<16x4x1xf32>
    %10 = vector.broadcast %9 : vector<16x4x1xf32> to vector<16x4x8xf32>
    %11 = arith.subf %3, %10 : vector<16x4x8xf32>
    %12 = arith.mulf %11, %11 : vector<16x4x8xf32>
    %cst_14 = arith.constant dense<0.000000e+00> : vector<16x4xf32>
    %13 = vector.multi_reduction <add>, %12, %cst_14 [2] : vector<16x4x8xf32> to vector<16x4xf32>
    %14 = vector.shape_cast %13 : vector<16x4xf32> to vector<16x4x1xf32>
    %cst_15 = arith.constant 8.000000e+00 : f32
    %15 = vector.broadcast %cst_15 : f32 to vector<16x4x1xf32>
    %16 = arith.divf %14, %15 : vector<16x4x1xf32>
    %17 = vector.broadcast %9 : vector<16x4x1xf32> to vector<16x4x8xf32>
    %18 = arith.subf %3, %17 : vector<16x4x8xf32>
    %cst_16 = arith.constant 9.99999974E-6 : f32
    %19 = vector.broadcast %cst_16 : f32 to vector<16x4x1xf32>
    %20 = arith.addf %16, %19 : vector<16x4x1xf32>
    %21 = math.rsqrt %20 : vector<16x4x1xf32>
    %22 = vector.broadcast %21 : vector<16x4x1xf32> to vector<16x4x8xf32>
    %23 = arith.mulf %18, %22 : vector<16x4x8xf32>
    %24 = vector.shape_cast %4 : vector<1x8xf32> to vector<1x1x8xf32>
    %25 = vector.broadcast %24 : vector<1x1x8xf32> to vector<16x4x8xf32>
    %26 = arith.mulf %23, %25 : vector<16x4x8xf32>
    %27 = vector.shape_cast %5 : vector<1x8xf32> to vector<1x1x8xf32>
    %28 = vector.broadcast %27 : vector<1x1x8xf32> to vector<16x4x8xf32>
    %29 = arith.addf %26, %28 : vector<16x4x8xf32>
    %cst_17 = arith.constant 0.000000e+00 : f32
    %30 = vector.broadcast %cst_17 : f32 to vector<16x4x8xf32>
    %31 = arith.maximumf %29, %30 : vector<16x4x8xf32>
    %32 = arith.truncf %31 : vector<16x4x8xf32> to vector<16x4x8xbf16>
    "tpu.trace_start"() <{level = 10 : i32, message = "brd,bdh->brh"}> : () -> ()
    %cst_18 = arith.constant dense<0.000000e+00> : vector<16x4x32xf32>
    %33 = tpu.matmul %32, %2, %cst_18 {dimension_numbers = #tpu.dot_dimension_numbers<[2], [1], [1], [2], [0, 0, 0, 1, 1, 2], [0], [0]>} : vector<16x4x8xbf16>, vector<16x8x32xbf16>, vector<16x4x32xf32> -> vector<16x4x32xf32>
    "tpu.trace_stop"() : () -> ()
    %c0_19 = arith.constant 0 : index
    %c0_20 = arith.constant 0 : index
    %34 = vector.load %arg7[%c0_19, %c0_20] : memref<1x32xf32, #tpu.memory_space<vmem>>, vector<1x32xf32>
    %c0_21 = arith.constant 0 : index
    %c0_22 = arith.constant 0 : index
    %35 = vector.load %arg8[%c0_21, %c0_22] : memref<1x32xf32, #tpu.memory_space<vmem>>, vector<1x32xf32>
    %cst_23 = arith.constant dense<0.000000e+00> : vector<16x4xf32>
    %36 = vector.multi_reduction <add>, %33, %cst_23 [2] : vector<16x4x32xf32> to vector<16x4xf32>
    %37 = vector.shape_cast %36 : vector<16x4xf32> to vector<16x4x1xf32>
    %cst_24 = arith.constant 3.200000e+01 : f32
    %38 = vector.broadcast %cst_24 : f32 to vector<16x4x1xf32>
    %39 = arith.divf %37, %38 : vector<16x4x1xf32>
    %40 = vector.broadcast %39 : vector<16x4x1xf32> to vector<16x4x32xf32>
    %41 = arith.subf %33, %40 : vector<16x4x32xf32>
    %42 = arith.mulf %41, %41 : vector<16x4x32xf32>
    %cst_25 = arith.constant dense<0.000000e+00> : vector<16x4xf32>
    %43 = vector.multi_reduction <add>, %42, %cst_25 [2] : vector<16x4x32xf32> to vector<16x4xf32>
    %44 = vector.shape_cast %43 : vector<16x4xf32> to vector<16x4x1xf32>
    %cst_26 = arith.constant 3.200000e+01 : f32
    %45 = vector.broadcast %cst_26 : f32 to vector<16x4x1xf32>
    %46 = arith.divf %44, %45 : vector<16x4x1xf32>
    %47 = vector.broadcast %39 : vector<16x4x1xf32> to vector<16x4x32xf32>
    %48 = arith.subf %33, %47 : vector<16x4x32xf32>
    %cst_27 = arith.constant 9.99999974E-6 : f32
    %49 = vector.broadcast %cst_27 : f32 to vector<16x4x1xf32>
    %50 = arith.addf %46, %49 : vector<16x4x1xf32>
    %51 = math.rsqrt %50 : vector<16x4x1xf32>
    %52 = vector.broadcast %51 : vector<16x4x1xf32> to vector<16x4x32xf32>
    %53 = arith.mulf %48, %52 : vector<16x4x32xf32>
    %54 = vector.shape_cast %34 : vector<1x32xf32> to vector<1x1x32xf32>
    %55 = vector.broadcast %54 : vector<1x1x32xf32> to vector<16x4x32xf32>
    %56 = arith.mulf %53, %55 : vector<16x4x32xf32>
    %57 = vector.shape_cast %35 : vector<1x32xf32> to vector<1x1x32xf32>
    %58 = vector.broadcast %57 : vector<1x1x32xf32> to vector<16x4x32xf32>
    %59 = arith.addf %56, %58 : vector<16x4x32xf32>
    %cst_28 = arith.constant 0.000000e+00 : f32
    %60 = vector.broadcast %cst_28 : f32 to vector<16x4x32xf32>
    %61 = arith.maximumf %59, %60 : vector<16x4x32xf32>
    %62 = arith.truncf %61 : vector<16x4x32xf32> to vector<16x4x32xbf16>
    %c0_29 = arith.constant 0 : index
    %c0_30 = arith.constant 0 : index
    %63 = vector.load %arg10[%c0_29, %c0_30] : memref<1x32xf32, #tpu.memory_space<vmem>>, vector<1x32xf32>
    %64 = vector.extract_strided_slice %62 {offsets = [0, 0, 0], sizes = [16, 1, 32], strides = [1, 1, 1]} : vector<16x4x32xbf16> to vector<16x1x32xbf16>
    %65 = vector.shape_cast %64 : vector<16x1x32xbf16> to vector<16x32xbf16>
    %c0_31 = arith.constant 0 : index
    %c0_32 = arith.constant 0 : index
    %c0_33 = arith.constant 0 : index
    %66 = vector.load %arg9[%c0_31, %c0_32, %c0_33] : memref<4x32x32xbf16, #tpu.memory_space<vmem>>, vector<1x32x32xbf16>
    %67 = vector.shape_cast %66 : vector<1x32x32xbf16> to vector<32x32xbf16>
    %cst_34 = arith.constant dense<0.000000e+00> : vector<16x32xf32>
    %68 = tpu.matmul %65, %67, %cst_34 {dimension_numbers = #tpu.dot_dimension_numbers<[1], [0], [0], [1], [0, 0, 1, 1], [], []>} : vector<16x32xbf16>, vector<32x32xbf16>, vector<16x32xf32> -> vector<16x32xf32>
    %69 = vector.broadcast %63 : vector<1x32xf32> to vector<16x32xf32>
    %70 = arith.addf %69, %68 : vector<16x32xf32>
    %71 = vector.extract_strided_slice %62 {offsets = [0, 1, 0], sizes = [16, 1, 32], strides = [1, 1, 1]} : vector<16x4x32xbf16> to vector<16x1x32xbf16>
    %72 = vector.shape_cast %71 : vector<16x1x32xbf16> to vector<16x32xbf16>
    %c1 = arith.constant 1 : index
    %c0_35 = arith.constant 0 : index
    %c0_36 = arith.constant 0 : index
    %73 = vector.load %arg9[%c1, %c0_35, %c0_36] : memref<4x32x32xbf16, #tpu.memory_space<vmem>>, vector<1x32x32xbf16>
    %74 = vector.shape_cast %73 : vector<1x32x32xbf16> to vector<32x32xbf16>
    %cst_37 = arith.constant dense<0.000000e+00> : vector<16x32xf32>
    %75 = tpu.matmul %72, %74, %cst_37 {dimension_numbers = #tpu.dot_dimension_numbers<[1], [0], [0], [1], [0, 0, 1, 1], [], []>} : vector<16x32xbf16>, vector<32x32xbf16>, vector<16x32xf32> -> vector<16x32xf32>
    %76 = arith.addf %70, %75 : vector<16x32xf32>
    %77 = vector.extract_strided_slice %62 {offsets = [0, 2, 0], sizes = [16, 1, 32], strides = [1, 1, 1]} : vector<16x4x32xbf16> to vector<16x1x32xbf16>
    %78 = vector.shape_cast %77 : vector<16x1x32xbf16> to vector<16x32xbf16>
    %c2 = arith.constant 2 : index
    %c0_38 = arith.constant 0 : index
    %c0_39 = arith.constant 0 : index
    %79 = vector.load %arg9[%c2, %c0_38, %c0_39] : memref<4x32x32xbf16, #tpu.memory_space<vmem>>, vector<1x32x32xbf16>
    %80 = vector.shape_cast %79 : vector<1x32x32xbf16> to vector<32x32xbf16>
    %cst_40 = arith.constant dense<0.000000e+00> : vector<16x32xf32>
    %81 = tpu.matmul %78, %80, %cst_40 {dimension_numbers = #tpu.dot_dimension_numbers<[1], [0], [0], [1], [0, 0, 1, 1], [], []>} : vector<16x32xbf16>, vector<32x32xbf16>, vector<16x32xf32> -> vector<16x32xf32>
    %82 = arith.addf %76, %81 : vector<16x32xf32>
    %83 = vector.extract_strided_slice %62 {offsets = [0, 3, 0], sizes = [16, 1, 32], strides = [1, 1, 1]} : vector<16x4x32xbf16> to vector<16x1x32xbf16>
    %84 = vector.shape_cast %83 : vector<16x1x32xbf16> to vector<16x32xbf16>
    %c3 = arith.constant 3 : index
    %c0_41 = arith.constant 0 : index
    %c0_42 = arith.constant 0 : index
    %85 = vector.load %arg9[%c3, %c0_41, %c0_42] : memref<4x32x32xbf16, #tpu.memory_space<vmem>>, vector<1x32x32xbf16>
    %86 = vector.shape_cast %85 : vector<1x32x32xbf16> to vector<32x32xbf16>
    %cst_43 = arith.constant dense<0.000000e+00> : vector<16x32xf32>
    %87 = tpu.matmul %84, %86, %cst_43 {dimension_numbers = #tpu.dot_dimension_numbers<[1], [0], [0], [1], [0, 0, 1, 1], [], []>} : vector<16x32xbf16>, vector<32x32xbf16>, vector<16x32xf32> -> vector<16x32xf32>
    %88 = arith.addf %82, %87 : vector<16x32xf32>
    %c0_44 = arith.constant 0 : index
    %c0_45 = arith.constant 0 : index
    %89 = vector.load %arg11[%c0_44, %c0_45] : memref<1x32xf32, #tpu.memory_space<vmem>>, vector<1x32xf32>
    %c0_46 = arith.constant 0 : index
    %c0_47 = arith.constant 0 : index
    %90 = vector.load %arg12[%c0_46, %c0_47] : memref<1x32xf32, #tpu.memory_space<vmem>>, vector<1x32xf32>
    %cst_48 = arith.constant dense<0.000000e+00> : vector<16xf32>
    %91 = vector.multi_reduction <add>, %88, %cst_48 [1] : vector<16x32xf32> to vector<16xf32>
    %92 = vector.shape_cast %91 : vector<16xf32> to vector<16x1xf32>
    %cst_49 = arith.constant 3.200000e+01 : f32
    %93 = vector.broadcast %cst_49 : f32 to vector<16x1xf32>
    %94 = arith.divf %92, %93 : vector<16x1xf32>
    %95 = vector.broadcast %94 : vector<16x1xf32> to vector<16x32xf32>
    %96 = arith.subf %88, %95 : vector<16x32xf32>
    %97 = arith.mulf %96, %96 : vector<16x32xf32>
    %cst_50 = arith.constant dense<0.000000e+00> : vector<16xf32>
    %98 = vector.multi_reduction <add>, %97, %cst_50 [1] : vector<16x32xf32> to vector<16xf32>
    %99 = vector.shape_cast %98 : vector<16xf32> to vector<16x1xf32>
    %cst_51 = arith.constant 3.200000e+01 : f32
    %100 = vector.broadcast %cst_51 : f32 to vector<16x1xf32>
    %101 = arith.divf %99, %100 : vector<16x1xf32>
    %102 = vector.broadcast %94 : vector<16x1xf32> to vector<16x32xf32>
    %103 = arith.subf %88, %102 : vector<16x32xf32>
    %cst_52 = arith.constant 9.99999974E-6 : f32
    %104 = vector.broadcast %cst_52 : f32 to vector<16x1xf32>
    %105 = arith.addf %101, %104 : vector<16x1xf32>
    %106 = math.rsqrt %105 : vector<16x1xf32>
    %107 = vector.broadcast %106 : vector<16x1xf32> to vector<16x32xf32>
    %108 = arith.mulf %103, %107 : vector<16x32xf32>
    %109 = vector.broadcast %89 : vector<1x32xf32> to vector<16x32xf32>
    %110 = arith.mulf %108, %109 : vector<16x32xf32>
    %111 = vector.broadcast %90 : vector<1x32xf32> to vector<16x32xf32>
    %112 = arith.addf %110, %111 : vector<16x32xf32>
    %cst_53 = arith.constant 0.000000e+00 : f32
    %113 = vector.broadcast %cst_53 : f32 to vector<16x32xf32>
    %114 = arith.maximumf %112, %113 : vector<16x32xf32>
    %c0_54 = arith.constant 0 : index
    %c0_55 = arith.constant 0 : index
    %115 = vector.load %arg4[%c0_54, %c0_55] : memref<16x32xf32, #tpu.memory_space<vmem>>, vector<16x32xf32>
    %116 = arith.addf %115, %114 : vector<16x32xf32>
    %c0_56 = arith.constant 0 : index
    %c0_57 = arith.constant 0 : index
    %117 = vector.load %arg13[%c0_56, %c0_57] : memref<1x32xf32, #tpu.memory_space<vmem>>, vector<1x32xf32>
    %c0_58 = arith.constant 0 : index
    %c0_59 = arith.constant 0 : index
    %118 = vector.load %arg14[%c0_58, %c0_59] : memref<1x32xf32, #tpu.memory_space<vmem>>, vector<1x32xf32>
    %cst_60 = arith.constant dense<0.000000e+00> : vector<16xf32>
    %119 = vector.multi_reduction <add>, %116, %cst_60 [1] : vector<16x32xf32> to vector<16xf32>
    %120 = vector.shape_cast %119 : vector<16xf32> to vector<16x1xf32>
    %cst_61 = arith.constant 3.200000e+01 : f32
    %121 = vector.broadcast %cst_61 : f32 to vector<16x1xf32>
    %122 = arith.divf %120, %121 : vector<16x1xf32>
    %123 = vector.broadcast %122 : vector<16x1xf32> to vector<16x32xf32>
    %124 = arith.subf %116, %123 : vector<16x32xf32>
    %125 = arith.mulf %124, %124 : vector<16x32xf32>
    %cst_62 = arith.constant dense<0.000000e+00> : vector<16xf32>
    %126 = vector.multi_reduction <add>, %125, %cst_62 [1] : vector<16x32xf32> to vector<16xf32>
    %127 = vector.shape_cast %126 : vector<16xf32> to vector<16x1xf32>
    %cst_63 = arith.constant 3.200000e+01 : f32
    %128 = vector.broadcast %cst_63 : f32 to vector<16x1xf32>
    %129 = arith.divf %127, %128 : vector<16x1xf32>
    %130 = vector.broadcast %122 : vector<16x1xf32> to vector<16x32xf32>
    %131 = arith.subf %116, %130 : vector<16x32xf32>
    %cst_64 = arith.constant 9.99999974E-6 : f32
    %132 = vector.broadcast %cst_64 : f32 to vector<16x1xf32>
    %133 = arith.addf %129, %132 : vector<16x1xf32>
    %134 = math.rsqrt %133 : vector<16x1xf32>
    %135 = vector.broadcast %134 : vector<16x1xf32> to vector<16x32xf32>
    %136 = arith.mulf %131, %135 : vector<16x32xf32>
    %137 = vector.broadcast %117 : vector<1x32xf32> to vector<16x32xf32>
    %138 = arith.mulf %136, %137 : vector<16x32xf32>
    %139 = vector.broadcast %118 : vector<1x32xf32> to vector<16x32xf32>
    %140 = arith.addf %138, %139 : vector<16x32xf32>
    %141 = arith.truncf %140 : vector<16x32xf32> to vector<16x32xbf16>
    %c0_65 = arith.constant 0 : index
    %c0_66 = arith.constant 0 : index
    %142 = vector.load %arg15[%c0_65, %c0_66] : memref<32x64xbf16, #tpu.memory_space<vmem>>, vector<32x64xbf16>
    %cst_67 = arith.constant dense<0.000000e+00> : vector<16x64xf32>
    %143 = tpu.matmul %141, %142, %cst_67 {dimension_numbers = #tpu.dot_dimension_numbers<[1], [0], [0], [1], [0, 0, 1, 1], [], []>} : vector<16x32xbf16>, vector<32x64xbf16>, vector<16x64xf32> -> vector<16x64xf32>
    %c0_68 = arith.constant 0 : index
    %c0_69 = arith.constant 0 : index
    %144 = vector.load %arg16[%c0_68, %c0_69] : memref<1x64xf32, #tpu.memory_space<vmem>>, vector<1x64xf32>
    %145 = vector.broadcast %144 : vector<1x64xf32> to vector<16x64xf32>
    %146 = arith.addf %143, %145 : vector<16x64xf32>
    %cst_70 = arith.constant 0.000000e+00 : f32
    %147 = vector.broadcast %cst_70 : f32 to vector<16x64xf32>
    %148 = arith.maximumf %146, %147 : vector<16x64xf32>
    %149 = arith.truncf %148 : vector<16x64xf32> to vector<16x64xbf16>
    %c0_71 = arith.constant 0 : index
    %c0_72 = arith.constant 0 : index
    %150 = vector.load %arg17[%c0_71, %c0_72] : memref<64x32xbf16, #tpu.memory_space<vmem>>, vector<64x32xbf16>
    %cst_73 = arith.constant dense<0.000000e+00> : vector<16x32xf32>
    %151 = tpu.matmul %149, %150, %cst_73 {dimension_numbers = #tpu.dot_dimension_numbers<[1], [0], [0], [1], [0, 0, 1, 1], [], []>} : vector<16x64xbf16>, vector<64x32xbf16>, vector<16x32xf32> -> vector<16x32xf32>
    %c0_74 = arith.constant 0 : index
    %c0_75 = arith.constant 0 : index
    %152 = vector.load %arg18[%c0_74, %c0_75] : memref<1x32xf32, #tpu.memory_space<vmem>>, vector<1x32xf32>
    %153 = vector.broadcast %152 : vector<1x32xf32> to vector<16x32xf32>
    %154 = arith.addf %151, %153 : vector<16x32xf32>
    %155 = arith.addf %140, %154 : vector<16x32xf32>
    %c0_76 = arith.constant 0 : index
    %c0_77 = arith.constant 0 : index
    %156 = vector.load %arg19[%c0_76, %c0_77] : memref<1x32xf32, #tpu.memory_space<vmem>>, vector<1x32xf32>
    %c0_78 = arith.constant 0 : index
    %c0_79 = arith.constant 0 : index
    %157 = vector.load %arg20[%c0_78, %c0_79] : memref<1x32xf32, #tpu.memory_space<vmem>>, vector<1x32xf32>
    %cst_80 = arith.constant dense<0.000000e+00> : vector<16xf32>
    %158 = vector.multi_reduction <add>, %155, %cst_80 [1] : vector<16x32xf32> to vector<16xf32>
    %159 = vector.shape_cast %158 : vector<16xf32> to vector<16x1xf32>
    %cst_81 = arith.constant 3.200000e+01 : f32
    %160 = vector.broadcast %cst_81 : f32 to vector<16x1xf32>
    %161 = arith.divf %159, %160 : vector<16x1xf32>
    %162 = vector.broadcast %161 : vector<16x1xf32> to vector<16x32xf32>
    %163 = arith.subf %155, %162 : vector<16x32xf32>
    %164 = arith.mulf %163, %163 : vector<16x32xf32>
    %cst_82 = arith.constant dense<0.000000e+00> : vector<16xf32>
    %165 = vector.multi_reduction <add>, %164, %cst_82 [1] : vector<16x32xf32> to vector<16xf32>
    %166 = vector.shape_cast %165 : vector<16xf32> to vector<16x1xf32>
    %cst_83 = arith.constant 3.200000e+01 : f32
    %167 = vector.broadcast %cst_83 : f32 to vector<16x1xf32>
    %168 = arith.divf %166, %167 : vector<16x1xf32>
    %169 = vector.broadcast %161 : vector<16x1xf32> to vector<16x32xf32>
    %170 = arith.subf %155, %169 : vector<16x32xf32>
    %cst_84 = arith.constant 9.99999974E-6 : f32
    %171 = vector.broadcast %cst_84 : f32 to vector<16x1xf32>
    %172 = arith.addf %168, %171 : vector<16x1xf32>
    %173 = math.rsqrt %172 : vector<16x1xf32>
    %174 = vector.broadcast %173 : vector<16x1xf32> to vector<16x32xf32>
    %175 = arith.mulf %170, %174 : vector<16x32xf32>
    %176 = vector.broadcast %156 : vector<1x32xf32> to vector<16x32xf32>
    %177 = arith.mulf %175, %176 : vector<16x32xf32>
    %178 = vector.broadcast %157 : vector<1x32xf32> to vector<16x32xf32>
    %179 = arith.addf %177, %178 : vector<16x32xf32>
    %c0_85 = arith.constant 0 : index
    %c0_86 = arith.constant 0 : index
    %180 = vector.load %arg21[%c0_85, %c0_86] : memref<16x32xf32, #tpu.memory_space<vmem>>, vector<16x32xf32>
    tpu.vector_store %arg21[%c0_85, %c0_86], %179 {strides = array<i32>} : memref<16x32xf32, #tpu.memory_space<vmem>>, vector<16x32xf32>,
    return
  }
  func.func @transform_0(%arg0: i32) -> (i32, i32, i32) {
    %c0_i32 = arith.constant 0 : i32
    %c0_i32_0 = arith.constant 0 : i32
    %c0_i32_1 = arith.constant 0 : i32
    return %arg0, %c0_i32, %c0_i32_0 : i32, i32, i32
  }
  func.func @transform_1(%arg0: i32) -> (i32, i32, i32) {
    %c0_i32 = arith.constant 0 : i32
    %c0_i32_0 = arith.constant 0 : i32
    %c0_i32_1 = arith.constant 0 : i32
    return %arg0, %c0_i32, %c0_i32_0 : i32, i32, i32
  }
  func.func @transform_2(%arg0: i32) -> (i32, i32, i32) {
    %c0_i32 = arith.constant 0 : i32
    %c0_i32_0 = arith.constant 0 : i32
    %c0_i32_1 = arith.constant 0 : i32
    return %arg0, %c0_i32, %c0_i32_0 : i32, i32, i32
  }
  func.func @transform_3(%arg0: i32) -> (i32, i32) {
    %c0_i32 = arith.constant 0 : i32
    %c0_i32_0 = arith.constant 0 : i32
    return %arg0, %c0_i32 : i32, i32
  }
  func.func @transform_4(%arg0: i32) -> (i32, i32) {
    %c0_i32 = arith.constant 0 : i32
    %c0_i32_0 = arith.constant 0 : i32
    %c0_i32_1 = arith.constant 0 : i32
    return %c0_i32, %c0_i32_0 : i32, i32
  }
  func.func @transform_5(%arg0: i32) -> (i32, i32) {
    %c0_i32 = arith.constant 0 : i32
    %c0_i32_0 = arith.constant 0 : i32
    %c0_i32_1 = arith.constant 0 : i32
    return %c0_i32, %c0_i32_0 : i32, i32
  }
  func.func @transform_6(%arg0: i32) -> (i32, i32) {
    %c0_i32 = arith.constant 0 : i32
    %c0_i32_0 = arith.constant 0 : i32
    %c0_i32_1 = arith.constant 0 : i32
    return %c0_i32, %c0_i32_0 : i32, i32
  }
  func.func @transform_7(%arg0: i32) -> (i32, i32) {
    %c0_i32 = arith.constant 0 : i32
    %c0_i32_0 = arith.constant 0 : i32
    %c0_i32_1 = arith.constant 0 : i32
    return %c0_i32, %c0_i32_0 : i32, i32
  }
  func.func @transform_8(%arg0: i32) -> (i32, i32, i32) {
    %c0_i32 = arith.constant 0 : i32
    %c0_i32_0 = arith.constant 0 : i32
    %c0_i32_1 = arith.constant 0 : i32
    %c0_i32_2 = arith.constant 0 : i32
    return %c0_i32, %c0_i32_0, %c0_i32_1 : i32, i32, i32
  }
  func.func @transform_9(%arg0: i32) -> (i32, i32) {
    %c0_i32 = arith.constant 0 : i32
    %c0_i32_0 = arith.constant 0 : i32
    %c0_i32_1 = arith.constant 0 : i32
    return %c0_i32, %c0_i32_0 : i32, i32
  }
  func.func @transform_10(%arg0: i32) -> (i32, i32) {
    %c0_i32 = arith.constant 0 : i32
    %c0_i32_0 = arith.constant 0 : i32
    %c0_i32_1 = arith.constant 0 : i32
    return %c0_i32, %c0_i32_0 : i32, i32
  }
  func.func @transform_11(%arg0: i32) -> (i32, i32) {
    %c0_i32 = arith.constant 0 : i32
    %c0_i32_0 = arith.constant 0 : i32
    %c0_i32_1 = arith.constant 0 : i32
    return %c0_i32, %c0_i32_0 : i32, i32
  }
  func.func @transform_12(%arg0: i32) -> (i32, i32) {
    %c0_i32 = arith.constant 0 : i32
    %c0_i32_0 = arith.constant 0 : i32
    %c0_i32_1 = arith.constant 0 : i32
    return %c0_i32, %c0_i32_0 : i32, i32
  }
  func.func @transform_13(%arg0: i32) -> (i32, i32) {
    %c0_i32 = arith.constant 0 : i32
    %c0_i32_0 = arith.constant 0 : i32
    %c0_i32_1 = arith.constant 0 : i32
    return %c0_i32, %c0_i32_0 : i32, i32
  }
  func.func @transform_14(%arg0: i32) -> (i32, i32) {
    %c0_i32 = arith.constant 0 : i32
    %c0_i32_0 = arith.constant 0 : i32
    %c0_i32_1 = arith.constant 0 : i32
    return %c0_i32, %c0_i32_0 : i32, i32
  }
  func.func @transform_15(%arg0: i32) -> (i32, i32) {
    %c0_i32 = arith.constant 0 : i32
    %c0_i32_0 = arith.constant 0 : i32
    %c0_i32_1 = arith.constant 0 : i32
    return %c0_i32, %c0_i32_0 : i32, i32
  }
  func.func @transform_16(%arg0: i32) -> (i32, i32) {
    %c0_i32 = arith.constant 0 : i32
    %c0_i32_0 = arith.constant 0 : i32
    %c0_i32_1 = arith.constant 0 : i32
    return %c0_i32, %c0_i32_0 : i32, i32
  }
  func.func @transform_17(%arg0: i32) -> (i32, i32) {
    %c0_i32 = arith.constant 0 : i32
    %c0_i32_0 = arith.constant 0 : i32
    %c0_i32_1 = arith.constant 0 : i32
    return %c0_i32, %c0_i32_0 : i32, i32
  }
  func.func @transform_18(%arg0: i32) -> (i32, i32) {
    %c0_i32 = arith.constant 0 : i32
    %c0_i32_0 = arith.constant 0 : i32
    %c0_i32_1 = arith.constant 0 : i32
    return %c0_i32, %c0_i32_0 : i32, i32
  }
  func.func @transform_19(%arg0: i32) -> (i32, i32) {
    %c0_i32 = arith.constant 0 : i32
    %c0_i32_0 = arith.constant 0 : i32
    %c0_i32_1 = arith.constant 0 : i32
    return %c0_i32, %c0_i32_0 : i32, i32
  }
  func.func @transform_20(%arg0: i32) -> (i32, i32) {
    %c0_i32 = arith.constant 0 : i32
    %c0_i32_0 = arith.constant 0 : i32
    return %arg0, %c0_i32 : i32, i32
  }
}

module attributes {stable_mosaic.version = 11 : i64} {
  func.func @_tower_heads_kernel(%arg0: i32, %arg1: memref<1x8x32xf32, #tpu.memory_space<vmem>>, %arg2: memref<1x1x128xf32, #tpu.memory_space<vmem>>, %arg3: memref<1x8x2xf32, #tpu.memory_space<vmem>>, %arg4: memref<128x64xbf16, #tpu.memory_space<vmem>>, %arg5: memref<1x64xf32, #tpu.memory_space<vmem>>, %arg6: memref<1x32x32xbf16, #tpu.memory_space<vmem>>, %arg7: memref<1x32xf32, #tpu.memory_space<vmem>>, %arg8: memref<1x32xf32, #tpu.memory_space<vmem>>, %arg9: memref<1x32x32xbf16, #tpu.memory_space<vmem>>, %arg10: memref<1x32xf32, #tpu.memory_space<vmem>>, %arg11: memref<1x32xf32, #tpu.memory_space<vmem>>, %arg12: memref<32x128xbf16, #tpu.memory_space<vmem>>, %arg13: memref<1x128xf32, #tpu.memory_space<vmem>>, %arg14: memref<32x2xbf16, #tpu.memory_space<vmem>>, %arg15: memref<1x2xf32, #tpu.memory_space<vmem>>, %arg16: memref<1x8x128xf32, #tpu.memory_space<vmem>>, %arg17: memref<1x8x2xf32, #tpu.memory_space<vmem>>) attributes {dimension_semantics = [#tpu.dimension_semantics<parallel>], iteration_bounds = array<i64: 2>, scalar_prefetch = 0 : i64, scratch_operands = 0 : i64, tpu.core_type = #tpu.core_type<tc>, window_params = [{transform_indices = @transform_0, window_bounds = array<i64: 1, 8, 32>}, {transform_indices = @transform_1, window_bounds = array<i64: 1, 1, 128>}, {transform_indices = @transform_2, window_bounds = array<i64: 1, 8, 2>}, {pipeline_mode = #tpu.pipeline_mode<synchronous>, transform_indices = @transform_3, window_bounds = array<i64: 128, 64>}, {pipeline_mode = #tpu.pipeline_mode<synchronous>, transform_indices = @transform_4, window_bounds = array<i64: 1, 64>}, {pipeline_mode = #tpu.pipeline_mode<synchronous>, transform_indices = @transform_5, window_bounds = array<i64: 1, 32, 32>}, {pipeline_mode = #tpu.pipeline_mode<synchronous>, transform_indices = @transform_6, window_bounds = array<i64: 1, 32>}, {pipeline_mode = #tpu.pipeline_mode<synchronous>, transform_indices = @transform_7, window_bounds = array<i64: 1, 32>}, {pipeline_mode = #tpu.pipeline_mode<synchronous>, transform_indices = @transform_8, window_bounds = array<i64: 1, 32, 32>}, {pipeline_mode = #tpu.pipeline_mode<synchronous>, transform_indices = @transform_9, window_bounds = array<i64: 1, 32>}, {pipeline_mode = #tpu.pipeline_mode<synchronous>, transform_indices = @transform_10, window_bounds = array<i64: 1, 32>}, {pipeline_mode = #tpu.pipeline_mode<synchronous>, transform_indices = @transform_11, window_bounds = array<i64: 32, 128>}, {pipeline_mode = #tpu.pipeline_mode<synchronous>, transform_indices = @transform_12, window_bounds = array<i64: 1, 128>}, {pipeline_mode = #tpu.pipeline_mode<synchronous>, transform_indices = @transform_13, window_bounds = array<i64: 32, 2>}, {pipeline_mode = #tpu.pipeline_mode<synchronous>, transform_indices = @transform_14, window_bounds = array<i64: 1, 2>}, {transform_indices = @transform_15, window_bounds = array<i64: 1, 8, 128>}, {transform_indices = @transform_16, window_bounds = array<i64: 1, 8, 2>}]} {
    %c0 = arith.constant 0 : index
    %c0_0 = arith.constant 0 : index
    %c0_1 = arith.constant 0 : index
    %0 = vector.load %arg1[%c0, %c0_0, %c0_1] : memref<1x8x32xf32, #tpu.memory_space<vmem>>, vector<1x8x32xf32>
    %1 = vector.shape_cast %0 : vector<1x8x32xf32> to vector<8x32xf32>
    %c0_2 = arith.constant 0 : index
    %c0_3 = arith.constant 0 : index
    %c0_4 = arith.constant 0 : index
    %2 = vector.load %arg2[%c0_2, %c0_3, %c0_4] : memref<1x1x128xf32, #tpu.memory_space<vmem>>, vector<1x1x128xf32>
    %3 = vector.shape_cast %2 : vector<1x1x128xf32> to vector<1x128xf32>
    %cst = arith.constant 0.000000e+00 : f32
    %4 = vector.broadcast %cst : f32 to vector<1x128xf32>
    %5 = arith.subf %4, %3 : vector<1x128xf32>
    %6 = math.exp %5 : vector<1x128xf32>
    %cst_5 = arith.constant 1.000000e+00 : f32
    %7 = vector.broadcast %cst_5 : f32 to vector<1x128xf32>
    %8 = arith.addf %7, %6 : vector<1x128xf32>
    %9 = arith.divf %3, %8 : vector<1x128xf32>
    %10 = arith.truncf %9 : vector<1x128xf32> to vector<1x128xbf16>
    %c0_6 = arith.constant 0 : index
    %c0_7 = arith.constant 0 : index
    %11 = vector.load %arg4[%c0_6, %c0_7] : memref<128x64xbf16, #tpu.memory_space<vmem>>, vector<128x64xbf16>
    %cst_8 = arith.constant dense<0.000000e+00> : vector<1x64xf32>
    %12 = tpu.matmul %10, %11, %cst_8 {dimension_numbers = #tpu.dot_dimension_numbers<[1], [0], [0], [1], [0, 0, 1, 1], [], []>} : vector<1x128xbf16>, vector<128x64xbf16>, vector<1x64xf32> -> vector<1x64xf32>
    %c0_9 = arith.constant 0 : index
    %c0_10 = arith.constant 0 : index
    %13 = vector.load %arg5[%c0_9, %c0_10] : memref<1x64xf32, #tpu.memory_space<vmem>>, vector<1x64xf32>
    %14 = arith.addf %12, %13 : vector<1x64xf32>
    %15 = vector.extract_strided_slice %14 {offsets = [0, 0], sizes = [1, 32], strides = [1, 1]} : vector<1x64xf32> to vector<1x32xf32>
    %16 = vector.extract_strided_slice %14 {offsets = [0, 32], sizes = [1, 32], strides = [1, 1]} : vector<1x64xf32> to vector<1x32xf32>
    %cst_11 = arith.constant 1.000000e+00 : f32
    %17 = vector.broadcast %cst_11 : f32 to vector<1x32xf32>
    %18 = arith.addf %15, %17 : vector<1x32xf32>
    %19 = vector.broadcast %18 : vector<1x32xf32> to vector<8x32xf32>
    %20 = arith.mulf %1, %19 : vector<8x32xf32>
    %21 = vector.broadcast %16 : vector<1x32xf32> to vector<8x32xf32>
    %22 = arith.addf %20, %21 : vector<8x32xf32>
    %23 = arith.truncf %22 : vector<8x32xf32> to vector<8x32xbf16>
    %c0_12 = arith.constant 0 : index
    %c0_13 = arith.constant 0 : index
    %c0_14 = arith.constant 0 : index
    %24 = vector.load %arg6[%c0_12, %c0_13, %c0_14] : memref<1x32x32xbf16, #tpu.memory_space<vmem>>, vector<1x32x32xbf16>
    %25 = vector.shape_cast %24 : vector<1x32x32xbf16> to vector<32x32xbf16>
    %cst_15 = arith.constant dense<0.000000e+00> : vector<8x32xf32>
    %26 = tpu.matmul %23, %25, %cst_15 {dimension_numbers = #tpu.dot_dimension_numbers<[1], [0], [0], [1], [0, 0, 1, 1], [], []>} : vector<8x32xbf16>, vector<32x32xbf16>, vector<8x32xf32> -> vector<8x32xf32>
    %c0_16 = arith.constant 0 : index
    %c0_17 = arith.constant 0 : index
    %27 = vector.load %arg7[%c0_16, %c0_17] : memref<1x32xf32, #tpu.memory_space<vmem>>, vector<1x32xf32>
    %28 = vector.shape_cast %27 : vector<1x32xf32> to vector<32xf32>
    %c0_18 = arith.constant 0 : index
    %c0_19 = arith.constant 0 : index
    %29 = vector.load %arg8[%c0_18, %c0_19] : memref<1x32xf32, #tpu.memory_space<vmem>>, vector<1x32xf32>
    %30 = vector.shape_cast %29 : vector<1x32xf32> to vector<32xf32>
    %cst_20 = arith.constant dense<0.000000e+00> : vector<8xf32>
    %31 = vector.multi_reduction <add>, %26, %cst_20 [1] : vector<8x32xf32> to vector<8xf32>
    %32 = vector.shape_cast %31 : vector<8xf32> to vector<8x1xf32>
    %cst_21 = arith.constant 3.200000e+01 : f32
    %33 = vector.broadcast %cst_21 : f32 to vector<8x1xf32>
    %34 = arith.divf %32, %33 : vector<8x1xf32>
    %35 = vector.broadcast %34 : vector<8x1xf32> to vector<8x32xf32>
    %36 = arith.subf %26, %35 : vector<8x32xf32>
    %37 = arith.mulf %36, %36 : vector<8x32xf32>
    %cst_22 = arith.constant dense<0.000000e+00> : vector<8xf32>
    %38 = vector.multi_reduction <add>, %37, %cst_22 [1] : vector<8x32xf32> to vector<8xf32>
    %39 = vector.shape_cast %38 : vector<8xf32> to vector<8x1xf32>
    %cst_23 = arith.constant 3.200000e+01 : f32
    %40 = vector.broadcast %cst_23 : f32 to vector<8x1xf32>
    %41 = arith.divf %39, %40 : vector<8x1xf32>
    %42 = vector.broadcast %34 : vector<8x1xf32> to vector<8x32xf32>
    %43 = arith.subf %26, %42 : vector<8x32xf32>
    %cst_24 = arith.constant 9.99999974E-6 : f32
    %44 = vector.broadcast %cst_24 : f32 to vector<8x1xf32>
    %45 = arith.addf %41, %44 : vector<8x1xf32>
    %46 = math.rsqrt %45 : vector<8x1xf32>
    %47 = vector.broadcast %46 : vector<8x1xf32> to vector<8x32xf32>
    %48 = arith.mulf %43, %47 : vector<8x32xf32>
    %49 = vector.shape_cast %28 : vector<32xf32> to vector<1x32xf32>
    %50 = vector.broadcast %49 : vector<1x32xf32> to vector<8x32xf32>
    %51 = arith.mulf %48, %50 : vector<8x32xf32>
    %52 = vector.shape_cast %30 : vector<32xf32> to vector<1x32xf32>
    %53 = vector.broadcast %52 : vector<1x32xf32> to vector<8x32xf32>
    %54 = arith.addf %51, %53 : vector<8x32xf32>
    %cst_25 = arith.constant 0.000000e+00 : f32
    %55 = vector.broadcast %cst_25 : f32 to vector<8x32xf32>
    %56 = arith.maximumf %54, %55 : vector<8x32xf32>
    %57 = arith.truncf %22 : vector<8x32xf32> to vector<8x32xbf16>
    %c0_26 = arith.constant 0 : index
    %c0_27 = arith.constant 0 : index
    %c0_28 = arith.constant 0 : index
    %58 = vector.load %arg9[%c0_26, %c0_27, %c0_28] : memref<1x32x32xbf16, #tpu.memory_space<vmem>>, vector<1x32x32xbf16>
    %59 = vector.shape_cast %58 : vector<1x32x32xbf16> to vector<32x32xbf16>
    %cst_29 = arith.constant dense<0.000000e+00> : vector<8x32xf32>
    %60 = tpu.matmul %57, %59, %cst_29 {dimension_numbers = #tpu.dot_dimension_numbers<[1], [0], [0], [1], [0, 0, 1, 1], [], []>} : vector<8x32xbf16>, vector<32x32xbf16>, vector<8x32xf32> -> vector<8x32xf32>
    %c0_30 = arith.constant 0 : index
    %c0_31 = arith.constant 0 : index
    %61 = vector.load %arg10[%c0_30, %c0_31] : memref<1x32xf32, #tpu.memory_space<vmem>>, vector<1x32xf32>
    %62 = vector.shape_cast %61 : vector<1x32xf32> to vector<32xf32>
    %c0_32 = arith.constant 0 : index
    %c0_33 = arith.constant 0 : index
    %63 = vector.load %arg11[%c0_32, %c0_33] : memref<1x32xf32, #tpu.memory_space<vmem>>, vector<1x32xf32>
    %64 = vector.shape_cast %63 : vector<1x32xf32> to vector<32xf32>
    %cst_34 = arith.constant dense<0.000000e+00> : vector<8xf32>
    %65 = vector.multi_reduction <add>, %60, %cst_34 [1] : vector<8x32xf32> to vector<8xf32>
    %66 = vector.shape_cast %65 : vector<8xf32> to vector<8x1xf32>
    %cst_35 = arith.constant 3.200000e+01 : f32
    %67 = vector.broadcast %cst_35 : f32 to vector<8x1xf32>
    %68 = arith.divf %66, %67 : vector<8x1xf32>
    %69 = vector.broadcast %68 : vector<8x1xf32> to vector<8x32xf32>
    %70 = arith.subf %60, %69 : vector<8x32xf32>
    %71 = arith.mulf %70, %70 : vector<8x32xf32>
    %cst_36 = arith.constant dense<0.000000e+00> : vector<8xf32>
    %72 = vector.multi_reduction <add>, %71, %cst_36 [1] : vector<8x32xf32> to vector<8xf32>
    %73 = vector.shape_cast %72 : vector<8xf32> to vector<8x1xf32>
    %cst_37 = arith.constant 3.200000e+01 : f32
    %74 = vector.broadcast %cst_37 : f32 to vector<8x1xf32>
    %75 = arith.divf %73, %74 : vector<8x1xf32>
    %76 = vector.broadcast %68 : vector<8x1xf32> to vector<8x32xf32>
    %77 = arith.subf %60, %76 : vector<8x32xf32>
    %cst_38 = arith.constant 9.99999974E-6 : f32
    %78 = vector.broadcast %cst_38 : f32 to vector<8x1xf32>
    %79 = arith.addf %75, %78 : vector<8x1xf32>
    %80 = math.rsqrt %79 : vector<8x1xf32>
    %81 = vector.broadcast %80 : vector<8x1xf32> to vector<8x32xf32>
    %82 = arith.mulf %77, %81 : vector<8x32xf32>
    %83 = vector.shape_cast %62 : vector<32xf32> to vector<1x32xf32>
    %84 = vector.broadcast %83 : vector<1x32xf32> to vector<8x32xf32>
    %85 = arith.mulf %82, %84 : vector<8x32xf32>
    %86 = vector.shape_cast %64 : vector<32xf32> to vector<1x32xf32>
    %87 = vector.broadcast %86 : vector<1x32xf32> to vector<8x32xf32>
    %88 = arith.addf %85, %87 : vector<8x32xf32>
    %cst_39 = arith.constant 0.000000e+00 : f32
    %89 = vector.broadcast %cst_39 : f32 to vector<8x32xf32>
    %90 = arith.maximumf %88, %89 : vector<8x32xf32>
    %91 = arith.truncf %56 : vector<8x32xf32> to vector<8x32xbf16>
    %c0_40 = arith.constant 0 : index
    %c0_41 = arith.constant 0 : index
    %92 = vector.load %arg12[%c0_40, %c0_41] : memref<32x128xbf16, #tpu.memory_space<vmem>>, vector<32x128xbf16>
    %cst_42 = arith.constant dense<0.000000e+00> : vector<8x128xf32>
    %93 = tpu.matmul %91, %92, %cst_42 {dimension_numbers = #tpu.dot_dimension_numbers<[1], [0], [0], [1], [0, 0, 1, 1], [], []>} : vector<8x32xbf16>, vector<32x128xbf16>, vector<8x128xf32> -> vector<8x128xf32>
    %c0_43 = arith.constant 0 : index
    %c0_44 = arith.constant 0 : index
    %94 = vector.load %arg13[%c0_43, %c0_44] : memref<1x128xf32, #tpu.memory_space<vmem>>, vector<1x128xf32>
    %95 = vector.broadcast %94 : vector<1x128xf32> to vector<8x128xf32>
    %96 = arith.addf %93, %95 : vector<8x128xf32>
    %97 = arith.truncf %90 : vector<8x32xf32> to vector<8x32xbf16>
    %c0_45 = arith.constant 0 : index
    %c0_46 = arith.constant 0 : index
    %98 = vector.load %arg14[%c0_45, %c0_46] : memref<32x2xbf16, #tpu.memory_space<vmem>>, vector<32x2xbf16>
    %cst_47 = arith.constant dense<0.000000e+00> : vector<8x2xf32>
    %99 = tpu.matmul %97, %98, %cst_47 {dimension_numbers = #tpu.dot_dimension_numbers<[1], [0], [0], [1], [0, 0, 1, 1], [], []>} : vector<8x32xbf16>, vector<32x2xbf16>, vector<8x2xf32> -> vector<8x2xf32>
    %c0_48 = arith.constant 0 : index
    %c0_49 = arith.constant 0 : index
    %100 = vector.load %arg15[%c0_48, %c0_49] : memref<1x2xf32, #tpu.memory_space<vmem>>, vector<1x2xf32>
    %101 = vector.broadcast %100 : vector<1x2xf32> to vector<8x2xf32>
    %102 = arith.addf %99, %101 : vector<8x2xf32>
    %c0_50 = arith.constant 0 : index
    %c0_51 = arith.constant 0 : index
    %c0_52 = arith.constant 0 : index
    %103 = vector.load %arg3[%c0_50, %c0_51, %c0_52] : memref<1x8x2xf32, #tpu.memory_space<vmem>>, vector<1x8x2xf32>
    %104 = vector.shape_cast %103 : vector<1x8x2xf32> to vector<8x2xf32>
    %105 = vector.extract_strided_slice %104 {offsets = [0, 0], sizes = [8, 1], strides = [1, 1]} : vector<8x2xf32> to vector<8x1xf32>
    %106 = vector.extract_strided_slice %104 {offsets = [0, 1], sizes = [8, 1], strides = [1, 1]} : vector<8x2xf32> to vector<8x1xf32>
    %107 = vector.extract_strided_slice %102 {offsets = [0, 0], sizes = [8, 1], strides = [1, 1]} : vector<8x2xf32> to vector<8x1xf32>
    %108 = vector.extract_strided_slice %102 {offsets = [0, 1], sizes = [8, 1], strides = [1, 1]} : vector<8x2xf32> to vector<8x1xf32>
    %cst_53 = arith.constant 8.74033641 : f32
    %109 = vector.broadcast %cst_53 : f32 to vector<8x1xf32>
    %110 = arith.minimumf %108, %109 : vector<8x1xf32>
    %c0_54 = arith.constant 0 : index
    %c0_55 = arith.constant 0 : index
    %c0_56 = arith.constant 0 : index
    %111 = vector.load %arg16[%c0_54, %c0_55, %c0_56] : memref<1x8x128xf32, #tpu.memory_space<vmem>>, vector<1x8x128xf32>
    %112 = vector.shape_cast %111 : vector<1x8x128xf32> to vector<8x128xf32>
    %113 = vector.shape_cast %96 : vector<8x128xf32> to vector<1x8x128xf32>
    tpu.vector_store %arg16[%c0_54, %c0_55, %c0_56], %113 {strides = array<i32>} : memref<1x8x128xf32, #tpu.memory_space<vmem>>, vector<1x8x128xf32>,
    %114 = arith.mulf %107, %106 : vector<8x1xf32>
    %115 = arith.addf %114, %105 : vector<8x1xf32>
    %116 = math.exp %110 : vector<8x1xf32>
    %117 = arith.mulf %116, %106 : vector<8x1xf32>
    %118 = tpu.concatenate %115, %117 in 1 : vector<8x1xf32>, vector<8x1xf32> -> vector<8x2xf32>
    %c0_57 = arith.constant 0 : index
    %c0_58 = arith.constant 0 : index
    %c0_59 = arith.constant 0 : index
    %119 = vector.load %arg17[%c0_57, %c0_58, %c0_59] : memref<1x8x2xf32, #tpu.memory_space<vmem>>, vector<1x8x2xf32>
    %120 = vector.shape_cast %119 : vector<1x8x2xf32> to vector<8x2xf32>
    %121 = vector.shape_cast %118 : vector<8x2xf32> to vector<1x8x2xf32>
    tpu.vector_store %arg17[%c0_57, %c0_58, %c0_59], %121 {strides = array<i32>} : memref<1x8x2xf32, #tpu.memory_space<vmem>>, vector<1x8x2xf32>,
    return
  }
  func.func @transform_0(%arg0: i32) -> (i32, i32, i32) {
    %c0_i32 = arith.constant 0 : i32
    %c0_i32_0 = arith.constant 0 : i32
    %c0_i32_1 = arith.constant 0 : i32
    return %arg0, %c0_i32, %c0_i32_0 : i32, i32, i32
  }
  func.func @transform_1(%arg0: i32) -> (i32, i32, i32) {
    %c0_i32 = arith.constant 0 : i32
    %c0_i32_0 = arith.constant 0 : i32
    %c0_i32_1 = arith.constant 0 : i32
    return %arg0, %c0_i32, %c0_i32_0 : i32, i32, i32
  }
  func.func @transform_2(%arg0: i32) -> (i32, i32, i32) {
    %c0_i32 = arith.constant 0 : i32
    %c0_i32_0 = arith.constant 0 : i32
    %c0_i32_1 = arith.constant 0 : i32
    return %arg0, %c0_i32, %c0_i32_0 : i32, i32, i32
  }
  func.func @transform_3(%arg0: i32) -> (i32, i32) {
    %c0_i32 = arith.constant 0 : i32
    %c0_i32_0 = arith.constant 0 : i32
    %c0_i32_1 = arith.constant 0 : i32
    return %c0_i32, %c0_i32_0 : i32, i32
  }
  func.func @transform_4(%arg0: i32) -> (i32, i32) {
    %c0_i32 = arith.constant 0 : i32
    %c0_i32_0 = arith.constant 0 : i32
    %c0_i32_1 = arith.constant 0 : i32
    return %c0_i32, %c0_i32_0 : i32, i32
  }
  func.func @transform_5(%arg0: i32) -> (i32, i32, i32) {
    %c0_i32 = arith.constant 0 : i32
    %c0_i32_0 = arith.constant 0 : i32
    %c0_i32_1 = arith.constant 0 : i32
    %c0_i32_2 = arith.constant 0 : i32
    return %c0_i32, %c0_i32_0, %c0_i32_1 : i32, i32, i32
  }
  func.func @transform_6(%arg0: i32) -> (i32, i32) {
    %c0_i32 = arith.constant 0 : i32
    %c0_i32_0 = arith.constant 0 : i32
    %c0_i32_1 = arith.constant 0 : i32
    return %c0_i32, %c0_i32_0 : i32, i32
  }
  func.func @transform_7(%arg0: i32) -> (i32, i32) {
    %c0_i32 = arith.constant 0 : i32
    %c0_i32_0 = arith.constant 0 : i32
    %c0_i32_1 = arith.constant 0 : i32
    return %c0_i32, %c0_i32_0 : i32, i32
  }
  func.func @transform_8(%arg0: i32) -> (i32, i32, i32) {
    %c0_i32 = arith.constant 0 : i32
    %c0_i32_0 = arith.constant 0 : i32
    %c0_i32_1 = arith.constant 0 : i32
    %c0_i32_2 = arith.constant 0 : i32
    return %c0_i32, %c0_i32_0, %c0_i32_1 : i32, i32, i32
  }
  func.func @transform_9(%arg0: i32) -> (i32, i32) {
    %c0_i32 = arith.constant 0 : i32
    %c0_i32_0 = arith.constant 0 : i32
    %c0_i32_1 = arith.constant 0 : i32
    return %c0_i32, %c0_i32_0 : i32, i32
  }
  func.func @transform_10(%arg0: i32) -> (i32, i32) {
    %c0_i32 = arith.constant 0 : i32
    %c0_i32_0 = arith.constant 0 : i32
    %c0_i32_1 = arith.constant 0 : i32
    return %c0_i32, %c0_i32_0 : i32, i32
  }
  func.func @transform_11(%arg0: i32) -> (i32, i32) {
    %c0_i32 = arith.constant 0 : i32
    %c0_i32_0 = arith.constant 0 : i32
    %c0_i32_1 = arith.constant 0 : i32
    return %c0_i32, %c0_i32_0 : i32, i32
  }
  func.func @transform_12(%arg0: i32) -> (i32, i32) {
    %c0_i32 = arith.constant 0 : i32
    %c0_i32_0 = arith.constant 0 : i32
    %c0_i32_1 = arith.constant 0 : i32
    return %c0_i32, %c0_i32_0 : i32, i32
  }
  func.func @transform_13(%arg0: i32) -> (i32, i32) {
    %c0_i32 = arith.constant 0 : i32
    %c0_i32_0 = arith.constant 0 : i32
    %c0_i32_1 = arith.constant 0 : i32
    return %c0_i32, %c0_i32_0 : i32, i32
  }
  func.func @transform_14(%arg0: i32) -> (i32, i32) {
    %c0_i32 = arith.constant 0 : i32
    %c0_i32_0 = arith.constant 0 : i32
    %c0_i32_1 = arith.constant 0 : i32
    return %c0_i32, %c0_i32_0 : i32, i32
  }
  func.func @transform_15(%arg0: i32) -> (i32, i32, i32) {
    %c0_i32 = arith.constant 0 : i32
    %c0_i32_0 = arith.constant 0 : i32
    %c0_i32_1 = arith.constant 0 : i32
    return %arg0, %c0_i32, %c0_i32_0 : i32, i32, i32
  }
  func.func @transform_16(%arg0: i32) -> (i32, i32, i32) {
    %c0_i32 = arith.constant 0 : i32
    %c0_i32_0 = arith.constant 0 : i32
    %c0_i32_1 = arith.constant 0 : i32
    return %arg0, %c0_i32, %c0_i32_0 : i32, i32, i32
  }
}

</mosaic_0001>

<llo_original>
// kernel: _lambda_.6
$region0: #{_lambda_.6}
  #allocation0 [shape = 'u32[]', space=smem, size = 0x4, offset = 0x4, fixed_abs, tag = 'smem constant byte address 0x4 - core index']
  #allocation1 [shape = 'u32[144,128]{1,0:T(1,128)}', space=vmem, size = 0x12000, scoped, tag = 'internal scratch']
  #allocation2 [shape = 'f32[16,256]{1,0:T(8,128)}', space=vmem, size = 0x4000, scoped, tag = 'scratch operand']
  %s0 = inlined_call_operand.vmem [shape: bf16[16,32], index: 0, kind: input, shape index: {}]
  %s1 = inlined_call_operand.vmem [shape: bf16[32,256], index: 1, kind: input, shape index: {}]
  %s2 = inlined_call_operand.vmem [shape: f32[1,256], index: 2, kind: input, shape index: {}]
  %s3 = inlined_call_operand.vmem [shape: bf16[16,256], index: 3, kind: output, shape index: {}]
  %s4 = sld [smem:[#allocation0]]
  $region30: #{_lambda_.6} parent=0
    _
  %s6 = ssub.s32 1, %s4
  %s7 = scalar_select 0, %s6, %s4
  // Predicated region
  $region2: #{_lambda_.6} parent=0 // pred_check
    _
  $region3: #{_lambda_.6} parent=0 // pred_check_branch
    %9 = sbr.rel (0) target = $region5
  $region4: #{_lambda_.6} parent=0 // pred_region
    _
  $region5: #{_lambda_.6} parent=0 // pred_fallthru
    _
  // Predicated region
  $region6: #{_lambda_.6} parent=0 // pred_check
    _
  $region7: #{_lambda_.6} parent=0 // pred_check_branch
    %11 = sbr.rel (0) target = $region9
  $region8: #{_lambda_.6} parent=0 // pred_region
    _
  $region9: #{_lambda_.6} parent=0 // pred_fallthru
    _
  // Predicated region
  $region10: #{_lambda_.6} parent=0 // pred_check
    _
  $region11: #{_lambda_.6} parent=0 // pred_check_branch
    %13 = sbr.rel (0) target = $region13
  $region12: #{_lambda_.6} parent=0 // pred_region
    _
  $region13: #{_lambda_.6} parent=0 // pred_fallthru
    _
  %p15 = scmp.eq.s32.totalorder 0, 0
  // Predicated region
  $region14: #{_lambda_.6} parent=0 // pred_check
    %p16 = pneg %p15
  $region15: #{_lambda_.6} parent=0 // pred_check_branch
    %18 = sbr.rel (%p16) target = $region17
  $region16: #{_lambda_.6} parent=0 // pred_region
    %19 = vst [vmem:[#allocation2] sm:$0xff] 0.0
    %20 = vst [vmem:[#allocation2 + $0x8] sm:$0xff] 0.0
    %21 = vst [vmem:[#allocation2 + $0x10] sm:$0xff] 0.0
    %22 = vst [vmem:[#allocation2 + $0x18] sm:$0xff] 0.0
  $region17: #{_lambda_.6} parent=0 // pred_fallthru
    _
  %v23 = vld [vmem:[#allocation2] sm:$0xff]
  %v24 = vld [vmem:[#allocation2 + $0x8] sm:$0xff]
  %v25 = vld [vmem:[#allocation2 + $0x10] sm:$0xff]
  %v26 = vld [vmem:[#allocation2 + $0x18] sm:$0xff]
  %v27 = vld [vmem:[%s0] sm:$0xf]
  %v28 = vld [vmem:[%s0 + $0x4] sm:$0xf]
  %v29 = vld [vmem:[%s1] sm:$0xff]
  %v30 = vld [vmem:[%s1 + $0x8] sm:$0xff]
  %v31 = vld [vmem:[%s1 + $0x10] sm:$0xff]
  %v32 = vld [vmem:[%s1 + $0x18] sm:$0xff]
  %v35 = vunpack.c.l.b16 %v27
  %v36 = vunpack.c.l.b16 %v28
  %v37 = vpack.c.b16 %v36, %v35
  %v42 = vunpack.c.l.b16 %v29
  %v43 = vunpack.c.h.b16 %v29
  %v44 = vunpack.c.l.b16 %v30
  %v45 = vunpack.c.h.b16 %v30
  %v46 = vunpack.c.l.b16 %v31
  %v47 = vunpack.c.h.b16 %v31
  %v48 = vunpack.c.l.b16 %v32
  %v49 = vunpack.c.h.b16 %v32
  %v50 = vpack.c.b16 %v44, %v42
  %v51 = vpack.c.b16 %v45, %v43
  %v52 = vpack.c.b16 %v48, %v46
  %v53 = vpack.c.b16 %v49, %v47
  %vm58 = vcmask 261120
  %v60 = vsel %vm58, %v37, 0
  %62 = vmatprep.subr.bf16.mxu0 %v51
  %63 = vmatpush1.bf16.msra.mxu0 %v50
  %64 = vmatprep.subr.bf16.mxu0 %v53
  %65 = vmatpush1.bf16.msra.mxu0 %v52
  %66 = vmatprep.subr.bf16.mxu0 0
  %67 = vmatpush1.bf16.msra.mxu0 0
  %68 = vmatprep.subr.bf16.mxu0 0
  %69 = vmatpush1.bf16.msra.mxu0 0
  %70 = vmatprep.subr.bf16.mxu0 0
  %71 = vmatpush1.bf16.msra.mxu0 0
  %72 = vmatprep.subr.bf16.mxu0 0
  %73 = vmatpush1.bf16.msra.mxu0 0
  %74 = vmatprep.subr.bf16.mxu0 0
  %75 = vmatpush1.bf16.msra.mxu0 0
  %76 = vmatprep.subr.bf16.mxu0 0
  %77 = vmatpush1.bf16.msra.mxu0 0
  %78 = vmatprep.subr.bf16.mxu0 0
  %79 = vmatpush1.bf16.msra.mxu0 0
  %80 = vmatprep.subr.bf16.mxu0 0
  %81 = vmatpush1.bf16.msra.mxu0 0
  %82 = vmatprep.subr.bf16.mxu0 0
  %83 = vmatpush1.bf16.msra.mxu0 0
  %84 = vmatprep.subr.bf16.mxu0 0
  %85 = vmatpush1.bf16.msra.mxu0 0
  %86 = vmatprep.subr.bf16.mxu0 0
  %87 = vmatpush1.bf16.msra.mxu0 0
  %88 = vmatprep.subr.bf16.mxu0 0
  %89 = vmatpush1.bf16.msra.mxu0 0
  %90 = vmatprep.subr.bf16.mxu0 0
  %91 = vmatpush1.bf16.msra.mxu0 0
  %92 = vmatprep.subr.bf16.mxu0 0
  %93 = vmatpush1.bf16.msra.mxu0 0
  %94 = vmatprep.mubr.bf16.mxu0 0
  %95 = vmatmul.mubr.bf16.gmra.mrb[0].mxu0 %v60
  %v96 = vpop.f32.mrb[0].mxu0
  %v97 = vadd.f32 0.0, %v96
  %v98 = vpop.f32.mrb[0].mxu0
  %v99 = vadd.f32 0.0, %v98
  %v100 = vpop.f32.mrb[0].mxu0
  %v101 = vadd.f32 0.0, %v100
  %v102 = vpop.f32.mrb[0].mxu0
  %v103 = vadd.f32 0.0, %v102
  %104 = vdwg.mxu0
  %v105 = vadd.f32 %v23, %v97
  %v106 = vadd.f32 %v24, %v99
  %v107 = vadd.f32 %v25, %v101
  %v108 = vadd.f32 %v26, %v103
  %109 = vst [vmem:[#allocation2] sm:$0xff] %v105
  %110 = vst [vmem:[#allocation2 + $0x8] sm:$0xff] %v106
  %111 = vst [vmem:[#allocation2 + $0x10] sm:$0xff] %v107
  %112 = vst [vmem:[#allocation2 + $0x18] sm:$0xff] %v108
  // Predicated region
  $region18: #{_lambda_.6} parent=0 // pred_check
    %p113 = pneg %p15
  $region19: #{_lambda_.6} parent=0 // pred_check_branch
    %115 = sbr.rel (%p113) target = $region21
  $region20: #{_lambda_.6} parent=0 // pred_region
    %v116 = vld [vmem:[#allocation2] sm:$0xff]
    %v117 = vld [vmem:[#allocation2 + $0x8] sm:$0xff]
    %v118 = vld [vmem:[#allocation2 + $0x10] sm:$0xff]
    %v119 = vld [vmem:[#allocation2 + $0x18] sm:$0xff]
    %v120 = vld [vmem:[%s2] sm:$0x3]
    %v122 = vlaneseq
    %v123 = vshrl.u32 %v122, 7
    %v124 = vsub.s32 0, %v123
    %v125 = vrot.slane %v120, %v124
    %v126 = vlaneseq
    %v127 = vshrl.u32 %v126, 7
    %v128 = vsub.s32 1, %v127
    %v129 = vrot.slane %v120, %v128
    %v132 = vadd.f32 %v116, %v125
    %v133 = vadd.f32 %v117, %v129
    %v134 = vadd.f32 %v118, %v125
    %v135 = vadd.f32 %v119, %v129
    %v136 = vpack.c.bf16 %v134, %v132
    %v137 = vpack.c.bf16 %v135, %v133
    %v140 = vunpack.c.l.b16 %v136
    %v141 = vunpack.c.l.b16 %v137
    %v142 = vunpack.c.h.b16 %v136
    %v143 = vunpack.c.h.b16 %v137
    %v144 = vpack.c.b16 %v141, %v140
    %v145 = vpack.c.b16 %v143, %v142
    %148 = vst [vmem:[%s3] sm:$0xff] %v144
    %149 = vst [vmem:[%s3 + $0x8] sm:$0xff] %v145
  $region21: #{_lambda_.6} parent=0 // pred_fallthru
    _
  // Predicated region
  $region22: #{_lambda_.6} parent=0 // pred_check
    _
  $region23: #{_lambda_.6} parent=0 // pred_check_branch
    %151 = sbr.rel (0) target = $region25
  $region24: #{_lambda_.6} parent=0 // pred_region
    _
  $region25: #{_lambda_.6} parent=0 // pred_fallthru
    _
  // Predicated region
  $region26: #{_lambda_.6} parent=0 // pred_check
    _
  $region27: #{_lambda_.6} parent=0 // pred_check_branch
    %153 = sbr.rel (0) target = $region29
  $region28: #{_lambda_.6} parent=0 // pred_region
    _
  $region29: #{_lambda_.6} parent=0 // pred_fallthru
    _

// kernel: _lambda_.5
$region0: #{_lambda_.5}
  #allocation0 [shape = 'u32[]', space=smem, size = 0x4, offset = 0x4, fixed_abs, tag = 'smem constant byte address 0x4 - core index']
  #allocation1 [shape = 'u32[144,128]{1,0:T(1,128)}', space=vmem, size = 0x12000, scoped, tag = 'internal scratch']
  %s0 = inlined_call_operand.vmem [shape: f32[2,8,32], index: 0, kind: input, shape index: {}]
  %s1 = inlined_call_operand.vmem [shape: bf16[32,96], index: 1, kind: input, shape index: {}]
  %s2 = inlined_call_operand.vmem [shape: f32[1,96], index: 2, kind: input, shape index: {}]
  %s3 = inlined_call_operand.vmem [shape: bf16[32,32], index: 3, kind: input, shape index: {}]
  %s4 = inlined_call_operand.vmem [shape: f32[1,32], index: 4, kind: input, shape index: {}]
  %s5 = inlined_call_operand.vmem [shape: f32[1,32], index: 5, kind: input, shape index: {}]
  %s6 = inlined_call_operand.vmem [shape: f32[1,32], index: 6, kind: input, shape index: {}]
  %s7 = inlined_call_operand.vmem [shape: f32[2,8,32], index: 7, kind: output, shape index: {}]
  %s8 = sld [smem:[#allocation0]]
  $region61: #{_lambda_.5} parent=0
    _
  %s10 = ssub.s32 1, %s8
  %s11 = scalar_select 0, %s10, %s8
  loop: start=0, step=1, limit=4
  $region2: #{_lambda_.5} parent=0 // loop_pre_header
    _
  $region3: #{_lambda_.5} parent=0 // loop_header
    %s13 = sphi 0, %s17
    %p14 = scmp.ge.s32.totalorder %s13, 4
    %s23 = sphi 0, %s25
    %s26 = sphi 0, %s23
    %s27 = sphi 0, %s26
    %s43 = sphi 0, %s27
    %s47 = sphi 0, %s47
    %s49 = sphi 0, %s47
    %s50 = sphi 0, %s49
    %s64 = sphi 0, %s50
    %s68 = sphi 0, %s68
    %s70 = sphi 0, %s68
    %s71 = sphi 0, %s70
    %s85 = sphi 0, %s71
    %s89 = sphi 0, %s89
    %s91 = sphi 0, %s89
    %s92 = sphi 0, %s91
    %s106 = sphi 0, %s92
    %s110 = sphi 0, %s110
    %s112 = sphi 0, %s110
    %s113 = sphi 0, %s112
    %s127 = sphi 0, %s113
    %s131 = sphi 0, %s131
    %s133 = sphi 0, %s131
    %s134 = sphi 0, %s133
    %s148 = sphi 0, %s134
    %s152 = sphi 0, %s152
    %s154 = sphi 0, %s152
    %s155 = sphi 0, %s154
    %s169 = sphi 0, %s155
    %s175 = sphi 0, %s177
    %s178 = sphi 0, %s175
    %s179 = sphi 0, %s178
    %s195 = sphi 0, %s179
  $region4: #{_lambda_.5} parent=0 // loop_header_branch
    %16 = sbr.rel (%p14) target = $region8
  $region5: #{_lambda_.5} parent=0 // loop_body
    %s18 = ssub.s32 %s13, 1
    %s19 = ssub.s32 %s13, 2
    %s20 = sadd.s32 %s13, 1
    %s21 = ssub.s32 %s13, %s20
    %p22 = scmp.eq.s32.totalorder %s21, 0
    %s24 = sadd.s32 %s23, 1
    %s25 = scalar_select %p22, %s23, %s24
    %p28 = pneg %p22
    %p29 = scmp.eq.s32.totalorder %s13, 1
    %p30 = por %p28, %p29
    %p31 = scmp.ne.s32.totalorder %s23, %s26
    %p32 = scmp.eq.s32.totalorder %s13, 0
    %p33 = por %p31, %p32
    %p34 = scmp.ne.s32.totalorder %s23, %s26
    %p35 = scmp.eq.s32.totalorder %s18, 1
    %p36 = por %p34, %p35
    %p37 = scmp.ne.s32.totalorder %s26, %s27
    %p38 = scmp.eq.s32.totalorder %s18, 0
    %p39 = por %p37, %p38
    %p40 = scmp.ne.s32.totalorder %s26, %s27
    %p41 = scmp.eq.s32.totalorder %s19, 1
    %p42 = por %p40, %p41
    %p44 = scmp.ne.s32.totalorder %s27, %s43
    %p45 = scmp.eq.s32.totalorder %s19, 0
    %p46 = por %p44, %p45
    %s48 = sadd.s32 %s47, 1
    %p51 = scmp.eq.s32.totalorder %s13, 1
    %p52 = scmp.ne.s32.totalorder %s47, %s49
    %p53 = scmp.eq.s32.totalorder %s13, 0
    %p54 = por %p52, %p53
    %p55 = scmp.ne.s32.totalorder %s47, %s49
    %p56 = scmp.eq.s32.totalorder %s18, 1
    %p57 = por %p55, %p56
    %p58 = scmp.ne.s32.totalorder %s49, %s50
    %p59 = scmp.eq.s32.totalorder %s18, 0
    %p60 = por %p58, %p59
    %p61 = scmp.ne.s32.totalorder %s49, %s50
    %p62 = scmp.eq.s32.totalorder %s19, 1
    %p63 = por %p61, %p62
    %p65 = scmp.ne.s32.totalorder %s50, %s64
    %p66 = scmp.eq.s32.totalorder %s19, 0
    %p67 = por %p65, %p66
    %s69 = sadd.s32 %s68, 1
    %p72 = scmp.eq.s32.totalorder %s13, 1
    %p73 = scmp.ne.s32.totalorder %s68, %s70
    %p74 = scmp.eq.s32.totalorder %s13, 0
    %p75 = por %p73, %p74
    %p76 = scmp.ne.s32.totalorder %s68, %s70
    %p77 = scmp.eq.s32.totalorder %s18, 1
    %p78 = por %p76, %p77
    %p79 = scmp.ne.s32.totalorder %s70, %s71
    %p80 = scmp.eq.s32.totalorder %s18, 0
    %p81 = por %p79, %p80
    %p82 = scmp.ne.s32.totalorder %s70, %s71
    %p83 = scmp.eq.s32.totalorder %s19, 1
    %p84 = por %p82, %p83
    %p86 = scmp.ne.s32.totalorder %s71, %s85
    %p87 = scmp.eq.s32.totalorder %s19, 0
    %p88 = por %p86, %p87
    %s90 = sadd.s32 %s89, 1
    %p93 = scmp.eq.s32.totalorder %s13, 1
    %p94 = scmp.ne.s32.totalorder %s89, %s91
    %p95 = scmp.eq.s32.totalorder %s13, 0
    %p96 = por %p94, %p95
    %p97 = scmp.ne.s32.totalorder %s89, %s91
    %p98 = scmp.eq.s32.totalorder %s18, 1
    %p99 = por %p97, %p98
    %p100 = scmp.ne.s32.totalorder %s91, %s92
    %p101 = scmp.eq.s32.totalorder %s18, 0
    %p102 = por %p100, %p101
    %p103 = scmp.ne.s32.totalorder %s91, %s92
    %p104 = scmp.eq.s32.totalorder %s19, 1
    %p105 = por %p103, %p104
    %p107 = scmp.ne.s32.totalorder %s92, %s106
    %p108 = scmp.eq.s32.totalorder %s19, 0
    %p109 = por %p107, %p108
    %s111 = sadd.s32 %s110, 1
    %p114 = scmp.eq.s32.totalorder %s13, 1
    %p115 = scmp.ne.s32.totalorder %s110, %s112
    %p116 = scmp.eq.s32.totalorder %s13, 0
    %p117 = por %p115, %p116
    %p118 = scmp.ne.s32.totalorder %s110, %s112
    %p119 = scmp.eq.s32.totalorder %s18, 1
    %p120 = por %p118, %p119
    %p121 = scmp.ne.s32.totalorder %s112, %s113
    %p122 = scmp.eq.s32.totalorder %s18, 0
    %p123 = por %p121, %p122
    %p124 = scmp.ne.s32.totalorder %s112, %s113
    %p125 = scmp.eq.s32.totalorder %s19, 1
    %p126 = por %p124, %p125
    %p128 = scmp.ne.s32.totalorder %s113, %s127
    %p129 = scmp.eq.s32.totalorder %s19, 0
    %p130 = por %p128, %p129
    %s132 = sadd.s32 %s131, 1
    %p135 = scmp.eq.s32.totalorder %s13, 1
    %p136 = scmp.ne.s32.totalorder %s131, %s133
    %p137 = scmp.eq.s32.totalorder %s13, 0
    %p138 = por %p136, %p137
    %p139 = scmp.ne.s32.totalorder %s131, %s133
    %p140 = scmp.eq.s32.totalorder %s18, 1
    %p141 = por %p139, %p140
    %p142 = scmp.ne.s32.totalorder %s133, %s134
    %p143 = scmp.eq.s32.totalorder %s18, 0
    %p144 = por %p142, %p143
    %p145 = scmp.ne.s32.totalorder %s133, %s134
    %p146 = scmp.eq.s32.totalorder %s19, 1
    %p147 = por %p145, %p146
    %p149 = scmp.ne.s32.totalorder %s134, %s148
    %p150 = scmp.eq.s32.totalorder %s19, 0
    %p151 = por %p149, %p150
    %s153 = sadd.s32 %s152, 1
    %p156 = scmp.eq.s32.totalorder %s13, 1
    %p157 = scmp.ne.s32.totalorder %s152, %s154
    %p158 = scmp.eq.s32.totalorder %s13, 0
    %p159 = por %p157, %p158
    %p160 = scmp.ne.s32.totalorder %s152, %s154
    %p161 = scmp.eq.s32.totalorder %s18, 1
    %p162 = por %p160, %p161
    %p163 = scmp.ne.s32.totalorder %s154, %s155
    %p164 = scmp.eq.s32.totalorder %s18, 0
    %p165 = por %p163, %p164
    %p166 = scmp.ne.s32.totalorder %s154, %s155
    %p167 = scmp.eq.s32.totalorder %s19, 1
    %p168 = por %p166, %p167
    %p170 = scmp.ne.s32.totalorder %s155, %s169
    %p171 = scmp.eq.s32.totalorder %s19, 0
    %p172 = por %p170, %p171
    %s173 = ssub.s32 %s13, %s20
    %p174 = scmp.eq.s32.totalorder %s173, 0
    %s176 = sadd.s32 %s175, 1
    %s177 = scalar_select %p174, %s175, %s176
    %p180 = pneg %p174
    %p181 = scmp.eq.s32.totalorder %s13, 1
    %p182 = por %p180, %p181
    %p183 = scmp.ne.s32.totalorder %s175, %s178
    %p184 = scmp.eq.s32.totalorder %s13, 0
    %p185 = por %p183, %p184
    %p186 = scmp.ne.s32.totalorder %s175, %s178
    %p187 = scmp.eq.s32.totalorder %s18, 1
    %p188 = por %p186, %p187
    %p189 = scmp.ne.s32.totalorder %s178, %s179
    %p190 = scmp.eq.s32.totalorder %s18, 0
    %p191 = por %p189, %p190
    %p192 = scmp.ne.s32.totalorder %s178, %s179
    %p193 = scmp.eq.s32.totalorder %s19, 1
    %p194 = por %p192, %p193
    %p196 = scmp.ne.s32.totalorder %s179, %s195
    %p197 = scmp.eq.s32.totalorder %s19, 0
    %p198 = por %p196, %p197
    %p199 = scmp.le.s32.totalorder 1, %s13
    %p200 = scmp.lt.s32.totalorder %s13, 3
    %p201 = pnand %p199, %p200
    %p202 = pneg %p201
    // Predicated region
    $region9: #{_lambda_.5} parent=5 // pred_check
      _
    $region10: #{_lambda_.5} parent=5 // pred_check_branch
      %204 = sbr.rel (%p201) target = $region12
    $region11: #{_lambda_.5} parent=5 // pred_region
      %s205 = ssub.s32 %s13, 1
      // Predicated region
      $region13: #{_lambda_.5} parent=11 // pred_check
        %p206 = pneg %p60
      $region14: #{_lambda_.5} parent=11 // pred_check_branch
        %208 = sbr.rel (%p206) target = $region16
      $region15: #{_lambda_.5} parent=11 // pred_region
        _
      $region16: #{_lambda_.5} parent=11 // pred_fallthru
        _
      // Predicated region
      $region17: #{_lambda_.5} parent=11 // pred_check
        %p209 = pneg %p81
      $region18: #{_lambda_.5} parent=11 // pred_check_branch
        %211 = sbr.rel (%p209) target = $region20
      $region19: #{_lambda_.5} parent=11 // pred_region
        _
      $region20: #{_lambda_.5} parent=11 // pred_fallthru
        _
      // Predicated region
      $region21: #{_lambda_.5} parent=11 // pred_check
        %p212 = pneg %p102
      $region22: #{_lambda_.5} parent=11 // pred_check_branch
        %214 = sbr.rel (%p212) target = $region24
      $region23: #{_lambda_.5} parent=11 // pred_region
        _
      $region24: #{_lambda_.5} parent=11 // pred_fallthru
        _
      // Predicated region
      $region25: #{_lambda_.5} parent=11 // pred_check
        %p215 = pneg %p123
      $region26: #{_lambda_.5} parent=11 // pred_check_branch
        %217 = sbr.rel (%p215) target = $region28
      $region27: #{_lambda_.5} parent=11 // pred_region
        _
      $region28: #{_lambda_.5} parent=11 // pred_fallthru
        _
      // Predicated region
      $region29: #{_lambda_.5} parent=11 // pred_check
        %p218 = pneg %p144
      $region30: #{_lambda_.5} parent=11 // pred_check_branch
        %220 = sbr.rel (%p218) target = $region32
      $region31: #{_lambda_.5} parent=11 // pred_region
        _
      $region32: #{_lambda_.5} parent=11 // pred_fallthru
        _
      // Predicated region
      $region33: #{_lambda_.5} parent=11 // pred_check
        %p221 = pneg %p165
      $region34: #{_lambda_.5} parent=11 // pred_check_branch
        %223 = sbr.rel (%p221) target = $region36
      $region35: #{_lambda_.5} parent=11 // pred_region
        _
      $region36: #{_lambda_.5} parent=11 // pred_fallthru
        _
    $region12: #{_lambda_.5} parent=5 // pred_fallthru
      _
    %p224 = scmp.lt.s32.totalorder %s13, 2
    // Predicated region
    $region37: #{_lambda_.5} parent=5 // pred_check
      %p225 = pneg %p224
    $region38: #{_lambda_.5} parent=5 // pred_check_branch
      %227 = sbr.rel (%p225) target = $region40
    $region39: #{_lambda_.5} parent=5 // pred_region
      // Predicated region
      $region41: #{_lambda_.5} parent=39 // pred_check
        %p228 = pneg %p33
      $region42: #{_lambda_.5} parent=39 // pred_check_branch
        %230 = sbr.rel (%p228) target = $region44
      $region43: #{_lambda_.5} parent=39 // pred_region
        %p231 = scmp.lt.s32.totalorder %s13, 1
        %s232 = scalar_select %p231, %s13, 1
        %s233 = smul.addr %s232, 8
        %s234 = scalar_lea.vmem %s0, %s233
      $region44: #{_lambda_.5} parent=39 // pred_fallthru
        _
    $region40: #{_lambda_.5} parent=5 // pred_fallthru
      _
    %p235 = scmp.le.s32.totalorder 1, %s13
    %p236 = scmp.lt.s32.totalorder %s13, 3
    %p237 = pnand %p235, %p236
    %p238 = pneg %p237
    // Predicated region
    $region45: #{_lambda_.5} parent=5 // pred_check
      _
    $region46: #{_lambda_.5} parent=5 // pred_check_branch
      %240 = sbr.rel (%p237) target = $region48
    $region47: #{_lambda_.5} parent=5 // pred_region
      %s241 = ssub.s32 %s13, 1
      %p242 = scmp.lt.s32.totalorder %s18, 1
      %s243 = scalar_select %p242, %s18, 1
      %s244 = smul.addr %s243, 8
      %s245 = scalar_lea.vmem %s0, %s244
      %p246 = pneg %p39
      %p247 = pneg %p36
      %p248 = pneg %p60
      %p249 = pneg %p57
      %p250 = pneg %p81
      %p251 = pneg %p78
      %p252 = pneg %p102
      %p253 = pneg %p99
      %p254 = pneg %p123
      %p255 = pneg %p120
      %p256 = pneg %p144
      %p257 = pneg %p141
      %p258 = pneg %p165
      %p259 = pneg %p162
      %p260 = pneg %p191
      %p261 = pneg %p188
      %p262 = scmp.lt.s32.totalorder %s18, 1
      %s263 = scalar_select %p262, %s18, 1
      %s264 = smul.addr %s263, 8
      %s265 = scalar_lea.vmem %s7, %s264
      %p266 = scmp.lt.s32.totalorder %s18, 1
      %s267 = scalar_select %p266, %s18, 1
      %s268 = smul.addr %s267, 8
      %s269 = scalar_lea.vmem %s0, %s268
      %p270 = scmp.lt.s32.totalorder %s18, 1
      %s271 = scalar_select %p270, %s18, 1
      %s272 = smul.addr %s271, 8
      %s273 = scalar_lea.vmem %s7, %s272
      %v275 = vld [vmem:[%s269] sm:$0xff]
      %v276 = vpack.c.bf16 %v275, %v275
      %v277 = vld [vmem:[%s1] sm:$0xf]
      %v278 = vld [vmem:[%s1 + $0x4] sm:$0xf]
      %v279 = vld [vmem:[%s1 + $0x8] sm:$0xf]
      %v280 = vld [vmem:[%s1 + $0xc] sm:$0xf]
      %v281 = vld [vmem:[%s2] sm:$0x1]
      %v283 = vlaneseq
      %v284 = vshrl.u32 %v283, 7
      %v285 = vsub.s32 0, %v284
      %v286 = vrot.slane %v281, %v285
      %v292 = vunpack.c.l.b16 %v277
      %v293 = vunpack.c.l.b16 %v278
      %v294 = vunpack.c.l.b16 %v279
      %v295 = vunpack.c.l.b16 %v280
      %v296 = vpack.c.b16 %v293, %v292
      %v297 = vpack.c.b16 %v295, %v294
      %vm300 = vcmask 261120
      %v302 = vsel %vm300, %v276, 0
      %304 = vmatprep.subr.bf16.mxu0 0
      %305 = vmatpush1.bf16.msra.mxu0 %v296
      %306 = vmatprep.subr.bf16.mxu0 0
      %307 = vmatpush1.bf16.msra.mxu0 %v297
      %308 = vmatprep.subr.bf16.mxu0 0
      %309 = vmatpush1.bf16.msra.mxu0 0
      %310 = vmatprep.subr.bf16.mxu0 0
      %311 = vmatpush1.bf16.msra.mxu0 0
      %312 = vmatprep.subr.bf16.mxu0 0
      %313 = vmatpush1.bf16.msra.mxu0 0
      %314 = vmatprep.subr.bf16.mxu0 0
      %315 = vmatpush1.bf16.msra.mxu0 0
      %316 = vmatprep.subr.bf16.mxu0 0
      %317 = vmatpush1.bf16.msra.mxu0 0
      %318 = vmatprep.subr.bf16.mxu0 0
      %319 = vmatpush1.bf16.msra.mxu0 0
      %320 = vmatprep.subr.bf16.mxu0 0
      %321 = vmatpush1.bf16.msra.mxu0 0
      %322 = vmatprep.subr.bf16.mxu0 0
      %323 = vmatpush1.bf16.msra.mxu0 0
      %324 = vmatprep.subr.bf16.mxu0 0
      %325 = vmatpush1.bf16.msra.mxu0 0
      %326 = vmatprep.subr.bf16.mxu0 0
      %327 = vmatpush1.bf16.msra.mxu0 0
      %328 = vmatprep.subr.bf16.mxu0 0
      %329 = vmatpush1.bf16.msra.mxu0 0
      %330 = vmatprep.subr.bf16.mxu0 0
      %331 = vmatpush1.bf16.msra.mxu0 0
      %332 = vmatprep.subr.bf16.mxu0 0
      %333 = vmatpush1.bf16.msra.mxu0 0
      %334 = vmatprep.subr.bf16.mxu0 0
      %335 = vmatpush1.bf16.msra.mxu0 0
      %336 = vmatprep.mubr.bf16.mxu0 0
      %337 = vmatmul.mubr.bf16.gmra.mrb[0].mxu0 %v302
      %v338 = vpop.f32.mrb[0].mxu0
      %v339 = vadd.f32 %v286, %v338
      %v340 = vpop.f32.mrb[0].mxu0
      %v341 = vpop.f32.mrb[0].mxu0
      %v342 = vpop.f32.mrb[0].mxu0
      %343 = vdwg.mxu0
      %v344 = vmul.f32 %v339, 0.35355338
      %v345 = vpack.c.bf16 %v344, %v344
      %v346 = vpack.c.bf16 %v339, %v339
      %348 = vrot.lane.b32.xlu0 %v346, 96
      %v349 = vpop.permute.xlu0 %348
      %vm350 = vcmask 64512
      %v352 = vsel %vm350, %v345, 0
      %v355 = vsel %vm350, %v349, 0
      %357 = vmatprep.subr.bf16.mxu0 0
      %358 = vmatpush1.bf16.xpose.msra.mxu0 %v355
      %359 = vmatprep.subr.bf16.mxu0 0
      %360 = vmatpush1.bf16.xpose.msra.mxu0 0
      %361 = vmatprep.subr.bf16.mxu0 0
      %362 = vmatpush1.bf16.xpose.msra.mxu0 0
      %363 = vmatprep.subr.bf16.mxu0 0
      %364 = vmatpush1.bf16.xpose.msra.mxu0 0
      %365 = vmatprep.subr.bf16.mxu0 0
      %366 = vmatpush1.bf16.xpose.msra.mxu0 0
      %367 = vmatprep.subr.bf16.mxu0 0
      %368 = vmatpush1.bf16.xpose.msra.mxu0 0
      %369 = vmatprep.subr.bf16.mxu0 0
      %370 = vmatpush1.bf16.xpose.msra.mxu0 0
      %371 = vmatprep.subr.bf16.mxu0 0
      %372 = vmatpush1.bf16.xpose.msra.mxu0 0
      %373 = vmatprep.subr.bf16.mxu0 0
      %374 = vmatpush1.bf16.xpose.msra.mxu0 0
      %375 = vmatprep.subr.bf16.mxu0 0
      %376 = vmatpush1.bf16.xpose.msra.mxu0 0
      %377 = vmatprep.subr.bf16.mxu0 0
      %378 = vmatpush1.bf16.xpose.msra.mxu0 0
      %379 = vmatprep.subr.bf16.mxu0 0
      %380 = vmatpush1.bf16.xpose.msra.mxu0 0
      %381 = vmatprep.subr.bf16.mxu0 0
      %382 = vmatpush1.bf16.xpose.msra.mxu0 0
      %383 = vmatprep.subr.bf16.mxu0 0
      %384 = vmatpush1.bf16.xpose.msra.mxu0 0
      %385 = vmatprep.subr.bf16.mxu0 0
      %386 = vmatpush1.bf16.xpose.msra.mxu0 0
      %387 = vmatprep.subr.bf16.mxu0 0
      %388 = vmatpush1.bf16.xpose.msra.mxu0 0
      %389 = vmatprep.mubr.bf16.mxu0 0
      %390 = vmatmul.mubr.bf16.gmra.mrb[0].mxu0 %v352
      %v391 = vpop.f32.mrb[0].mxu0
      %v392 = vadd.f32 0.0, %v391
      %v393 = vpop.f32.mrb[0].mxu0
      %v394 = vpop.f32.mrb[0].mxu0
      %v395 = vpop.f32.mrb[0].mxu0
      %396 = vdwg.mxu0
      %v397 = vsel %vm350, %v392, -inf
      %398 = vmax.xlane.f32.xlu0 %v397
      %v399 = vpop.xlane.xlu0 %398
      %v400 = vsub.f32 %v392, %v399
      %v401 = vmul.f32 %v400, 1.442695
      %v402 = vpow.pop %v401
      %v403 = vsel %vm350, %v402, 0.0
      %404 = vadd.xlane.f32.xlu0 %v403
      %v405 = vpop.xlane.xlu0 %404
      %v406 = vrcp.pop %v405
      %v407 = vmul.f32 %v402, %v406
      %v408 = vpack.c.bf16 %v407, %v407
      %409 = vrot.lane.b32.xlu0 %v346, 64
      %v410 = vpop.permute.xlu0 %409
      %v412 = vsel %vm350, %v408, 0
      %vm414 = vcmask 1043456
      %v416 = vsel %vm414, %v410, 0
      %418 = vmatprep.subr.bf16.mxu0 0
      %419 = vmatpush1.bf16.msra.mxu0 %v416
      %420 = vmatprep.subr.bf16.mxu0 0
      %421 = vmatpush1.bf16.msra.mxu0 0
      %422 = vmatprep.subr.bf16.mxu0 0
      %423 = vmatpush1.bf16.msra.mxu0 0
      %424 = vmatprep.subr.bf16.mxu0 0
      %425 = vmatpush1.bf16.msra.mxu0 0
      %426 = vmatprep.subr.bf16.mxu0 0
      %427 = vmatpush1.bf16.msra.mxu0 0
      %428 = vmatprep.subr.bf16.mxu0 0
      %429 = vmatpush1.bf16.msra.mxu0 0
      %430 = vmatprep.subr.bf16.mxu0 0
      %431 = vmatpush1.bf16.msra.mxu0 0
      %432 = vmatprep.subr.bf16.mxu0 0
      %433 = vmatpush1.bf16.msra.mxu0 0
      %434 = vmatprep.subr.bf16.mxu0 0
      %435 = vmatpush1.bf16.msra.mxu0 0
      %436 = vmatprep.subr.bf16.mxu0 0
      %437 = vmatpush1.bf16.msra.mxu0 0
      %438 = vmatprep.subr.bf16.mxu0 0
      %439 = vmatpush1.bf16.msra.mxu0 0
      %440 = vmatprep.subr.bf16.mxu0 0
      %441 = vmatpush1.bf16.msra.mxu0 0
      %442 = vmatprep.subr.bf16.mxu0 0
      %443 = vmatpush1.bf16.msra.mxu0 0
      %444 = vmatprep.subr.bf16.mxu0 0
      %445 = vmatpush1.bf16.msra.mxu0 0
      %446 = vmatprep.subr.bf16.mxu0 0
      %447 = vmatpush1.bf16.msra.mxu0 0
      %448 = vmatprep.subr.bf16.mxu0 0
      %449 = vmatpush1.bf16.msra.mxu0 0
      %450 = vmatprep.mubr.bf16.mxu0 0
      %451 = vmatmul.mubr.bf16.gmra.mrb[0].mxu0 %v412
      %v452 = vpop.f32.mrb[0].mxu0
      %v453 = vadd.f32 0.0, %v452
      %v454 = vpop.f32.mrb[0].mxu0
      %v455 = vpop.f32.mrb[0].mxu0
      %v456 = vpop.f32.mrb[0].mxu0
      %457 = vdwg.mxu0
      %459 = vrot.lane.b32.xlu0 %v345, 120
      %v460 = vpop.permute.xlu0 %459
      %461 = vrot.lane.b32.xlu0 %v346, 88
      %v462 = vpop.permute.xlu0 %461
      %v464 = vsel %vm350, %v460, 0
      %v467 = vsel %vm350, %v462, 0
      %469 = vmatprep.subr.bf16.mxu0 0
      %470 = vmatpush1.bf16.xpose.msra.mxu0 %v467
      %471 = vmatprep.subr.bf16.mxu0 0
      %472 = vmatpush1.bf16.xpose.msra.mxu0 0
      %473 = vmatprep.subr.bf16.mxu0 0
      %474 = vmatpush1.bf16.xpose.msra.mxu0 0
      %475 = vmatprep.subr.bf16.mxu0 0
      %476 = vmatpush1.bf16.xpose.msra.mxu0 0
      %477 = vmatprep.subr.bf16.mxu0 0
      %478 = vmatpush1.bf16.xpose.msra.mxu0 0
      %479 = vmatprep.subr.bf16.mxu0 0
      %480 = vmatpush1.bf16.xpose.msra.mxu0 0
      %481 = vmatprep.subr.bf16.mxu0 0
      %482 = vmatpush1.bf16.xpose.msra.mxu0 0
      %483 = vmatprep.subr.bf16.mxu0 0
      %484 = vmatpush1.bf16.xpose.msra.mxu0 0
      %485 = vmatprep.subr.bf16.mxu0 0
      %486 = vmatpush1.bf16.xpose.msra.mxu0 0
      %487 = vmatprep.subr.bf16.mxu0 0
      %488 = vmatpush1.bf16.xpose.msra.mxu0 0
      %489 = vmatprep.subr.bf16.mxu0 0
      %490 = vmatpush1.bf16.xpose.msra.mxu0 0
      %491 = vmatprep.subr.bf16.mxu0 0
      %492 = vmatpush1.bf16.xpose.msra.mxu0 0
      %493 = vmatprep.subr.bf16.mxu0 0
      %494 = vmatpush1.bf16.xpose.msra.mxu0 0
      %495 = vmatprep.subr.bf16.mxu0 0
      %496 = vmatpush1.bf16.xpose.msra.mxu0 0
      %497 = vmatprep.subr.bf16.mxu0 0
      %498 = vmatpush1.bf16.xpose.msra.mxu0 0
      %499 = vmatprep.subr.bf16.mxu0 0
      %500 = vmatpush1.bf16.xpose.msra.mxu0 0
      %501 = vmatprep.mubr.bf16.mxu0 0
      %502 = vmatmul.mubr.bf16.gmra.mrb[0].mxu0 %v464
      %v503 = vpop.f32.mrb[0].mxu0
      %v504 = vadd.f32 0.0, %v503
      %v505 = vpop.f32.mrb[0].mxu0
      %v506 = vpop.f32.mrb[0].mxu0
      %v507 = vpop.f32.mrb[0].mxu0
      %508 = vdwg.mxu0
      %v509 = vsel %vm350, %v504, -inf
      %510 = vmax.xlane.f32.xlu0 %v509
      %v511 = vpop.xlane.xlu0 %510
      %v512 = vsub.f32 %v504, %v511
      %v513 = vmul.f32 %v512, 1.442695
      %v514 = vpow.pop %v513
      %v515 = vsel %vm350, %v514, 0.0
      %516 = vadd.xlane.f32.xlu0 %v515
      %v517 = vpop.xlane.xlu0 %516
      %v518 = vrcp.pop %v517
      %v519 = vmul.f32 %v514, %v518
      %v520 = vpack.c.bf16 %v519, %v519
      %521 = vrot.lane.b32.xlu0 %v346, 56
      %v522 = vpop.permute.xlu0 %521
      %v524 = vsel %vm350, %v520, 0
      %v527 = vsel %vm414, %v522, 0
      %529 = vmatprep.subr.bf16.mxu0 0
      %530 = vmatpush1.bf16.msra.mxu0 %v527
      %531 = vmatprep.subr.bf16.mxu0 0
      %532 = vmatpush1.bf16.msra.mxu0 0
      %533 = vmatprep.subr.bf16.mxu0 0
      %534 = vmatpush1.bf16.msra.mxu0 0
      %535 = vmatprep.subr.bf16.mxu0 0
      %536 = vmatpush1.bf16.msra.mxu0 0
      %537 = vmatprep.subr.bf16.mxu0 0
      %538 = vmatpush1.bf16.msra.mxu0 0
      %539 = vmatprep.subr.bf16.mxu0 0
      %540 = vmatpush1.bf16.msra.mxu0 0
      %541 = vmatprep.subr.bf16.mxu0 0
      %542 = vmatpush1.bf16.msra.mxu0 0
      %543 = vmatprep.subr.bf16.mxu0 0
      %544 = vmatpush1.bf16.msra.mxu0 0
      %545 = vmatprep.subr.bf16.mxu0 0
      %546 = vmatpush1.bf16.msra.mxu0 0
      %547 = vmatprep.subr.bf16.mxu0 0
      %548 = vmatpush1.bf16.msra.mxu0 0
      %549 = vmatprep.subr.bf16.mxu0 0
      %550 = vmatpush1.bf16.msra.mxu0 0
      %551 = vmatprep.subr.bf16.mxu0 0
      %552 = vmatpush1.bf16.msra.mxu0 0
      %553 = vmatprep.subr.bf16.mxu0 0
      %554 = vmatpush1.bf16.msra.mxu0 0
      %555 = vmatprep.subr.bf16.mxu0 0
      %556 = vmatpush1.bf16.msra.mxu0 0
      %557 = vmatprep.subr.bf16.mxu0 0
      %558 = vmatpush1.bf16.msra.mxu0 0
      %559 = vmatprep.subr.bf16.mxu0 0
      %560 = vmatpush1.bf16.msra.mxu0 0
      %561 = vmatprep.mubr.bf16.mxu0 0
      %562 = vmatmul.mubr.bf16.gmra.mrb[0].mxu0 %v524
      %v563 = vpop.f32.mrb[0].mxu0
      %v564 = vadd.f32 0.0, %v563
      %v565 = vpop.f32.mrb[0].mxu0
      %v566 = vpop.f32.mrb[0].mxu0
      %v567 = vpop.f32.mrb[0].mxu0
      %568 = vdwg.mxu0
      %569 = vrot.lane.b32.xlu0 %v345, 112
      %v570 = vpop.permute.xlu0 %569
      %571 = vrot.lane.b32.xlu0 %v346, 80
      %v572 = vpop.permute.xlu0 %571
      %v574 = vsel %vm350, %v570, 0
      %v577 = vsel %vm350, %v572, 0
      %579 = vmatprep.subr.bf16.mxu0 0
      %580 = vmatpush1.bf16.xpose.msra.mxu0 %v577
      %581 = vmatprep.subr.bf16.mxu0 0
      %582 = vmatpush1.bf16.xpose.msra.mxu0 0
      %583 = vmatprep.subr.bf16.mxu0 0
      %584 = vmatpush1.bf16.xpose.msra.mxu0 0
      %585 = vmatprep.subr.bf16.mxu0 0
      %586 = vmatpush1.bf16.xpose.msra.mxu0 0
      %587 = vmatprep.subr.bf16.mxu0 0
      %588 = vmatpush1.bf16.xpose.msra.mxu0 0
      %589 = vmatprep.subr.bf16.mxu0 0
      %590 = vmatpush1.bf16.xpose.msra.mxu0 0
      %591 = vmatprep.subr.bf16.mxu0 0
      %592 = vmatpush1.bf16.xpose.msra.mxu0 0
      %593 = vmatprep.subr.bf16.mxu0 0
      %594 = vmatpush1.bf16.xpose.msra.mxu0 0
      %595 = vmatprep.subr.bf16.mxu0 0
      %596 = vmatpush1.bf16.xpose.msra.mxu0 0
      %597 = vmatprep.subr.bf16.mxu0 0
      %598 = vmatpush1.bf16.xpose.msra.mxu0 0
      %599 = vmatprep.subr.bf16.mxu0 0
      %600 = vmatpush1.bf16.xpose.msra.mxu0 0
      %601 = vmatprep.subr.bf16.mxu0 0
      %602 = vmatpush1.bf16.xpose.msra.mxu0 0
      %603 = vmatprep.subr.bf16.mxu0 0
      %604 = vmatpush1.bf16.xpose.msra.mxu0 0
      %605 = vmatprep.subr.bf16.mxu0 0
      %606 = vmatpush1.bf16.xpose.msra.mxu0 0
      %607 = vmatprep.subr.bf16.mxu0 0
      %608 = vmatpush1.bf16.xpose.msra.mxu0 0
      %609 = vmatprep.subr.bf16.mxu0 0
      %610 = vmatpush1.bf16.xpose.msra.mxu0 0
      %611 = vmatprep.mubr.bf16.mxu0 0
      %612 = vmatmul.mubr.bf16.gmra.mrb[0].mxu0 %v574
      %v613 = vpop.f32.mrb[0].mxu0
      %v614 = vadd.f32 0.0, %v613
      %v615 = vpop.f32.mrb[0].mxu0
      %v616 = vpop.f32.mrb[0].mxu0
      %v617 = vpop.f32.mrb[0].mxu0
      %618 = vdwg.mxu0
      %v619 = vsel %vm350, %v614, -inf
      %620 = vmax.xlane.f32.xlu0 %v619
      %v621 = vpop.xlane.xlu0 %620
      %v622 = vsub.f32 %v614, %v621
      %v623 = vmul.f32 %v622, 1.442695
      %v624 = vpow.pop %v623
      %v625 = vsel %vm350, %v624, 0.0
      %626 = vadd.xlane.f32.xlu0 %v625
      %v627 = vpop.xlane.xlu0 %626
      %v628 = vrcp.pop %v627
      %v629 = vmul.f32 %v624, %v628
      %v630 = vpack.c.bf16 %v629, %v629
      %631 = vrot.lane.b32.xlu0 %v346, 48
      %v632 = vpop.permute.xlu0 %631
      %v634 = vsel %vm350, %v630, 0
      %v637 = vsel %vm414, %v632, 0
      %639 = vmatprep.subr.bf16.mxu0 0
      %640 = vmatpush1.bf16.msra.mxu0 %v637
      %641 = vmatprep.subr.bf16.mxu0 0
      %642 = vmatpush1.bf16.msra.mxu0 0
      %643 = vmatprep.subr.bf16.mxu0 0
      %644 = vmatpush1.bf16.msra.mxu0 0
      %645 = vmatprep.subr.bf16.mxu0 0
      %646 = vmatpush1.bf16.msra.mxu0 0
      %647 = vmatprep.subr.bf16.mxu0 0
      %648 = vmatpush1.bf16.msra.mxu0 0
      %649 = vmatprep.subr.bf16.mxu0 0
      %650 = vmatpush1.bf16.msra.mxu0 0
      %651 = vmatprep.subr.bf16.mxu0 0
      %652 = vmatpush1.bf16.msra.mxu0 0
      %653 = vmatprep.subr.bf16.mxu0 0
      %654 = vmatpush1.bf16.msra.mxu0 0
      %655 = vmatprep.subr.bf16.mxu0 0
      %656 = vmatpush1.bf16.msra.mxu0 0
      %657 = vmatprep.subr.bf16.mxu0 0
      %658 = vmatpush1.bf16.msra.mxu0 0
      %659 = vmatprep.subr.bf16.mxu0 0
      %660 = vmatpush1.bf16.msra.mxu0 0
      %661 = vmatprep.subr.bf16.mxu0 0
      %662 = vmatpush1.bf16.msra.mxu0 0
      %663 = vmatprep.subr.bf16.mxu0 0
      %664 = vmatpush1.bf16.msra.mxu0 0
      %665 = vmatprep.subr.bf16.mxu0 0
      %666 = vmatpush1.bf16.msra.mxu0 0
      %667 = vmatprep.subr.bf16.mxu0 0
      %668 = vmatpush1.bf16.msra.mxu0 0
      %669 = vmatprep.subr.bf16.mxu0 0
      %670 = vmatpush1.bf16.msra.mxu0 0
      %671 = vmatprep.mubr.bf16.mxu0 0
      %672 = vmatmul.mubr.bf16.gmra.mrb[0].mxu0 %v634
      %v673 = vpop.f32.mrb[0].mxu0
      %v674 = vadd.f32 0.0, %v673
      %v675 = vpop.f32.mrb[0].mxu0
      %v676 = vpop.f32.mrb[0].mxu0
      %v677 = vpop.f32.mrb[0].mxu0
      %678 = vdwg.mxu0
      %679 = vrot.lane.b32.xlu0 %v345, 104
      %v680 = vpop.permute.xlu0 %679
      %681 = vrot.lane.b32.xlu0 %v346, 72
      %v682 = vpop.permute.xlu0 %681
      %v684 = vsel %vm350, %v680, 0
      %v687 = vsel %vm350, %v682, 0
      %689 = vmatprep.subr.bf16.mxu0 0
      %690 = vmatpush1.bf16.xpose.msra.mxu0 %v687
      %691 = vmatprep.subr.bf16.mxu0 0
      %692 = vmatpush1.bf16.xpose.msra.mxu0 0
      %693 = vmatprep.subr.bf16.mxu0 0
      %694 = vmatpush1.bf16.xpose.msra.mxu0 0
      %695 = vmatprep.subr.bf16.mxu0 0
      %696 = vmatpush1.bf16.xpose.msra.mxu0 0
      %697 = vmatprep.subr.bf16.mxu0 0
      %698 = vmatpush1.bf16.xpose.msra.mxu0 0
      %699 = vmatprep.subr.bf16.mxu0 0
      %700 = vmatpush1.bf16.xpose.msra.mxu0 0
      %701 = vmatprep.subr.bf16.mxu0 0
      %702 = vmatpush1.bf16.xpose.msra.mxu0 0
      %703 = vmatprep.subr.bf16.mxu0 0
      %704 = vmatpush1.bf16.xpose.msra.mxu0 0
      %705 = vmatprep.subr.bf16.mxu0 0
      %706 = vmatpush1.bf16.xpose.msra.mxu0 0
      %707 = vmatprep.subr.bf16.mxu0 0
      %708 = vmatpush1.bf16.xpose.msra.mxu0 0
      %709 = vmatprep.subr.bf16.mxu0 0
      %710 = vmatpush1.bf16.xpose.msra.mxu0 0
      %711 = vmatprep.subr.bf16.mxu0 0
      %712 = vmatpush1.bf16.xpose.msra.mxu0 0
      %713 = vmatprep.subr.bf16.mxu0 0
      %714 = vmatpush1.bf16.xpose.msra.mxu0 0
      %715 = vmatprep.subr.bf16.mxu0 0
      %716 = vmatpush1.bf16.xpose.msra.mxu0 0
      %717 = vmatprep.subr.bf16.mxu0 0
      %718 = vmatpush1.bf16.xpose.msra.mxu0 0
      %719 = vmatprep.subr.bf16.mxu0 0
      %720 = vmatpush1.bf16.xpose.msra.mxu0 0
      %721 = vmatprep.mubr.bf16.mxu0 0
      %722 = vmatmul.mubr.bf16.gmra.mrb[0].mxu0 %v684
      %v723 = vpop.f32.mrb[0].mxu0
      %v724 = vadd.f32 0.0, %v723
      %v725 = vpop.f32.mrb[0].mxu0
      %v726 = vpop.f32.mrb[0].mxu0
      %v727 = vpop.f32.mrb[0].mxu0
      %728 = vdwg.mxu0
      %v729 = vsel %vm350, %v724, -inf
      %730 = vmax.xlane.f32.xlu0 %v729
      %v731 = vpop.xlane.xlu0 %730
      %v732 = vsub.f32 %v724, %v731
      %v733 = vmul.f32 %v732, 1.442695
      %v734 = vpow.pop %v733
      %v735 = vsel %vm350, %v734, 0.0
      %736 = vadd.xlane.f32.xlu0 %v735
      %v737 = vpop.xlane.xlu0 %736
      %v738 = vrcp.pop %v737
      %v739 = vmul.f32 %v734, %v738
      %v740 = vpack.c.bf16 %v739, %v739
      %741 = vrot.lane.b32.xlu0 %v346, 40
      %v742 = vpop.permute.xlu0 %741
      %v744 = vsel %vm350, %v740, 0
      %v747 = vsel %vm414, %v742, 0
      %749 = vmatprep.subr.bf16.mxu0 0
      %750 = vmatpush1.bf16.msra.mxu0 %v747
      %751 = vmatprep.subr.bf16.mxu0 0
      %752 = vmatpush1.bf16.msra.mxu0 0
      %753 = vmatprep.subr.bf16.mxu0 0
      %754 = vmatpush1.bf16.msra.mxu0 0
      %755 = vmatprep.subr.bf16.mxu0 0
      %756 = vmatpush1.bf16.msra.mxu0 0
      %757 = vmatprep.subr.bf16.mxu0 0
      %758 = vmatpush1.bf16.msra.mxu0 0
      %759 = vmatprep.subr.bf16.mxu0 0
      %760 = vmatpush1.bf16.msra.mxu0 0
      %761 = vmatprep.subr.bf16.mxu0 0
      %762 = vmatpush1.bf16.msra.mxu0 0
      %763 = vmatprep.subr.bf16.mxu0 0
      %764 = vmatpush1.bf16.msra.mxu0 0
      %765 = vmatprep.subr.bf16.mxu0 0
      %766 = vmatpush1.bf16.msra.mxu0 0
      %767 = vmatprep.subr.bf16.mxu0 0
      %768 = vmatpush1.bf16.msra.mxu0 0
      %769 = vmatprep.subr.bf16.mxu0 0
      %770 = vmatpush1.bf16.msra.mxu0 0
      %771 = vmatprep.subr.bf16.mxu0 0
      %772 = vmatpush1.bf16.msra.mxu0 0
      %773 = vmatprep.subr.bf16.mxu0 0
      %774 = vmatpush1.bf16.msra.mxu0 0
      %775 = vmatprep.subr.bf16.mxu0 0
      %776 = vmatpush1.bf16.msra.mxu0 0
      %777 = vmatprep.subr.bf16.mxu0 0
      %778 = vmatpush1.bf16.msra.mxu0 0
      %779 = vmatprep.subr.bf16.mxu0 0
      %780 = vmatpush1.bf16.msra.mxu0 0
      %781 = vmatprep.mubr.bf16.mxu0 0
      %782 = vmatmul.mubr.bf16.gmra.mrb[0].mxu0 %v744
      %v783 = vpop.f32.mrb[0].mxu0
      %v784 = vadd.f32 0.0, %v783
      %v785 = vpop.f32.mrb[0].mxu0
      %v786 = vpop.f32.mrb[0].mxu0
      %v787 = vpop.f32.mrb[0].mxu0
      %788 = vdwg.mxu0
      %790 = vrot.lane.b32.xlu0 %v564, 8
      %v791 = vpop.permute.xlu0 %790
      %794 = vrot.lane.b32.xlu0 %v674, 16
      %v795 = vpop.permute.xlu0 %794
      %798 = vrot.lane.b32.xlu0 %v784, 24
      %v799 = vpop.permute.xlu0 %798
      %v801 = vsel %vm350, %v453, %v791
      %vm802 = vcmask 130048
      %v803 = vsel %vm802, %v801, %v795
      %vm804 = vcmask 195584
      %v805 = vsel %vm804, %v803, %v799
      %v806 = vpack.c.bf16 %v805, %v805
      %v807 = vld [vmem:[%s3] sm:$0xf]
      %v808 = vld [vmem:[%s3 + $0x4] sm:$0xf]
      %v809 = vld [vmem:[%s3 + $0x8] sm:$0xf]
      %v810 = vld [vmem:[%s3 + $0xc] sm:$0xf]
      %v811 = vld [vmem:[%s4] sm:$0x1]
      %v813 = vlaneseq
      %v814 = vshrl.u32 %v813, 7
      %v815 = vsub.s32 0, %v814
      %v816 = vrot.slane %v811, %v815
      %v822 = vunpack.c.l.b16 %v807
      %v823 = vunpack.c.l.b16 %v808
      %v824 = vunpack.c.l.b16 %v809
      %v825 = vunpack.c.l.b16 %v810
      %v826 = vpack.c.b16 %v823, %v822
      %v827 = vpack.c.b16 %v825, %v824
      %v831 = vsel %vm300, %v806, 0
      %833 = vmatprep.subr.bf16.mxu0 0
      %834 = vmatpush1.bf16.msra.mxu0 %v826
      %835 = vmatprep.subr.bf16.mxu0 0
      %836 = vmatpush1.bf16.msra.mxu0 %v827
      %837 = vmatprep.subr.bf16.mxu0 0
      %838 = vmatpush1.bf16.msra.mxu0 0
      %839 = vmatprep.subr.bf16.mxu0 0
      %840 = vmatpush1.bf16.msra.mxu0 0
      %841 = vmatprep.subr.bf16.mxu0 0
      %842 = vmatpush1.bf16.msra.mxu0 0
      %843 = vmatprep.subr.bf16.mxu0 0
      %844 = vmatpush1.bf16.msra.mxu0 0
      %845 = vmatprep.subr.bf16.mxu0 0
      %846 = vmatpush1.bf16.msra.mxu0 0
      %847 = vmatprep.subr.bf16.mxu0 0
      %848 = vmatpush1.bf16.msra.mxu0 0
      %849 = vmatprep.subr.bf16.mxu0 0
      %850 = vmatpush1.bf16.msra.mxu0 0
      %851 = vmatprep.subr.bf16.mxu0 0
      %852 = vmatpush1.bf16.msra.mxu0 0
      %853 = vmatprep.subr.bf16.mxu0 0
      %854 = vmatpush1.bf16.msra.mxu0 0
      %855 = vmatprep.subr.bf16.mxu0 0
      %856 = vmatpush1.bf16.msra.mxu0 0
      %857 = vmatprep.subr.bf16.mxu0 0
      %858 = vmatpush1.bf16.msra.mxu0 0
      %859 = vmatprep.subr.bf16.mxu0 0
      %860 = vmatpush1.bf16.msra.mxu0 0
      %861 = vmatprep.subr.bf16.mxu0 0
      %862 = vmatpush1.bf16.msra.mxu0 0
      %863 = vmatprep.subr.bf16.mxu0 0
      %864 = vmatpush1.bf16.msra.mxu0 0
      %865 = vmatprep.mubr.bf16.mxu0 0
      %866 = vmatmul.mubr.bf16.gmra.mrb[0].mxu0 %v831
      %v867 = vpop.f32.mrb[0].mxu0
      %v868 = vadd.f32 %v816, %v867
      %v869 = vpop.f32.mrb[0].mxu0
      %v870 = vpop.f32.mrb[0].mxu0
      %v871 = vpop.f32.mrb[0].mxu0
      %872 = vdwg.mxu0
      %v873 = vadd.f32 %v275, %v868
      %v874 = vld [vmem:[%s5] sm:$0x1]
      %v875 = vld [vmem:[%s6] sm:$0x1]
      %v876 = vsel %vm300, %v873, 0.0
      %877 = vadd.xlane.f32.xlu0 %v876
      %v878 = vpop.xlane.xlu0 %877
      %v879 = vrcp.pop 32.0
      %v880 = vmul.f32 %v878, %v879
      %v881 = vsub.f32 %v873, %v880
      %v882 = vmul.f32 %v881, %v881
      %v883 = vsel %vm300, %v882, 0.0
      %884 = vadd.xlane.f32.xlu0 %v883
      %v885 = vpop.xlane.xlu0 %884
      %v886 = vmul.f32 %v885, %v879
      %v887 = vadd.f32 %v886, 1e-05
      %v888 = vrsqrt.pop %v887
      %v889 = vmul.f32 %v881, %v888
      %v891 = vlaneseq
      %v892 = vshrl.u32 %v891, 7
      %v893 = vsub.s32 0, %v892
      %v894 = vrot.slane %v874, %v893
      %v896 = vmul.f32 %v889, %v894
      %v898 = vlaneseq
      %v899 = vshrl.u32 %v898, 7
      %v900 = vsub.s32 0, %v899
      %v901 = vrot.slane %v875, %v900
      %v903 = vadd.f32 %v896, %v901
      %904 = vst.msk [vmem:[%s273] sm:$0xff] %vm300, %v903
      %p905 = scmp.lt.s32.totalorder %s18, 1
      %s906 = scalar_select %p905, %s18, 1
      %s907 = smul.addr %s906, 8
      %s908 = scalar_lea.vmem %s7, %s907
      // Predicated region
      $region49: #{_lambda_.5} parent=47 // pred_check
        %p909 = pneg %p188
      $region50: #{_lambda_.5} parent=47 // pred_check_branch
        %911 = sbr.rel (%p909) target = $region52
      $region51: #{_lambda_.5} parent=47 // pred_region
        _
      $region52: #{_lambda_.5} parent=47 // pred_fallthru
        _
    $region48: #{_lambda_.5} parent=5 // pred_fallthru
      _
    %p912 = scmp.le.s32.totalorder 2, %s13
    // Predicated region
    $region53: #{_lambda_.5} parent=5 // pred_check
      %p913 = pneg %p912
    $region54: #{_lambda_.5} parent=5 // pred_check_branch
      %915 = sbr.rel (%p913) target = $region56
    $region55: #{_lambda_.5} parent=5 // pred_region
      %s916 = ssub.s32 %s13, 2
      // Predicated region
      $region57: #{_lambda_.5} parent=55 // pred_check
        %p917 = pneg %p194
      $region58: #{_lambda_.5} parent=55 // pred_check_branch
        %919 = sbr.rel (%p917) target = $region60
      $region59: #{_lambda_.5} parent=55 // pred_region
        %p920 = scmp.lt.s32.totalorder %s19, 1
        %s921 = scalar_select %p920, %s19, 1
        %s922 = smul.addr %s921, 8
        %s923 = scalar_lea.vmem %s7, %s922
      $region60: #{_lambda_.5} parent=55 // pred_fallthru
        _
    $region56: #{_lambda_.5} parent=5 // pred_fallthru
      _
  $region6: #{_lambda_.5} parent=0 // loop_footer
    %s17 = sadd.s32 1, %s13
  $region7: #{_lambda_.5} parent=0 // loop_footer_branch
    %12 = sbr.rel target = $region3
  $region8: #{_lambda_.5} parent=0 // loop_exit
    _

// kernel: _lambda_.9
$region0: #{_lambda_.9}
  #allocation0 [shape = 'u32[]', space=smem, size = 0x4, offset = 0x4, fixed_abs, tag = 'smem constant byte address 0x4 - core index']
  #allocation1 [shape = 'u32[144,128]{1,0:T(1,128)}', space=vmem, size = 0x12000, scoped, tag = 'internal scratch']
  %s0 = inlined_call_operand.vmem [shape: f32[2,8,32], index: 0, kind: input, shape index: {}]
  %s1 = inlined_call_operand.vmem [shape: f32[2,1,128], index: 1, kind: input, shape index: {}]
  %s2 = inlined_call_operand.hbm [shape: f32[2,8,2], index: 2, kind: input, shape index: {}]
  %s3 = inlined_call_operand.hbm [shape: bf16[128,64], index: 3, kind: input, shape index: {}]
  %s4 = inlined_call_operand.vmem [shape: f32[1,64], index: 4, kind: input, shape index: {}]
  %s5 = inlined_call_operand.hbm [shape: bf16[1,32,32], index: 5, kind: input, shape index: {}]
  %s6 = inlined_call_operand.vmem [shape: f32[1,32], index: 6, kind: input, shape index: {}, may-alias: {6,9}]
  %s7 = inlined_call_operand.vmem [shape: f32[1,32], index: 7, kind: input, shape index: {}, may-alias: {7,10}]
  %s8 = inlined_call_operand.hbm [shape: bf16[1,32,32], index: 8, kind: input, shape index: {}]
  %s9 = inlined_call_operand.vmem [shape: f32[1,32], index: 9, kind: input, shape index: {}, may-alias: {6,9}]
  %s10 = inlined_call_operand.vmem [shape: f32[1,32], index: 10, kind: input, shape index: {}, may-alias: {7,10}]
  %s11 = inlined_call_operand.hbm [shape: bf16[32,128], index: 11, kind: input, shape index: {}]
  %s12 = inlined_call_operand.vmem [shape: f32[1,128], index: 12, kind: input, shape index: {}]
  %s13 = inlined_call_operand.hbm [shape: bf16[32,2], index: 13, kind: input, shape index: {}]
  %s14 = inlined_call_operand.vmem [shape: f32[1,2], index: 14, kind: input, shape index: {}]
  %s15 = inlined_call_operand.vmem [shape: f32[2,8,128], index: 15, kind: output, shape index: {0}]
  %s16 = inlined_call_operand.vmem [shape: f32[2,8,2], index: 16, kind: output, shape index: {1}]
  %17 = xla_tuple %s15, %s16
  %s18 = sld [smem:[#allocation0]]
  $region125: #{_lambda_.9} parent=0
    _
  %s20 = ssub.s32 1, %s18
  %s21 = scalar_select 0, %s20, %s18
  $region1: #{_lambda_.9} parent=0
    #allocation2 [shape = 'u8[8192]{0}', space=vmem, size = 0x2000, scoped, tag = 'input window, operand 2']
    #allocation3 [shape = 's32[2]{0}', space=sflag, size = 0x8, scoped, tag = 'scoped memory for _lambda_.9']
    #allocation4 [shape = 'u8[32768]{0}', space=vmem, size = 0x8000, scoped, tag = 'input window, operand 3, single buffered']
    #allocation5 [shape = 's32[1]{0}', space=sflag, size = 0x4, scoped, tag = 'scoped memory for _lambda_.9']
    #allocation6 [shape = 'u8[8192]{0}', space=vmem, size = 0x2000, scoped, tag = 'input window, operand 5, single buffered']
    #allocation7 [shape = 'u8[8192]{0}', space=vmem, size = 0x2000, scoped, tag = 'input window, operand 8, single buffered']
    #allocation8 [shape = 's32[1]{0}', space=sflag, size = 0x4, scoped, tag = 'scoped memory for _lambda_.9']
    #allocation9 [shape = 'u8[8192]{0}', space=vmem, size = 0x2000, scoped, tag = 'input window, operand 11, single buffered']
    #allocation10 [shape = 'u8[8192]{0}', space=vmem, size = 0x2000, scoped, tag = 'input window, operand 13, single buffered']
    #allocation11 [shape = 's32[1]{0}', space=sflag, size = 0x4, scoped, tag = 'scoped memory for _lambda_.9']
    %22 = vsyncpa [#allocation3], 0
    %s23 = scalar_lea.sflag [#allocation3], 1
    %24 = vsyncpa %s23, 0
    %25 = vsyncpa [#allocation5], 0
    %26 = vsyncpa [#allocation8], 0
    %27 = vsyncpa [#allocation11], 0
    loop: start=0, step=1, limit=4
    $region2: #{_lambda_.9} parent=1 // loop_pre_header
      _
    $region3: #{_lambda_.9} parent=1 // loop_header
      %s29 = sphi 0, %s33
      %p30 = scmp.ge.s32.totalorder %s29, 4
      %s39 = sphi 0, %s41
      %s42 = sphi 0, %s39
      %s43 = sphi 0, %s42
      %s59 = sphi 0, %s43
      %s65 = sphi 0, %s67
      %s68 = sphi 0, %s65
      %s69 = sphi 0, %s68
      %s85 = sphi 0, %s69
      %s91 = sphi 0, %s93
      %s94 = sphi 0, %s91
      %s95 = sphi 0, %s94
      %s111 = sphi 0, %s95
      %s115 = sphi 0, %s115
      %s117 = sphi 0, %s115
      %s118 = sphi 0, %s117
      %s132 = sphi 0, %s118
      %s136 = sphi 0, %s136
      %s138 = sphi 0, %s136
      %s139 = sphi 0, %s138
      %s153 = sphi 0, %s139
      %s157 = sphi 0, %s157
      %s159 = sphi 0, %s157
      %s160 = sphi 0, %s159
      %s174 = sphi 0, %s160
      %s178 = sphi 0, %s178
      %s180 = sphi 0, %s178
      %s181 = sphi 0, %s180
      %s195 = sphi 0, %s181
      %s199 = sphi 0, %s199
      %s201 = sphi 0, %s199
      %s202 = sphi 0, %s201
      %s216 = sphi 0, %s202
      %s220 = sphi 0, %s220
      %s222 = sphi 0, %s220
      %s223 = sphi 0, %s222
      %s237 = sphi 0, %s223
      %s241 = sphi 0, %s241
      %s243 = sphi 0, %s241
      %s244 = sphi 0, %s243
      %s258 = sphi 0, %s244
      %s262 = sphi 0, %s262
      %s264 = sphi 0, %s262
      %s265 = sphi 0, %s264
      %s279 = sphi 0, %s265
      %s283 = sphi 0, %s283
      %s285 = sphi 0, %s283
      %s286 = sphi 0, %s285
      %s300 = sphi 0, %s286
      %s304 = sphi 0, %s304
      %s306 = sphi 0, %s304
      %s307 = sphi 0, %s306
      %s321 = sphi 0, %s307
      %s325 = sphi 0, %s325
      %s327 = sphi 0, %s325
      %s328 = sphi 0, %s327
      %s342 = sphi 0, %s328
      %s346 = sphi 0, %s346
      %s348 = sphi 0, %s346
      %s349 = sphi 0, %s348
      %s363 = sphi 0, %s349
      %s369 = sphi 0, %s371
      %s372 = sphi 0, %s369
      %s373 = sphi 0, %s372
      %s389 = sphi 0, %s373
      %s395 = sphi 0, %s397
      %s398 = sphi 0, %s395
      %s399 = sphi 0, %s398
      %s415 = sphi 0, %s399
    $region4: #{_lambda_.9} parent=1 // loop_header_branch
      %32 = sbr.rel (%p30) target = $region8
    $region5: #{_lambda_.9} parent=1 // loop_body
      %s34 = ssub.s32 %s29, 1
      %s35 = ssub.s32 %s29, 2
      %s36 = sadd.s32 %s29, 1
      %s37 = ssub.s32 %s29, %s36
      %p38 = scmp.eq.s32.totalorder %s37, 0
      %s40 = sadd.s32 %s39, 1
      %s41 = scalar_select %p38, %s39, %s40
      %p44 = pneg %p38
      %p45 = scmp.eq.s32.totalorder %s29, 1
      %p46 = por %p44, %p45
      %p47 = scmp.ne.s32.totalorder %s39, %s42
      %p48 = scmp.eq.s32.totalorder %s29, 0
      %p49 = por %p47, %p48
      %p50 = scmp.ne.s32.totalorder %s39, %s42
      %p51 = scmp.eq.s32.totalorder %s34, 1
      %p52 = por %p50, %p51
      %p53 = scmp.ne.s32.totalorder %s42, %s43
      %p54 = scmp.eq.s32.totalorder %s34, 0
      %p55 = por %p53, %p54
      %p56 = scmp.ne.s32.totalorder %s42, %s43
      %p57 = scmp.eq.s32.totalorder %s35, 1
      %p58 = por %p56, %p57
      %p60 = scmp.ne.s32.totalorder %s43, %s59
      %p61 = scmp.eq.s32.totalorder %s35, 0
      %p62 = por %p60, %p61
      %s63 = ssub.s32 %s29, %s36
      %p64 = scmp.eq.s32.totalorder %s63, 0
      %s66 = sadd.s32 %s65, 1
      %s67 = scalar_select %p64, %s65, %s66
      %p70 = pneg %p64
      %p71 = scmp.eq.s32.totalorder %s29, 1
      %p72 = por %p70, %p71
      %p73 = scmp.ne.s32.totalorder %s65, %s68
      %p74 = scmp.eq.s32.totalorder %s29, 0
      %p75 = por %p73, %p74
      %p76 = scmp.ne.s32.totalorder %s65, %s68
      %p77 = scmp.eq.s32.totalorder %s34, 1
      %p78 = por %p76, %p77
      %p79 = scmp.ne.s32.totalorder %s68, %s69
      %p80 = scmp.eq.s32.totalorder %s34, 0
      %p81 = por %p79, %p80
      %p82 = scmp.ne.s32.totalorder %s68, %s69
      %p83 = scmp.eq.s32.totalorder %s35, 1
      %p84 = por %p82, %p83
      %p86 = scmp.ne.s32.totalorder %s69, %s85
      %p87 = scmp.eq.s32.totalorder %s35, 0
      %p88 = por %p86, %p87
      %s89 = ssub.s32 %s29, %s36
      %p90 = scmp.eq.s32.totalorder %s89, 0
      %s92 = sadd.s32 %s91, 1
      %s93 = scalar_select %p90, %s91, %s92
      %p96 = pneg %p90
      %p97 = scmp.eq.s32.totalorder %s29, 1
      %p98 = por %p96, %p97
      %p99 = scmp.ne.s32.totalorder %s91, %s94
      %p100 = scmp.eq.s32.totalorder %s29, 0
      %p101 = por %p99, %p100
      %p102 = scmp.ne.s32.totalorder %s91, %s94
      %p103 = scmp.eq.s32.totalorder %s34, 1
      %p104 = por %p102, %p103
      %p105 = scmp.ne.s32.totalorder %s94, %s95
      %p106 = scmp.eq.s32.totalorder %s34, 0
      %p107 = por %p105, %p106
      %p108 = scmp.ne.s32.totalorder %s94, %s95
      %p109 = scmp.eq.s32.totalorder %s35, 1
      %p110 = por %p108, %p109
      %p112 = scmp.ne.s32.totalorder %s95, %s111
      %p113 = scmp.eq.s32.totalorder %s35, 0
      %p114 = por %p112, %p113
      %s116 = sadd.s32 %s115, 1
      %p119 = scmp.eq.s32.totalorder %s29, 1
      %p120 = scmp.ne.s32.totalorder %s115, %s117
      %p121 = scmp.eq.s32.totalorder %s29, 0
      %p122 = por %p120, %p121
      %p123 = scmp.ne.s32.totalorder %s115, %s117
      %p124 = scmp.eq.s32.totalorder %s34, 1
      %p125 = por %p123, %p124
      %p126 = scmp.ne.s32.totalorder %s117, %s118
      %p127 = scmp.eq.s32.totalorder %s34, 0
      %p128 = por %p126, %p127
      %p129 = scmp.ne.s32.totalorder %s117, %s118
      %p130 = scmp.eq.s32.totalorder %s35, 1
      %p131 = por %p129, %p130
      %p133 = scmp.ne.s32.totalorder %s118, %s132
      %p134 = scmp.eq.s32.totalorder %s35, 0
      %p135 = por %p133, %p134
      %s137 = sadd.s32 %s136, 1
      %p140 = scmp.eq.s32.totalorder %s29, 1
      %p141 = scmp.ne.s32.totalorder %s136, %s138
      %p142 = scmp.eq.s32.totalorder %s29, 0
      %p143 = por %p141, %p142
      %p144 = scmp.ne.s32.totalorder %s136, %s138
      %p145 = scmp.eq.s32.totalorder %s34, 1
      %p146 = por %p144, %p145
      %p147 = scmp.ne.s32.totalorder %s138, %s139
      %p148 = scmp.eq.s32.totalorder %s34, 0
      %p149 = por %p147, %p148
      %p150 = scmp.ne.s32.totalorder %s138, %s139
      %p151 = scmp.eq.s32.totalorder %s35, 1
      %p152 = por %p150, %p151
      %p154 = scmp.ne.s32.totalorder %s139, %s153
      %p155 = scmp.eq.s32.totalorder %s35, 0
      %p156 = por %p154, %p155
      %s158 = sadd.s32 %s157, 1
      %p161 = scmp.eq.s32.totalorder %s29, 1
      %p162 = scmp.ne.s32.totalorder %s157, %s159
      %p163 = scmp.eq.s32.totalorder %s29, 0
      %p164 = por %p162, %p163
      %p165 = scmp.ne.s32.totalorder %s157, %s159
      %p166 = scmp.eq.s32.totalorder %s34, 1
      %p167 = por %p165, %p166
      %p168 = scmp.ne.s32.totalorder %s159, %s160
      %p169 = scmp.eq.s32.totalorder %s34, 0
      %p170 = por %p168, %p169
      %p171 = scmp.ne.s32.totalorder %s159, %s160
      %p172 = scmp.eq.s32.totalorder %s35, 1
      %p173 = por %p171, %p172
      %p175 = scmp.ne.s32.totalorder %s160, %s174
      %p176 = scmp.eq.s32.totalorder %s35, 0
      %p177 = por %p175, %p176
      %s179 = sadd.s32 %s178, 1
      %p182 = scmp.eq.s32.totalorder %s29, 1
      %p183 = scmp.ne.s32.totalorder %s178, %s180
      %p184 = scmp.eq.s32.totalorder %s29, 0
      %p185 = por %p183, %p184
      %p186 = scmp.ne.s32.totalorder %s178, %s180
      %p187 = scmp.eq.s32.totalorder %s34, 1
      %p188 = por %p186, %p187
      %p189 = scmp.ne.s32.totalorder %s180, %s181
      %p190 = scmp.eq.s32.totalorder %s34, 0
      %p191 = por %p189, %p190
      %p192 = scmp.ne.s32.totalorder %s180, %s181
      %p193 = scmp.eq.s32.totalorder %s35, 1
      %p194 = por %p192, %p193
      %p196 = scmp.ne.s32.totalorder %s181, %s195
      %p197 = scmp.eq.s32.totalorder %s35, 0
      %p198 = por %p196, %p197
      %s200 = sadd.s32 %s199, 1
      %p203 = scmp.eq.s32.totalorder %s29, 1
      %p204 = scmp.ne.s32.totalorder %s199, %s201
      %p205 = scmp.eq.s32.totalorder %s29, 0
      %p206 = por %p204, %p205
      %p207 = scmp.ne.s32.totalorder %s199, %s201
      %p208 = scmp.eq.s32.totalorder %s34, 1
      %p209 = por %p207, %p208
      %p210 = scmp.ne.s32.totalorder %s201, %s202
      %p211 = scmp.eq.s32.totalorder %s34, 0
      %p212 = por %p210, %p211
      %p213 = scmp.ne.s32.totalorder %s201, %s202
      %p214 = scmp.eq.s32.totalorder %s35, 1
      %p215 = por %p213, %p214
      %p217 = scmp.ne.s32.totalorder %s202, %s216
      %p218 = scmp.eq.s32.totalorder %s35, 0
      %p219 = por %p217, %p218
      %s221 = sadd.s32 %s220, 1
      %p224 = scmp.eq.s32.totalorder %s29, 1
      %p225 = scmp.ne.s32.totalorder %s220, %s222
      %p226 = scmp.eq.s32.totalorder %s29, 0
      %p227 = por %p225, %p226
      %p228 = scmp.ne.s32.totalorder %s220, %s222
      %p229 = scmp.eq.s32.totalorder %s34, 1
      %p230 = por %p228, %p229
      %p231 = scmp.ne.s32.totalorder %s222, %s223
      %p232 = scmp.eq.s32.totalorder %s34, 0
      %p233 = por %p231, %p232
      %p234 = scmp.ne.s32.totalorder %s222, %s223
      %p235 = scmp.eq.s32.totalorder %s35, 1
      %p236 = por %p234, %p235
      %p238 = scmp.ne.s32.totalorder %s223, %s237
      %p239 = scmp.eq.s32.totalorder %s35, 0
      %p240 = por %p238, %p239
      %s242 = sadd.s32 %s241, 1
      %p245 = scmp.eq.s32.totalorder %s29, 1
      %p246 = scmp.ne.s32.totalorder %s241, %s243
      %p247 = scmp.eq.s32.totalorder %s29, 0
      %p248 = por %p246, %p247
      %p249 = scmp.ne.s32.totalorder %s241, %s243
      %p250 = scmp.eq.s32.totalorder %s34, 1
      %p251 = por %p249, %p250
      %p252 = scmp.ne.s32.totalorder %s243, %s244
      %p253 = scmp.eq.s32.totalorder %s34, 0
      %p254 = por %p252, %p253
      %p255 = scmp.ne.s32.totalorder %s243, %s244
      %p256 = scmp.eq.s32.totalorder %s35, 1
      %p257 = por %p255, %p256
      %p259 = scmp.ne.s32.totalorder %s244, %s258
      %p260 = scmp.eq.s32.totalorder %s35, 0
      %p261 = por %p259, %p260
      %s263 = sadd.s32 %s262, 1
      %p266 = scmp.eq.s32.totalorder %s29, 1
      %p267 = scmp.ne.s32.totalorder %s262, %s264
      %p268 = scmp.eq.s32.totalorder %s29, 0
      %p269 = por %p267, %p268
      %p270 = scmp.ne.s32.totalorder %s262, %s264
      %p271 = scmp.eq.s32.totalorder %s34, 1
      %p272 = por %p270, %p271
      %p273 = scmp.ne.s32.totalorder %s264, %s265
      %p274 = scmp.eq.s32.totalorder %s34, 0
      %p275 = por %p273, %p274
      %p276 = scmp.ne.s32.totalorder %s264, %s265
      %p277 = scmp.eq.s32.totalorder %s35, 1
      %p278 = por %p276, %p277
      %p280 = scmp.ne.s32.totalorder %s265, %s279
      %p281 = scmp.eq.s32.totalorder %s35, 0
      %p282 = por %p280, %p281
      %s284 = sadd.s32 %s283, 1
      %p287 = scmp.eq.s32.totalorder %s29, 1
      %p288 = scmp.ne.s32.totalorder %s283, %s285
      %p289 = scmp.eq.s32.totalorder %s29, 0
      %p290 = por %p288, %p289
      %p291 = scmp.ne.s32.totalorder %s283, %s285
      %p292 = scmp.eq.s32.totalorder %s34, 1
      %p293 = por %p291, %p292
      %p294 = scmp.ne.s32.totalorder %s285, %s286
      %p295 = scmp.eq.s32.totalorder %s34, 0
      %p296 = por %p294, %p295
      %p297 = scmp.ne.s32.totalorder %s285, %s286
      %p298 = scmp.eq.s32.totalorder %s35, 1
      %p299 = por %p297, %p298
      %p301 = scmp.ne.s32.totalorder %s286, %s300
      %p302 = scmp.eq.s32.totalorder %s35, 0
      %p303 = por %p301, %p302
      %s305 = sadd.s32 %s304, 1
      %p308 = scmp.eq.s32.totalorder %s29, 1
      %p309 = scmp.ne.s32.totalorder %s304, %s306
      %p310 = scmp.eq.s32.totalorder %s29, 0
      %p311 = por %p309, %p310
      %p312 = scmp.ne.s32.totalorder %s304, %s306
      %p313 = scmp.eq.s32.totalorder %s34, 1
      %p314 = por %p312, %p313
      %p315 = scmp.ne.s32.totalorder %s306, %s307
      %p316 = scmp.eq.s32.totalorder %s34, 0
      %p317 = por %p315, %p316
      %p318 = scmp.ne.s32.totalorder %s306, %s307
      %p319 = scmp.eq.s32.totalorder %s35, 1
      %p320 = por %p318, %p319
      %p322 = scmp.ne.s32.totalorder %s307, %s321
      %p323 = scmp.eq.s32.totalorder %s35, 0
      %p324 = por %p322, %p323
      %s326 = sadd.s32 %s325, 1
      %p329 = scmp.eq.s32.totalorder %s29, 1
      %p330 = scmp.ne.s32.totalorder %s325, %s327
      %p331 = scmp.eq.s32.totalorder %s29, 0
      %p332 = por %p330, %p331
      %p333 = scmp.ne.s32.totalorder %s325, %s327
      %p334 = scmp.eq.s32.totalorder %s34, 1
      %p335 = por %p333, %p334
      %p336 = scmp.ne.s32.totalorder %s327, %s328
      %p337 = scmp.eq.s32.totalorder %s34, 0
      %p338 = por %p336, %p337
      %p339 = scmp.ne.s32.totalorder %s327, %s328
      %p340 = scmp.eq.s32.totalorder %s35, 1
      %p341 = por %p339, %p340
      %p343 = scmp.ne.s32.totalorder %s328, %s342
      %p344 = scmp.eq.s32.totalorder %s35, 0
      %p345 = por %p343, %p344
      %s347 = sadd.s32 %s346, 1
      %p350 = scmp.eq.s32.totalorder %s29, 1
      %p351 = scmp.ne.s32.totalorder %s346, %s348
      %p352 = scmp.eq.s32.totalorder %s29, 0
      %p353 = por %p351, %p352
      %p354 = scmp.ne.s32.totalorder %s346, %s348
      %p355 = scmp.eq.s32.totalorder %s34, 1
      %p356 = por %p354, %p355
      %p357 = scmp.ne.s32.totalorder %s348, %s349
      %p358 = scmp.eq.s32.totalorder %s34, 0
      %p359 = por %p357, %p358
      %p360 = scmp.ne.s32.totalorder %s348, %s349
      %p361 = scmp.eq.s32.totalorder %s35, 1
      %p362 = por %p360, %p361
      %p364 = scmp.ne.s32.totalorder %s349, %s363
      %p365 = scmp.eq.s32.totalorder %s35, 0
      %p366 = por %p364, %p365
      %s367 = ssub.s32 %s29, %s36
      %p368 = scmp.eq.s32.totalorder %s367, 0
      %s370 = sadd.s32 %s369, 1
      %s371 = scalar_select %p368, %s369, %s370
      %p374 = pneg %p368
      %p375 = scmp.eq.s32.totalorder %s29, 1
      %p376 = por %p374, %p375
      %p377 = scmp.ne.s32.totalorder %s369, %s372
      %p378 = scmp.eq.s32.totalorder %s29, 0
      %p379 = por %p377, %p378
      %p380 = scmp.ne.s32.totalorder %s369, %s372
      %p381 = scmp.eq.s32.totalorder %s34, 1
      %p382 = por %p380, %p381
      %p383 = scmp.ne.s32.totalorder %s372, %s373
      %p384 = scmp.eq.s32.totalorder %s34, 0
      %p385 = por %p383, %p384
      %p386 = scmp.ne.s32.totalorder %s372, %s373
      %p387 = scmp.eq.s32.totalorder %s35, 1
      %p388 = por %p386, %p387
      %p390 = scmp.ne.s32.totalorder %s373, %s389
      %p391 = scmp.eq.s32.totalorder %s35, 0
      %p392 = por %p390, %p391
      %s393 = ssub.s32 %s29, %s36
      %p394 = scmp.eq.s32.totalorder %s393, 0
      %s396 = sadd.s32 %s395, 1
      %s397 = scalar_select %p394, %s395, %s396
      %p400 = pneg %p394
      %p401 = scmp.eq.s32.totalorder %s29, 1
      %p402 = por %p400, %p401
      %p403 = scmp.ne.s32.totalorder %s395, %s398
      %p404 = scmp.eq.s32.totalorder %s29, 0
      %p405 = por %p403, %p404
      %p406 = scmp.ne.s32.totalorder %s395, %s398
      %p407 = scmp.eq.s32.totalorder %s34, 1
      %p408 = por %p406, %p407
      %p409 = scmp.ne.s32.totalorder %s398, %s399
      %p410 = scmp.eq.s32.totalorder %s34, 0
      %p411 = por %p409, %p410
      %p412 = scmp.ne.s32.totalorder %s398, %s399
      %p413 = scmp.eq.s32.totalorder %s35, 1
      %p414 = por %p412, %p413
      %p416 = scmp.ne.s32.totalorder %s399, %s415
      %p417 = scmp.eq.s32.totalorder %s35, 0
      %p418 = por %p416, %p417
      %p419 = scmp.le.s32.totalorder 1, %s29
      %p420 = scmp.lt.s32.totalorder %s29, 3
      %p421 = pnand %p419, %p420
      %p422 = pneg %p421
      // Predicated region
      $region9: #{_lambda_.9} parent=5 // pred_check
        _
      $region10: #{_lambda_.9} parent=5 // pred_check_branch
        %424 = sbr.rel (%p421) target = $region12
      $region11: #{_lambda_.9} parent=5 // pred_region
        %s425 = ssub.s32 %s29, 1
        // Predicated region
        $region13: #{_lambda_.9} parent=11 // pred_check
          %p426 = pneg %p128
        $region14: #{_lambda_.9} parent=11 // pred_check_branch
          %428 = sbr.rel (%p426) target = $region16
        $region15: #{_lambda_.9} parent=11 // pred_region
          %s430 = ssub.s32 1024, 1024
          %431 = vsyncadd [#allocation5], %s430
          %s432 = sshll.u32 [#allocation4], 4
          %s433 = int_to_ptr.vmem [resolvable:$true] %s432
          %438 = dma.hbm_to_vmem [thread:$0]  %s3, 1024, %s433, [#allocation5], 64, 64, 4
        $region16: #{_lambda_.9} parent=11 // pred_fallthru
          _
        // Predicated region
        $region17: #{_lambda_.9} parent=11 // pred_check
          %p439 = pneg %p149
        $region18: #{_lambda_.9} parent=11 // pred_check_branch
          %441 = sbr.rel (%p439) target = $region20
        $region19: #{_lambda_.9} parent=11 // pred_region
          _
        $region20: #{_lambda_.9} parent=11 // pred_fallthru
          _
        // Predicated region
        $region21: #{_lambda_.9} parent=11 // pred_check
          %p442 = pneg %p170
        $region22: #{_lambda_.9} parent=11 // pred_check_branch
          %444 = sbr.rel (%p442) target = $region24
        $region23: #{_lambda_.9} parent=11 // pred_region
          %s446 = ssub.s32 256, 256
          %447 = vsyncadd [#allocation5], %s446
          %s448 = sshll.u32 [#allocation6], 4
          %s449 = int_to_ptr.vmem [resolvable:$true] %s448
          %454 = dma.hbm_to_vmem [thread:$0]  %s5, 256, %s449, [#allocation5], 64, 64, 4
        $region24: #{_lambda_.9} parent=11 // pred_fallthru
          _
        // Predicated region
        $region25: #{_lambda_.9} parent=11 // pred_check
          %p455 = pneg %p191
        $region26: #{_lambda_.9} parent=11 // pred_check_branch
          %457 = sbr.rel (%p455) target = $region28
        $region27: #{_lambda_.9} parent=11 // pred_region
          _
        $region28: #{_lambda_.9} parent=11 // pred_fallthru
          _
        // Predicated region
        $region29: #{_lambda_.9} parent=11 // pred_check
          %p458 = pneg %p212
        $region30: #{_lambda_.9} parent=11 // pred_check_branch
          %460 = sbr.rel (%p458) target = $region32
        $region31: #{_lambda_.9} parent=11 // pred_region
          _
        $region32: #{_lambda_.9} parent=11 // pred_fallthru
          _
        // Predicated region
        $region33: #{_lambda_.9} parent=11 // pred_check
          %p461 = pneg %p233
        $region34: #{_lambda_.9} parent=11 // pred_check_branch
          %463 = sbr.rel (%p461) target = $region36
        $region35: #{_lambda_.9} parent=11 // pred_region
          %s465 = ssub.s32 256, 256
          %466 = vsyncadd [#allocation8], %s465
          %s467 = sshll.u32 [#allocation7], 4
          %s468 = int_to_ptr.vmem [resolvable:$true] %s467
          %473 = dma.hbm_to_vmem [thread:$0]  %s8, 256, %s468, [#allocation8], 64, 64, 4
        $region36: #{_lambda_.9} parent=11 // pred_fallthru
          _
        // Predicated region
        $region37: #{_lambda_.9} parent=11 // pred_check
          %p474 = pneg %p254
        $region38: #{_lambda_.9} parent=11 // pred_check_branch
          %476 = sbr.rel (%p474) target = $region40
        $region39: #{_lambda_.9} parent=11 // pred_region
          _
        $region40: #{_lambda_.9} parent=11 // pred_fallthru
          _
        // Predicated region
        $region41: #{_lambda_.9} parent=11 // pred_check
          %p477 = pneg %p275
        $region42: #{_lambda_.9} parent=11 // pred_check_branch
          %479 = sbr.rel (%p477) target = $region44
        $region43: #{_lambda_.9} parent=11 // pred_region
          _
        $region44: #{_lambda_.9} parent=11 // pred_fallthru
          _
        // Predicated region
        $region45: #{_lambda_.9} parent=11 // pred_check
          %p480 = pneg %p296
        $region46: #{_lambda_.9} parent=11 // pred_check_branch
          %482 = sbr.rel (%p480) target = $region48
        $region47: #{_lambda_.9} parent=11 // pred_region
          %s484 = ssub.s32 256, 256
          %485 = vsyncadd [#allocation8], %s484
          %s486 = sshll.u32 [#allocation9], 4
          %s487 = int_to_ptr.vmem [resolvable:$true] %s486
          %492 = dma.hbm_to_vmem [thread:$0]  %s11, 256, %s487, [#allocation8], 64, 64, 4
        $region48: #{_lambda_.9} parent=11 // pred_fallthru
          _
        // Predicated region
        $region49: #{_lambda_.9} parent=11 // pred_check
          %p493 = pneg %p317
        $region50: #{_lambda_.9} parent=11 // pred_check_branch
          %495 = sbr.rel (%p493) target = $region52
        $region51: #{_lambda_.9} parent=11 // pred_region
          _
        $region52: #{_lambda_.9} parent=11 // pred_fallthru
          _
        // Predicated region
        $region53: #{_lambda_.9} parent=11 // pred_check
          %p496 = pneg %p338
        $region54: #{_lambda_.9} parent=11 // pred_check_branch
          %498 = sbr.rel (%p496) target = $region56
        $region55: #{_lambda_.9} parent=11 // pred_region
          %s500 = ssub.s32 256, 256
          %501 = vsyncadd [#allocation11], %s500
          %s502 = sshll.u32 [#allocation10], 4
          %s503 = int_to_ptr.vmem [resolvable:$true] %s502
          %508 = dma.hbm_to_vmem [thread:$0]  %s13, 256, %s503, [#allocation11], 64, 64, 4
        $region56: #{_lambda_.9} parent=11 // pred_fallthru
          _
        // Predicated region
        $region57: #{_lambda_.9} parent=11 // pred_check
          %p509 = pneg %p359
        $region58: #{_lambda_.9} parent=11 // pred_check_branch
          %511 = sbr.rel (%p509) target = $region60
        $region59: #{_lambda_.9} parent=11 // pred_region
          _
        $region60: #{_lambda_.9} parent=11 // pred_fallthru
          _
      $region12: #{_lambda_.9} parent=5 // pred_fallthru
        _
      %p512 = scmp.lt.s32.totalorder %s29, 2
      // Predicated region
      $region61: #{_lambda_.9} parent=5 // pred_check
        %p513 = pneg %p512
      $region62: #{_lambda_.9} parent=5 // pred_check_branch
        %515 = sbr.rel (%p513) target = $region64
      $region63: #{_lambda_.9} parent=5 // pred_region
        // Predicated region
        $region65: #{_lambda_.9} parent=63 // pred_check
          %p516 = pneg %p49
        $region66: #{_lambda_.9} parent=63 // pred_check_branch
          %518 = sbr.rel (%p516) target = $region68
        $region67: #{_lambda_.9} parent=63 // pred_region
          %p519 = scmp.lt.s32.totalorder %s29, 1
          %s520 = scalar_select %p519, %s29, 1
          %s521 = smul.addr %s520, 8
          %s522 = scalar_lea.vmem %s0, %s521
        $region68: #{_lambda_.9} parent=63 // pred_fallthru
          _
        // Predicated region
        $region69: #{_lambda_.9} parent=63 // pred_check
          %p523 = pneg %p75
        $region70: #{_lambda_.9} parent=63 // pred_check_branch
          %525 = sbr.rel (%p523) target = $region72
        $region71: #{_lambda_.9} parent=63 // pred_region
          %p526 = scmp.lt.s32.totalorder %s29, 1
          %s527 = scalar_select %p526, %s29, 1
          %s528 = scalar_lea.vmem %s1, %s527
        $region72: #{_lambda_.9} parent=63 // pred_fallthru
          _
        // Predicated region
        $region73: #{_lambda_.9} parent=63 // pred_check
          %p529 = pneg %p101
        $region74: #{_lambda_.9} parent=63 // pred_check_branch
          %531 = sbr.rel (%p529) target = $region76
        $region75: #{_lambda_.9} parent=63 // pred_region
          %s532 = sand.u32 %s91, 1
          %s533 = scalar_lea.sflag [#allocation3], %s532
          %s534 = sand.u32 %s91, 1
          %s535 = smul.addr %s534, 8
          %s536 = scalar_lea.vmem [#allocation2], %s535
          %s538 = ssub.s32 128, 128
          %539 = vsyncadd %s533, %s538
          %s540 = smul.addr %s29, 128
          %s541 = scalar_lea.hbm %s2, %s540
          %s543 = sshll.u32 %s536, 4
          %s544 = int_to_ptr.vmem [resolvable:$true] %s543
          %546 = dma.hbm_to_vmem [thread:$0]  %s541, 128, %s544, %s533
        $region76: #{_lambda_.9} parent=63 // pred_fallthru
          _
      $region64: #{_lambda_.9} parent=5 // pred_fallthru
        _
      %p547 = scmp.le.s32.totalorder 1, %s29
      %p548 = scmp.lt.s32.totalorder %s29, 3
      %p549 = pnand %p547, %p548
      %p550 = pneg %p549
      // Predicated region
      $region77: #{_lambda_.9} parent=5 // pred_check
        _
      $region78: #{_lambda_.9} parent=5 // pred_check_branch
        %552 = sbr.rel (%p549) target = $region80
      $region79: #{_lambda_.9} parent=5 // pred_region
        %s553 = ssub.s32 %s29, 1
        %s554 = sand.u32 %s94, 1
        %s555 = scalar_lea.sflag [#allocation3], %s554
        %s556 = sand.u32 %s94, 1
        %s557 = smul.addr %s556, 8
        %s558 = scalar_lea.vmem [#allocation2], %s557
        // Predicated region
        $region81: #{_lambda_.9} parent=79 // pred_check
          %p559 = pneg %p107
        $region82: #{_lambda_.9} parent=79 // pred_check_branch
          %561 = sbr.rel (%p559) target = $region84
        $region83: #{_lambda_.9} parent=79 // pred_region
          %562 = dma.done %s555, 128
        $region84: #{_lambda_.9} parent=79 // pred_fallthru
          _
        // Predicated region
        $region85: #{_lambda_.9} parent=79 // pred_check
          %p563 = pneg %p128
        $region86: #{_lambda_.9} parent=79 // pred_check_branch
          %565 = sbr.rel (%p563) target = $region88
        $region87: #{_lambda_.9} parent=79 // pred_region
          %566 = dma.done [#allocation5], 1024
        $region88: #{_lambda_.9} parent=79 // pred_fallthru
          _
        // Predicated region
        $region89: #{_lambda_.9} parent=79 // pred_check
          %p567 = pneg %p170
        $region90: #{_lambda_.9} parent=79 // pred_check_branch
          %569 = sbr.rel (%p567) target = $region92
        $region91: #{_lambda_.9} parent=79 // pred_region
          %570 = dma.done [#allocation5], 256
        $region92: #{_lambda_.9} parent=79 // pred_fallthru
          _
        // Predicated region
        $region93: #{_lambda_.9} parent=79 // pred_check
          %p571 = pneg %p233
        $region94: #{_lambda_.9} parent=79 // pred_check_branch
          %573 = sbr.rel (%p571) target = $region96
        $region95: #{_lambda_.9} parent=79 // pred_region
          %574 = dma.done [#allocation8], 256
        $region96: #{_lambda_.9} parent=79 // pred_fallthru
          _
        // Predicated region
        $region97: #{_lambda_.9} parent=79 // pred_check
          %p575 = pneg %p296
        $region98: #{_lambda_.9} parent=79 // pred_check_branch
          %577 = sbr.rel (%p575) target = $region100
        $region99: #{_lambda_.9} parent=79 // pred_region
          %578 = dma.done [#allocation8], 256
        $region100: #{_lambda_.9} parent=79 // pred_fallthru
          _
        // Predicated region
        $region101: #{_lambda_.9} parent=79 // pred_check
          %p579 = pneg %p338
        $region102: #{_lambda_.9} parent=79 // pred_check_branch
          %581 = sbr.rel (%p579) target = $region104
        $region103: #{_lambda_.9} parent=79 // pred_region
          %582 = dma.done [#allocation11], 256
        $region104: #{_lambda_.9} parent=79 // pred_fallthru
          _
        %p583 = scmp.lt.s32.totalorder %s34, 1
        %s584 = scalar_select %p583, %s34, 1
        %s585 = smul.addr %s584, 8
        %s586 = scalar_lea.vmem %s0, %s585
        %p587 = pneg %p55
        %p588 = pneg %p52
        %p589 = scmp.lt.s32.totalorder %s34, 1
        %s590 = scalar_select %p589, %s34, 1
        %s591 = scalar_lea.vmem %s1, %s590
        %p592 = pneg %p81
        %p593 = pneg %p78
        %s594 = sand.u32 %s94, 1
        %s595 = scalar_lea.sflag [#allocation3], %s594
        %s596 = sand.u32 %s94, 1
        %s597 = smul.addr %s596, 8
        %s598 = scalar_lea.vmem [#allocation2], %s597
        %p599 = pneg %p107
        %p600 = pneg %p104
        %p601 = pneg %p128
        %p602 = pneg %p125
        %p603 = pneg %p149
        %p604 = pneg %p146
        %p605 = pneg %p170
        %p606 = pneg %p167
        %p607 = pneg %p191
        %p608 = pneg %p188
        %p609 = pneg %p212
        %p610 = pneg %p209
        %p611 = pneg %p233
        %p612 = pneg %p230
        %p613 = pneg %p254
        %p614 = pneg %p251
        %p615 = pneg %p275
        %p616 = pneg %p272
        %p617 = pneg %p296
        %p618 = pneg %p293
        %p619 = pneg %p317
        %p620 = pneg %p314
        %p621 = pneg %p338
        %p622 = pneg %p335
        %p623 = pneg %p359
        %p624 = pneg %p356
        %p625 = pneg %p385
        %p626 = pneg %p382
        %p627 = scmp.lt.s32.totalorder %s34, 1
        %s628 = scalar_select %p627, %s34, 1
        %s629 = smul.addr %s628, 8
        %s630 = scalar_lea.vmem %s15, %s629
        %p631 = pneg %p411
        %p632 = pneg %p408
        %p633 = scmp.lt.s32.totalorder %s34, 1
        %s634 = scalar_select %p633, %s34, 1
        %s635 = smul.addr %s634, 8
        %s636 = scalar_lea.vmem %s16, %s635
        %p637 = scmp.lt.s32.totalorder %s34, 1
        %s638 = scalar_select %p637, %s34, 1
        %s639 = smul.addr %s638, 8
        %s640 = scalar_lea.vmem %s0, %s639
        %p641 = scmp.lt.s32.totalorder %s34, 1
        %s642 = scalar_select %p641, %s34, 1
        %s643 = scalar_lea.vmem %s1, %s642
        %p644 = scmp.lt.s32.totalorder %s34, 1
        %s645 = scalar_select %p644, %s34, 1
        %s646 = smul.addr %s645, 8
        %s647 = scalar_lea.vmem %s15, %s646
        %p648 = scmp.lt.s32.totalorder %s34, 1
        %s649 = scalar_select %p648, %s34, 1
        %s650 = smul.addr %s649, 8
        %s651 = scalar_lea.vmem %s16, %s650
        %v653 = vld [vmem:[%s640] sm:$0xff]
        %v654 = vld [vmem:[%s643] sm:$0x1]
        %v655 = vsub.f32 0.0, %v654
        %v656 = vmul.f32 %v655, 1.442695
        %v657 = vpow.pop %v656
        %v658 = vadd.f32 %v657, 1.0
        %v659 = vrcp.pop %v658
        %v660 = vmul.f32 %v654, %v659
        %v661 = vpack.c.bf16 %v660, %v660
        %v662 = vld [vmem:[#allocation4] sm:$0xf]
        %v663 = vld [vmem:[#allocation4 + $0x4] sm:$0xf]
        %v664 = vld [vmem:[#allocation4 + $0x8] sm:$0xf]
        %v665 = vld [vmem:[#allocation4 + $0xc] sm:$0xf]
        %v666 = vld [vmem:[#allocation4 + $0x10] sm:$0xf]
        %v667 = vld [vmem:[#allocation4 + $0x14] sm:$0xf]
        %v668 = vld [vmem:[#allocation4 + $0x18] sm:$0xf]
        %v669 = vld [vmem:[#allocation4 + $0x1c] sm:$0xf]
        %v670 = vld [vmem:[#allocation4 + $0x20] sm:$0xf]
        %v671 = vld [vmem:[#allocation4 + $0x24] sm:$0xf]
        %v672 = vld [vmem:[#allocation4 + $0x28] sm:$0xf]
        %v673 = vld [vmem:[#allocation4 + $0x2c] sm:$0xf]
        %v674 = vld [vmem:[#allocation4 + $0x30] sm:$0xf]
        %v675 = vld [vmem:[#allocation4 + $0x34] sm:$0xf]
        %v676 = vld [vmem:[#allocation4 + $0x38] sm:$0xf]
        %v677 = vld [vmem:[#allocation4 + $0x3c] sm:$0xf]
        %v678 = vld [vmem:[%s4] sm:$0x1]
        %v695 = vunpack.c.l.b16 %v662
        %v696 = vunpack.c.l.b16 %v663
        %v697 = vunpack.c.l.b16 %v664
        %v698 = vunpack.c.l.b16 %v665
        %v699 = vunpack.c.l.b16 %v666
        %v700 = vunpack.c.l.b16 %v667
        %v701 = vunpack.c.l.b16 %v668
        %v702 = vunpack.c.l.b16 %v669
        %v703 = vunpack.c.l.b16 %v670
        %v704 = vunpack.c.l.b16 %v671
        %v705 = vunpack.c.l.b16 %v672
        %v706 = vunpack.c.l.b16 %v673
        %v707 = vunpack.c.l.b16 %v674
        %v708 = vunpack.c.l.b16 %v675
        %v709 = vunpack.c.l.b16 %v676
        %v710 = vunpack.c.l.b16 %v677
        %v711 = vpack.c.b16 %v696, %v695
        %v712 = vpack.c.b16 %v698, %v697
        %v713 = vpack.c.b16 %v700, %v699
        %v714 = vpack.c.b16 %v702, %v701
        %v715 = vpack.c.b16 %v704, %v703
        %v716 = vpack.c.b16 %v706, %v705
        %v717 = vpack.c.b16 %v708, %v707
        %v718 = vpack.c.b16 %v710, %v709
        %727 = vmatprep.subr.bf16.mxu0 0
        %728 = vmatpush1.bf16.msra.mxu0 %v711
        %729 = vmatprep.subr.bf16.mxu0 0
        %730 = vmatpush1.bf16.msra.mxu0 %v712
        %731 = vmatprep.subr.bf16.mxu0 0
        %732 = vmatpush1.bf16.msra.mxu0 %v713
        %733 = vmatprep.subr.bf16.mxu0 0
        %734 = vmatpush1.bf16.msra.mxu0 %v714
        %735 = vmatprep.subr.bf16.mxu0 0
        %736 = vmatpush1.bf16.msra.mxu0 %v715
        %737 = vmatprep.subr.bf16.mxu0 0
        %738 = vmatpush1.bf16.msra.mxu0 %v716
        %739 = vmatprep.subr.bf16.mxu0 0
        %740 = vmatpush1.bf16.msra.mxu0 %v717
        %741 = vmatprep.subr.bf16.mxu0 0
        %742 = vmatpush1.bf16.msra.mxu0 %v718
        %743 = vmatprep.subr.bf16.mxu0 0
        %744 = vmatpush1.bf16.msra.mxu0 0
        %745 = vmatprep.subr.bf16.mxu0 0
        %746 = vmatpush1.bf16.msra.mxu0 0
        %747 = vmatprep.subr.bf16.mxu0 0
        %748 = vmatpush1.bf16.msra.mxu0 0
        %749 = vmatprep.subr.bf16.mxu0 0
        %750 = vmatpush1.bf16.msra.mxu0 0
        %751 = vmatprep.subr.bf16.mxu0 0
        %752 = vmatpush1.bf16.msra.mxu0 0
        %753 = vmatprep.subr.bf16.mxu0 0
        %754 = vmatpush1.bf16.msra.mxu0 0
        %755 = vmatprep.subr.bf16.mxu0 0
        %756 = vmatpush1.bf16.msra.mxu0 0
        %757 = vmatprep.subr.bf16.mxu0 0
        %758 = vmatpush1.bf16.msra.mxu0 0
        %759 = vmatprep.mubr.bf16.mxu0 0
        %760 = vmatmul.mubr.bf16.gmra.mrb[0].mxu0 %v661
        %v761 = vpop.f32.mrb[0].mxu0
        %v762 = vadd.f32 %v678, %v761
        %v763 = vpop.f32.mrb[0].mxu0
        %v764 = vpop.f32.mrb[0].mxu0
        %v765 = vpop.f32.mrb[0].mxu0
        %766 = vdwg.mxu0
        %v767 = vadd.f32 %v762, 1.0
        %v768 = vlaneseq
        %v769 = vshrl.u32 %v768, 7
        %v770 = vsub.s32 0, %v769
        %v771 = vrot.slane %v767, %v770
        %v772 = vmul.f32 %v653, %v771
        %v773 = vlaneseq
        %v774 = vshrl.u32 %v773, 7
        %v775 = vsub.s32 0, %v774
        %v776 = vrot.slane %v762, %v775
        %778 = vrot.lane.b32.xlu0 %v776, 96
        %v779 = vpop.permute.xlu0 %778
        %v781 = vadd.f32 %v772, %v779
        %v782 = vpack.c.bf16 %v781, %v781
        %v783 = vld [vmem:[#allocation6] sm:$0xf]
        %v784 = vld [vmem:[#allocation6 + $0x4] sm:$0xf]
        %v785 = vld [vmem:[#allocation6 + $0x8] sm:$0xf]
        %v786 = vld [vmem:[#allocation6 + $0xc] sm:$0xf]
        %v791 = vunpack.c.l.b16 %v783
        %v792 = vunpack.c.l.b16 %v784
        %v793 = vunpack.c.l.b16 %v785
        %v794 = vunpack.c.l.b16 %v786
        %v795 = vpack.c.b16 %v792, %v791
        %v796 = vpack.c.b16 %v794, %v793
        %vm799 = vcmask 261120
        %v801 = vsel %vm799, %v782, 0
        %803 = vmatprep.subr.bf16.mxu0 0
        %804 = vmatpush1.bf16.msra.mxu0 %v795
        %805 = vmatprep.subr.bf16.mxu0 0
        %806 = vmatpush1.bf16.msra.mxu0 %v796
        %807 = vmatprep.subr.bf16.mxu0 0
        %808 = vmatpush1.bf16.msra.mxu0 0
        %809 = vmatprep.subr.bf16.mxu0 0
        %810 = vmatpush1.bf16.msra.mxu0 0
        %811 = vmatprep.subr.bf16.mxu0 0
        %812 = vmatpush1.bf16.msra.mxu0 0
        %813 = vmatprep.subr.bf16.mxu0 0
        %814 = vmatpush1.bf16.msra.mxu0 0
        %815 = vmatprep.subr.bf16.mxu0 0
        %816 = vmatpush1.bf16.msra.mxu0 0
        %817 = vmatprep.subr.bf16.mxu0 0
        %818 = vmatpush1.bf16.msra.mxu0 0
        %819 = vmatprep.subr.bf16.mxu0 0
        %820 = vmatpush1.bf16.msra.mxu0 0
        %821 = vmatprep.subr.bf16.mxu0 0
        %822 = vmatpush1.bf16.msra.mxu0 0
        %823 = vmatprep.subr.bf16.mxu0 0
        %824 = vmatpush1.bf16.msra.mxu0 0
        %825 = vmatprep.subr.bf16.mxu0 0
        %826 = vmatpush1.bf16.msra.mxu0 0
        %827 = vmatprep.subr.bf16.mxu0 0
        %828 = vmatpush1.bf16.msra.mxu0 0
        %829 = vmatprep.subr.bf16.mxu0 0
        %830 = vmatpush1.bf16.msra.mxu0 0
        %831 = vmatprep.subr.bf16.mxu0 0
        %832 = vmatpush1.bf16.msra.mxu0 0
        %833 = vmatprep.subr.bf16.mxu0 0
        %834 = vmatpush1.bf16.msra.mxu0 0
        %835 = vmatprep.mubr.bf16.mxu0 0
        %836 = vmatmul.mubr.bf16.gmra.mrb[0].mxu0 %v801
        %v837 = vpop.f32.mrb[0].mxu0
        %v838 = vadd.f32 0.0, %v837
        %v839 = vpop.f32.mrb[0].mxu0
        %v840 = vpop.f32.mrb[0].mxu0
        %v841 = vpop.f32.mrb[0].mxu0
        %842 = vdwg.mxu0
        %v843 = vld [vmem:[%s6] sm:$0x1]
        %v844 = vld [vmem:[%s7] sm:$0x1]
        %v845 = vsel %vm799, %v838, 0.0
        %846 = vadd.xlane.f32.xlu0 %v845
        %v847 = vpop.xlane.xlu0 %846
        %v848 = vrcp.pop 32.0
        %v849 = vmul.f32 %v847, %v848
        %v850 = vsub.f32 %v838, %v849
        %v851 = vmul.f32 %v850, %v850
        %v852 = vsel %vm799, %v851, 0.0
        %853 = vadd.xlane.f32.xlu0 %v852
        %v854 = vpop.xlane.xlu0 %853
        %v855 = vmul.f32 %v854, %v848
        %v856 = vadd.f32 %v855, 1e-05
        %v857 = vrsqrt.pop %v856
        %v858 = vmul.f32 %v850, %v857
        %v860 = vlaneseq
        %v861 = vshrl.u32 %v860, 7
        %v862 = vsub.s32 0, %v861
        %v863 = vrot.slane %v843, %v862
        %v865 = vmul.f32 %v858, %v863
        %v867 = vlaneseq
        %v868 = vshrl.u32 %v867, 7
        %v869 = vsub.s32 0, %v868
        %v870 = vrot.slane %v844, %v869
        %v872 = vadd.f32 %v865, %v870
        %v873 = vmax.f32 %v872, 0.0
        %v874 = vld [vmem:[#allocation7] sm:$0xf]
        %v875 = vld [vmem:[#allocation7 + $0x4] sm:$0xf]
        %v876 = vld [vmem:[#allocation7 + $0x8] sm:$0xf]
        %v877 = vld [vmem:[#allocation7 + $0xc] sm:$0xf]
        %v882 = vunpack.c.l.b16 %v874
        %v883 = vunpack.c.l.b16 %v875
        %v884 = vunpack.c.l.b16 %v876
        %v885 = vunpack.c.l.b16 %v877
        %v886 = vpack.c.b16 %v883, %v882
        %v887 = vpack.c.b16 %v885, %v884
        %890 = vmatprep.subr.bf16.mxu0 0
        %891 = vmatpush1.bf16.msra.mxu0 %v886
        %892 = vmatprep.subr.bf16.mxu0 0
        %893 = vmatpush1.bf16.msra.mxu0 %v887
        %894 = vmatprep.subr.bf16.mxu0 0
        %895 = vmatpush1.bf16.msra.mxu0 0
        %896 = vmatprep.subr.bf16.mxu0 0
        %897 = vmatpush1.bf16.msra.mxu0 0
        %898 = vmatprep.subr.bf16.mxu0 0
        %899 = vmatpush1.bf16.msra.mxu0 0
        %900 = vmatprep.subr.bf16.mxu0 0
        %901 = vmatpush1.bf16.msra.mxu0 0
        %902 = vmatprep.subr.bf16.mxu0 0
        %903 = vmatpush1.bf16.msra.mxu0 0
        %904 = vmatprep.subr.bf16.mxu0 0
        %905 = vmatpush1.bf16.msra.mxu0 0
        %906 = vmatprep.subr.bf16.mxu0 0
        %907 = vmatpush1.bf16.msra.mxu0 0
        %908 = vmatprep.subr.bf16.mxu0 0
        %909 = vmatpush1.bf16.msra.mxu0 0
        %910 = vmatprep.subr.bf16.mxu0 0
        %911 = vmatpush1.bf16.msra.mxu0 0
        %912 = vmatprep.subr.bf16.mxu0 0
        %913 = vmatpush1.bf16.msra.mxu0 0
        %914 = vmatprep.subr.bf16.mxu0 0
        %915 = vmatpush1.bf16.msra.mxu0 0
        %916 = vmatprep.subr.bf16.mxu0 0
        %917 = vmatpush1.bf16.msra.mxu0 0
        %918 = vmatprep.subr.bf16.mxu0 0
        %919 = vmatpush1.bf16.msra.mxu0 0
        %920 = vmatprep.subr.bf16.mxu0 0
        %921 = vmatpush1.bf16.msra.mxu0 0
        %922 = vmatprep.mubr.bf16.mxu0 0
        %923 = vmatmul.mubr.bf16.gmra.mrb[0].mxu0 %v801
        %v924 = vpop.f32.mrb[0].mxu0
        %v925 = vadd.f32 0.0, %v924
        %v926 = vpop.f32.mrb[0].mxu0
        %v927 = vpop.f32.mrb[0].mxu0
        %v928 = vpop.f32.mrb[0].mxu0
        %929 = vdwg.mxu0
        %v930 = vld [vmem:[%s9] sm:$0x1]
        %v931 = vld [vmem:[%s10] sm:$0x1]
        %v932 = vsel %vm799, %v925, 0.0
        %933 = vadd.xlane.f32.xlu0 %v932
        %v934 = vpop.xlane.xlu0 %933
        %v935 = vmul.f32 %v934, %v848
        %v936 = vsub.f32 %v925, %v935
        %v937 = vmul.f32 %v936, %v936
        %v938 = vsel %vm799, %v937, 0.0
        %939 = vadd.xlane.f32.xlu0 %v938
        %v940 = vpop.xlane.xlu0 %939
        %v941 = vmul.f32 %v940, %v848
        %v942 = vadd.f32 %v941, 1e-05
        %v943 = vrsqrt.pop %v942
        %v944 = vmul.f32 %v936, %v943
        %v946 = vlaneseq
        %v947 = vshrl.u32 %v946, 7
        %v948 = vsub.s32 0, %v947
        %v949 = vrot.slane %v930, %v948
        %v951 = vmul.f32 %v944, %v949
        %v953 = vlaneseq
        %v954 = vshrl.u32 %v953, 7
        %v955 = vsub.s32 0, %v954
        %v956 = vrot.slane %v931, %v955
        %v958 = vadd.f32 %v951, %v956
        %v959 = vmax.f32 %v958, 0.0
        %v960 = vpack.c.bf16 %v873, %v873
        %v961 = vld [vmem:[#allocation9] sm:$0xf]
        %v962 = vld [vmem:[#allocation9 + $0x4] sm:$0xf]
        %v963 = vld [vmem:[#allocation9 + $0x8] sm:$0xf]
        %v964 = vld [vmem:[#allocation9 + $0xc] sm:$0xf]
        %v965 = vld [vmem:[%s12] sm:$0x1]
        %v967 = vlaneseq
        %v968 = vshrl.u32 %v967, 7
        %v969 = vsub.s32 0, %v968
        %v970 = vrot.slane %v965, %v969
        %v976 = vunpack.c.l.b16 %v961
        %v977 = vunpack.c.l.b16 %v962
        %v978 = vunpack.c.l.b16 %v963
        %v979 = vunpack.c.l.b16 %v964
        %v980 = vpack.c.b16 %v977, %v976
        %v981 = vpack.c.b16 %v979, %v978
        %v985 = vsel %vm799, %v960, 0
        %987 = vmatprep.subr.bf16.mxu0 0
        %988 = vmatpush1.bf16.msra.mxu0 %v980
        %989 = vmatprep.subr.bf16.mxu0 0
        %990 = vmatpush1.bf16.msra.mxu0 %v981
        %991 = vmatprep.subr.bf16.mxu0 0
        %992 = vmatpush1.bf16.msra.mxu0 0
        %993 = vmatprep.subr.bf16.mxu0 0
        %994 = vmatpush1.bf16.msra.mxu0 0
        %995 = vmatprep.subr.bf16.mxu0 0
        %996 = vmatpush1.bf16.msra.mxu0 0
        %997 = vmatprep.subr.bf16.mxu0 0
        %998 = vmatpush1.bf16.msra.mxu0 0
        %999 = vmatprep.subr.bf16.mxu0 0
        %1000 = vmatpush1.bf16.msra.mxu0 0
        %1001 = vmatprep.subr.bf16.mxu0 0
        %1002 = vmatpush1.bf16.msra.mxu0 0
        %1003 = vmatprep.subr.bf16.mxu0 0
        %1004 = vmatpush1.bf16.msra.mxu0 0
        %1005 = vmatprep.subr.bf16.mxu0 0
        %1006 = vmatpush1.bf16.msra.mxu0 0
        %1007 = vmatprep.subr.bf16.mxu0 0
        %1008 = vmatpush1.bf16.msra.mxu0 0
        %1009 = vmatprep.subr.bf16.mxu0 0
        %1010 = vmatpush1.bf16.msra.mxu0 0
        %1011 = vmatprep.subr.bf16.mxu0 0
        %1012 = vmatpush1.bf16.msra.mxu0 0
        %1013 = vmatprep.subr.bf16.mxu0 0
        %1014 = vmatpush1.bf16.msra.mxu0 0
        %1015 = vmatprep.subr.bf16.mxu0 0
        %1016 = vmatpush1.bf16.msra.mxu0 0
        %1017 = vmatprep.subr.bf16.mxu0 0
        %1018 = vmatpush1.bf16.msra.mxu0 0
        %1019 = vmatprep.mubr.bf16.mxu0 0
        %1020 = vmatmul.mubr.bf16.gmra.mrb[0].mxu0 %v985
        %v1021 = vpop.f32.mrb[0].mxu0
        %v1022 = vadd.f32 %v970, %v1021
        %v1023 = vpop.f32.mrb[0].mxu0
        %v1024 = vpop.f32.mrb[0].mxu0
        %v1025 = vpop.f32.mrb[0].mxu0
        %1026 = vdwg.mxu0
        %v1027 = vpack.c.bf16 %v959, %v959
        %v1028 = vld [vmem:[#allocation10] sm:$0xf]
        %v1029 = vld [vmem:[#allocation10 + $0x4] sm:$0xf]
        %v1030 = vld [vmem:[#allocation10 + $0x8] sm:$0xf]
        %v1031 = vld [vmem:[#allocation10 + $0xc] sm:$0xf]
        %v1032 = vld [vmem:[%s14] sm:$0x1]
        %v1034 = vlaneseq
        %v1035 = vshrl.u32 %v1034, 7
        %v1036 = vsub.s32 0, %v1035
        %v1037 = vrot.slane %v1032, %v1036
        %v1043 = vunpack.c.l.b16 %v1028
        %v1044 = vunpack.c.l.b16 %v1029
        %v1045 = vunpack.c.l.b16 %v1030
        %v1046 = vunpack.c.l.b16 %v1031
        %v1047 = vpack.c.b16 %v1044, %v1043
        %v1048 = vpack.c.b16 %v1046, %v1045
        %v1052 = vsel %vm799, %v1027, 0
        %1054 = vmatprep.subr.bf16.mxu0 0
        %1055 = vmatpush1.bf16.msra.mxu0 %v1047
        %1056 = vmatprep.subr.bf16.mxu0 0
        %1057 = vmatpush1.bf16.msra.mxu0 %v1048
        %1058 = vmatprep.subr.bf16.mxu0 0
        %1059 = vmatpush1.bf16.msra.mxu0 0
        %1060 = vmatprep.subr.bf16.mxu0 0
        %1061 = vmatpush1.bf16.msra.mxu0 0
        %1062 = vmatprep.subr.bf16.mxu0 0
        %1063 = vmatpush1.bf16.msra.mxu0 0
        %1064 = vmatprep.subr.bf16.mxu0 0
        %1065 = vmatpush1.bf16.msra.mxu0 0
        %1066 = vmatprep.subr.bf16.mxu0 0
        %1067 = vmatpush1.bf16.msra.mxu0 0
        %1068 = vmatprep.subr.bf16.mxu0 0
        %1069 = vmatpush1.bf16.msra.mxu0 0
        %1070 = vmatprep.subr.bf16.mxu0 0
        %1071 = vmatpush1.bf16.msra.mxu0 0
        %1072 = vmatprep.subr.bf16.mxu0 0
        %1073 = vmatpush1.bf16.msra.mxu0 0
        %1074 = vmatprep.subr.bf16.mxu0 0
        %1075 = vmatpush1.bf16.msra.mxu0 0
        %1076 = vmatprep.subr.bf16.mxu0 0
        %1077 = vmatpush1.bf16.msra.mxu0 0
        %1078 = vmatprep.subr.bf16.mxu0 0
        %1079 = vmatpush1.bf16.msra.mxu0 0
        %1080 = vmatprep.subr.bf16.mxu0 0
        %1081 = vmatpush1.bf16.msra.mxu0 0
        %1082 = vmatprep.subr.bf16.mxu0 0
        %1083 = vmatpush1.bf16.msra.mxu0 0
        %1084 = vmatprep.subr.bf16.mxu0 0
        %1085 = vmatpush1.bf16.msra.mxu0 0
        %1086 = vmatprep.mubr.bf16.mxu0 0
        %1087 = vmatmul.mubr.bf16.gmra.mrb[0].mxu0 %v1052
        %v1088 = vpop.f32.mrb[0].mxu0
        %v1089 = vadd.f32 %v1037, %v1088
        %v1090 = vpop.f32.mrb[0].mxu0
        %v1091 = vpop.f32.mrb[0].mxu0
        %v1092 = vpop.f32.mrb[0].mxu0
        %1093 = vdwg.mxu0
        %v1094 = vld [vmem:[%s558] sm:$0xff]
        %v1095 = vmin.f32 %v1089, 8.740336
        %1096 = vst [vmem:[%s647] sm:$0xff] %v1022
        %1098 = vrot.lane.b32.xlu0 %v1094, 127
        %v1099 = vpop.permute.xlu0 %1098
        %v1101 = vmul.f32 %v1089, %v1099
        %v1102 = vadd.f32 %v1101, %v1094
        %v1103 = vmul.f32 %v1095, 1.442695
        %v1104 = vpow.pop %v1103
        %v1105 = vmul.f32 %v1104, %v1094
        %vm1106 = vcmask 7168
        %v1107 = vsel %vm1106, %v1102, %v1105
        %vm1108 = vcmask 15360
        %1109 = vst.msk [vmem:[%s651] sm:$0xff] %vm1108, %v1107
        %p1110 = scmp.lt.s32.totalorder %s34, 1
        %s1111 = scalar_select %p1110, %s34, 1
        %s1112 = smul.addr %s1111, 8
        %s1113 = scalar_lea.vmem %s15, %s1112
        %p1114 = scmp.lt.s32.totalorder %s34, 1
        %s1115 = scalar_select %p1114, %s34, 1
        %s1116 = smul.addr %s1115, 8
        %s1117 = scalar_lea.vmem %s16, %s1116
        // Predicated region
        $region105: #{_lambda_.9} parent=79 // pred_check
          %p1118 = pneg %p382
        $region106: #{_lambda_.9} parent=79 // pred_check_branch
          %1120 = sbr.rel (%p1118) target = $region108
        $region107: #{_lambda_.9} parent=79 // pred_region
          _
        $region108: #{_lambda_.9} parent=79 // pred_fallthru
          _
        // Predicated region
        $region109: #{_lambda_.9} parent=79 // pred_check
          %p1121 = pneg %p408
        $region110: #{_lambda_.9} parent=79 // pred_check_branch
          %1123 = sbr.rel (%p1121) target = $region112
        $region111: #{_lambda_.9} parent=79 // pred_region
          _
        $region112: #{_lambda_.9} parent=79 // pred_fallthru
          _
      $region80: #{_lambda_.9} parent=5 // pred_fallthru
        _
      %p1124 = scmp.le.s32.totalorder 2, %s29
      // Predicated region
      $region113: #{_lambda_.9} parent=5 // pred_check
        %p1125 = pneg %p1124
      $region114: #{_lambda_.9} parent=5 // pred_check_branch
        %1127 = sbr.rel (%p1125) target = $region116
      $region115: #{_lambda_.9} parent=5 // pred_region
        %s1128 = ssub.s32 %s29, 2
        // Predicated region
        $region117: #{_lambda_.9} parent=115 // pred_check
          %p1129 = pneg %p388
        $region118: #{_lambda_.9} parent=115 // pred_check_branch
          %1131 = sbr.rel (%p1129) target = $region120
        $region119: #{_lambda_.9} parent=115 // pred_region
          %p1132 = scmp.lt.s32.totalorder %s35, 1
          %s1133 = scalar_select %p1132, %s35, 1
          %s1134 = smul.addr %s1133, 8
          %s1135 = scalar_lea.vmem %s15, %s1134
        $region120: #{_lambda_.9} parent=115 // pred_fallthru
          _
        // Predicated region
        $region121: #{_lambda_.9} parent=115 // pred_check
          %p1136 = pneg %p414
        $region122: #{_lambda_.9} parent=115 // pred_check_branch
          %1138 = sbr.rel (%p1136) target = $region124
        $region123: #{_lambda_.9} parent=115 // pred_region
          %p1139 = scmp.lt.s32.totalorder %s35, 1
          %s1140 = scalar_select %p1139, %s35, 1
          %s1141 = smul.addr %s1140, 8
          %s1142 = scalar_lea.vmem %s16, %s1141
        $region124: #{_lambda_.9} parent=115 // pred_fallthru
          _
      $region116: #{_lambda_.9} parent=5 // pred_fallthru
        _
    $region6: #{_lambda_.9} parent=1 // loop_footer
      %s33 = sadd.s32 1, %s29
    $region7: #{_lambda_.9} parent=1 // loop_footer_branch
      %28 = sbr.rel target = $region3
    $region8: #{_lambda_.9} parent=1 // loop_exit
      _
    %1143 = vsyncpa [#allocation3], 1
    %s1144 = scalar_lea.sflag [#allocation3], 1
    %1145 = vsyncpa %s1144, 1
    %1146 = vsyncpa [#allocation5], 1
    %1147 = vsyncpa [#allocation8], 1
    %1148 = vsyncpa [#allocation11], 1

// kernel: _lambda_.8
$region0: #{_lambda_.8}
  #allocation0 [shape = 'u32[]', space=smem, size = 0x4, offset = 0x4, fixed_abs, tag = 'smem constant byte address 0x4 - core index']
  #allocation1 [shape = 'u32[144,128]{1,0:T(1,128)}', space=vmem, size = 0x12000, scoped, tag = 'internal scratch']
  %s0 = inlined_call_operand.hbm [shape: bf16[16,4,32], index: 0, kind: input, shape index: {}]
  %s1 = inlined_call_operand.hbm [shape: bf16[16,32,8], index: 1, kind: input, shape index: {}]
  %s2 = inlined_call_operand.hbm [shape: bf16[16,8,32], index: 2, kind: input, shape index: {}]
  %s3 = inlined_call_operand.hbm [shape: f32[16,32], index: 3, kind: input, shape index: {}]
  %s4 = inlined_call_operand.hbm [shape: f32[1,8], index: 4, kind: input, shape index: {}]
  %s5 = inlined_call_operand.hbm [shape: f32[1,8], index: 5, kind: input, shape index: {}]
  %s6 = inlined_call_operand.hbm [shape: f32[1,32], index: 6, kind: input, shape index: {}, may-alias: {6,10,12,18}]
  %s7 = inlined_call_operand.hbm [shape: f32[1,32], index: 7, kind: input, shape index: {}, may-alias: {7,11,13,19}]
  %s8 = inlined_call_operand.hbm [shape: bf16[4,32,32], index: 8, kind: input, shape index: {}]
  %s9 = inlined_call_operand.hbm [shape: f32[1,32], index: 9, kind: input, shape index: {}]
  %s10 = inlined_call_operand.hbm [shape: f32[1,32], index: 10, kind: input, shape index: {}, may-alias: {6,10,12,18}]
  %s11 = inlined_call_operand.hbm [shape: f32[1,32], index: 11, kind: input, shape index: {}, may-alias: {7,11,13,19}]
  %s12 = inlined_call_operand.hbm [shape: f32[1,32], index: 12, kind: input, shape index: {}, may-alias: {6,10,12,18}]
  %s13 = inlined_call_operand.hbm [shape: f32[1,32], index: 13, kind: input, shape index: {}, may-alias: {7,11,13,19}]
  %s14 = inlined_call_operand.hbm [shape: bf16[32,64], index: 14, kind: input, shape index: {}]
  %s15 = inlined_call_operand.hbm [shape: f32[1,64], index: 15, kind: input, shape index: {}]
  %s16 = inlined_call_operand.hbm [shape: bf16[64,32], index: 16, kind: input, shape index: {}]
  %s17 = inlined_call_operand.hbm [shape: f32[1,32], index: 17, kind: input, shape index: {}]
  %s18 = inlined_call_operand.hbm [shape: f32[1,32], index: 18, kind: input, shape index: {}, may-alias: {6,10,12,18}]
  %s19 = inlined_call_operand.hbm [shape: f32[1,32], index: 19, kind: input, shape index: {}, may-alias: {7,11,13,19}]
  %s20 = inlined_call_operand.hbm [shape: f32[16,32], index: 20, kind: output, shape index: {}]
  %s21 = sld [smem:[#allocation0]]
  $region170: #{_lambda_.8} parent=0
    _
  %s23 = ssub.s32 1, %s21
  %s24 = scalar_select 0, %s23, %s21
  $region1: #{_lambda_.8} parent=0
    #allocation2 [shape = 'u8[16384]{0}', space=vmem, size = 0x4000, scoped, tag = 'input window, operand 0, single buffered']
    #allocation3 [shape = 's32[1]{0}', space=sflag, size = 0x4, scoped, tag = 'scoped memory for _lambda_.8']
    #allocation4 [shape = 's32[1]{0}', space=sflag, size = 0x4, scoped, tag = 'scoped memory for _lambda_.8']
    #allocation5 [shape = 'u8[131072]{0}', space=vmem, size = 0x20000, scoped, tag = 'input window, operand 1, single buffered']
    #allocation6 [shape = 's32[1]{0}', space=sflag, size = 0x4, scoped, tag = 'scoped memory for _lambda_.8']
    #allocation7 [shape = 'u8[32768]{0}', space=vmem, size = 0x8000, scoped, tag = 'input window, operand 2, single buffered']
    #allocation8 [shape = 'u8[8192]{0}', space=vmem, size = 0x2000, scoped, tag = 'input window, operand 3, single buffered']
    #allocation9 [shape = 's32[1]{0}', space=sflag, size = 0x4, scoped, tag = 'scoped memory for _lambda_.8']
    #allocation10 [shape = 'u8[512]{0}', space=vmem, size = 0x400, scoped, tag = 'input window, operand 4, single buffered']
    #allocation11 [shape = 'u8[512]{0}', space=vmem, size = 0x400, scoped, tag = 'input window, operand 5, single buffered']
    #allocation12 [shape = 's32[1]{0}', space=sflag, size = 0x4, scoped, tag = 'scoped memory for _lambda_.8']
    #allocation13 [shape = 'u8[512]{0}', space=vmem, size = 0x400, scoped, tag = 'input window, operand 6, single buffered']
    #allocation14 [shape = 'u8[512]{0}', space=vmem, size = 0x400, scoped, tag = 'input window, operand 7, single buffered']
    #allocation15 [shape = 's32[1]{0}', space=sflag, size = 0x4, scoped, tag = 'scoped memory for _lambda_.8']
    #allocation16 [shape = 'u8[32768]{0}', space=vmem, size = 0x8000, scoped, tag = 'input window, operand 8, single buffered']
    #allocation17 [shape = 'u8[512]{0}', space=vmem, size = 0x400, scoped, tag = 'input window, operand 9, single buffered']
    #allocation18 [shape = 's32[1]{0}', space=sflag, size = 0x4, scoped, tag = 'scoped memory for _lambda_.8']
    #allocation19 [shape = 'u8[512]{0}', space=vmem, size = 0x400, scoped, tag = 'input window, operand 10, single buffered']
    #allocation20 [shape = 'u8[512]{0}', space=vmem, size = 0x400, scoped, tag = 'input window, operand 11, single buffered']
    #allocation21 [shape = 's32[1]{0}', space=sflag, size = 0x4, scoped, tag = 'scoped memory for _lambda_.8']
    #allocation22 [shape = 'u8[512]{0}', space=vmem, size = 0x400, scoped, tag = 'input window, operand 12, single buffered']
    #allocation23 [shape = 'u8[512]{0}', space=vmem, size = 0x400, scoped, tag = 'input window, operand 13, single buffered']
    #allocation24 [shape = 's32[1]{0}', space=sflag, size = 0x4, scoped, tag = 'scoped memory for _lambda_.8']
    #allocation25 [shape = 'u8[8192]{0}', space=vmem, size = 0x2000, scoped, tag = 'input window, operand 14, single buffered']
    #allocation26 [shape = 'u8[512]{0}', space=vmem, size = 0x400, scoped, tag = 'input window, operand 15, single buffered']
    #allocation27 [shape = 's32[1]{0}', space=sflag, size = 0x4, scoped, tag = 'scoped memory for _lambda_.8']
    #allocation28 [shape = 'u8[16384]{0}', space=vmem, size = 0x4000, scoped, tag = 'input window, operand 16, single buffered']
    #allocation29 [shape = 'u8[512]{0}', space=vmem, size = 0x400, scoped, tag = 'input window, operand 17, single buffered']
    #allocation30 [shape = 's32[1]{0}', space=sflag, size = 0x4, scoped, tag = 'scoped memory for _lambda_.8']
    #allocation31 [shape = 'u8[512]{0}', space=vmem, size = 0x400, scoped, tag = 'input window, operand 18, single buffered']
    #allocation32 [shape = 'u8[512]{0}', space=vmem, size = 0x400, scoped, tag = 'input window, operand 19, single buffered']
    #allocation33 [shape = 's32[1]{0}', space=sflag, size = 0x4, scoped, tag = 'scoped memory for _lambda_.8']
    #allocation34 [shape = 'u8[8192]{0}', space=vmem, size = 0x2000, scoped, tag = 'output window, operand 0, single buffered']
    %25 = vsyncpa [#allocation3], 0
    %26 = vsyncpa [#allocation6], 0
    %27 = vsyncpa [#allocation9], 0
    %28 = vsyncpa [#allocation12], 0
    %29 = vsyncpa [#allocation15], 0
    %30 = vsyncpa [#allocation18], 0
    %31 = vsyncpa [#allocation21], 0
    %32 = vsyncpa [#allocation24], 0
    %33 = vsyncpa [#allocation27], 0
    %34 = vsyncpa [#allocation30], 0
    %35 = vsyncpa [#allocation33], 0
    %36 = vsyncpa [#allocation4], 0
    // Predicated region
    $region2: #{_lambda_.8} parent=1 // pred_check
      _
    $region3: #{_lambda_.8} parent=1 // pred_check_branch
      %38 = sbr.rel (0) target = $region5
    $region4: #{_lambda_.8} parent=1 // pred_region
      %s40 = ssub.s32 512, 512
      %41 = vsyncadd [#allocation3], %s40
      %s42 = sshll.u32 [#allocation2], 4
      %s43 = int_to_ptr.vmem [resolvable:$true] %s42
      %48 = dma.hbm_to_vmem [thread:$0]  %s0, 512, %s43, [#allocation3], 32, 32, 2
    $region5: #{_lambda_.8} parent=1 // pred_fallthru
      _
    // Predicated region
    $region6: #{_lambda_.8} parent=1 // pred_check
      _
    $region7: #{_lambda_.8} parent=1 // pred_check_branch
      %50 = sbr.rel (0) target = $region9
    $region8: #{_lambda_.8} parent=1 // pred_region
      %s52 = ssub.s32 4096, 4096
      %53 = vsyncadd [#allocation6], %s52
      %s54 = sshll.u32 [#allocation5], 4
      %s55 = int_to_ptr.vmem [resolvable:$true] %s54
      %60 = dma.hbm_to_vmem [thread:$0]  %s1, 4096, %s55, [#allocation6], 64, 64, 4
    $region9: #{_lambda_.8} parent=1 // pred_fallthru
      _
    // Predicated region
    $region10: #{_lambda_.8} parent=1 // pred_check
      _
    $region11: #{_lambda_.8} parent=1 // pred_check_branch
      %62 = sbr.rel (0) target = $region13
    $region12: #{_lambda_.8} parent=1 // pred_region
      %s64 = ssub.s32 1024, 1024
      %65 = vsyncadd [#allocation6], %s64
      %s66 = sshll.u32 [#allocation7], 4
      %s67 = int_to_ptr.vmem [resolvable:$true] %s66
      %72 = dma.hbm_to_vmem [thread:$0]  %s2, 1024, %s67, [#allocation6], 64, 64, 4
    $region13: #{_lambda_.8} parent=1 // pred_fallthru
      _
    // Predicated region
    $region14: #{_lambda_.8} parent=1 // pred_check
      _
    $region15: #{_lambda_.8} parent=1 // pred_check_branch
      %74 = sbr.rel (0) target = $region17
    $region16: #{_lambda_.8} parent=1 // pred_region
      %s76 = ssub.s32 256, 256
      %77 = vsyncadd [#allocation9], %s76
      %s78 = sshll.u32 [#allocation8], 4
      %s79 = int_to_ptr.vmem [resolvable:$true] %s78
      %84 = dma.hbm_to_vmem [thread:$0]  %s3, 256, %s79, [#allocation9], 128, 128, 8
    $region17: #{_lambda_.8} parent=1 // pred_fallthru
      _
    // Predicated region
    $region18: #{_lambda_.8} parent=1 // pred_check
      _
    $region19: #{_lambda_.8} parent=1 // pred_check_branch
      %86 = sbr.rel (0) target = $region21
    $region20: #{_lambda_.8} parent=1 // pred_region
      %s88 = ssub.s32 16, 16
      %89 = vsyncadd [#allocation9], %s88
      %s91 = sshll.u32 [#allocation10], 4
      %s92 = int_to_ptr.vmem [resolvable:$true] %s91
      %94 = dma.hbm_to_vmem [thread:$0]  %s4, 16, %s92, [#allocation9]
    $region21: #{_lambda_.8} parent=1 // pred_fallthru
      _
    // Predicated region
    $region22: #{_lambda_.8} parent=1 // pred_check
      _
    $region23: #{_lambda_.8} parent=1 // pred_check_branch
      %96 = sbr.rel (0) target = $region25
    $region24: #{_lambda_.8} parent=1 // pred_region
      %s98 = ssub.s32 16, 16
      %99 = vsyncadd [#allocation12], %s98
      %s101 = sshll.u32 [#allocation11], 4
      %s102 = int_to_ptr.vmem [resolvable:$true] %s101
      %104 = dma.hbm_to_vmem [thread:$0]  %s5, 16, %s102, [#allocation12]
    $region25: #{_lambda_.8} parent=1 // pred_fallthru
      _
    // Predicated region
    $region26: #{_lambda_.8} parent=1 // pred_check
      _
    $region27: #{_lambda_.8} parent=1 // pred_check_branch
      %106 = sbr.rel (0) target = $region29
    $region28: #{_lambda_.8} parent=1 // pred_region
      %s108 = ssub.s32 16, 16
      %109 = vsyncadd [#allocation12], %s108
      %s111 = sshll.u32 [#allocation13], 4
      %s112 = int_to_ptr.vmem [resolvable:$true] %s111
      %114 = dma.hbm_to_vmem [thread:$0]  %s6, 16, %s112, [#allocation12]
    $region29: #{_lambda_.8} parent=1 // pred_fallthru
      _
    // Predicated region
    $region30: #{_lambda_.8} parent=1 // pred_check
      _
    $region31: #{_lambda_.8} parent=1 // pred_check_branch
      %116 = sbr.rel (0) target = $region33
    $region32: #{_lambda_.8} parent=1 // pred_region
      %s118 = ssub.s32 16, 16
      %119 = vsyncadd [#allocation15], %s118
      %s121 = sshll.u32 [#allocation14], 4
      %s122 = int_to_ptr.vmem [resolvable:$true] %s121
      %124 = dma.hbm_to_vmem [thread:$0]  %s7, 16, %s122, [#allocation15]
    $region33: #{_lambda_.8} parent=1 // pred_fallthru
      _
    // Predicated region
    $region34: #{_lambda_.8} parent=1 // pred_check
      _
    $region35: #{_lambda_.8} parent=1 // pred_check_branch
      %126 = sbr.rel (0) target = $region37
    $region36: #{_lambda_.8} parent=1 // pred_region
      %s128 = ssub.s32 1024, 1024
      %129 = vsyncadd [#allocation15], %s128
      %s130 = sshll.u32 [#allocation16], 4
      %s131 = int_to_ptr.vmem [resolvable:$true] %s130
      %136 = dma.hbm_to_vmem [thread:$0]  %s8, 1024, %s131, [#allocation15], 64, 64, 4
    $region37: #{_lambda_.8} parent=1 // pred_fallthru
      _
    // Predicated region
    $region38: #{_lambda_.8} parent=1 // pred_check
      _
    $region39: #{_lambda_.8} parent=1 // pred_check_branch
      %138 = sbr.rel (0) target = $region41
    $region40: #{_lambda_.8} parent=1 // pred_region
      %s140 = ssub.s32 16, 16
      %141 = vsyncadd [#allocation18], %s140
      %s143 = sshll.u32 [#allocation17], 4
      %s144 = int_to_ptr.vmem [resolvable:$true] %s143
      %146 = dma.hbm_to_vmem [thread:$0]  %s9, 16, %s144, [#allocation18]
    $region41: #{_lambda_.8} parent=1 // pred_fallthru
      _
    // Predicated region
    $region42: #{_lambda_.8} parent=1 // pred_check
      _
    $region43: #{_lambda_.8} parent=1 // pred_check_branch
      %148 = sbr.rel (0) target = $region45
    $region44: #{_lambda_.8} parent=1 // pred_region
      %s150 = ssub.s32 16, 16
      %151 = vsyncadd [#allocation18], %s150
      %s153 = sshll.u32 [#allocation19], 4
      %s154 = int_to_ptr.vmem [resolvable:$true] %s153
      %156 = dma.hbm_to_vmem [thread:$0]  %s10, 16, %s154, [#allocation18]
    $region45: #{_lambda_.8} parent=1 // pred_fallthru
      _
    // Predicated region
    $region46: #{_lambda_.8} parent=1 // pred_check
      _
    $region47: #{_lambda_.8} parent=1 // pred_check_branch
      %158 = sbr.rel (0) target = $region49
    $region48: #{_lambda_.8} parent=1 // pred_region
      %s160 = ssub.s32 16, 16
      %161 = vsyncadd [#allocation21], %s160
      %s163 = sshll.u32 [#allocation20], 4
      %s164 = int_to_ptr.vmem [resolvable:$true] %s163
      %166 = dma.hbm_to_vmem [thread:$0]  %s11, 16, %s164, [#allocation21]
    $region49: #{_lambda_.8} parent=1 // pred_fallthru
      _
    // Predicated region
    $region50: #{_lambda_.8} parent=1 // pred_check
      _
    $region51: #{_lambda_.8} parent=1 // pred_check_branch
      %168 = sbr.rel (0) target = $region53
    $region52: #{_lambda_.8} parent=1 // pred_region
      %s170 = ssub.s32 16, 16
      %171 = vsyncadd [#allocation21], %s170
      %s173 = sshll.u32 [#allocation22], 4
      %s174 = int_to_ptr.vmem [resolvable:$true] %s173
      %176 = dma.hbm_to_vmem [thread:$0]  %s12, 16, %s174, [#allocation21]
    $region53: #{_lambda_.8} parent=1 // pred_fallthru
      _
    // Predicated region
    $region54: #{_lambda_.8} parent=1 // pred_check
      _
    $region55: #{_lambda_.8} parent=1 // pred_check_branch
      %178 = sbr.rel (0) target = $region57
    $region56: #{_lambda_.8} parent=1 // pred_region
      %s180 = ssub.s32 16, 16
      %181 = vsyncadd [#allocation24], %s180
      %s183 = sshll.u32 [#allocation23], 4
      %s184 = int_to_ptr.vmem [resolvable:$true] %s183
      %186 = dma.hbm_to_vmem [thread:$0]  %s13, 16, %s184, [#allocation24]
    $region57: #{_lambda_.8} parent=1 // pred_fallthru
      _
    // Predicated region
    $region58: #{_lambda_.8} parent=1 // pred_check
      _
    $region59: #{_lambda_.8} parent=1 // pred_check_branch
      %188 = sbr.rel (0) target = $region61
    $region60: #{_lambda_.8} parent=1 // pred_region
      %s190 = ssub.s32 256, 256
      %191 = vsyncadd [#allocation24], %s190
      %s192 = sshll.u32 [#allocation25], 4
      %s193 = int_to_ptr.vmem [resolvable:$true] %s192
      %198 = dma.hbm_to_vmem [thread:$0]  %s14, 256, %s193, [#allocation24], 64, 64, 4
    $region61: #{_lambda_.8} parent=1 // pred_fallthru
      _
    // Predicated region
    $region62: #{_lambda_.8} parent=1 // pred_check
      _
    $region63: #{_lambda_.8} parent=1 // pred_check_branch
      %200 = sbr.rel (0) target = $region65
    $region64: #{_lambda_.8} parent=1 // pred_region
      %s202 = ssub.s32 16, 16
      %203 = vsyncadd [#allocation27], %s202
      %s205 = sshll.u32 [#allocation26], 4
      %s206 = int_to_ptr.vmem [resolvable:$true] %s205
      %208 = dma.hbm_to_vmem [thread:$0]  %s15, 16, %s206, [#allocation27]
    $region65: #{_lambda_.8} parent=1 // pred_fallthru
      _
    // Predicated region
    $region66: #{_lambda_.8} parent=1 // pred_check
      _
    $region67: #{_lambda_.8} parent=1 // pred_check_branch
      %210 = sbr.rel (0) target = $region69
    $region68: #{_lambda_.8} parent=1 // pred_region
      %s212 = ssub.s32 512, 512
      %213 = vsyncadd [#allocation27], %s212
      %s214 = sshll.u32 [#allocation28], 4
      %s215 = int_to_ptr.vmem [resolvable:$true] %s214
      %220 = dma.hbm_to_vmem [thread:$0]  %s16, 512, %s215, [#allocation27], 64, 64, 4
    $region69: #{_lambda_.8} parent=1 // pred_fallthru
      _
    // Predicated region
    $region70: #{_lambda_.8} parent=1 // pred_check
      _
    $region71: #{_lambda_.8} parent=1 // pred_check_branch
      %222 = sbr.rel (0) target = $region73
    $region72: #{_lambda_.8} parent=1 // pred_region
      %s224 = ssub.s32 16, 16
      %225 = vsyncadd [#allocation30], %s224
      %s227 = sshll.u32 [#allocation29], 4
      %s228 = int_to_ptr.vmem [resolvable:$true] %s227
      %230 = dma.hbm_to_vmem [thread:$0]  %s17, 16, %s228, [#allocation30]
    $region73: #{_lambda_.8} parent=1 // pred_fallthru
      _
    // Predicated region
    $region74: #{_lambda_.8} parent=1 // pred_check
      _
    $region75: #{_lambda_.8} parent=1 // pred_check_branch
      %232 = sbr.rel (0) target = $region77
    $region76: #{_lambda_.8} parent=1 // pred_region
      %s234 = ssub.s32 16, 16
      %235 = vsyncadd [#allocation30], %s234
      %s237 = sshll.u32 [#allocation31], 4
      %s238 = int_to_ptr.vmem [resolvable:$true] %s237
      %240 = dma.hbm_to_vmem [thread:$0]  %s18, 16, %s238, [#allocation30]
    $region77: #{_lambda_.8} parent=1 // pred_fallthru
      _
    // Predicated region
    $region78: #{_lambda_.8} parent=1 // pred_check
      _
    $region79: #{_lambda_.8} parent=1 // pred_check_branch
      %242 = sbr.rel (0) target = $region81
    $region80: #{_lambda_.8} parent=1 // pred_region
      %s244 = ssub.s32 16, 16
      %245 = vsyncadd [#allocation33], %s244
      %s247 = sshll.u32 [#allocation32], 4
      %s248 = int_to_ptr.vmem [resolvable:$true] %s247
      %250 = dma.hbm_to_vmem [thread:$0]  %s19, 16, %s248, [#allocation33]
    $region81: #{_lambda_.8} parent=1 // pred_fallthru
      _
    // Predicated region
    $region82: #{_lambda_.8} parent=1 // pred_check
      _
    $region83: #{_lambda_.8} parent=1 // pred_check_branch
      %252 = sbr.rel (0) target = $region85
    $region84: #{_lambda_.8} parent=1 // pred_region
      %253 = dma.done [#allocation3], 512
    $region85: #{_lambda_.8} parent=1 // pred_fallthru
      _
    // Predicated region
    $region86: #{_lambda_.8} parent=1 // pred_check
      _
    $region87: #{_lambda_.8} parent=1 // pred_check_branch
      %255 = sbr.rel (0) target = $region89
    $region88: #{_lambda_.8} parent=1 // pred_region
      %256 = dma.done [#allocation6], 4096
    $region89: #{_lambda_.8} parent=1 // pred_fallthru
      _
    // Predicated region
    $region90: #{_lambda_.8} parent=1 // pred_check
      _
    $region91: #{_lambda_.8} parent=1 // pred_check_branch
      %258 = sbr.rel (0) target = $region93
    $region92: #{_lambda_.8} parent=1 // pred_region
      %259 = dma.done [#allocation6], 1024
    $region93: #{_lambda_.8} parent=1 // pred_fallthru
      _
    // Predicated region
    $region94: #{_lambda_.8} parent=1 // pred_check
      _
    $region95: #{_lambda_.8} parent=1 // pred_check_branch
      %261 = sbr.rel (0) target = $region97
    $region96: #{_lambda_.8} parent=1 // pred_region
      %262 = dma.done [#allocation9], 256
    $region97: #{_lambda_.8} parent=1 // pred_fallthru
      _
    // Predicated region
    $region98: #{_lambda_.8} parent=1 // pred_check
      _
    $region99: #{_lambda_.8} parent=1 // pred_check_branch
      %264 = sbr.rel (0) target = $region101
    $region100: #{_lambda_.8} parent=1 // pred_region
      %265 = dma.done [#allocation9], 16
    $region101: #{_lambda_.8} parent=1 // pred_fallthru
      _
    // Predicated region
    $region102: #{_lambda_.8} parent=1 // pred_check
      _
    $region103: #{_lambda_.8} parent=1 // pred_check_branch
      %267 = sbr.rel (0) target = $region105
    $region104: #{_lambda_.8} parent=1 // pred_region
      %268 = dma.done [#allocation12], 16
    $region105: #{_lambda_.8} parent=1 // pred_fallthru
      _
    // Predicated region
    $region106: #{_lambda_.8} parent=1 // pred_check
      _
    $region107: #{_lambda_.8} parent=1 // pred_check_branch
      %270 = sbr.rel (0) target = $region109
    $region108: #{_lambda_.8} parent=1 // pred_region
      %271 = dma.done [#allocation12], 16
    $region109: #{_lambda_.8} parent=1 // pred_fallthru
      _
    // Predicated region
    $region110: #{_lambda_.8} parent=1 // pred_check
      _
    $region111: #{_lambda_.8} parent=1 // pred_check_branch
      %273 = sbr.rel (0) target = $region113
    $region112: #{_lambda_.8} parent=1 // pred_region
      %274 = dma.done [#allocation15], 16
    $region113: #{_lambda_.8} parent=1 // pred_fallthru
      _
    // Predicated region
    $region114: #{_lambda_.8} parent=1 // pred_check
      _
    $region115: #{_lambda_.8} parent=1 // pred_check_branch
      %276 = sbr.rel (0) target = $region117
    $region116: #{_lambda_.8} parent=1 // pred_region
      %277 = dma.done [#allocation15], 1024
    $region117: #{_lambda_.8} parent=1 // pred_fallthru
      _
    // Predicated region
    $region118: #{_lambda_.8} parent=1 // pred_check
      _
    $region119: #{_lambda_.8} parent=1 // pred_check_branch
      %279 = sbr.rel (0) target = $region121
    $region120: #{_lambda_.8} parent=1 // pred_region
      %280 = dma.done [#allocation18], 16
    $region121: #{_lambda_.8} parent=1 // pred_fallthru
      _
    // Predicated region
    $region122: #{_lambda_.8} parent=1 // pred_check
      _
    $region123: #{_lambda_.8} parent=1 // pred_check_branch
      %282 = sbr.rel (0) target = $region125
    $region124: #{_lambda_.8} parent=1 // pred_region
      %283 = dma.done [#allocation18], 16
    $region125: #{_lambda_.8} parent=1 // pred_fallthru
      _
    // Predicated region
    $region126: #{_lambda_.8} parent=1 // pred_check
      _
    $region127: #{_lambda_.8} parent=1 // pred_check_branch
      %285 = sbr.rel (0) target = $region129
    $region128: #{_lambda_.8} parent=1 // pred_region
      %286 = dma.done [#allocation21], 16
    $region129: #{_lambda_.8} parent=1 // pred_fallthru
      _
    // Predicated region
    $region130: #{_lambda_.8} parent=1 // pred_check
      _
    $region131: #{_lambda_.8} parent=1 // pred_check_branch
      %288 = sbr.rel (0) target = $region133
    $region132: #{_lambda_.8} parent=1 // pred_region
      %289 = dma.done [#allocation21], 16
    $region133: #{_lambda_.8} parent=1 // pred_fallthru
      _
    // Predicated region
    $region134: #{_lambda_.8} parent=1 // pred_check
      _
    $region135: #{_lambda_.8} parent=1 // pred_check_branch
      %291 = sbr.rel (0) target = $region137
    $region136: #{_lambda_.8} parent=1 // pred_region
      %292 = dma.done [#allocation24], 16
    $region137: #{_lambda_.8} parent=1 // pred_fallthru
      _
    // Predicated region
    $region138: #{_lambda_.8} parent=1 // pred_check
      _
    $region139: #{_lambda_.8} parent=1 // pred_check_branch
      %294 = sbr.rel (0) target = $region141
    $region140: #{_lambda_.8} parent=1 // pred_region
      %295 = dma.done [#allocation24], 256
    $region141: #{_lambda_.8} parent=1 // pred_fallthru
      _
    // Predicated region
    $region142: #{_lambda_.8} parent=1 // pred_check
      _
    $region143: #{_lambda_.8} parent=1 // pred_check_branch
      %297 = sbr.rel (0) target = $region145
    $region144: #{_lambda_.8} parent=1 // pred_region
      %298 = dma.done [#allocation27], 16
    $region145: #{_lambda_.8} parent=1 // pred_fallthru
      _
    // Predicated region
    $region146: #{_lambda_.8} parent=1 // pred_check
      _
    $region147: #{_lambda_.8} parent=1 // pred_check_branch
      %300 = sbr.rel (0) target = $region149
    $region148: #{_lambda_.8} parent=1 // pred_region
      %301 = dma.done [#allocation27], 512
    $region149: #{_lambda_.8} parent=1 // pred_fallthru
      _
    // Predicated region
    $region150: #{_lambda_.8} parent=1 // pred_check
      _
    $region151: #{_lambda_.8} parent=1 // pred_check_branch
      %303 = sbr.rel (0) target = $region153
    $region152: #{_lambda_.8} parent=1 // pred_region
      %304 = dma.done [#allocation30], 16
    $region153: #{_lambda_.8} parent=1 // pred_fallthru
      _
    // Predicated region
    $region154: #{_lambda_.8} parent=1 // pred_check
      _
    $region155: #{_lambda_.8} parent=1 // pred_check_branch
      %306 = sbr.rel (0) target = $region157
    $region156: #{_lambda_.8} parent=1 // pred_region
      %307 = dma.done [#allocation30], 16
    $region157: #{_lambda_.8} parent=1 // pred_fallthru
      _
    // Predicated region
    $region158: #{_lambda_.8} parent=1 // pred_check
      _
    $region159: #{_lambda_.8} parent=1 // pred_check_branch
      %309 = sbr.rel (0) target = $region161
    $region160: #{_lambda_.8} parent=1 // pred_region
      %310 = dma.done [#allocation33], 16
    $region161: #{_lambda_.8} parent=1 // pred_fallthru
      _
    %v312 = vld [vmem:[#allocation2] sm:$0x3]
    %v313 = vld [vmem:[#allocation2 + $0x2] sm:$0x3]
    %v314 = vld [vmem:[#allocation2 + $0x4] sm:$0x3]
    %v315 = vld [vmem:[#allocation2 + $0x6] sm:$0x3]
    %v316 = vld [vmem:[#allocation2 + $0x8] sm:$0x3]
    %v317 = vld [vmem:[#allocation2 + $0xa] sm:$0x3]
    %v318 = vld [vmem:[#allocation2 + $0xc] sm:$0x3]
    %v319 = vld [vmem:[#allocation2 + $0xe] sm:$0x3]
    %v320 = vld [vmem:[#allocation2 + $0x10] sm:$0x3]
    %v321 = vld [vmem:[#allocation2 + $0x12] sm:$0x3]
    %v322 = vld [vmem:[#allocation2 + $0x14] sm:$0x3]
    %v323 = vld [vmem:[#allocation2 + $0x16] sm:$0x3]
    %v324 = vld [vmem:[#allocation2 + $0x18] sm:$0x3]
    %v325 = vld [vmem:[#allocation2 + $0x1a] sm:$0x3]
    %v326 = vld [vmem:[#allocation2 + $0x1c] sm:$0x3]
    %v327 = vld [vmem:[#allocation2 + $0x1e] sm:$0x3]
    %v328 = vld [vmem:[#allocation5] sm:$0xf]
    %v329 = vld [vmem:[#allocation5 + $0x4] sm:$0xf]
    %v330 = vld [vmem:[#allocation5 + $0x8] sm:$0xf]
    %v331 = vld [vmem:[#allocation5 + $0xc] sm:$0xf]
    %v332 = vld [vmem:[#allocation5 + $0x10] sm:$0xf]
    %v333 = vld [vmem:[#allocation5 + $0x14] sm:$0xf]
    %v334 = vld [vmem:[#allocation5 + $0x18] sm:$0xf]
    %v335 = vld [vmem:[#allocation5 + $0x1c] sm:$0xf]
    %v336 = vld [vmem:[#allocation5 + $0x20] sm:$0xf]
    %v337 = vld [vmem:[#allocation5 + $0x24] sm:$0xf]
    %v338 = vld [vmem:[#allocation5 + $0x28] sm:$0xf]
    %v339 = vld [vmem:[#allocation5 + $0x2c] sm:$0xf]
    %v340 = vld [vmem:[#allocation5 + $0x30] sm:$0xf]
    %v341 = vld [vmem:[#allocation5 + $0x34] sm:$0xf]
    %v342 = vld [vmem:[#allocation5 + $0x38] sm:$0xf]
    %v343 = vld [vmem:[#allocation5 + $0x3c] sm:$0xf]
    %v344 = vld [vmem:[#allocation5 + $0x40] sm:$0xf]
    %v345 = vld [vmem:[#allocation5 + $0x44] sm:$0xf]
    %v346 = vld [vmem:[#allocation5 + $0x48] sm:$0xf]
    %v347 = vld [vmem:[#allocation5 + $0x4c] sm:$0xf]
    %v348 = vld [vmem:[#allocation5 + $0x50] sm:$0xf]
    %v349 = vld [vmem:[#allocation5 + $0x54] sm:$0xf]
    %v350 = vld [vmem:[#allocation5 + $0x58] sm:$0xf]
    %v351 = vld [vmem:[#allocation5 + $0x5c] sm:$0xf]
    %v352 = vld [vmem:[#allocation5 + $0x60] sm:$0xf]
    %v353 = vld [vmem:[#allocation5 + $0x64] sm:$0xf]
    %v354 = vld [vmem:[#allocation5 + $0x68] sm:$0xf]
    %v355 = vld [vmem:[#allocation5 + $0x6c] sm:$0xf]
    %v356 = vld [vmem:[#allocation5 + $0x70] sm:$0xf]
    %v357 = vld [vmem:[#allocation5 + $0x74] sm:$0xf]
    %v358 = vld [vmem:[#allocation5 + $0x78] sm:$0xf]
    %v359 = vld [vmem:[#allocation5 + $0x7c] sm:$0xf]
    %v360 = vld [vmem:[#allocation5 + $0x80] sm:$0xf]
    %v361 = vld [vmem:[#allocation5 + $0x84] sm:$0xf]
    %v362 = vld [vmem:[#allocation5 + $0x88] sm:$0xf]
    %v363 = vld [vmem:[#allocation5 + $0x8c] sm:$0xf]
    %v364 = vld [vmem:[#allocation5 + $0x90] sm:$0xf]
    %v365 = vld [vmem:[#allocation5 + $0x94] sm:$0xf]
    %v366 = vld [vmem:[#allocation5 + $0x98] sm:$0xf]
    %v367 = vld [vmem:[#allocation5 + $0x9c] sm:$0xf]
    %v368 = vld [vmem:[#allocation5 + $0xa0] sm:$0xf]
    %v369 = vld [vmem:[#allocation5 + $0xa4] sm:$0xf]
    %v370 = vld [vmem:[#allocation5 + $0xa8] sm:$0xf]
    %v371 = vld [vmem:[#allocation5 + $0xac] sm:$0xf]
    %v372 = vld [vmem:[#allocation5 + $0xb0] sm:$0xf]
    %v373 = vld [vmem:[#allocation5 + $0xb4] sm:$0xf]
    %v374 = vld [vmem:[#allocation5 + $0xb8] sm:$0xf]
    %v375 = vld [vmem:[#allocation5 + $0xbc] sm:$0xf]
    %v376 = vld [vmem:[#allocation5 + $0xc0] sm:$0xf]
    %v377 = vld [vmem:[#allocation5 + $0xc4] sm:$0xf]
    %v378 = vld [vmem:[#allocation5 + $0xc8] sm:$0xf]
    %v379 = vld [vmem:[#allocation5 + $0xcc] sm:$0xf]
    %v380 = vld [vmem:[#allocation5 + $0xd0] sm:$0xf]
    %v381 = vld [vmem:[#allocation5 + $0xd4] sm:$0xf]
    %v382 = vld [vmem:[#allocation5 + $0xd8] sm:$0xf]
    %v383 = vld [vmem:[#allocation5 + $0xdc] sm:$0xf]
    %v384 = vld [vmem:[#allocation5 + $0xe0] sm:$0xf]
    %v385 = vld [vmem:[#allocation5 + $0xe4] sm:$0xf]
    %v386 = vld [vmem:[#allocation5 + $0xe8] sm:$0xf]
    %v387 = vld [vmem:[#allocation5 + $0xec] sm:$0xf]
    %v388 = vld [vmem:[#allocation5 + $0xf0] sm:$0xf]
    %v389 = vld [vmem:[#allocation5 + $0xf4] sm:$0xf]
    %v390 = vld [vmem:[#allocation5 + $0xf8] sm:$0xf]
    %v391 = vld [vmem:[#allocation5 + $0xfc] sm:$0xf]
    %v392 = vld [vmem:[#allocation7] sm:$0xf]
    %v393 = vld [vmem:[#allocation7 + $0x4] sm:$0xf]
    %v394 = vld [vmem:[#allocation7 + $0x8] sm:$0xf]
    %v395 = vld [vmem:[#allocation7 + $0xc] sm:$0xf]
    %v396 = vld [vmem:[#allocation7 + $0x10] sm:$0xf]
    %v397 = vld [vmem:[#allocation7 + $0x14] sm:$0xf]
    %v398 = vld [vmem:[#allocation7 + $0x18] sm:$0xf]
    %v399 = vld [vmem:[#allocation7 + $0x1c] sm:$0xf]
    %v400 = vld [vmem:[#allocation7 + $0x20] sm:$0xf]
    %v401 = vld [vmem:[#allocation7 + $0x24] sm:$0xf]
    %v402 = vld [vmem:[#allocation7 + $0x28] sm:$0xf]
    %v403 = vld [vmem:[#allocation7 + $0x2c] sm:$0xf]
    %v404 = vld [vmem:[#allocation7 + $0x30] sm:$0xf]
    %v405 = vld [vmem:[#allocation7 + $0x34] sm:$0xf]
    %v406 = vld [vmem:[#allocation7 + $0x38] sm:$0xf]
    %v407 = vld [vmem:[#allocation7 + $0x3c] sm:$0xf]
    %v412 = vunpack.c.l.b16 %v328
    %v413 = vunpack.c.l.b16 %v329
    %v414 = vunpack.c.l.b16 %v330
    %v415 = vunpack.c.l.b16 %v331
    %v416 = vpack.c.b16 %v413, %v412
    %v417 = vpack.c.b16 %v415, %v414
    %vm420 = vcmask 261120
    %v422 = vsel %vm420, %v312, 0
    %424 = vmatprep.subr.bf16.mxu0 0
    %425 = vmatpush1.bf16.msra.mxu0 %v416
    %426 = vmatprep.subr.bf16.mxu0 0
    %427 = vmatpush1.bf16.msra.mxu0 %v417
    %428 = vmatprep.subr.bf16.mxu0 0
    %429 = vmatpush1.bf16.msra.mxu0 0
    %430 = vmatprep.subr.bf16.mxu0 0
    %431 = vmatpush1.bf16.msra.mxu0 0
    %432 = vmatprep.subr.bf16.mxu0 0
    %433 = vmatpush1.bf16.msra.mxu0 0
    %434 = vmatprep.subr.bf16.mxu0 0
    %435 = vmatpush1.bf16.msra.mxu0 0
    %436 = vmatprep.subr.bf16.mxu0 0
    %437 = vmatpush1.bf16.msra.mxu0 0
    %438 = vmatprep.subr.bf16.mxu0 0
    %439 = vmatpush1.bf16.msra.mxu0 0
    %440 = vmatprep.subr.bf16.mxu0 0
    %441 = vmatpush1.bf16.msra.mxu0 0
    %442 = vmatprep.subr.bf16.mxu0 0
    %443 = vmatpush1.bf16.msra.mxu0 0
    %444 = vmatprep.subr.bf16.mxu0 0
    %445 = vmatpush1.bf16.msra.mxu0 0
    %446 = vmatprep.subr.bf16.mxu0 0
    %447 = vmatpush1.bf16.msra.mxu0 0
    %448 = vmatprep.subr.bf16.mxu0 0
    %449 = vmatpush1.bf16.msra.mxu0 0
    %450 = vmatprep.subr.bf16.mxu0 0
    %451 = vmatpush1.bf16.msra.mxu0 0
    %452 = vmatprep.subr.bf16.mxu0 0
    %453 = vmatpush1.bf16.msra.mxu0 0
    %454 = vmatprep.subr.bf16.mxu0 0
    %455 = vmatpush1.bf16.msra.mxu0 0
    %456 = vmatprep.mubr.bf16.mxu0 0
    %457 = vmatmul.mubr.bf16.gmra.mrb[0].mxu0 %v422
    %v458 = vpop.f32.mrb[0].mxu0
    %v459 = vadd.f32 0.0, %v458
    %v460 = vpop.f32.mrb[0].mxu0
    %v461 = vpop.f32.mrb[0].mxu0
    %v462 = vpop.f32.mrb[0].mxu0
    %463 = vdwg.mxu0
    %v468 = vunpack.c.l.b16 %v332
    %v469 = vunpack.c.l.b16 %v333
    %v470 = vunpack.c.l.b16 %v334
    %v471 = vunpack.c.l.b16 %v335
    %v472 = vpack.c.b16 %v469, %v468
    %v473 = vpack.c.b16 %v471, %v470
    %v477 = vsel %vm420, %v313, 0
    %479 = vmatprep.subr.bf16.mxu0 0
    %480 = vmatpush1.bf16.msra.mxu0 %v472
    %481 = vmatprep.subr.bf16.mxu0 0
    %482 = vmatpush1.bf16.msra.mxu0 %v473
    %483 = vmatprep.subr.bf16.mxu0 0
    %484 = vmatpush1.bf16.msra.mxu0 0
    %485 = vmatprep.subr.bf16.mxu0 0
    %486 = vmatpush1.bf16.msra.mxu0 0
    %487 = vmatprep.subr.bf16.mxu0 0
    %488 = vmatpush1.bf16.msra.mxu0 0
    %489 = vmatprep.subr.bf16.mxu0 0
    %490 = vmatpush1.bf16.msra.mxu0 0
    %491 = vmatprep.subr.bf16.mxu0 0
    %492 = vmatpush1.bf16.msra.mxu0 0
    %493 = vmatprep.subr.bf16.mxu0 0
    %494 = vmatpush1.bf16.msra.mxu0 0
    %495 = vmatprep.subr.bf16.mxu0 0
    %496 = vmatpush1.bf16.msra.mxu0 0
    %497 = vmatprep.subr.bf16.mxu0 0
    %498 = vmatpush1.bf16.msra.mxu0 0
    %499 = vmatprep.subr.bf16.mxu0 0
    %500 = vmatpush1.bf16.msra.mxu0 0
    %501 = vmatprep.subr.bf16.mxu0 0
    %502 = vmatpush1.bf16.msra.mxu0 0
    %503 = vmatprep.subr.bf16.mxu0 0
    %504 = vmatpush1.bf16.msra.mxu0 0
    %505 = vmatprep.subr.bf16.mxu0 0
    %506 = vmatpush1.bf16.msra.mxu0 0
    %507 = vmatprep.subr.bf16.mxu0 0
    %508 = vmatpush1.bf16.msra.mxu0 0
    %509 = vmatprep.subr.bf16.mxu0 0
    %510 = vmatpush1.bf16.msra.mxu0 0
    %511 = vmatprep.mubr.bf16.mxu0 0
    %512 = vmatmul.mubr.bf16.gmra.mrb[0].mxu0 %v477
    %v513 = vpop.f32.mrb[0].mxu0
    %v514 = vadd.f32 0.0, %v513
    %v515 = vpop.f32.mrb[0].mxu0
    %v516 = vpop.f32.mrb[0].mxu0
    %v517 = vpop.f32.mrb[0].mxu0
    %518 = vdwg.mxu0
    %v523 = vunpack.c.l.b16 %v336
    %v524 = vunpack.c.l.b16 %v337
    %v525 = vunpack.c.l.b16 %v338
    %v526 = vunpack.c.l.b16 %v339
    %v527 = vpack.c.b16 %v524, %v523
    %v528 = vpack.c.b16 %v526, %v525
    %v532 = vsel %vm420, %v314, 0
    %534 = vmatprep.subr.bf16.mxu0 0
    %535 = vmatpush1.bf16.msra.mxu0 %v527
    %536 = vmatprep.subr.bf16.mxu0 0
    %537 = vmatpush1.bf16.msra.mxu0 %v528
    %538 = vmatprep.subr.bf16.mxu0 0
    %539 = vmatpush1.bf16.msra.mxu0 0
    %540 = vmatprep.subr.bf16.mxu0 0
    %541 = vmatpush1.bf16.msra.mxu0 0
    %542 = vmatprep.subr.bf16.mxu0 0
    %543 = vmatpush1.bf16.msra.mxu0 0
    %544 = vmatprep.subr.bf16.mxu0 0
    %545 = vmatpush1.bf16.msra.mxu0 0
    %546 = vmatprep.subr.bf16.mxu0 0
    %547 = vmatpush1.bf16.msra.mxu0 0
    %548 = vmatprep.subr.bf16.mxu0 0
    %549 = vmatpush1.bf16.msra.mxu0 0
    %550 = vmatprep.subr.bf16.mxu0 0
    %551 = vmatpush1.bf16.msra.mxu0 0
    %552 = vmatprep.subr.bf16.mxu0 0
    %553 = vmatpush1.bf16.msra.mxu0 0
    %554 = vmatprep.subr.bf16.mxu0 0
    %555 = vmatpush1.bf16.msra.mxu0 0
    %556 = vmatprep.subr.bf16.mxu0 0
    %557 = vmatpush1.bf16.msra.mxu0 0
    %558 = vmatprep.subr.bf16.mxu0 0
    %559 = vmatpush1.bf16.msra.mxu0 0
    %560 = vmatprep.subr.bf16.mxu0 0
    %561 = vmatpush1.bf16.msra.mxu0 0
    %562 = vmatprep.subr.bf16.mxu0 0
    %563 = vmatpush1.bf16.msra.mxu0 0
    %564 = vmatprep.subr.bf16.mxu0 0
    %565 = vmatpush1.bf16.msra.mxu0 0
    %566 = vmatprep.mubr.bf16.mxu0 0
    %567 = vmatmul.mubr.bf16.gmra.mrb[0].mxu0 %v532
    %v568 = vpop.f32.mrb[0].mxu0
    %v569 = vadd.f32 0.0, %v568
    %v570 = vpop.f32.mrb[0].mxu0
    %v571 = vpop.f32.mrb[0].mxu0
    %v572 = vpop.f32.mrb[0].mxu0
    %573 = vdwg.mxu0
    %v578 = vunpack.c.l.b16 %v340
    %v579 = vunpack.c.l.b16 %v341
    %v580 = vunpack.c.l.b16 %v342
    %v581 = vunpack.c.l.b16 %v343
    %v582 = vpack.c.b16 %v579, %v578
    %v583 = vpack.c.b16 %v581, %v580
    %v587 = vsel %vm420, %v315, 0
    %589 = vmatprep.subr.bf16.mxu0 0
    %590 = vmatpush1.bf16.msra.mxu0 %v582
    %591 = vmatprep.subr.bf16.mxu0 0
    %592 = vmatpush1.bf16.msra.mxu0 %v583
    %593 = vmatprep.subr.bf16.mxu0 0
    %594 = vmatpush1.bf16.msra.mxu0 0
    %595 = vmatprep.subr.bf16.mxu0 0
    %596 = vmatpush1.bf16.msra.mxu0 0
    %597 = vmatprep.subr.bf16.mxu0 0
    %598 = vmatpush1.bf16.msra.mxu0 0
    %599 = vmatprep.subr.bf16.mxu0 0
    %600 = vmatpush1.bf16.msra.mxu0 0
    %601 = vmatprep.subr.bf16.mxu0 0
    %602 = vmatpush1.bf16.msra.mxu0 0
    %603 = vmatprep.subr.bf16.mxu0 0
    %604 = vmatpush1.bf16.msra.mxu0 0
    %605 = vmatprep.subr.bf16.mxu0 0
    %606 = vmatpush1.bf16.msra.mxu0 0
    %607 = vmatprep.subr.bf16.mxu0 0
    %608 = vmatpush1.bf16.msra.mxu0 0
    %609 = vmatprep.subr.bf16.mxu0 0
    %610 = vmatpush1.bf16.msra.mxu0 0
    %611 = vmatprep.subr.bf16.mxu0 0
    %612 = vmatpush1.bf16.msra.mxu0 0
    %613 = vmatprep.subr.bf16.mxu0 0
    %614 = vmatpush1.bf16.msra.mxu0 0
    %615 = vmatprep.subr.bf16.mxu0 0
    %616 = vmatpush1.bf16.msra.mxu0 0
    %617 = vmatprep.subr.bf16.mxu0 0
    %618 = vmatpush1.bf16.msra.mxu0 0
    %619 = vmatprep.subr.bf16.mxu0 0
    %620 = vmatpush1.bf16.msra.mxu0 0
    %621 = vmatprep.mubr.bf16.mxu0 0
    %622 = vmatmul.mubr.bf16.gmra.mrb[0].mxu0 %v587
    %v623 = vpop.f32.mrb[0].mxu0
    %v624 = vadd.f32 0.0, %v623
    %v625 = vpop.f32.mrb[0].mxu0
    %v626 = vpop.f32.mrb[0].mxu0
    %v627 = vpop.f32.mrb[0].mxu0
    %628 = vdwg.mxu0
    %v633 = vunpack.c.l.b16 %v344
    %v634 = vunpack.c.l.b16 %v345
    %v635 = vunpack.c.l.b16 %v346
    %v636 = vunpack.c.l.b16 %v347
    %v637 = vpack.c.b16 %v634, %v633
    %v638 = vpack.c.b16 %v636, %v635
    %v642 = vsel %vm420, %v316, 0
    %644 = vmatprep.subr.bf16.mxu0 0
    %645 = vmatpush1.bf16.msra.mxu0 %v637
    %646 = vmatprep.subr.bf16.mxu0 0
    %647 = vmatpush1.bf16.msra.mxu0 %v638
    %648 = vmatprep.subr.bf16.mxu0 0
    %649 = vmatpush1.bf16.msra.mxu0 0
    %650 = vmatprep.subr.bf16.mxu0 0
    %651 = vmatpush1.bf16.msra.mxu0 0
    %652 = vmatprep.subr.bf16.mxu0 0
    %653 = vmatpush1.bf16.msra.mxu0 0
    %654 = vmatprep.subr.bf16.mxu0 0
    %655 = vmatpush1.bf16.msra.mxu0 0
    %656 = vmatprep.subr.bf16.mxu0 0
    %657 = vmatpush1.bf16.msra.mxu0 0
    %658 = vmatprep.subr.bf16.mxu0 0
    %659 = vmatpush1.bf16.msra.mxu0 0
    %660 = vmatprep.subr.bf16.mxu0 0
    %661 = vmatpush1.bf16.msra.mxu0 0
    %662 = vmatprep.subr.bf16.mxu0 0
    %663 = vmatpush1.bf16.msra.mxu0 0
    %664 = vmatprep.subr.bf16.mxu0 0
    %665 = vmatpush1.bf16.msra.mxu0 0
    %666 = vmatprep.subr.bf16.mxu0 0
    %667 = vmatpush1.bf16.msra.mxu0 0
    %668 = vmatprep.subr.bf16.mxu0 0
    %669 = vmatpush1.bf16.msra.mxu0 0
    %670 = vmatprep.subr.bf16.mxu0 0
    %671 = vmatpush1.bf16.msra.mxu0 0
    %672 = vmatprep.subr.bf16.mxu0 0
    %673 = vmatpush1.bf16.msra.mxu0 0
    %674 = vmatprep.subr.bf16.mxu0 0
    %675 = vmatpush1.bf16.msra.mxu0 0
    %676 = vmatprep.mubr.bf16.mxu0 0
    %677 = vmatmul.mubr.bf16.gmra.mrb[0].mxu0 %v642
    %v678 = vpop.f32.mrb[0].mxu0
    %v679 = vadd.f32 0.0, %v678
    %v680 = vpop.f32.mrb[0].mxu0
    %v681 = vpop.f32.mrb[0].mxu0
    %v682 = vpop.f32.mrb[0].mxu0
    %683 = vdwg.mxu0
    %v688 = vunpack.c.l.b16 %v348
    %v689 = vunpack.c.l.b16 %v349
    %v690 = vunpack.c.l.b16 %v350
    %v691 = vunpack.c.l.b16 %v351
    %v692 = vpack.c.b16 %v689, %v688
    %v693 = vpack.c.b16 %v691, %v690
    %v697 = vsel %vm420, %v317, 0
    %699 = vmatprep.subr.bf16.mxu0 0
    %700 = vmatpush1.bf16.msra.mxu0 %v692
    %701 = vmatprep.subr.bf16.mxu0 0
    %702 = vmatpush1.bf16.msra.mxu0 %v693
    %703 = vmatprep.subr.bf16.mxu0 0
    %704 = vmatpush1.bf16.msra.mxu0 0
    %705 = vmatprep.subr.bf16.mxu0 0
    %706 = vmatpush1.bf16.msra.mxu0 0
    %707 = vmatprep.subr.bf16.mxu0 0
    %708 = vmatpush1.bf16.msra.mxu0 0
    %709 = vmatprep.subr.bf16.mxu0 0
    %710 = vmatpush1.bf16.msra.mxu0 0
    %711 = vmatprep.subr.bf16.mxu0 0
    %712 = vmatpush1.bf16.msra.mxu0 0
    %713 = vmatprep.subr.bf16.mxu0 0
    %714 = vmatpush1.bf16.msra.mxu0 0
    %715 = vmatprep.subr.bf16.mxu0 0
    %716 = vmatpush1.bf16.msra.mxu0 0
    %717 = vmatprep.subr.bf16.mxu0 0
    %718 = vmatpush1.bf16.msra.mxu0 0
    %719 = vmatprep.subr.bf16.mxu0 0
    %720 = vmatpush1.bf16.msra.mxu0 0
    %721 = vmatprep.subr.bf16.mxu0 0
    %722 = vmatpush1.bf16.msra.mxu0 0
    %723 = vmatprep.subr.bf16.mxu0 0
    %724 = vmatpush1.bf16.msra.mxu0 0
    %725 = vmatprep.subr.bf16.mxu0 0
    %726 = vmatpush1.bf16.msra.mxu0 0
    %727 = vmatprep.subr.bf16.mxu0 0
    %728 = vmatpush1.bf16.msra.mxu0 0
    %729 = vmatprep.subr.bf16.mxu0 0
    %730 = vmatpush1.bf16.msra.mxu0 0
    %731 = vmatprep.mubr.bf16.mxu0 0
    %732 = vmatmul.mubr.bf16.gmra.mrb[0].mxu0 %v697
    %v733 = vpop.f32.mrb[0].mxu0
    %v734 = vadd.f32 0.0, %v733
    %v735 = vpop.f32.mrb[0].mxu0
    %v736 = vpop.f32.mrb[0].mxu0
    %v737 = vpop.f32.mrb[0].mxu0
    %738 = vdwg.mxu0
    %v743 = vunpack.c.l.b16 %v352
    %v744 = vunpack.c.l.b16 %v353
    %v745 = vunpack.c.l.b16 %v354
    %v746 = vunpack.c.l.b16 %v355
    %v747 = vpack.c.b16 %v744, %v743
    %v748 = vpack.c.b16 %v746, %v745
    %v752 = vsel %vm420, %v318, 0
    %754 = vmatprep.subr.bf16.mxu0 0
    %755 = vmatpush1.bf16.msra.mxu0 %v747
    %756 = vmatprep.subr.bf16.mxu0 0
    %757 = vmatpush1.bf16.msra.mxu0 %v748
    %758 = vmatprep.subr.bf16.mxu0 0
    %759 = vmatpush1.bf16.msra.mxu0 0
    %760 = vmatprep.subr.bf16.mxu0 0
    %761 = vmatpush1.bf16.msra.mxu0 0
    %762 = vmatprep.subr.bf16.mxu0 0
    %763 = vmatpush1.bf16.msra.mxu0 0
    %764 = vmatprep.subr.bf16.mxu0 0
    %765 = vmatpush1.bf16.msra.mxu0 0
    %766 = vmatprep.subr.bf16.mxu0 0
    %767 = vmatpush1.bf16.msra.mxu0 0
    %768 = vmatprep.subr.bf16.mxu0 0
    %769 = vmatpush1.bf16.msra.mxu0 0
    %770 = vmatprep.subr.bf16.mxu0 0
    %771 = vmatpush1.bf16.msra.mxu0 0
    %772 = vmatprep.subr.bf16.mxu0 0
    %773 = vmatpush1.bf16.msra.mxu0 0
    %774 = vmatprep.subr.bf16.mxu0 0
    %775 = vmatpush1.bf16.msra.mxu0 0
    %776 = vmatprep.subr.bf16.mxu0 0
    %777 = vmatpush1.bf16.msra.mxu0 0
    %778 = vmatprep.subr.bf16.mxu0 0
    %779 = vmatpush1.bf16.msra.mxu0 0
    %780 = vmatprep.subr.bf16.mxu0 0
    %781 = vmatpush1.bf16.msra.mxu0 0
    %782 = vmatprep.subr.bf16.mxu0 0
    %783 = vmatpush1.bf16.msra.mxu0 0
    %784 = vmatprep.subr.bf16.mxu0 0
    %785 = vmatpush1.bf16.msra.mxu0 0
    %786 = vmatprep.mubr.bf16.mxu0 0
    %787 = vmatmul.mubr.bf16.gmra.mrb[0].mxu0 %v752
    %v788 = vpop.f32.mrb[0].mxu0
    %v789 = vadd.f32 0.0, %v788
    %v790 = vpop.f32.mrb[0].mxu0
    %v791 = vpop.f32.mrb[0].mxu0
    %v792 = vpop.f32.mrb[0].mxu0
    %793 = vdwg.mxu0
    %v798 = vunpack.c.l.b16 %v356
    %v799 = vunpack.c.l.b16 %v357
    %v800 = vunpack.c.l.b16 %v358
    %v801 = vunpack.c.l.b16 %v359
    %v802 = vpack.c.b16 %v799, %v798
    %v803 = vpack.c.b16 %v801, %v800
    %v807 = vsel %vm420, %v319, 0
    %809 = vmatprep.subr.bf16.mxu0 0
    %810 = vmatpush1.bf16.msra.mxu0 %v802
    %811 = vmatprep.subr.bf16.mxu0 0
    %812 = vmatpush1.bf16.msra.mxu0 %v803
    %813 = vmatprep.subr.bf16.mxu0 0
    %814 = vmatpush1.bf16.msra.mxu0 0
    %815 = vmatprep.subr.bf16.mxu0 0
    %816 = vmatpush1.bf16.msra.mxu0 0
    %817 = vmatprep.subr.bf16.mxu0 0
    %818 = vmatpush1.bf16.msra.mxu0 0
    %819 = vmatprep.subr.bf16.mxu0 0
    %820 = vmatpush1.bf16.msra.mxu0 0
    %821 = vmatprep.subr.bf16.mxu0 0
    %822 = vmatpush1.bf16.msra.mxu0 0
    %823 = vmatprep.subr.bf16.mxu0 0
    %824 = vmatpush1.bf16.msra.mxu0 0
    %825 = vmatprep.subr.bf16.mxu0 0
    %826 = vmatpush1.bf16.msra.mxu0 0
    %827 = vmatprep.subr.bf16.mxu0 0
    %828 = vmatpush1.bf16.msra.mxu0 0
    %829 = vmatprep.subr.bf16.mxu0 0
    %830 = vmatpush1.bf16.msra.mxu0 0
    %831 = vmatprep.subr.bf16.mxu0 0
    %832 = vmatpush1.bf16.msra.mxu0 0
    %833 = vmatprep.subr.bf16.mxu0 0
    %834 = vmatpush1.bf16.msra.mxu0 0
    %835 = vmatprep.subr.bf16.mxu0 0
    %836 = vmatpush1.bf16.msra.mxu0 0
    %837 = vmatprep.subr.bf16.mxu0 0
    %838 = vmatpush1.bf16.msra.mxu0 0
    %839 = vmatprep.subr.bf16.mxu0 0
    %840 = vmatpush1.bf16.msra.mxu0 0
    %841 = vmatprep.mubr.bf16.mxu0 0
    %842 = vmatmul.mubr.bf16.gmra.mrb[0].mxu0 %v807
    %v843 = vpop.f32.mrb[0].mxu0
    %v844 = vadd.f32 0.0, %v843
    %v845 = vpop.f32.mrb[0].mxu0
    %v846 = vpop.f32.mrb[0].mxu0
    %v847 = vpop.f32.mrb[0].mxu0
    %848 = vdwg.mxu0
    %v853 = vunpack.c.l.b16 %v360
    %v854 = vunpack.c.l.b16 %v361
    %v855 = vunpack.c.l.b16 %v362
    %v856 = vunpack.c.l.b16 %v363
    %v857 = vpack.c.b16 %v854, %v853
    %v858 = vpack.c.b16 %v856, %v855
    %v862 = vsel %vm420, %v320, 0
    %864 = vmatprep.subr.bf16.mxu0 0
    %865 = vmatpush1.bf16.msra.mxu0 %v857
    %866 = vmatprep.subr.bf16.mxu0 0
    %867 = vmatpush1.bf16.msra.mxu0 %v858
    %868 = vmatprep.subr.bf16.mxu0 0
    %869 = vmatpush1.bf16.msra.mxu0 0
    %870 = vmatprep.subr.bf16.mxu0 0
    %871 = vmatpush1.bf16.msra.mxu0 0
    %872 = vmatprep.subr.bf16.mxu0 0
    %873 = vmatpush1.bf16.msra.mxu0 0
    %874 = vmatprep.subr.bf16.mxu0 0
    %875 = vmatpush1.bf16.msra.mxu0 0
    %876 = vmatprep.subr.bf16.mxu0 0
    %877 = vmatpush1.bf16.msra.mxu0 0
    %878 = vmatprep.subr.bf16.mxu0 0
    %879 = vmatpush1.bf16.msra.mxu0 0
    %880 = vmatprep.subr.bf16.mxu0 0
    %881 = vmatpush1.bf16.msra.mxu0 0
    %882 = vmatprep.subr.bf16.mxu0 0
    %883 = vmatpush1.bf16.msra.mxu0 0
    %884 = vmatprep.subr.bf16.mxu0 0
    %885 = vmatpush1.bf16.msra.mxu0 0
    %886 = vmatprep.subr.bf16.mxu0 0
    %887 = vmatpush1.bf16.msra.mxu0 0
    %888 = vmatprep.subr.bf16.mxu0 0
    %889 = vmatpush1.bf16.msra.mxu0 0
    %890 = vmatprep.subr.bf16.mxu0 0
    %891 = vmatpush1.bf16.msra.mxu0 0
    %892 = vmatprep.subr.bf16.mxu0 0
    %893 = vmatpush1.bf16.msra.mxu0 0
    %894 = vmatprep.subr.bf16.mxu0 0
    %895 = vmatpush1.bf16.msra.mxu0 0
    %896 = vmatprep.mubr.bf16.mxu0 0
    %897 = vmatmul.mubr.bf16.gmra.mrb[0].mxu0 %v862
    %v898 = vpop.f32.mrb[0].mxu0
    %v899 = vadd.f32 0.0, %v898
    %v900 = vpop.f32.mrb[0].mxu0
    %v901 = vpop.f32.mrb[0].mxu0
    %v902 = vpop.f32.mrb[0].mxu0
    %903 = vdwg.mxu0
    %v908 = vunpack.c.l.b16 %v364
    %v909 = vunpack.c.l.b16 %v365
    %v910 = vunpack.c.l.b16 %v366
    %v911 = vunpack.c.l.b16 %v367
    %v912 = vpack.c.b16 %v909, %v908
    %v913 = vpack.c.b16 %v911, %v910
    %v917 = vsel %vm420, %v321, 0
    %919 = vmatprep.subr.bf16.mxu0 0
    %920 = vmatpush1.bf16.msra.mxu0 %v912
    %921 = vmatprep.subr.bf16.mxu0 0
    %922 = vmatpush1.bf16.msra.mxu0 %v913
    %923 = vmatprep.subr.bf16.mxu0 0
    %924 = vmatpush1.bf16.msra.mxu0 0
    %925 = vmatprep.subr.bf16.mxu0 0
    %926 = vmatpush1.bf16.msra.mxu0 0
    %927 = vmatprep.subr.bf16.mxu0 0
    %928 = vmatpush1.bf16.msra.mxu0 0
    %929 = vmatprep.subr.bf16.mxu0 0
    %930 = vmatpush1.bf16.msra.mxu0 0
    %931 = vmatprep.subr.bf16.mxu0 0
    %932 = vmatpush1.bf16.msra.mxu0 0
    %933 = vmatprep.subr.bf16.mxu0 0
    %934 = vmatpush1.bf16.msra.mxu0 0
    %935 = vmatprep.subr.bf16.mxu0 0
    %936 = vmatpush1.bf16.msra.mxu0 0
    %937 = vmatprep.subr.bf16.mxu0 0
    %938 = vmatpush1.bf16.msra.mxu0 0
    %939 = vmatprep.subr.bf16.mxu0 0
    %940 = vmatpush1.bf16.msra.mxu0 0
    %941 = vmatprep.subr.bf16.mxu0 0
    %942 = vmatpush1.bf16.msra.mxu0 0
    %943 = vmatprep.subr.bf16.mxu0 0
    %944 = vmatpush1.bf16.msra.mxu0 0
    %945 = vmatprep.subr.bf16.mxu0 0
    %946 = vmatpush1.bf16.msra.mxu0 0
    %947 = vmatprep.subr.bf16.mxu0 0
    %948 = vmatpush1.bf16.msra.mxu0 0
    %949 = vmatprep.subr.bf16.mxu0 0
    %950 = vmatpush1.bf16.msra.mxu0 0
    %951 = vmatprep.mubr.bf16.mxu0 0
    %952 = vmatmul.mubr.bf16.gmra.mrb[0].mxu0 %v917
    %v953 = vpop.f32.mrb[0].mxu0
    %v954 = vadd.f32 0.0, %v953
    %v955 = vpop.f32.mrb[0].mxu0
    %v956 = vpop.f32.mrb[0].mxu0
    %v957 = vpop.f32.mrb[0].mxu0
    %958 = vdwg.mxu0
    %v963 = vunpack.c.l.b16 %v368
    %v964 = vunpack.c.l.b16 %v369
    %v965 = vunpack.c.l.b16 %v370
    %v966 = vunpack.c.l.b16 %v371
    %v967 = vpack.c.b16 %v964, %v963
    %v968 = vpack.c.b16 %v966, %v965
    %v972 = vsel %vm420, %v322, 0
    %974 = vmatprep.subr.bf16.mxu0 0
    %975 = vmatpush1.bf16.msra.mxu0 %v967
    %976 = vmatprep.subr.bf16.mxu0 0
    %977 = vmatpush1.bf16.msra.mxu0 %v968
    %978 = vmatprep.subr.bf16.mxu0 0
    %979 = vmatpush1.bf16.msra.mxu0 0
    %980 = vmatprep.subr.bf16.mxu0 0
    %981 = vmatpush1.bf16.msra.mxu0 0
    %982 = vmatprep.subr.bf16.mxu0 0
    %983 = vmatpush1.bf16.msra.mxu0 0
    %984 = vmatprep.subr.bf16.mxu0 0
    %985 = vmatpush1.bf16.msra.mxu0 0
    %986 = vmatprep.subr.bf16.mxu0 0
    %987 = vmatpush1.bf16.msra.mxu0 0
    %988 = vmatprep.subr.bf16.mxu0 0
    %989 = vmatpush1.bf16.msra.mxu0 0
    %990 = vmatprep.subr.bf16.mxu0 0
    %991 = vmatpush1.bf16.msra.mxu0 0
    %992 = vmatprep.subr.bf16.mxu0 0
    %993 = vmatpush1.bf16.msra.mxu0 0
    %994 = vmatprep.subr.bf16.mxu0 0
    %995 = vmatpush1.bf16.msra.mxu0 0
    %996 = vmatprep.subr.bf16.mxu0 0
    %997 = vmatpush1.bf16.msra.mxu0 0
    %998 = vmatprep.subr.bf16.mxu0 0
    %999 = vmatpush1.bf16.msra.mxu0 0
    %1000 = vmatprep.subr.bf16.mxu0 0
    %1001 = vmatpush1.bf16.msra.mxu0 0
    %1002 = vmatprep.subr.bf16.mxu0 0
    %1003 = vmatpush1.bf16.msra.mxu0 0
    %1004 = vmatprep.subr.bf16.mxu0 0
    %1005 = vmatpush1.bf16.msra.mxu0 0
    %1006 = vmatprep.mubr.bf16.mxu0 0
    %1007 = vmatmul.mubr.bf16.gmra.mrb[0].mxu0 %v972
    %v1008 = vpop.f32.mrb[0].mxu0
    %v1009 = vadd.f32 0.0, %v1008
    %v1010 = vpop.f32.mrb[0].mxu0
    %v1011 = vpop.f32.mrb[0].mxu0
    %v1012 = vpop.f32.mrb[0].mxu0
    %1013 = vdwg.mxu0
    %v1018 = vunpack.c.l.b16 %v372
    %v1019 = vunpack.c.l.b16 %v373
    %v1020 = vunpack.c.l.b16 %v374
    %v1021 = vunpack.c.l.b16 %v375
    %v1022 = vpack.c.b16 %v1019, %v1018
    %v1023 = vpack.c.b16 %v1021, %v1020
    %v1027 = vsel %vm420, %v323, 0
    %1029 = vmatprep.subr.bf16.mxu0 0
    %1030 = vmatpush1.bf16.msra.mxu0 %v1022
    %1031 = vmatprep.subr.bf16.mxu0 0
    %1032 = vmatpush1.bf16.msra.mxu0 %v1023
    %1033 = vmatprep.subr.bf16.mxu0 0
    %1034 = vmatpush1.bf16.msra.mxu0 0
    %1035 = vmatprep.subr.bf16.mxu0 0
    %1036 = vmatpush1.bf16.msra.mxu0 0
    %1037 = vmatprep.subr.bf16.mxu0 0
    %1038 = vmatpush1.bf16.msra.mxu0 0
    %1039 = vmatprep.subr.bf16.mxu0 0
    %1040 = vmatpush1.bf16.msra.mxu0 0
    %1041 = vmatprep.subr.bf16.mxu0 0
    %1042 = vmatpush1.bf16.msra.mxu0 0
    %1043 = vmatprep.subr.bf16.mxu0 0
    %1044 = vmatpush1.bf16.msra.mxu0 0
    %1045 = vmatprep.subr.bf16.mxu0 0
    %1046 = vmatpush1.bf16.msra.mxu0 0
    %1047 = vmatprep.subr.bf16.mxu0 0
    %1048 = vmatpush1.bf16.msra.mxu0 0
    %1049 = vmatprep.subr.bf16.mxu0 0
    %1050 = vmatpush1.bf16.msra.mxu0 0
    %1051 = vmatprep.subr.bf16.mxu0 0
    %1052 = vmatpush1.bf16.msra.mxu0 0
    %1053 = vmatprep.subr.bf16.mxu0 0
    %1054 = vmatpush1.bf16.msra.mxu0 0
    %1055 = vmatprep.subr.bf16.mxu0 0
    %1056 = vmatpush1.bf16.msra.mxu0 0
    %1057 = vmatprep.subr.bf16.mxu0 0
    %1058 = vmatpush1.bf16.msra.mxu0 0
    %1059 = vmatprep.subr.bf16.mxu0 0
    %1060 = vmatpush1.bf16.msra.mxu0 0
    %1061 = vmatprep.mubr.bf16.mxu0 0
    %1062 = vmatmul.mubr.bf16.gmra.mrb[0].mxu0 %v1027
    %v1063 = vpop.f32.mrb[0].mxu0
    %v1064 = vadd.f32 0.0, %v1063
    %v1065 = vpop.f32.mrb[0].mxu0
    %v1066 = vpop.f32.mrb[0].mxu0
    %v1067 = vpop.f32.mrb[0].mxu0
    %1068 = vdwg.mxu0
    %v1073 = vunpack.c.l.b16 %v376
    %v1074 = vunpack.c.l.b16 %v377
    %v1075 = vunpack.c.l.b16 %v378
    %v1076 = vunpack.c.l.b16 %v379
    %v1077 = vpack.c.b16 %v1074, %v1073
    %v1078 = vpack.c.b16 %v1076, %v1075
    %v1082 = vsel %vm420, %v324, 0
    %1084 = vmatprep.subr.bf16.mxu0 0
    %1085 = vmatpush1.bf16.msra.mxu0 %v1077
    %1086 = vmatprep.subr.bf16.mxu0 0
    %1087 = vmatpush1.bf16.msra.mxu0 %v1078
    %1088 = vmatprep.subr.bf16.mxu0 0
    %1089 = vmatpush1.bf16.msra.mxu0 0
    %1090 = vmatprep.subr.bf16.mxu0 0
    %1091 = vmatpush1.bf16.msra.mxu0 0
    %1092 = vmatprep.subr.bf16.mxu0 0
    %1093 = vmatpush1.bf16.msra.mxu0 0
    %1094 = vmatprep.subr.bf16.mxu0 0
    %1095 = vmatpush1.bf16.msra.mxu0 0
    %1096 = vmatprep.subr.bf16.mxu0 0
    %1097 = vmatpush1.bf16.msra.mxu0 0
    %1098 = vmatprep.subr.bf16.mxu0 0
    %1099 = vmatpush1.bf16.msra.mxu0 0
    %1100 = vmatprep.subr.bf16.mxu0 0
    %1101 = vmatpush1.bf16.msra.mxu0 0
    %1102 = vmatprep.subr.bf16.mxu0 0
    %1103 = vmatpush1.bf16.msra.mxu0 0
    %1104 = vmatprep.subr.bf16.mxu0 0
    %1105 = vmatpush1.bf16.msra.mxu0 0
    %1106 = vmatprep.subr.bf16.mxu0 0
    %1107 = vmatpush1.bf16.msra.mxu0 0
    %1108 = vmatprep.subr.bf16.mxu0 0
    %1109 = vmatpush1.bf16.msra.mxu0 0
    %1110 = vmatprep.subr.bf16.mxu0 0
    %1111 = vmatpush1.bf16.msra.mxu0 0
    %1112 = vmatprep.subr.bf16.mxu0 0
    %1113 = vmatpush1.bf16.msra.mxu0 0
    %1114 = vmatprep.subr.bf16.mxu0 0
    %1115 = vmatpush1.bf16.msra.mxu0 0
    %1116 = vmatprep.mubr.bf16.mxu0 0
    %1117 = vmatmul.mubr.bf16.gmra.mrb[0].mxu0 %v1082
    %v1118 = vpop.f32.mrb[0].mxu0
    %v1119 = vadd.f32 0.0, %v1118
    %v1120 = vpop.f32.mrb[0].mxu0
    %v1121 = vpop.f32.mrb[0].mxu0
    %v1122 = vpop.f32.mrb[0].mxu0
    %1123 = vdwg.mxu0
    %v1128 = vunpack.c.l.b16 %v380
    %v1129 = vunpack.c.l.b16 %v381
    %v1130 = vunpack.c.l.b16 %v382
    %v1131 = vunpack.c.l.b16 %v383
    %v1132 = vpack.c.b16 %v1129, %v1128
    %v1133 = vpack.c.b16 %v1131, %v1130
    %v1137 = vsel %vm420, %v325, 0
    %1139 = vmatprep.subr.bf16.mxu0 0
    %1140 = vmatpush1.bf16.msra.mxu0 %v1132
    %1141 = vmatprep.subr.bf16.mxu0 0
    %1142 = vmatpush1.bf16.msra.mxu0 %v1133
    %1143 = vmatprep.subr.bf16.mxu0 0
    %1144 = vmatpush1.bf16.msra.mxu0 0
    %1145 = vmatprep.subr.bf16.mxu0 0
    %1146 = vmatpush1.bf16.msra.mxu0 0
    %1147 = vmatprep.subr.bf16.mxu0 0
    %1148 = vmatpush1.bf16.msra.mxu0 0
    %1149 = vmatprep.subr.bf16.mxu0 0
    %1150 = vmatpush1.bf16.msra.mxu0 0
    %1151 = vmatprep.subr.bf16.mxu0 0
    %1152 = vmatpush1.bf16.msra.mxu0 0
    %1153 = vmatprep.subr.bf16.mxu0 0
    %1154 = vmatpush1.bf16.msra.mxu0 0
    %1155 = vmatprep.subr.bf16.mxu0 0
    %1156 = vmatpush1.bf16.msra.mxu0 0
    %1157 = vmatprep.subr.bf16.mxu0 0
    %1158 = vmatpush1.bf16.msra.mxu0 0
    %1159 = vmatprep.subr.bf16.mxu0 0
    %1160 = vmatpush1.bf16.msra.mxu0 0
    %1161 = vmatprep.subr.bf16.mxu0 0
    %1162 = vmatpush1.bf16.msra.mxu0 0
    %1163 = vmatprep.subr.bf16.mxu0 0
    %1164 = vmatpush1.bf16.msra.mxu0 0
    %1165 = vmatprep.subr.bf16.mxu0 0
    %1166 = vmatpush1.bf16.msra.mxu0 0
    %1167 = vmatprep.subr.bf16.mxu0 0
    %1168 = vmatpush1.bf16.msra.mxu0 0
    %1169 = vmatprep.subr.bf16.mxu0 0
    %1170 = vmatpush1.bf16.msra.mxu0 0
    %1171 = vmatprep.mubr.bf16.mxu0 0
    %1172 = vmatmul.mubr.bf16.gmra.mrb[0].mxu0 %v1137
    %v1173 = vpop.f32.mrb[0].mxu0
    %v1174 = vadd.f32 0.0, %v1173
    %v1175 = vpop.f32.mrb[0].mxu0
    %v1176 = vpop.f32.mrb[0].mxu0
    %v1177 = vpop.f32.mrb[0].mxu0
    %1178 = vdwg.mxu0
    %v1183 = vunpack.c.l.b16 %v384
    %v1184 = vunpack.c.l.b16 %v385
    %v1185 = vunpack.c.l.b16 %v386
    %v1186 = vunpack.c.l.b16 %v387
    %v1187 = vpack.c.b16 %v1184, %v1183
    %v1188 = vpack.c.b16 %v1186, %v1185
    %v1192 = vsel %vm420, %v326, 0
    %1194 = vmatprep.subr.bf16.mxu0 0
    %1195 = vmatpush1.bf16.msra.mxu0 %v1187
    %1196 = vmatprep.subr.bf16.mxu0 0
    %1197 = vmatpush1.bf16.msra.mxu0 %v1188
    %1198 = vmatprep.subr.bf16.mxu0 0
    %1199 = vmatpush1.bf16.msra.mxu0 0
    %1200 = vmatprep.subr.bf16.mxu0 0
    %1201 = vmatpush1.bf16.msra.mxu0 0
    %1202 = vmatprep.subr.bf16.mxu0 0
    %1203 = vmatpush1.bf16.msra.mxu0 0
    %1204 = vmatprep.subr.bf16.mxu0 0
    %1205 = vmatpush1.bf16.msra.mxu0 0
    %1206 = vmatprep.subr.bf16.mxu0 0
    %1207 = vmatpush1.bf16.msra.mxu0 0
    %1208 = vmatprep.subr.bf16.mxu0 0
    %1209 = vmatpush1.bf16.msra.mxu0 0
    %1210 = vmatprep.subr.bf16.mxu0 0
    %1211 = vmatpush1.bf16.msra.mxu0 0
    %1212 = vmatprep.subr.bf16.mxu0 0
    %1213 = vmatpush1.bf16.msra.mxu0 0
    %1214 = vmatprep.subr.bf16.mxu0 0
    %1215 = vmatpush1.bf16.msra.mxu0 0
    %1216 = vmatprep.subr.bf16.mxu0 0
    %1217 = vmatpush1.bf16.msra.mxu0 0
    %1218 = vmatprep.subr.bf16.mxu0 0
    %1219 = vmatpush1.bf16.msra.mxu0 0
    %1220 = vmatprep.subr.bf16.mxu0 0
    %1221 = vmatpush1.bf16.msra.mxu0 0
    %1222 = vmatprep.subr.bf16.mxu0 0
    %1223 = vmatpush1.bf16.msra.mxu0 0
    %1224 = vmatprep.subr.bf16.mxu0 0
    %1225 = vmatpush1.bf16.msra.mxu0 0
    %1226 = vmatprep.mubr.bf16.mxu0 0
    %1227 = vmatmul.mubr.bf16.gmra.mrb[0].mxu0 %v1192
    %v1228 = vpop.f32.mrb[0].mxu0
    %v1229 = vadd.f32 0.0, %v1228
    %v1230 = vpop.f32.mrb[0].mxu0
    %v1231 = vpop.f32.mrb[0].mxu0
    %v1232 = vpop.f32.mrb[0].mxu0
    %1233 = vdwg.mxu0
    %v1238 = vunpack.c.l.b16 %v388
    %v1239 = vunpack.c.l.b16 %v389
    %v1240 = vunpack.c.l.b16 %v390
    %v1241 = vunpack.c.l.b16 %v391
    %v1242 = vpack.c.b16 %v1239, %v1238
    %v1243 = vpack.c.b16 %v1241, %v1240
    %v1247 = vsel %vm420, %v327, 0
    %1249 = vmatprep.subr.bf16.mxu0 0
    %1250 = vmatpush1.bf16.msra.mxu0 %v1242
    %1251 = vmatprep.subr.bf16.mxu0 0
    %1252 = vmatpush1.bf16.msra.mxu0 %v1243
    %1253 = vmatprep.subr.bf16.mxu0 0
    %1254 = vmatpush1.bf16.msra.mxu0 0
    %1255 = vmatprep.subr.bf16.mxu0 0
    %1256 = vmatpush1.bf16.msra.mxu0 0
    %1257 = vmatprep.subr.bf16.mxu0 0
    %1258 = vmatpush1.bf16.msra.mxu0 0
    %1259 = vmatprep.subr.bf16.mxu0 0
    %1260 = vmatpush1.bf16.msra.mxu0 0
    %1261 = vmatprep.subr.bf16.mxu0 0
    %1262 = vmatpush1.bf16.msra.mxu0 0
    %1263 = vmatprep.subr.bf16.mxu0 0
    %1264 = vmatpush1.bf16.msra.mxu0 0
    %1265 = vmatprep.subr.bf16.mxu0 0
    %1266 = vmatpush1.bf16.msra.mxu0 0
    %1267 = vmatprep.subr.bf16.mxu0 0
    %1268 = vmatpush1.bf16.msra.mxu0 0
    %1269 = vmatprep.subr.bf16.mxu0 0
    %1270 = vmatpush1.bf16.msra.mxu0 0
    %1271 = vmatprep.subr.bf16.mxu0 0
    %1272 = vmatpush1.bf16.msra.mxu0 0
    %1273 = vmatprep.subr.bf16.mxu0 0
    %1274 = vmatpush1.bf16.msra.mxu0 0
    %1275 = vmatprep.subr.bf16.mxu0 0
    %1276 = vmatpush1.bf16.msra.mxu0 0
    %1277 = vmatprep.subr.bf16.mxu0 0
    %1278 = vmatpush1.bf16.msra.mxu0 0
    %1279 = vmatprep.subr.bf16.mxu0 0
    %1280 = vmatpush1.bf16.msra.mxu0 0
    %1281 = vmatprep.mubr.bf16.mxu0 0
    %1282 = vmatmul.mubr.bf16.gmra.mrb[0].mxu0 %v1247
    %v1283 = vpop.f32.mrb[0].mxu0
    %v1284 = vadd.f32 0.0, %v1283
    %v1285 = vpop.f32.mrb[0].mxu0
    %v1286 = vpop.f32.mrb[0].mxu0
    %v1287 = vpop.f32.mrb[0].mxu0
    %1288 = vdwg.mxu0
    %v1289 = vld [vmem:[#allocation10] sm:$0x1]
    %v1290 = vld [vmem:[#allocation11] sm:$0x1]
    %vm1291 = vcmask 60416
    %v1292 = vsel %vm1291, %v459, 0.0
    %1293 = vadd.xlane.f32.xlu0 %v1292
    %v1294 = vpop.xlane.xlu0 %1293
    %v1295 = vsel %vm1291, %v514, 0.0
    %1296 = vadd.xlane.f32.xlu0 %v1295
    %v1297 = vpop.xlane.xlu0 %1296
    %v1298 = vsel %vm1291, %v569, 0.0
    %1299 = vadd.xlane.f32.xlu0 %v1298
    %v1300 = vpop.xlane.xlu0 %1299
    %v1301 = vsel %vm1291, %v624, 0.0
    %1302 = vadd.xlane.f32.xlu0 %v1301
    %v1303 = vpop.xlane.xlu0 %1302
    %v1304 = vsel %vm1291, %v679, 0.0
    %1305 = vadd.xlane.f32.xlu0 %v1304
    %v1306 = vpop.xlane.xlu0 %1305
    %v1307 = vsel %vm1291, %v734, 0.0
    %1308 = vadd.xlane.f32.xlu0 %v1307
    %v1309 = vpop.xlane.xlu0 %1308
    %v1310 = vsel %vm1291, %v789, 0.0
    %1311 = vadd.xlane.f32.xlu0 %v1310
    %v1312 = vpop.xlane.xlu0 %1311
    %v1313 = vsel %vm1291, %v844, 0.0
    %1314 = vadd.xlane.f32.xlu0 %v1313
    %v1315 = vpop.xlane.xlu0 %1314
    %v1316 = vsel %vm1291, %v899, 0.0
    %1317 = vadd.xlane.f32.xlu0 %v1316
    %v1318 = vpop.xlane.xlu0 %1317
    %v1319 = vsel %vm1291, %v954, 0.0
    %1320 = vadd.xlane.f32.xlu0 %v1319
    %v1321 = vpop.xlane.xlu0 %1320
    %v1322 = vsel %vm1291, %v1009, 0.0
    %1323 = vadd.xlane.f32.xlu0 %v1322
    %v1324 = vpop.xlane.xlu0 %1323
    %v1325 = vsel %vm1291, %v1064, 0.0
    %1326 = vadd.xlane.f32.xlu0 %v1325
    %v1327 = vpop.xlane.xlu0 %1326
    %v1328 = vsel %vm1291, %v1119, 0.0
    %1329 = vadd.xlane.f32.xlu0 %v1328
    %v1330 = vpop.xlane.xlu0 %1329
    %v1331 = vsel %vm1291, %v1174, 0.0
    %1332 = vadd.xlane.f32.xlu0 %v1331
    %v1333 = vpop.xlane.xlu0 %1332
    %v1334 = vsel %vm1291, %v1229, 0.0
    %1335 = vadd.xlane.f32.xlu0 %v1334
    %v1336 = vpop.xlane.xlu0 %1335
    %v1337 = vsel %vm1291, %v1284, 0.0
    %1338 = vadd.xlane.f32.xlu0 %v1337
    %v1339 = vpop.xlane.xlu0 %1338
    %v1340 = vrcp.pop 8.0
    %v1341 = vmul.f32 %v1294, %v1340
    %v1342 = vmul.f32 %v1297, %v1340
    %v1343 = vmul.f32 %v1300, %v1340
    %v1344 = vmul.f32 %v1303, %v1340
    %v1345 = vmul.f32 %v1306, %v1340
    %v1346 = vmul.f32 %v1309, %v1340
    %v1347 = vmul.f32 %v1312, %v1340
    %v1348 = vmul.f32 %v1315, %v1340
    %v1349 = vmul.f32 %v1318, %v1340
    %v1350 = vmul.f32 %v1321, %v1340
    %v1351 = vmul.f32 %v1324, %v1340
    %v1352 = vmul.f32 %v1327, %v1340
    %v1353 = vmul.f32 %v1330, %v1340
    %v1354 = vmul.f32 %v1333, %v1340
    %v1355 = vmul.f32 %v1336, %v1340
    %v1356 = vmul.f32 %v1339, %v1340
    %v1357 = vsub.f32 %v459, %v1341
    %v1358 = vsub.f32 %v514, %v1342
    %v1359 = vsub.f32 %v569, %v1343
    %v1360 = vsub.f32 %v624, %v1344
    %v1361 = vsub.f32 %v679, %v1345
    %v1362 = vsub.f32 %v734, %v1346
    %v1363 = vsub.f32 %v789, %v1347
    %v1364 = vsub.f32 %v844, %v1348
    %v1365 = vsub.f32 %v899, %v1349
    %v1366 = vsub.f32 %v954, %v1350
    %v1367 = vsub.f32 %v1009, %v1351
    %v1368 = vsub.f32 %v1064, %v1352
    %v1369 = vsub.f32 %v1119, %v1353
    %v1370 = vsub.f32 %v1174, %v1354
    %v1371 = vsub.f32 %v1229, %v1355
    %v1372 = vsub.f32 %v1284, %v1356
    %v1373 = vmul.f32 %v1357, %v1357
    %v1374 = vmul.f32 %v1358, %v1358
    %v1375 = vmul.f32 %v1359, %v1359
    %v1376 = vmul.f32 %v1360, %v1360
    %v1377 = vmul.f32 %v1361, %v1361
    %v1378 = vmul.f32 %v1362, %v1362
    %v1379 = vmul.f32 %v1363, %v1363
    %v1380 = vmul.f32 %v1364, %v1364
    %v1381 = vmul.f32 %v1365, %v1365
    %v1382 = vmul.f32 %v1366, %v1366
    %v1383 = vmul.f32 %v1367, %v1367
    %v1384 = vmul.f32 %v1368, %v1368
    %v1385 = vmul.f32 %v1369, %v1369
    %v1386 = vmul.f32 %v1370, %v1370
    %v1387 = vmul.f32 %v1371, %v1371
    %v1388 = vmul.f32 %v1372, %v1372
    %v1389 = vsel %vm1291, %v1373, 0.0
    %1390 = vadd.xlane.f32.xlu0 %v1389
    %v1391 = vpop.xlane.xlu0 %1390
    %v1392 = vsel %vm1291, %v1374, 0.0
    %1393 = vadd.xlane.f32.xlu0 %v1392
    %v1394 = vpop.xlane.xlu0 %1393
    %v1395 = vsel %vm1291, %v1375, 0.0
    %1396 = vadd.xlane.f32.xlu0 %v1395
    %v1397 = vpop.xlane.xlu0 %1396
    %v1398 = vsel %vm1291, %v1376, 0.0
    %1399 = vadd.xlane.f32.xlu0 %v1398
    %v1400 = vpop.xlane.xlu0 %1399
    %v1401 = vsel %vm1291, %v1377, 0.0
    %1402 = vadd.xlane.f32.xlu0 %v1401
    %v1403 = vpop.xlane.xlu0 %1402
    %v1404 = vsel %vm1291, %v1378, 0.0
    %1405 = vadd.xlane.f32.xlu0 %v1404
    %v1406 = vpop.xlane.xlu0 %1405
    %v1407 = vsel %vm1291, %v1379, 0.0
    %1408 = vadd.xlane.f32.xlu0 %v1407
    %v1409 = vpop.xlane.xlu0 %1408
    %v1410 = vsel %vm1291, %v1380, 0.0
    %1411 = vadd.xlane.f32.xlu0 %v1410
    %v1412 = vpop.xlane.xlu0 %1411
    %v1413 = vsel %vm1291, %v1381, 0.0
    %1414 = vadd.xlane.f32.xlu0 %v1413
    %v1415 = vpop.xlane.xlu0 %1414
    %v1416 = vsel %vm1291, %v1382, 0.0
    %1417 = vadd.xlane.f32.xlu0 %v1416
    %v1418 = vpop.xlane.xlu0 %1417
    %v1419 = vsel %vm1291, %v1383, 0.0
    %1420 = vadd.xlane.f32.xlu0 %v1419
    %v1421 = vpop.xlane.xlu0 %1420
    %v1422 = vsel %vm1291, %v1384, 0.0
    %1423 = vadd.xlane.f32.xlu0 %v1422
    %v1424 = vpop.xlane.xlu0 %1423
    %v1425 = vsel %vm1291, %v1385, 0.0
    %1426 = vadd.xlane.f32.xlu0 %v1425
    %v1427 = vpop.xlane.xlu0 %1426
    %v1428 = vsel %vm1291, %v1386, 0.0
    %1429 = vadd.xlane.f32.xlu0 %v1428
    %v1430 = vpop.xlane.xlu0 %1429
    %v1431 = vsel %vm1291, %v1387, 0.0
    %1432 = vadd.xlane.f32.xlu0 %v1431
    %v1433 = vpop.xlane.xlu0 %1432
    %v1434 = vsel %vm1291, %v1388, 0.0
    %1435 = vadd.xlane.f32.xlu0 %v1434
    %v1436 = vpop.xlane.xlu0 %1435
    %v1437 = vmul.f32 %v1391, %v1340
    %v1438 = vmul.f32 %v1394, %v1340
    %v1439 = vmul.f32 %v1397, %v1340
    %v1440 = vmul.f32 %v1400, %v1340
    %v1441 = vmul.f32 %v1403, %v1340
    %v1442 = vmul.f32 %v1406, %v1340
    %v1443 = vmul.f32 %v1409, %v1340
    %v1444 = vmul.f32 %v1412, %v1340
    %v1445 = vmul.f32 %v1415, %v1340
    %v1446 = vmul.f32 %v1418, %v1340
    %v1447 = vmul.f32 %v1421, %v1340
    %v1448 = vmul.f32 %v1424, %v1340
    %v1449 = vmul.f32 %v1427, %v1340
    %v1450 = vmul.f32 %v1430, %v1340
    %v1451 = vmul.f32 %v1433, %v1340
    %v1452 = vmul.f32 %v1436, %v1340
    %v1453 = vadd.f32 %v1437, 1e-05
    %v1454 = vadd.f32 %v1438, 1e-05
    %v1455 = vadd.f32 %v1439, 1e-05
    %v1456 = vadd.f32 %v1440, 1e-05
    %v1457 = vadd.f32 %v1441, 1e-05
    %v1458 = vadd.f32 %v1442, 1e-05
    %v1459 = vadd.f32 %v1443, 1e-05
    %v1460 = vadd.f32 %v1444, 1e-05
    %v1461 = vadd.f32 %v1445, 1e-05
    %v1462 = vadd.f32 %v1446, 1e-05
    %v1463 = vadd.f32 %v1447, 1e-05
    %v1464 = vadd.f32 %v1448, 1e-05
    %v1465 = vadd.f32 %v1449, 1e-05
    %v1466 = vadd.f32 %v1450, 1e-05
    %v1467 = vadd.f32 %v1451, 1e-05
    %v1468 = vadd.f32 %v1452, 1e-05
    %v1469 = vrsqrt.pop %v1453
    %v1470 = vrsqrt.pop %v1454
    %v1471 = vrsqrt.pop %v1455
    %v1472 = vrsqrt.pop %v1456
    %v1473 = vrsqrt.pop %v1457
    %v1474 = vrsqrt.pop %v1458
    %v1475 = vrsqrt.pop %v1459
    %v1476 = vrsqrt.pop %v1460
    %v1477 = vrsqrt.pop %v1461
    %v1478 = vrsqrt.pop %v1462
    %v1479 = vrsqrt.pop %v1463
    %v1480 = vrsqrt.pop %v1464
    %v1481 = vrsqrt.pop %v1465
    %v1482 = vrsqrt.pop %v1466
    %v1483 = vrsqrt.pop %v1467
    %v1484 = vrsqrt.pop %v1468
    %v1485 = vmul.f32 %v1357, %v1469
    %v1486 = vmul.f32 %v1358, %v1470
    %v1487 = vmul.f32 %v1359, %v1471
    %v1488 = vmul.f32 %v1360, %v1472
    %v1489 = vmul.f32 %v1361, %v1473
    %v1490 = vmul.f32 %v1362, %v1474
    %v1491 = vmul.f32 %v1363, %v1475
    %v1492 = vmul.f32 %v1364, %v1476
    %v1493 = vmul.f32 %v1365, %v1477
    %v1494 = vmul.f32 %v1366, %v1478
    %v1495 = vmul.f32 %v1367, %v1479
    %v1496 = vmul.f32 %v1368, %v1480
    %v1497 = vmul.f32 %v1369, %v1481
    %v1498 = vmul.f32 %v1370, %v1482
    %v1499 = vmul.f32 %v1371, %v1483
    %v1500 = vmul.f32 %v1372, %v1484
    %v1502 = vlaneseq
    %v1503 = vshrl.u32 %v1502, 7
    %v1504 = vsub.s32 0, %v1503
    %v1505 = vrot.slane %v1289, %v1504
    %v1507 = vmul.f32 %v1485, %v1505
    %v1508 = vmul.f32 %v1486, %v1505
    %v1509 = vmul.f32 %v1487, %v1505
    %v1510 = vmul.f32 %v1488, %v1505
    %v1511 = vmul.f32 %v1489, %v1505
    %v1512 = vmul.f32 %v1490, %v1505
    %v1513 = vmul.f32 %v1491, %v1505
    %v1514 = vmul.f32 %v1492, %v1505
    %v1515 = vmul.f32 %v1493, %v1505
    %v1516 = vmul.f32 %v1494, %v1505
    %v1517 = vmul.f32 %v1495, %v1505
    %v1518 = vmul.f32 %v1496, %v1505
    %v1519 = vmul.f32 %v1497, %v1505
    %v1520 = vmul.f32 %v1498, %v1505
    %v1521 = vmul.f32 %v1499, %v1505
    %v1522 = vmul.f32 %v1500, %v1505
    %v1524 = vlaneseq
    %v1525 = vshrl.u32 %v1524, 7
    %v1526 = vsub.s32 0, %v1525
    %v1527 = vrot.slane %v1290, %v1526
    %v1529 = vadd.f32 %v1507, %v1527
    %v1530 = vadd.f32 %v1508, %v1527
    %v1531 = vadd.f32 %v1509, %v1527
    %v1532 = vadd.f32 %v1510, %v1527
    %v1533 = vadd.f32 %v1511, %v1527
    %v1534 = vadd.f32 %v1512, %v1527
    %v1535 = vadd.f32 %v1513, %v1527
    %v1536 = vadd.f32 %v1514, %v1527
    %v1537 = vadd.f32 %v1515, %v1527
    %v1538 = vadd.f32 %v1516, %v1527
    %v1539 = vadd.f32 %v1517, %v1527
    %v1540 = vadd.f32 %v1518, %v1527
    %v1541 = vadd.f32 %v1519, %v1527
    %v1542 = vadd.f32 %v1520, %v1527
    %v1543 = vadd.f32 %v1521, %v1527
    %v1544 = vadd.f32 %v1522, %v1527
    %v1545 = vmax.f32 %v1529, 0.0
    %v1546 = vmax.f32 %v1530, 0.0
    %v1547 = vmax.f32 %v1531, 0.0
    %v1548 = vmax.f32 %v1532, 0.0
    %v1549 = vmax.f32 %v1533, 0.0
    %v1550 = vmax.f32 %v1534, 0.0
    %v1551 = vmax.f32 %v1535, 0.0
    %v1552 = vmax.f32 %v1536, 0.0
    %v1553 = vmax.f32 %v1537, 0.0
    %v1554 = vmax.f32 %v1538, 0.0
    %v1555 = vmax.f32 %v1539, 0.0
    %v1556 = vmax.f32 %v1540, 0.0
    %v1557 = vmax.f32 %v1541, 0.0
    %v1558 = vmax.f32 %v1542, 0.0
    %v1559 = vmax.f32 %v1543, 0.0
    %v1560 = vmax.f32 %v1544, 0.0
    %v1561 = vpack.c.bf16 %v1545, %v1545
    %v1562 = vpack.c.bf16 %v1546, %v1546
    %v1563 = vpack.c.bf16 %v1547, %v1547
    %v1564 = vpack.c.bf16 %v1548, %v1548
    %v1565 = vpack.c.bf16 %v1549, %v1549
    %v1566 = vpack.c.bf16 %v1550, %v1550
    %v1567 = vpack.c.bf16 %v1551, %v1551
    %v1568 = vpack.c.bf16 %v1552, %v1552
    %v1569 = vpack.c.bf16 %v1553, %v1553
    %v1570 = vpack.c.bf16 %v1554, %v1554
    %v1571 = vpack.c.bf16 %v1555, %v1555
    %v1572 = vpack.c.bf16 %v1556, %v1556
    %v1573 = vpack.c.bf16 %v1557, %v1557
    %v1574 = vpack.c.bf16 %v1558, %v1558
    %v1575 = vpack.c.bf16 %v1559, %v1559
    %v1576 = vpack.c.bf16 %v1560, %v1560
    %vm1577 = vcmask 64512
    %v1579 = vsel %vm1577, %v1561, 0
    %vm1581 = vcmask 1043456
    %v1583 = vsel %vm1581, %v392, 0
    %1585 = vmatprep.subr.bf16.mxu0 0
    %1586 = vmatpush1.bf16.msra.mxu0 %v1583
    %1587 = vmatprep.subr.bf16.mxu0 0
    %1588 = vmatpush1.bf16.msra.mxu0 0
    %1589 = vmatprep.subr.bf16.mxu0 0
    %1590 = vmatpush1.bf16.msra.mxu0 0
    %1591 = vmatprep.subr.bf16.mxu0 0
    %1592 = vmatpush1.bf16.msra.mxu0 0
    %1593 = vmatprep.subr.bf16.mxu0 0
    %1594 = vmatpush1.bf16.msra.mxu0 0
    %1595 = vmatprep.subr.bf16.mxu0 0
    %1596 = vmatpush1.bf16.msra.mxu0 0
    %1597 = vmatprep.subr.bf16.mxu0 0
    %1598 = vmatpush1.bf16.msra.mxu0 0
    %1599 = vmatprep.subr.bf16.mxu0 0
    %1600 = vmatpush1.bf16.msra.mxu0 0
    %1601 = vmatprep.subr.bf16.mxu0 0
    %1602 = vmatpush1.bf16.msra.mxu0 0
    %1603 = vmatprep.subr.bf16.mxu0 0
    %1604 = vmatpush1.bf16.msra.mxu0 0
    %1605 = vmatprep.subr.bf16.mxu0 0
    %1606 = vmatpush1.bf16.msra.mxu0 0
    %1607 = vmatprep.subr.bf16.mxu0 0
    %1608 = vmatpush1.bf16.msra.mxu0 0
    %1609 = vmatprep.subr.bf16.mxu0 0
    %1610 = vmatpush1.bf16.msra.mxu0 0
    %1611 = vmatprep.subr.bf16.mxu0 0
    %1612 = vmatpush1.bf16.msra.mxu0 0
    %1613 = vmatprep.subr.bf16.mxu0 0
    %1614 = vmatpush1.bf16.msra.mxu0 0
    %1615 = vmatprep.subr.bf16.mxu0 0
    %1616 = vmatpush1.bf16.msra.mxu0 0
    %1617 = vmatprep.mubr.bf16.mxu0 0
    %1618 = vmatmul.mubr.bf16.gmra.mrb[0].mxu0 %v1579
    %v1619 = vpop.f32.mrb[0].mxu0
    %v1620 = vadd.f32 0.0, %v1619
    %v1621 = vpop.f32.mrb[0].mxu0
    %v1622 = vpop.f32.mrb[0].mxu0
    %v1623 = vpop.f32.mrb[0].mxu0
    %1624 = vdwg.mxu0
    %v1626 = vsel %vm1577, %v1562, 0
    %v1629 = vsel %vm1581, %v393, 0
    %1631 = vmatprep.subr.bf16.mxu0 0
    %1632 = vmatpush1.bf16.msra.mxu0 %v1629
    %1633 = vmatprep.subr.bf16.mxu0 0
    %1634 = vmatpush1.bf16.msra.mxu0 0
    %1635 = vmatprep.subr.bf16.mxu0 0
    %1636 = vmatpush1.bf16.msra.mxu0 0
    %1637 = vmatprep.subr.bf16.mxu0 0
    %1638 = vmatpush1.bf16.msra.mxu0 0
    %1639 = vmatprep.subr.bf16.mxu0 0
    %1640 = vmatpush1.bf16.msra.mxu0 0
    %1641 = vmatprep.subr.bf16.mxu0 0
    %1642 = vmatpush1.bf16.msra.mxu0 0
    %1643 = vmatprep.subr.bf16.mxu0 0
    %1644 = vmatpush1.bf16.msra.mxu0 0
    %1645 = vmatprep.subr.bf16.mxu0 0
    %1646 = vmatpush1.bf16.msra.mxu0 0
    %1647 = vmatprep.subr.bf16.mxu0 0
    %1648 = vmatpush1.bf16.msra.mxu0 0
    %1649 = vmatprep.subr.bf16.mxu0 0
    %1650 = vmatpush1.bf16.msra.mxu0 0
    %1651 = vmatprep.subr.bf16.mxu0 0
    %1652 = vmatpush1.bf16.msra.mxu0 0
    %1653 = vmatprep.subr.bf16.mxu0 0
    %1654 = vmatpush1.bf16.msra.mxu0 0
    %1655 = vmatprep.subr.bf16.mxu0 0
    %1656 = vmatpush1.bf16.msra.mxu0 0
    %1657 = vmatprep.subr.bf16.mxu0 0
    %1658 = vmatpush1.bf16.msra.mxu0 0
    %1659 = vmatprep.subr.bf16.mxu0 0
    %1660 = vmatpush1.bf16.msra.mxu0 0
    %1661 = vmatprep.subr.bf16.mxu0 0
    %1662 = vmatpush1.bf16.msra.mxu0 0
    %1663 = vmatprep.mubr.bf16.mxu0 0
    %1664 = vmatmul.mubr.bf16.gmra.mrb[0].mxu0 %v1626
    %v1665 = vpop.f32.mrb[0].mxu0
    %v1666 = vadd.f32 0.0, %v1665
    %v1667 = vpop.f32.mrb[0].mxu0
    %v1668 = vpop.f32.mrb[0].mxu0
    %v1669 = vpop.f32.mrb[0].mxu0
    %1670 = vdwg.mxu0
    %v1672 = vsel %vm1577, %v1563, 0
    %v1675 = vsel %vm1581, %v394, 0
    %1677 = vmatprep.subr.bf16.mxu0 0
    %1678 = vmatpush1.bf16.msra.mxu0 %v1675
    %1679 = vmatprep.subr.bf16.mxu0 0
    %1680 = vmatpush1.bf16.msra.mxu0 0
    %1681 = vmatprep.subr.bf16.mxu0 0
    %1682 = vmatpush1.bf16.msra.mxu0 0
    %1683 = vmatprep.subr.bf16.mxu0 0
    %1684 = vmatpush1.bf16.msra.mxu0 0
    %1685 = vmatprep.subr.bf16.mxu0 0
    %1686 = vmatpush1.bf16.msra.mxu0 0
    %1687 = vmatprep.subr.bf16.mxu0 0
    %1688 = vmatpush1.bf16.msra.mxu0 0
    %1689 = vmatprep.subr.bf16.mxu0 0
    %1690 = vmatpush1.bf16.msra.mxu0 0
    %1691 = vmatprep.subr.bf16.mxu0 0
    %1692 = vmatpush1.bf16.msra.mxu0 0
    %1693 = vmatprep.subr.bf16.mxu0 0
    %1694 = vmatpush1.bf16.msra.mxu0 0
    %1695 = vmatprep.subr.bf16.mxu0 0
    %1696 = vmatpush1.bf16.msra.mxu0 0
    %1697 = vmatprep.subr.bf16.mxu0 0
    %1698 = vmatpush1.bf16.msra.mxu0 0
    %1699 = vmatprep.subr.bf16.mxu0 0
    %1700 = vmatpush1.bf16.msra.mxu0 0
    %1701 = vmatprep.subr.bf16.mxu0 0
    %1702 = vmatpush1.bf16.msra.mxu0 0
    %1703 = vmatprep.subr.bf16.mxu0 0
    %1704 = vmatpush1.bf16.msra.mxu0 0
    %1705 = vmatprep.subr.bf16.mxu0 0
    %1706 = vmatpush1.bf16.msra.mxu0 0
    %1707 = vmatprep.subr.bf16.mxu0 0
    %1708 = vmatpush1.bf16.msra.mxu0 0
    %1709 = vmatprep.mubr.bf16.mxu0 0
    %1710 = vmatmul.mubr.bf16.gmra.mrb[0].mxu0 %v1672
    %v1711 = vpop.f32.mrb[0].mxu0
    %v1712 = vadd.f32 0.0, %v1711
    %v1713 = vpop.f32.mrb[0].mxu0
    %v1714 = vpop.f32.mrb[0].mxu0
    %v1715 = vpop.f32.mrb[0].mxu0
    %1716 = vdwg.mxu0
    %v1718 = vsel %vm1577, %v1564, 0
    %v1721 = vsel %vm1581, %v395, 0
    %1723 = vmatprep.subr.bf16.mxu0 0
    %1724 = vmatpush1.bf16.msra.mxu0 %v1721
    %1725 = vmatprep.subr.bf16.mxu0 0
    %1726 = vmatpush1.bf16.msra.mxu0 0
    %1727 = vmatprep.subr.bf16.mxu0 0
    %1728 = vmatpush1.bf16.msra.mxu0 0
    %1729 = vmatprep.subr.bf16.mxu0 0
    %1730 = vmatpush1.bf16.msra.mxu0 0
    %1731 = vmatprep.subr.bf16.mxu0 0
    %1732 = vmatpush1.bf16.msra.mxu0 0
    %1733 = vmatprep.subr.bf16.mxu0 0
    %1734 = vmatpush1.bf16.msra.mxu0 0
    %1735 = vmatprep.subr.bf16.mxu0 0
    %1736 = vmatpush1.bf16.msra.mxu0 0
    %1737 = vmatprep.subr.bf16.mxu0 0
    %1738 = vmatpush1.bf16.msra.mxu0 0
    %1739 = vmatprep.subr.bf16.mxu0 0
    %1740 = vmatpush1.bf16.msra.mxu0 0
    %1741 = vmatprep.subr.bf16.mxu0 0
    %1742 = vmatpush1.bf16.msra.mxu0 0
    %1743 = vmatprep.subr.bf16.mxu0 0
    %1744 = vmatpush1.bf16.msra.mxu0 0
    %1745 = vmatprep.subr.bf16.mxu0 0
    %1746 = vmatpush1.bf16.msra.mxu0 0
    %1747 = vmatprep.subr.bf16.mxu0 0
    %1748 = vmatpush1.bf16.msra.mxu0 0
    %1749 = vmatprep.subr.bf16.mxu0 0
    %1750 = vmatpush1.bf16.msra.mxu0 0
    %1751 = vmatprep.subr.bf16.mxu0 0
    %1752 = vmatpush1.bf16.msra.mxu0 0
    %1753 = vmatprep.subr.bf16.mxu0 0
    %1754 = vmatpush1.bf16.msra.mxu0 0
    %1755 = vmatprep.mubr.bf16.mxu0 0
    %1756 = vmatmul.mubr.bf16.gmra.mrb[0].mxu0 %v1718
    %v1757 = vpop.f32.mrb[0].mxu0
    %v1758 = vadd.f32 0.0, %v1757
    %v1759 = vpop.f32.mrb[0].mxu0
    %v1760 = vpop.f32.mrb[0].mxu0
    %v1761 = vpop.f32.mrb[0].mxu0
    %1762 = vdwg.mxu0
    %v1764 = vsel %vm1577, %v1565, 0
    %v1767 = vsel %vm1581, %v396, 0
    %1769 = vmatprep.subr.bf16.mxu0 0
    %1770 = vmatpush1.bf16.msra.mxu0 %v1767
    %1771 = vmatprep.subr.bf16.mxu0 0
    %1772 = vmatpush1.bf16.msra.mxu0 0
    %1773 = vmatprep.subr.bf16.mxu0 0
    %1774 = vmatpush1.bf16.msra.mxu0 0
    %1775 = vmatprep.subr.bf16.mxu0 0
    %1776 = vmatpush1.bf16.msra.mxu0 0
    %1777 = vmatprep.subr.bf16.mxu0 0
    %1778 = vmatpush1.bf16.msra.mxu0 0
    %1779 = vmatprep.subr.bf16.mxu0 0
    %1780 = vmatpush1.bf16.msra.mxu0 0
    %1781 = vmatprep.subr.bf16.mxu0 0
    %1782 = vmatpush1.bf16.msra.mxu0 0
    %1783 = vmatprep.subr.bf16.mxu0 0
    %1784 = vmatpush1.bf16.msra.mxu0 0
    %1785 = vmatprep.subr.bf16.mxu0 0
    %1786 = vmatpush1.bf16.msra.mxu0 0
    %1787 = vmatprep.subr.bf16.mxu0 0
    %1788 = vmatpush1.bf16.msra.mxu0 0
    %1789 = vmatprep.subr.bf16.mxu0 0
    %1790 = vmatpush1.bf16.msra.mxu0 0
    %1791 = vmatprep.subr.bf16.mxu0 0
    %1792 = vmatpush1.bf16.msra.mxu0 0
    %1793 = vmatprep.subr.bf16.mxu0 0
    %1794 = vmatpush1.bf16.msra.mxu0 0
    %1795 = vmatprep.subr.bf16.mxu0 0
    %1796 = vmatpush1.bf16.msra.mxu0 0
    %1797 = vmatprep.subr.bf16.mxu0 0
    %1798 = vmatpush1.bf16.msra.mxu0 0
    %1799 = vmatprep.subr.bf16.mxu0 0
    %1800 = vmatpush1.bf16.msra.mxu0 0
    %1801 = vmatprep.mubr.bf16.mxu0 0
    %1802 = vmatmul.mubr.bf16.gmra.mrb[0].mxu0 %v1764
    %v1803 = vpop.f32.mrb[0].mxu0
    %v1804 = vadd.f32 0.0, %v1803
    %v1805 = vpop.f32.mrb[0].mxu0
    %v1806 = vpop.f32.mrb[0].mxu0
    %v1807 = vpop.f32.mrb[0].mxu0
    %1808 = vdwg.mxu0
    %v1810 = vsel %vm1577, %v1566, 0
    %v1813 = vsel %vm1581, %v397, 0
    %1815 = vmatprep.subr.bf16.mxu0 0
    %1816 = vmatpush1.bf16.msra.mxu0 %v1813
    %1817 = vmatprep.subr.bf16.mxu0 0
    %1818 = vmatpush1.bf16.msra.mxu0 0
    %1819 = vmatprep.subr.bf16.mxu0 0
    %1820 = vmatpush1.bf16.msra.mxu0 0
    %1821 = vmatprep.subr.bf16.mxu0 0
    %1822 = vmatpush1.bf16.msra.mxu0 0
    %1823 = vmatprep.subr.bf16.mxu0 0
    %1824 = vmatpush1.bf16.msra.mxu0 0
    %1825 = vmatprep.subr.bf16.mxu0 0
    %1826 = vmatpush1.bf16.msra.mxu0 0
    %1827 = vmatprep.subr.bf16.mxu0 0
    %1828 = vmatpush1.bf16.msra.mxu0 0
    %1829 = vmatprep.subr.bf16.mxu0 0
    %1830 = vmatpush1.bf16.msra.mxu0 0
    %1831 = vmatprep.subr.bf16.mxu0 0
    %1832 = vmatpush1.bf16.msra.mxu0 0
    %1833 = vmatprep.subr.bf16.mxu0 0
    %1834 = vmatpush1.bf16.msra.mxu0 0
    %1835 = vmatprep.subr.bf16.mxu0 0
    %1836 = vmatpush1.bf16.msra.mxu0 0
    %1837 = vmatprep.subr.bf16.mxu0 0
    %1838 = vmatpush1.bf16.msra.mxu0 0
    %1839 = vmatprep.subr.bf16.mxu0 0
    %1840 = vmatpush1.bf16.msra.mxu0 0
    %1841 = vmatprep.subr.bf16.mxu0 0
    %1842 = vmatpush1.bf16.msra.mxu0 0
    %1843 = vmatprep.subr.bf16.mxu0 0
    %1844 = vmatpush1.bf16.msra.mxu0 0
    %1845 = vmatprep.subr.bf16.mxu0 0
    %1846 = vmatpush1.bf16.msra.mxu0 0
    %1847 = vmatprep.mubr.bf16.mxu0 0
    %1848 = vmatmul.mubr.bf16.gmra.mrb[0].mxu0 %v1810
    %v1849 = vpop.f32.mrb[0].mxu0
    %v1850 = vadd.f32 0.0, %v1849
    %v1851 = vpop.f32.mrb[0].mxu0
    %v1852 = vpop.f32.mrb[0].mxu0
    %v1853 = vpop.f32.mrb[0].mxu0
    %1854 = vdwg.mxu0
    %v1856 = vsel %vm1577, %v1567, 0
    %v1859 = vsel %vm1581, %v398, 0
    %1861 = vmatprep.subr.bf16.mxu0 0
    %1862 = vmatpush1.bf16.msra.mxu0 %v1859
    %1863 = vmatprep.subr.bf16.mxu0 0
    %1864 = vmatpush1.bf16.msra.mxu0 0
    %1865 = vmatprep.subr.bf16.mxu0 0
    %1866 = vmatpush1.bf16.msra.mxu0 0
    %1867 = vmatprep.subr.bf16.mxu0 0
    %1868 = vmatpush1.bf16.msra.mxu0 0
    %1869 = vmatprep.subr.bf16.mxu0 0
    %1870 = vmatpush1.bf16.msra.mxu0 0
    %1871 = vmatprep.subr.bf16.mxu0 0
    %1872 = vmatpush1.bf16.msra.mxu0 0
    %1873 = vmatprep.subr.bf16.mxu0 0
    %1874 = vmatpush1.bf16.msra.mxu0 0
    %1875 = vmatprep.subr.bf16.mxu0 0
    %1876 = vmatpush1.bf16.msra.mxu0 0
    %1877 = vmatprep.subr.bf16.mxu0 0
    %1878 = vmatpush1.bf16.msra.mxu0 0
    %1879 = vmatprep.subr.bf16.mxu0 0
    %1880 = vmatpush1.bf16.msra.mxu0 0
    %1881 = vmatprep.subr.bf16.mxu0 0
    %1882 = vmatpush1.bf16.msra.mxu0 0
    %1883 = vmatprep.subr.bf16.mxu0 0
    %1884 = vmatpush1.bf16.msra.mxu0 0
    %1885 = vmatprep.subr.bf16.mxu0 0
    %1886 = vmatpush1.bf16.msra.mxu0 0
    %1887 = vmatprep.subr.bf16.mxu0 0
    %1888 = vmatpush1.bf16.msra.mxu0 0
    %1889 = vmatprep.subr.bf16.mxu0 0
    %1890 = vmatpush1.bf16.msra.mxu0 0
    %1891 = vmatprep.subr.bf16.mxu0 0
    %1892 = vmatpush1.bf16.msra.mxu0 0
    %1893 = vmatprep.mubr.bf16.mxu0 0
    %1894 = vmatmul.mubr.bf16.gmra.mrb[0].mxu0 %v1856
    %v1895 = vpop.f32.mrb[0].mxu0
    %v1896 = vadd.f32 0.0, %v1895
    %v1897 = vpop.f32.mrb[0].mxu0
    %v1898 = vpop.f32.mrb[0].mxu0
    %v1899 = vpop.f32.mrb[0].mxu0
    %1900 = vdwg.mxu0
    %v1902 = vsel %vm1577, %v1568, 0
    %v1905 = vsel %vm1581, %v399, 0
    %1907 = vmatprep.subr.bf16.mxu0 0
    %1908 = vmatpush1.bf16.msra.mxu0 %v1905
    %1909 = vmatprep.subr.bf16.mxu0 0
    %1910 = vmatpush1.bf16.msra.mxu0 0
    %1911 = vmatprep.subr.bf16.mxu0 0
    %1912 = vmatpush1.bf16.msra.mxu0 0
    %1913 = vmatprep.subr.bf16.mxu0 0
    %1914 = vmatpush1.bf16.msra.mxu0 0
    %1915 = vmatprep.subr.bf16.mxu0 0
    %1916 = vmatpush1.bf16.msra.mxu0 0
    %1917 = vmatprep.subr.bf16.mxu0 0
    %1918 = vmatpush1.bf16.msra.mxu0 0
    %1919 = vmatprep.subr.bf16.mxu0 0
    %1920 = vmatpush1.bf16.msra.mxu0 0
    %1921 = vmatprep.subr.bf16.mxu0 0
    %1922 = vmatpush1.bf16.msra.mxu0 0
    %1923 = vmatprep.subr.bf16.mxu0 0
    %1924 = vmatpush1.bf16.msra.mxu0 0
    %1925 = vmatprep.subr.bf16.mxu0 0
    %1926 = vmatpush1.bf16.msra.mxu0 0
    %1927 = vmatprep.subr.bf16.mxu0 0
    %1928 = vmatpush1.bf16.msra.mxu0 0
    %1929 = vmatprep.subr.bf16.mxu0 0
    %1930 = vmatpush1.bf16.msra.mxu0 0
    %1931 = vmatprep.subr.bf16.mxu0 0
    %1932 = vmatpush1.bf16.msra.mxu0 0
    %1933 = vmatprep.subr.bf16.mxu0 0
    %1934 = vmatpush1.bf16.msra.mxu0 0
    %1935 = vmatprep.subr.bf16.mxu0 0
    %1936 = vmatpush1.bf16.msra.mxu0 0
    %1937 = vmatprep.subr.bf16.mxu0 0
    %1938 = vmatpush1.bf16.msra.mxu0 0
    %1939 = vmatprep.mubr.bf16.mxu0 0
    %1940 = vmatmul.mubr.bf16.gmra.mrb[0].mxu0 %v1902
    %v1941 = vpop.f32.mrb[0].mxu0
    %v1942 = vadd.f32 0.0, %v1941
    %v1943 = vpop.f32.mrb[0].mxu0
    %v1944 = vpop.f32.mrb[0].mxu0
    %v1945 = vpop.f32.mrb[0].mxu0
    %1946 = vdwg.mxu0
    %v1948 = vsel %vm1577, %v1569, 0
    %v1951 = vsel %vm1581, %v400, 0
    %1953 = vmatprep.subr.bf16.mxu0 0
    %1954 = vmatpush1.bf16.msra.mxu0 %v1951
    %1955 = vmatprep.subr.bf16.mxu0 0
    %1956 = vmatpush1.bf16.msra.mxu0 0
    %1957 = vmatprep.subr.bf16.mxu0 0
    %1958 = vmatpush1.bf16.msra.mxu0 0
    %1959 = vmatprep.subr.bf16.mxu0 0
    %1960 = vmatpush1.bf16.msra.mxu0 0
    %1961 = vmatprep.subr.bf16.mxu0 0
    %1962 = vmatpush1.bf16.msra.mxu0 0
    %1963 = vmatprep.subr.bf16.mxu0 0
    %1964 = vmatpush1.bf16.msra.mxu0 0
    %1965 = vmatprep.subr.bf16.mxu0 0
    %1966 = vmatpush1.bf16.msra.mxu0 0
    %1967 = vmatprep.subr.bf16.mxu0 0
    %1968 = vmatpush1.bf16.msra.mxu0 0
    %1969 = vmatprep.subr.bf16.mxu0 0
    %1970 = vmatpush1.bf16.msra.mxu0 0
    %1971 = vmatprep.subr.bf16.mxu0 0
    %1972 = vmatpush1.bf16.msra.mxu0 0
    %1973 = vmatprep.subr.bf16.mxu0 0
    %1974 = vmatpush1.bf16.msra.mxu0 0
    %1975 = vmatprep.subr.bf16.mxu0 0
    %1976 = vmatpush1.bf16.msra.mxu0 0
    %1977 = vmatprep.subr.bf16.mxu0 0
    %1978 = vmatpush1.bf16.msra.mxu0 0
    %1979 = vmatprep.subr.bf16.mxu0 0
    %1980 = vmatpush1.bf16.msra.mxu0 0
    %1981 = vmatprep.subr.bf16.mxu0 0
    %1982 = vmatpush1.bf16.msra.mxu0 0
    %1983 = vmatprep.subr.bf16.mxu0 0
    %1984 = vmatpush1.bf16.msra.mxu0 0
    %1985 = vmatprep.mubr.bf16.mxu0 0
    %1986 = vmatmul.mubr.bf16.gmra.mrb[0].mxu0 %v1948
    %v1987 = vpop.f32.mrb[0].mxu0
    %v1988 = vadd.f32 0.0, %v1987
    %v1989 = vpop.f32.mrb[0].mxu0
    %v1990 = vpop.f32.mrb[0].mxu0
    %v1991 = vpop.f32.mrb[0].mxu0
    %1992 = vdwg.mxu0
    %v1994 = vsel %vm1577, %v1570, 0
    %v1997 = vsel %vm1581, %v401, 0
    %1999 = vmatprep.subr.bf16.mxu0 0
    %2000 = vmatpush1.bf16.msra.mxu0 %v1997
    %2001 = vmatprep.subr.bf16.mxu0 0
    %2002 = vmatpush1.bf16.msra.mxu0 0
    %2003 = vmatprep.subr.bf16.mxu0 0
    %2004 = vmatpush1.bf16.msra.mxu0 0
    %2005 = vmatprep.subr.bf16.mxu0 0
    %2006 = vmatpush1.bf16.msra.mxu0 0
    %2007 = vmatprep.subr.bf16.mxu0 0
    %2008 = vmatpush1.bf16.msra.mxu0 0
    %2009 = vmatprep.subr.bf16.mxu0 0
    %2010 = vmatpush1.bf16.msra.mxu0 0
    %2011 = vmatprep.subr.bf16.mxu0 0
    %2012 = vmatpush1.bf16.msra.mxu0 0
    %2013 = vmatprep.subr.bf16.mxu0 0
    %2014 = vmatpush1.bf16.msra.mxu0 0
    %2015 = vmatprep.subr.bf16.mxu0 0
    %2016 = vmatpush1.bf16.msra.mxu0 0
    %2017 = vmatprep.subr.bf16.mxu0 0
    %2018 = vmatpush1.bf16.msra.mxu0 0
    %2019 = vmatprep.subr.bf16.mxu0 0
    %2020 = vmatpush1.bf16.msra.mxu0 0
    %2021 = vmatprep.subr.bf16.mxu0 0
    %2022 = vmatpush1.bf16.msra.mxu0 0
    %2023 = vmatprep.subr.bf16.mxu0 0
    %2024 = vmatpush1.bf16.msra.mxu0 0
    %2025 = vmatprep.subr.bf16.mxu0 0
    %2026 = vmatpush1.bf16.msra.mxu0 0
    %2027 = vmatprep.subr.bf16.mxu0 0
    %2028 = vmatpush1.bf16.msra.mxu0 0
    %2029 = vmatprep.subr.bf16.mxu0 0
    %2030 = vmatpush1.bf16.msra.mxu0 0
    %2031 = vmatprep.mubr.bf16.mxu0 0
    %2032 = vmatmul.mubr.bf16.gmra.mrb[0].mxu0 %v1994
    %v2033 = vpop.f32.mrb[0].mxu0
    %v2034 = vadd.f32 0.0, %v2033
    %v2035 = vpop.f32.mrb[0].mxu0
    %v2036 = vpop.f32.mrb[0].mxu0
    %v2037 = vpop.f32.mrb[0].mxu0
    %2038 = vdwg.mxu0
    %v2040 = vsel %vm1577, %v1571, 0
    %v2043 = vsel %vm1581, %v402, 0
    %2045 = vmatprep.subr.bf16.mxu0 0
    %2046 = vmatpush1.bf16.msra.mxu0 %v2043
    %2047 = vmatprep.subr.bf16.mxu0 0
    %2048 = vmatpush1.bf16.msra.mxu0 0
    %2049 = vmatprep.subr.bf16.mxu0 0
    %2050 = vmatpush1.bf16.msra.mxu0 0
    %2051 = vmatprep.subr.bf16.mxu0 0
    %2052 = vmatpush1.bf16.msra.mxu0 0
    %2053 = vmatprep.subr.bf16.mxu0 0
    %2054 = vmatpush1.bf16.msra.mxu0 0
    %2055 = vmatprep.subr.bf16.mxu0 0
    %2056 = vmatpush1.bf16.msra.mxu0 0
    %2057 = vmatprep.subr.bf16.mxu0 0
    %2058 = vmatpush1.bf16.msra.mxu0 0
    %2059 = vmatprep.subr.bf16.mxu0 0
    %2060 = vmatpush1.bf16.msra.mxu0 0
    %2061 = vmatprep.subr.bf16.mxu0 0
    %2062 = vmatpush1.bf16.msra.mxu0 0
    %2063 = vmatprep.subr.bf16.mxu0 0
    %2064 = vmatpush1.bf16.msra.mxu0 0
    %2065 = vmatprep.subr.bf16.mxu0 0
    %2066 = vmatpush1.bf16.msra.mxu0 0
    %2067 = vmatprep.subr.bf16.mxu0 0
    %2068 = vmatpush1.bf16.msra.mxu0 0
    %2069 = vmatprep.subr.bf16.mxu0 0
    %2070 = vmatpush1.bf16.msra.mxu0 0
    %2071 = vmatprep.subr.bf16.mxu0 0
    %2072 = vmatpush1.bf16.msra.mxu0 0
    %2073 = vmatprep.subr.bf16.mxu0 0
    %2074 = vmatpush1.bf16.msra.mxu0 0
    %2075 = vmatprep.subr.bf16.mxu0 0
    %2076 = vmatpush1.bf16.msra.mxu0 0
    %2077 = vmatprep.mubr.bf16.mxu0 0
    %2078 = vmatmul.mubr.bf16.gmra.mrb[0].mxu0 %v2040
    %v2079 = vpop.f32.mrb[0].mxu0
    %v2080 = vadd.f32 0.0, %v2079
    %v2081 = vpop.f32.mrb[0].mxu0
    %v2082 = vpop.f32.mrb[0].mxu0
    %v2083 = vpop.f32.mrb[0].mxu0
    %2084 = vdwg.mxu0
    %v2086 = vsel %vm1577, %v1572, 0
    %v2089 = vsel %vm1581, %v403, 0
    %2091 = vmatprep.subr.bf16.mxu0 0
    %2092 = vmatpush1.bf16.msra.mxu0 %v2089
    %2093 = vmatprep.subr.bf16.mxu0 0
    %2094 = vmatpush1.bf16.msra.mxu0 0
    %2095 = vmatprep.subr.bf16.mxu0 0
    %2096 = vmatpush1.bf16.msra.mxu0 0
    %2097 = vmatprep.subr.bf16.mxu0 0
    %2098 = vmatpush1.bf16.msra.mxu0 0
    %2099 = vmatprep.subr.bf16.mxu0 0
    %2100 = vmatpush1.bf16.msra.mxu0 0
    %2101 = vmatprep.subr.bf16.mxu0 0
    %2102 = vmatpush1.bf16.msra.mxu0 0
    %2103 = vmatprep.subr.bf16.mxu0 0
    %2104 = vmatpush1.bf16.msra.mxu0 0
    %2105 = vmatprep.subr.bf16.mxu0 0
    %2106 = vmatpush1.bf16.msra.mxu0 0
    %2107 = vmatprep.subr.bf16.mxu0 0
    %2108 = vmatpush1.bf16.msra.mxu0 0
    %2109 = vmatprep.subr.bf16.mxu0 0
    %2110 = vmatpush1.bf16.msra.mxu0 0
    %2111 = vmatprep.subr.bf16.mxu0 0
    %2112 = vmatpush1.bf16.msra.mxu0 0
    %2113 = vmatprep.subr.bf16.mxu0 0
    %2114 = vmatpush1.bf16.msra.mxu0 0
    %2115 = vmatprep.subr.bf16.mxu0 0
    %2116 = vmatpush1.bf16.msra.mxu0 0
    %2117 = vmatprep.subr.bf16.mxu0 0
    %2118 = vmatpush1.bf16.msra.mxu0 0
    %2119 = vmatprep.subr.bf16.mxu0 0
    %2120 = vmatpush1.bf16.msra.mxu0 0
    %2121 = vmatprep.subr.bf16.mxu0 0
    %2122 = vmatpush1.bf16.msra.mxu0 0
    %2123 = vmatprep.mubr.bf16.mxu0 0
    %2124 = vmatmul.mubr.bf16.gmra.mrb[0].mxu0 %v2086
    %v2125 = vpop.f32.mrb[0].mxu0
    %v2126 = vadd.f32 0.0, %v2125
    %v2127 = vpop.f32.mrb[0].mxu0
    %v2128 = vpop.f32.mrb[0].mxu0
    %v2129 = vpop.f32.mrb[0].mxu0
    %2130 = vdwg.mxu0
    %v2132 = vsel %vm1577, %v1573, 0
    %v2135 = vsel %vm1581, %v404, 0
    %2137 = vmatprep.subr.bf16.mxu0 0
    %2138 = vmatpush1.bf16.msra.mxu0 %v2135
    %2139 = vmatprep.subr.bf16.mxu0 0
    %2140 = vmatpush1.bf16.msra.mxu0 0
    %2141 = vmatprep.subr.bf16.mxu0 0
    %2142 = vmatpush1.bf16.msra.mxu0 0
    %2143 = vmatprep.subr.bf16.mxu0 0
    %2144 = vmatpush1.bf16.msra.mxu0 0
    %2145 = vmatprep.subr.bf16.mxu0 0
    %2146 = vmatpush1.bf16.msra.mxu0 0
    %2147 = vmatprep.subr.bf16.mxu0 0
    %2148 = vmatpush1.bf16.msra.mxu0 0
    %2149 = vmatprep.subr.bf16.mxu0 0
    %2150 = vmatpush1.bf16.msra.mxu0 0
    %2151 = vmatprep.subr.bf16.mxu0 0
    %2152 = vmatpush1.bf16.msra.mxu0 0
    %2153 = vmatprep.subr.bf16.mxu0 0
    %2154 = vmatpush1.bf16.msra.mxu0 0
    %2155 = vmatprep.subr.bf16.mxu0 0
    %2156 = vmatpush1.bf16.msra.mxu0 0
    %2157 = vmatprep.subr.bf16.mxu0 0
    %2158 = vmatpush1.bf16.msra.mxu0 0
    %2159 = vmatprep.subr.bf16.mxu0 0
    %2160 = vmatpush1.bf16.msra.mxu0 0
    %2161 = vmatprep.subr.bf16.mxu0 0
    %2162 = vmatpush1.bf16.msra.mxu0 0
    %2163 = vmatprep.subr.bf16.mxu0 0
    %2164 = vmatpush1.bf16.msra.mxu0 0
    %2165 = vmatprep.subr.bf16.mxu0 0
    %2166 = vmatpush1.bf16.msra.mxu0 0
    %2167 = vmatprep.subr.bf16.mxu0 0
    %2168 = vmatpush1.bf16.msra.mxu0 0
    %2169 = vmatprep.mubr.bf16.mxu0 0
    %2170 = vmatmul.mubr.bf16.gmra.mrb[0].mxu0 %v2132
    %v2171 = vpop.f32.mrb[0].mxu0
    %v2172 = vadd.f32 0.0, %v2171
    %v2173 = vpop.f32.mrb[0].mxu0
    %v2174 = vpop.f32.mrb[0].mxu0
    %v2175 = vpop.f32.mrb[0].mxu0
    %2176 = vdwg.mxu0
    %v2178 = vsel %vm1577, %v1574, 0
    %v2181 = vsel %vm1581, %v405, 0
    %2183 = vmatprep.subr.bf16.mxu0 0
    %2184 = vmatpush1.bf16.msra.mxu0 %v2181
    %2185 = vmatprep.subr.bf16.mxu0 0
    %2186 = vmatpush1.bf16.msra.mxu0 0
    %2187 = vmatprep.subr.bf16.mxu0 0
    %2188 = vmatpush1.bf16.msra.mxu0 0
    %2189 = vmatprep.subr.bf16.mxu0 0
    %2190 = vmatpush1.bf16.msra.mxu0 0
    %2191 = vmatprep.subr.bf16.mxu0 0
    %2192 = vmatpush1.bf16.msra.mxu0 0
    %2193 = vmatprep.subr.bf16.mxu0 0
    %2194 = vmatpush1.bf16.msra.mxu0 0
    %2195 = vmatprep.subr.bf16.mxu0 0
    %2196 = vmatpush1.bf16.msra.mxu0 0
    %2197 = vmatprep.subr.bf16.mxu0 0
    %2198 = vmatpush1.bf16.msra.mxu0 0
    %2199 = vmatprep.subr.bf16.mxu0 0
    %2200 = vmatpush1.bf16.msra.mxu0 0
    %2201 = vmatprep.subr.bf16.mxu0 0
    %2202 = vmatpush1.bf16.msra.mxu0 0
    %2203 = vmatprep.subr.bf16.mxu0 0
    %2204 = vmatpush1.bf16.msra.mxu0 0
    %2205 = vmatprep.subr.bf16.mxu0 0
    %2206 = vmatpush1.bf16.msra.mxu0 0
    %2207 = vmatprep.subr.bf16.mxu0 0
    %2208 = vmatpush1.bf16.msra.mxu0 0
    %2209 = vmatprep.subr.bf16.mxu0 0
    %2210 = vmatpush1.bf16.msra.mxu0 0
    %2211 = vmatprep.subr.bf16.mxu0 0
    %2212 = vmatpush1.bf16.msra.mxu0 0
    %2213 = vmatprep.subr.bf16.mxu0 0
    %2214 = vmatpush1.bf16.msra.mxu0 0
    %2215 = vmatprep.mubr.bf16.mxu0 0
    %2216 = vmatmul.mubr.bf16.gmra.mrb[0].mxu0 %v2178
    %v2217 = vpop.f32.mrb[0].mxu0
    %v2218 = vadd.f32 0.0, %v2217
    %v2219 = vpop.f32.mrb[0].mxu0
    %v2220 = vpop.f32.mrb[0].mxu0
    %v2221 = vpop.f32.mrb[0].mxu0
    %2222 = vdwg.mxu0
    %v2224 = vsel %vm1577, %v1575, 0
    %v2227 = vsel %vm1581, %v406, 0
    %2229 = vmatprep.subr.bf16.mxu0 0
    %2230 = vmatpush1.bf16.msra.mxu0 %v2227
    %2231 = vmatprep.subr.bf16.mxu0 0
    %2232 = vmatpush1.bf16.msra.mxu0 0
    %2233 = vmatprep.subr.bf16.mxu0 0
    %2234 = vmatpush1.bf16.msra.mxu0 0
    %2235 = vmatprep.subr.bf16.mxu0 0
    %2236 = vmatpush1.bf16.msra.mxu0 0
    %2237 = vmatprep.subr.bf16.mxu0 0
    %2238 = vmatpush1.bf16.msra.mxu0 0
    %2239 = vmatprep.subr.bf16.mxu0 0
    %2240 = vmatpush1.bf16.msra.mxu0 0
    %2241 = vmatprep.subr.bf16.mxu0 0
    %2242 = vmatpush1.bf16.msra.mxu0 0
    %2243 = vmatprep.subr.bf16.mxu0 0
    %2244 = vmatpush1.bf16.msra.mxu0 0
    %2245 = vmatprep.subr.bf16.mxu0 0
    %2246 = vmatpush1.bf16.msra.mxu0 0
    %2247 = vmatprep.subr.bf16.mxu0 0
    %2248 = vmatpush1.bf16.msra.mxu0 0
    %2249 = vmatprep.subr.bf16.mxu0 0
    %2250 = vmatpush1.bf16.msra.mxu0 0
    %2251 = vmatprep.subr.bf16.mxu0 0
    %2252 = vmatpush1.bf16.msra.mxu0 0
    %2253 = vmatprep.subr.bf16.mxu0 0
    %2254 = vmatpush1.bf16.msra.mxu0 0
    %2255 = vmatprep.subr.bf16.mxu0 0
    %2256 = vmatpush1.bf16.msra.mxu0 0
    %2257 = vmatprep.subr.bf16.mxu0 0
    %2258 = vmatpush1.bf16.msra.mxu0 0
    %2259 = vmatprep.subr.bf16.mxu0 0
    %2260 = vmatpush1.bf16.msra.mxu0 0
    %2261 = vmatprep.mubr.bf16.mxu0 0
    %2262 = vmatmul.mubr.bf16.gmra.mrb[0].mxu0 %v2224
    %v2263 = vpop.f32.mrb[0].mxu0
    %v2264 = vadd.f32 0.0, %v2263
    %v2265 = vpop.f32.mrb[0].mxu0
    %v2266 = vpop.f32.mrb[0].mxu0
    %v2267 = vpop.f32.mrb[0].mxu0
    %2268 = vdwg.mxu0
    %v2270 = vsel %vm1577, %v1576, 0
    %v2273 = vsel %vm1581, %v407, 0
    %2275 = vmatprep.subr.bf16.mxu0 0
    %2276 = vmatpush1.bf16.msra.mxu0 %v2273
    %2277 = vmatprep.subr.bf16.mxu0 0
    %2278 = vmatpush1.bf16.msra.mxu0 0
    %2279 = vmatprep.subr.bf16.mxu0 0
    %2280 = vmatpush1.bf16.msra.mxu0 0
    %2281 = vmatprep.subr.bf16.mxu0 0
    %2282 = vmatpush1.bf16.msra.mxu0 0
    %2283 = vmatprep.subr.bf16.mxu0 0
    %2284 = vmatpush1.bf16.msra.mxu0 0
    %2285 = vmatprep.subr.bf16.mxu0 0
    %2286 = vmatpush1.bf16.msra.mxu0 0
    %2287 = vmatprep.subr.bf16.mxu0 0
    %2288 = vmatpush1.bf16.msra.mxu0 0
    %2289 = vmatprep.subr.bf16.mxu0 0
    %2290 = vmatpush1.bf16.msra.mxu0 0
    %2291 = vmatprep.subr.bf16.mxu0 0
    %2292 = vmatpush1.bf16.msra.mxu0 0
    %2293 = vmatprep.subr.bf16.mxu0 0
    %2294 = vmatpush1.bf16.msra.mxu0 0
    %2295 = vmatprep.subr.bf16.mxu0 0
    %2296 = vmatpush1.bf16.msra.mxu0 0
    %2297 = vmatprep.subr.bf16.mxu0 0
    %2298 = vmatpush1.bf16.msra.mxu0 0
    %2299 = vmatprep.subr.bf16.mxu0 0
    %2300 = vmatpush1.bf16.msra.mxu0 0
    %2301 = vmatprep.subr.bf16.mxu0 0
    %2302 = vmatpush1.bf16.msra.mxu0 0
    %2303 = vmatprep.subr.bf16.mxu0 0
    %2304 = vmatpush1.bf16.msra.mxu0 0
    %2305 = vmatprep.subr.bf16.mxu0 0
    %2306 = vmatpush1.bf16.msra.mxu0 0
    %2307 = vmatprep.mubr.bf16.mxu0 0
    %2308 = vmatmul.mubr.bf16.gmra.mrb[0].mxu0 %v2270
    %v2309 = vpop.f32.mrb[0].mxu0
    %v2310 = vadd.f32 0.0, %v2309
    %v2311 = vpop.f32.mrb[0].mxu0
    %v2312 = vpop.f32.mrb[0].mxu0
    %v2313 = vpop.f32.mrb[0].mxu0
    %2314 = vdwg.mxu0
    %v2315 = vld [vmem:[#allocation13] sm:$0x1]
    %v2316 = vld [vmem:[#allocation14] sm:$0x1]
    %vm2317 = vcmask 257024
    %v2318 = vsel %vm2317, %v1620, 0.0
    %2319 = vadd.xlane.f32.xlu0 %v2318
    %v2320 = vpop.xlane.xlu0 %2319
    %v2321 = vsel %vm2317, %v1666, 0.0
    %2322 = vadd.xlane.f32.xlu0 %v2321
    %v2323 = vpop.xlane.xlu0 %2322
    %v2324 = vsel %vm2317, %v1712, 0.0
    %2325 = vadd.xlane.f32.xlu0 %v2324
    %v2326 = vpop.xlane.xlu0 %2325
    %v2327 = vsel %vm2317, %v1758, 0.0
    %2328 = vadd.xlane.f32.xlu0 %v2327
    %v2329 = vpop.xlane.xlu0 %2328
    %v2330 = vsel %vm2317, %v1804, 0.0
    %2331 = vadd.xlane.f32.xlu0 %v2330
    %v2332 = vpop.xlane.xlu0 %2331
    %v2333 = vsel %vm2317, %v1850, 0.0
    %2334 = vadd.xlane.f32.xlu0 %v2333
    %v2335 = vpop.xlane.xlu0 %2334
    %v2336 = vsel %vm2317, %v1896, 0.0
    %2337 = vadd.xlane.f32.xlu0 %v2336
    %v2338 = vpop.xlane.xlu0 %2337
    %v2339 = vsel %vm2317, %v1942, 0.0
    %2340 = vadd.xlane.f32.xlu0 %v2339
    %v2341 = vpop.xlane.xlu0 %2340
    %v2342 = vsel %vm2317, %v1988, 0.0
    %2343 = vadd.xlane.f32.xlu0 %v2342
    %v2344 = vpop.xlane.xlu0 %2343
    %v2345 = vsel %vm2317, %v2034, 0.0
    %2346 = vadd.xlane.f32.xlu0 %v2345
    %v2347 = vpop.xlane.xlu0 %2346
    %v2348 = vsel %vm2317, %v2080, 0.0
    %2349 = vadd.xlane.f32.xlu0 %v2348
    %v2350 = vpop.xlane.xlu0 %2349
    %v2351 = vsel %vm2317, %v2126, 0.0
    %2352 = vadd.xlane.f32.xlu0 %v2351
    %v2353 = vpop.xlane.xlu0 %2352
    %v2354 = vsel %vm2317, %v2172, 0.0
    %2355 = vadd.xlane.f32.xlu0 %v2354
    %v2356 = vpop.xlane.xlu0 %2355
    %v2357 = vsel %vm2317, %v2218, 0.0
    %2358 = vadd.xlane.f32.xlu0 %v2357
    %v2359 = vpop.xlane.xlu0 %2358
    %v2360 = vsel %vm2317, %v2264, 0.0
    %2361 = vadd.xlane.f32.xlu0 %v2360
    %v2362 = vpop.xlane.xlu0 %2361
    %v2363 = vsel %vm2317, %v2310, 0.0
    %2364 = vadd.xlane.f32.xlu0 %v2363
    %v2365 = vpop.xlane.xlu0 %2364
    %v2366 = vrcp.pop 32.0
    %v2367 = vmul.f32 %v2320, %v2366
    %v2368 = vmul.f32 %v2323, %v2366
    %v2369 = vmul.f32 %v2326, %v2366
    %v2370 = vmul.f32 %v2329, %v2366
    %v2371 = vmul.f32 %v2332, %v2366
    %v2372 = vmul.f32 %v2335, %v2366
    %v2373 = vmul.f32 %v2338, %v2366
    %v2374 = vmul.f32 %v2341, %v2366
    %v2375 = vmul.f32 %v2344, %v2366
    %v2376 = vmul.f32 %v2347, %v2366
    %v2377 = vmul.f32 %v2350, %v2366
    %v2378 = vmul.f32 %v2353, %v2366
    %v2379 = vmul.f32 %v2356, %v2366
    %v2380 = vmul.f32 %v2359, %v2366
    %v2381 = vmul.f32 %v2362, %v2366
    %v2382 = vmul.f32 %v2365, %v2366
    %v2383 = vsub.f32 %v1620, %v2367
    %v2384 = vsub.f32 %v1666, %v2368
    %v2385 = vsub.f32 %v1712, %v2369
    %v2386 = vsub.f32 %v1758, %v2370
    %v2387 = vsub.f32 %v1804, %v2371
    %v2388 = vsub.f32 %v1850, %v2372
    %v2389 = vsub.f32 %v1896, %v2373
    %v2390 = vsub.f32 %v1942, %v2374
    %v2391 = vsub.f32 %v1988, %v2375
    %v2392 = vsub.f32 %v2034, %v2376
    %v2393 = vsub.f32 %v2080, %v2377
    %v2394 = vsub.f32 %v2126, %v2378
    %v2395 = vsub.f32 %v2172, %v2379
    %v2396 = vsub.f32 %v2218, %v2380
    %v2397 = vsub.f32 %v2264, %v2381
    %v2398 = vsub.f32 %v2310, %v2382
    %v2399 = vmul.f32 %v2383, %v2383
    %v2400 = vmul.f32 %v2384, %v2384
    %v2401 = vmul.f32 %v2385, %v2385
    %v2402 = vmul.f32 %v2386, %v2386
    %v2403 = vmul.f32 %v2387, %v2387
    %v2404 = vmul.f32 %v2388, %v2388
    %v2405 = vmul.f32 %v2389, %v2389
    %v2406 = vmul.f32 %v2390, %v2390
    %v2407 = vmul.f32 %v2391, %v2391
    %v2408 = vmul.f32 %v2392, %v2392
    %v2409 = vmul.f32 %v2393, %v2393
    %v2410 = vmul.f32 %v2394, %v2394
    %v2411 = vmul.f32 %v2395, %v2395
    %v2412 = vmul.f32 %v2396, %v2396
    %v2413 = vmul.f32 %v2397, %v2397
    %v2414 = vmul.f32 %v2398, %v2398
    %v2415 = vsel %vm2317, %v2399, 0.0
    %2416 = vadd.xlane.f32.xlu0 %v2415
    %v2417 = vpop.xlane.xlu0 %2416
    %v2418 = vsel %vm2317, %v2400, 0.0
    %2419 = vadd.xlane.f32.xlu0 %v2418
    %v2420 = vpop.xlane.xlu0 %2419
    %v2421 = vsel %vm2317, %v2401, 0.0
    %2422 = vadd.xlane.f32.xlu0 %v2421
    %v2423 = vpop.xlane.xlu0 %2422
    %v2424 = vsel %vm2317, %v2402, 0.0
    %2425 = vadd.xlane.f32.xlu0 %v2424
    %v2426 = vpop.xlane.xlu0 %2425
    %v2427 = vsel %vm2317, %v2403, 0.0
    %2428 = vadd.xlane.f32.xlu0 %v2427
    %v2429 = vpop.xlane.xlu0 %2428
    %v2430 = vsel %vm2317, %v2404, 0.0
    %2431 = vadd.xlane.f32.xlu0 %v2430
    %v2432 = vpop.xlane.xlu0 %2431
    %v2433 = vsel %vm2317, %v2405, 0.0
    %2434 = vadd.xlane.f32.xlu0 %v2433
    %v2435 = vpop.xlane.xlu0 %2434
    %v2436 = vsel %vm2317, %v2406, 0.0
    %2437 = vadd.xlane.f32.xlu0 %v2436
    %v2438 = vpop.xlane.xlu0 %2437
    %v2439 = vsel %vm2317, %v2407, 0.0
    %2440 = vadd.xlane.f32.xlu0 %v2439
    %v2441 = vpop.xlane.xlu0 %2440
    %v2442 = vsel %vm2317, %v2408, 0.0
    %2443 = vadd.xlane.f32.xlu0 %v2442
    %v2444 = vpop.xlane.xlu0 %2443
    %v2445 = vsel %vm2317, %v2409, 0.0
    %2446 = vadd.xlane.f32.xlu0 %v2445
    %v2447 = vpop.xlane.xlu0 %2446
    %v2448 = vsel %vm2317, %v2410, 0.0
    %2449 = vadd.xlane.f32.xlu0 %v2448
    %v2450 = vpop.xlane.xlu0 %2449
    %v2451 = vsel %vm2317, %v2411, 0.0
    %2452 = vadd.xlane.f32.xlu0 %v2451
    %v2453 = vpop.xlane.xlu0 %2452
    %v2454 = vsel %vm2317, %v2412, 0.0
    %2455 = vadd.xlane.f32.xlu0 %v2454
    %v2456 = vpop.xlane.xlu0 %2455
    %v2457 = vsel %vm2317, %v2413, 0.0
    %2458 = vadd.xlane.f32.xlu0 %v2457
    %v2459 = vpop.xlane.xlu0 %2458
    %v2460 = vsel %vm2317, %v2414, 0.0
    %2461 = vadd.xlane.f32.xlu0 %v2460
    %v2462 = vpop.xlane.xlu0 %2461
    %v2463 = vmul.f32 %v2417, %v2366
    %v2464 = vmul.f32 %v2420, %v2366
    %v2465 = vmul.f32 %v2423, %v2366
    %v2466 = vmul.f32 %v2426, %v2366
    %v2467 = vmul.f32 %v2429, %v2366
    %v2468 = vmul.f32 %v2432, %v2366
    %v2469 = vmul.f32 %v2435, %v2366
    %v2470 = vmul.f32 %v2438, %v2366
    %v2471 = vmul.f32 %v2441, %v2366
    %v2472 = vmul.f32 %v2444, %v2366
    %v2473 = vmul.f32 %v2447, %v2366
    %v2474 = vmul.f32 %v2450, %v2366
    %v2475 = vmul.f32 %v2453, %v2366
    %v2476 = vmul.f32 %v2456, %v2366
    %v2477 = vmul.f32 %v2459, %v2366
    %v2478 = vmul.f32 %v2462, %v2366
    %v2479 = vadd.f32 %v2463, 1e-05
    %v2480 = vadd.f32 %v2464, 1e-05
    %v2481 = vadd.f32 %v2465, 1e-05
    %v2482 = vadd.f32 %v2466, 1e-05
    %v2483 = vadd.f32 %v2467, 1e-05
    %v2484 = vadd.f32 %v2468, 1e-05
    %v2485 = vadd.f32 %v2469, 1e-05
    %v2486 = vadd.f32 %v2470, 1e-05
    %v2487 = vadd.f32 %v2471, 1e-05
    %v2488 = vadd.f32 %v2472, 1e-05
    %v2489 = vadd.f32 %v2473, 1e-05
    %v2490 = vadd.f32 %v2474, 1e-05
    %v2491 = vadd.f32 %v2475, 1e-05
    %v2492 = vadd.f32 %v2476, 1e-05
    %v2493 = vadd.f32 %v2477, 1e-05
    %v2494 = vadd.f32 %v2478, 1e-05
    %v2495 = vrsqrt.pop %v2479
    %v2496 = vrsqrt.pop %v2480
    %v2497 = vrsqrt.pop %v2481
    %v2498 = vrsqrt.pop %v2482
    %v2499 = vrsqrt.pop %v2483
    %v2500 = vrsqrt.pop %v2484
    %v2501 = vrsqrt.pop %v2485
    %v2502 = vrsqrt.pop %v2486
    %v2503 = vrsqrt.pop %v2487
    %v2504 = vrsqrt.pop %v2488
    %v2505 = vrsqrt.pop %v2489
    %v2506 = vrsqrt.pop %v2490
    %v2507 = vrsqrt.pop %v2491
    %v2508 = vrsqrt.pop %v2492
    %v2509 = vrsqrt.pop %v2493
    %v2510 = vrsqrt.pop %v2494
    %v2511 = vmul.f32 %v2383, %v2495
    %v2512 = vmul.f32 %v2384, %v2496
    %v2513 = vmul.f32 %v2385, %v2497
    %v2514 = vmul.f32 %v2386, %v2498
    %v2515 = vmul.f32 %v2387, %v2499
    %v2516 = vmul.f32 %v2388, %v2500
    %v2517 = vmul.f32 %v2389, %v2501
    %v2518 = vmul.f32 %v2390, %v2502
    %v2519 = vmul.f32 %v2391, %v2503
    %v2520 = vmul.f32 %v2392, %v2504
    %v2521 = vmul.f32 %v2393, %v2505
    %v2522 = vmul.f32 %v2394, %v2506
    %v2523 = vmul.f32 %v2395, %v2507
    %v2524 = vmul.f32 %v2396, %v2508
    %v2525 = vmul.f32 %v2397, %v2509
    %v2526 = vmul.f32 %v2398, %v2510
    %v2528 = vlaneseq
    %v2529 = vshrl.u32 %v2528, 7
    %v2530 = vsub.s32 0, %v2529
    %v2531 = vrot.slane %v2315, %v2530
    %v2533 = vmul.f32 %v2511, %v2531
    %v2534 = vmul.f32 %v2512, %v2531
    %v2535 = vmul.f32 %v2513, %v2531
    %v2536 = vmul.f32 %v2514, %v2531
    %v2537 = vmul.f32 %v2515, %v2531
    %v2538 = vmul.f32 %v2516, %v2531
    %v2539 = vmul.f32 %v2517, %v2531
    %v2540 = vmul.f32 %v2518, %v2531
    %v2541 = vmul.f32 %v2519, %v2531
    %v2542 = vmul.f32 %v2520, %v2531
    %v2543 = vmul.f32 %v2521, %v2531
    %v2544 = vmul.f32 %v2522, %v2531
    %v2545 = vmul.f32 %v2523, %v2531
    %v2546 = vmul.f32 %v2524, %v2531
    %v2547 = vmul.f32 %v2525, %v2531
    %v2548 = vmul.f32 %v2526, %v2531
    %v2550 = vlaneseq
    %v2551 = vshrl.u32 %v2550, 7
    %v2552 = vsub.s32 0, %v2551
    %v2553 = vrot.slane %v2316, %v2552
    %v2555 = vadd.f32 %v2533, %v2553
    %v2556 = vadd.f32 %v2534, %v2553
    %v2557 = vadd.f32 %v2535, %v2553
    %v2558 = vadd.f32 %v2536, %v2553
    %v2559 = vadd.f32 %v2537, %v2553
    %v2560 = vadd.f32 %v2538, %v2553
    %v2561 = vadd.f32 %v2539, %v2553
    %v2562 = vadd.f32 %v2540, %v2553
    %v2563 = vadd.f32 %v2541, %v2553
    %v2564 = vadd.f32 %v2542, %v2553
    %v2565 = vadd.f32 %v2543, %v2553
    %v2566 = vadd.f32 %v2544, %v2553
    %v2567 = vadd.f32 %v2545, %v2553
    %v2568 = vadd.f32 %v2546, %v2553
    %v2569 = vadd.f32 %v2547, %v2553
    %v2570 = vadd.f32 %v2548, %v2553
    %v2571 = vmax.f32 %v2555, 0.0
    %v2572 = vmax.f32 %v2556, 0.0
    %v2573 = vmax.f32 %v2557, 0.0
    %v2574 = vmax.f32 %v2558, 0.0
    %v2575 = vmax.f32 %v2559, 0.0
    %v2576 = vmax.f32 %v2560, 0.0
    %v2577 = vmax.f32 %v2561, 0.0
    %v2578 = vmax.f32 %v2562, 0.0
    %v2579 = vmax.f32 %v2563, 0.0
    %v2580 = vmax.f32 %v2564, 0.0
    %v2581 = vmax.f32 %v2565, 0.0
    %v2582 = vmax.f32 %v2566, 0.0
    %v2583 = vmax.f32 %v2567, 0.0
    %v2584 = vmax.f32 %v2568, 0.0
    %v2585 = vmax.f32 %v2569, 0.0
    %v2586 = vmax.f32 %v2570, 0.0
    %v2587 = vpack.c.bf16 %v2571, %v2571
    %v2588 = vpack.c.bf16 %v2572, %v2572
    %v2589 = vpack.c.bf16 %v2573, %v2573
    %v2590 = vpack.c.bf16 %v2574, %v2574
    %v2591 = vpack.c.bf16 %v2575, %v2575
    %v2592 = vpack.c.bf16 %v2576, %v2576
    %v2593 = vpack.c.bf16 %v2577, %v2577
    %v2594 = vpack.c.bf16 %v2578, %v2578
    %v2595 = vpack.c.bf16 %v2579, %v2579
    %v2596 = vpack.c.bf16 %v2580, %v2580
    %v2597 = vpack.c.bf16 %v2581, %v2581
    %v2598 = vpack.c.bf16 %v2582, %v2582
    %v2599 = vpack.c.bf16 %v2583, %v2583
    %v2600 = vpack.c.bf16 %v2584, %v2584
    %v2601 = vpack.c.bf16 %v2585, %v2585
    %v2602 = vpack.c.bf16 %v2586, %v2586
    %v2603 = vld [vmem:[#allocation17] sm:$0x1]
    %v2604 = vld [vmem:[#allocation16] sm:$0xf]
    %v2605 = vld [vmem:[#allocation16 + $0x4] sm:$0xf]
    %v2606 = vld [vmem:[#allocation16 + $0x8] sm:$0xf]
    %v2607 = vld [vmem:[#allocation16 + $0xc] sm:$0xf]
    %v2624 = vunpack.c.l.b16 %v2587
    %v2625 = vunpack.c.l.b16 %v2588
    %v2626 = vunpack.c.l.b16 %v2589
    %v2627 = vunpack.c.l.b16 %v2590
    %v2628 = vunpack.c.l.b16 %v2591
    %v2629 = vunpack.c.l.b16 %v2592
    %v2630 = vunpack.c.l.b16 %v2593
    %v2631 = vunpack.c.l.b16 %v2594
    %v2632 = vunpack.c.l.b16 %v2595
    %v2633 = vunpack.c.l.b16 %v2596
    %v2634 = vunpack.c.l.b16 %v2597
    %v2635 = vunpack.c.l.b16 %v2598
    %v2636 = vunpack.c.l.b16 %v2599
    %v2637 = vunpack.c.l.b16 %v2600
    %v2638 = vunpack.c.l.b16 %v2601
    %v2639 = vunpack.c.l.b16 %v2602
    %v2640 = vrot.slane %v2625, 7
    %vm2641 = vcmask 1041409
    %v2642 = vsel %vm2641, %v2640, %v2624
    %v2643 = vrot.slane %v2626, 6
    %vm2644 = vcmask 1042434
    %v2645 = vsel %vm2644, %v2643, %v2642
    %v2646 = vrot.slane %v2627, 5
    %vm2647 = vcmask 1043459
    %v2648 = vsel %vm2647, %v2646, %v2645
    %v2649 = vrot.slane %v2628, 4
    %vm2650 = vcmask 1044484
    %v2651 = vsel %vm2650, %v2649, %v2648
    %v2652 = vrot.slane %v2629, 3
    %vm2653 = vcmask 1045509
    %v2654 = vsel %vm2653, %v2652, %v2651
    %v2655 = vrot.slane %v2630, 2
    %vm2656 = vcmask 1046534
    %v2657 = vsel %vm2656, %v2655, %v2654
    %v2658 = vrot.slane %v2631, 1
    %vm2659 = vcmask 1047559
    %v2660 = vsel %vm2659, %v2658, %v2657
    %v2661 = vrot.slane %v2633, 7
    %v2662 = vsel %vm2641, %v2661, %v2632
    %v2663 = vrot.slane %v2634, 6
    %v2664 = vsel %vm2644, %v2663, %v2662
    %v2665 = vrot.slane %v2635, 5
    %v2666 = vsel %vm2647, %v2665, %v2664
    %v2667 = vrot.slane %v2636, 4
    %v2668 = vsel %vm2650, %v2667, %v2666
    %v2669 = vrot.slane %v2637, 3
    %v2670 = vsel %vm2653, %v2669, %v2668
    %v2671 = vrot.slane %v2638, 2
    %v2672 = vsel %vm2656, %v2671, %v2670
    %v2673 = vrot.slane %v2639, 1
    %v2674 = vsel %vm2659, %v2673, %v2672
    %v2675 = vpack.c.b16 %v2674, %v2660
    %v2680 = vunpack.c.l.b16 %v2604
    %v2681 = vunpack.c.l.b16 %v2605
    %v2682 = vunpack.c.l.b16 %v2606
    %v2683 = vunpack.c.l.b16 %v2607
    %v2684 = vpack.c.b16 %v2681, %v2680
    %v2685 = vpack.c.b16 %v2683, %v2682
    %v2689 = vsel %vm420, %v2675, 0
    %2691 = vmatprep.subr.bf16.mxu0 0
    %2692 = vmatpush1.bf16.msra.mxu0 %v2684
    %2693 = vmatprep.subr.bf16.mxu0 0
    %2694 = vmatpush1.bf16.msra.mxu0 %v2685
    %2695 = vmatprep.subr.bf16.mxu0 0
    %2696 = vmatpush1.bf16.msra.mxu0 0
    %2697 = vmatprep.subr.bf16.mxu0 0
    %2698 = vmatpush1.bf16.msra.mxu0 0
    %2699 = vmatprep.subr.bf16.mxu0 0
    %2700 = vmatpush1.bf16.msra.mxu0 0
    %2701 = vmatprep.subr.bf16.mxu0 0
    %2702 = vmatpush1.bf16.msra.mxu0 0
    %2703 = vmatprep.subr.bf16.mxu0 0
    %2704 = vmatpush1.bf16.msra.mxu0 0
    %2705 = vmatprep.subr.bf16.mxu0 0
    %2706 = vmatpush1.bf16.msra.mxu0 0
    %2707 = vmatprep.subr.bf16.mxu0 0
    %2708 = vmatpush1.bf16.msra.mxu0 0
    %2709 = vmatprep.subr.bf16.mxu0 0
    %2710 = vmatpush1.bf16.msra.mxu0 0
    %2711 = vmatprep.subr.bf16.mxu0 0
    %2712 = vmatpush1.bf16.msra.mxu0 0
    %2713 = vmatprep.subr.bf16.mxu0 0
    %2714 = vmatpush1.bf16.msra.mxu0 0
    %2715 = vmatprep.subr.bf16.mxu0 0
    %2716 = vmatpush1.bf16.msra.mxu0 0
    %2717 = vmatprep.subr.bf16.mxu0 0
    %2718 = vmatpush1.bf16.msra.mxu0 0
    %2719 = vmatprep.subr.bf16.mxu0 0
    %2720 = vmatpush1.bf16.msra.mxu0 0
    %2721 = vmatprep.subr.bf16.mxu0 0
    %2722 = vmatpush1.bf16.msra.mxu0 0
    %2723 = vmatprep.mubr.bf16.mxu0 0
    %2724 = vmatmul.mubr.bf16.gmra.mrb[0].mxu0 %v2689
    %v2725 = vpop.f32.mrb[0].mxu0
    %v2726 = vadd.f32 0.0, %v2725
    %v2727 = vpop.f32.mrb[0].mxu0
    %v2728 = vpop.f32.mrb[0].mxu0
    %v2729 = vadd.f32 0.0, %v2728
    %v2730 = vpop.f32.mrb[0].mxu0
    %2731 = vdwg.mxu0
    %v2733 = vlaneseq
    %v2734 = vshrl.u32 %v2733, 7
    %v2735 = vsub.s32 0, %v2734
    %v2736 = vrot.slane %v2603, %v2735
    %v2738 = vadd.f32 %v2736, %v2726
    %v2739 = vadd.f32 %v2736, %v2729
    %s2740 = scalar_lea.vmem [#allocation16], 16
    %v2741 = vld [vmem:[%s2740] sm:$0xf]
    %v2742 = vld [vmem:[%s2740 + $0x4] sm:$0xf]
    %v2743 = vld [vmem:[%s2740 + $0x8] sm:$0xf]
    %v2744 = vld [vmem:[%s2740 + $0xc] sm:$0xf]
    %v2745 = vrot.slane %v2624, 1
    %v2746 = vsel %vm2641, %v2625, %v2745
    %v2747 = vrot.slane %v2626, 7
    %v2748 = vsel %vm2644, %v2747, %v2746
    %v2749 = vrot.slane %v2627, 6
    %v2750 = vsel %vm2647, %v2749, %v2748
    %v2751 = vrot.slane %v2628, 5
    %v2752 = vsel %vm2650, %v2751, %v2750
    %v2753 = vrot.slane %v2629, 4
    %v2754 = vsel %vm2653, %v2753, %v2752
    %v2755 = vrot.slane %v2630, 3
    %v2756 = vsel %vm2656, %v2755, %v2754
    %v2757 = vrot.slane %v2631, 2
    %v2758 = vsel %vm2659, %v2757, %v2756
    %v2759 = vrot.slane %v2632, 1
    %v2760 = vsel %vm2641, %v2633, %v2759
    %v2761 = vrot.slane %v2634, 7
    %v2762 = vsel %vm2644, %v2761, %v2760
    %v2763 = vrot.slane %v2635, 6
    %v2764 = vsel %vm2647, %v2763, %v2762
    %v2765 = vrot.slane %v2636, 5
    %v2766 = vsel %vm2650, %v2765, %v2764
    %v2767 = vrot.slane %v2637, 4
    %v2768 = vsel %vm2653, %v2767, %v2766
    %v2769 = vrot.slane %v2638, 3
    %v2770 = vsel %vm2656, %v2769, %v2768
    %v2771 = vrot.slane %v2639, 2
    %v2772 = vsel %vm2659, %v2771, %v2770
    %v2773 = vpack.c.b16 %v2772, %v2758
    %v2778 = vunpack.c.l.b16 %v2741
    %v2779 = vunpack.c.l.b16 %v2742
    %v2780 = vunpack.c.l.b16 %v2743
    %v2781 = vunpack.c.l.b16 %v2744
    %v2782 = vpack.c.b16 %v2779, %v2778
    %v2783 = vpack.c.b16 %v2781, %v2780
    %v2787 = vsel %vm420, %v2773, 0
    %2789 = vmatprep.subr.bf16.mxu0 0
    %2790 = vmatpush1.bf16.msra.mxu0 %v2782
    %2791 = vmatprep.subr.bf16.mxu0 0
    %2792 = vmatpush1.bf16.msra.mxu0 %v2783
    %2793 = vmatprep.subr.bf16.mxu0 0
    %2794 = vmatpush1.bf16.msra.mxu0 0
    %2795 = vmatprep.subr.bf16.mxu0 0
    %2796 = vmatpush1.bf16.msra.mxu0 0
    %2797 = vmatprep.subr.bf16.mxu0 0
    %2798 = vmatpush1.bf16.msra.mxu0 0
    %2799 = vmatprep.subr.bf16.mxu0 0
    %2800 = vmatpush1.bf16.msra.mxu0 0
    %2801 = vmatprep.subr.bf16.mxu0 0
    %2802 = vmatpush1.bf16.msra.mxu0 0
    %2803 = vmatprep.subr.bf16.mxu0 0
    %2804 = vmatpush1.bf16.msra.mxu0 0
    %2805 = vmatprep.subr.bf16.mxu0 0
    %2806 = vmatpush1.bf16.msra.mxu0 0
    %2807 = vmatprep.subr.bf16.mxu0 0
    %2808 = vmatpush1.bf16.msra.mxu0 0
    %2809 = vmatprep.subr.bf16.mxu0 0
    %2810 = vmatpush1.bf16.msra.mxu0 0
    %2811 = vmatprep.subr.bf16.mxu0 0
    %2812 = vmatpush1.bf16.msra.mxu0 0
    %2813 = vmatprep.subr.bf16.mxu0 0
    %2814 = vmatpush1.bf16.msra.mxu0 0
    %2815 = vmatprep.subr.bf16.mxu0 0
    %2816 = vmatpush1.bf16.msra.mxu0 0
    %2817 = vmatprep.subr.bf16.mxu0 0
    %2818 = vmatpush1.bf16.msra.mxu0 0
    %2819 = vmatprep.subr.bf16.mxu0 0
    %2820 = vmatpush1.bf16.msra.mxu0 0
    %2821 = vmatprep.mubr.bf16.mxu0 0
    %2822 = vmatmul.mubr.bf16.gmra.mrb[0].mxu0 %v2787
    %v2823 = vpop.f32.mrb[0].mxu0
    %v2824 = vadd.f32 0.0, %v2823
    %v2825 = vpop.f32.mrb[0].mxu0
    %v2826 = vpop.f32.mrb[0].mxu0
    %v2827 = vadd.f32 0.0, %v2826
    %v2828 = vpop.f32.mrb[0].mxu0
    %2829 = vdwg.mxu0
    %v2830 = vadd.f32 %v2738, %v2824
    %v2831 = vadd.f32 %v2739, %v2827
    %s2832 = scalar_lea.vmem [#allocation16], 32
    %v2833 = vld [vmem:[%s2832] sm:$0xf]
    %v2834 = vld [vmem:[%s2832 + $0x4] sm:$0xf]
    %v2835 = vld [vmem:[%s2832 + $0x8] sm:$0xf]
    %v2836 = vld [vmem:[%s2832 + $0xc] sm:$0xf]
    %v2837 = vrot.slane %v2624, 2
    %v2838 = vrot.slane %v2625, 1
    %v2839 = vsel %vm2641, %v2838, %v2837
    %v2840 = vsel %vm2644, %v2626, %v2839
    %v2841 = vrot.slane %v2627, 7
    %v2842 = vsel %vm2647, %v2841, %v2840
    %v2843 = vrot.slane %v2628, 6
    %v2844 = vsel %vm2650, %v2843, %v2842
    %v2845 = vrot.slane %v2629, 5
    %v2846 = vsel %vm2653, %v2845, %v2844
    %v2847 = vrot.slane %v2630, 4
    %v2848 = vsel %vm2656, %v2847, %v2846
    %v2849 = vrot.slane %v2631, 3
    %v2850 = vsel %vm2659, %v2849, %v2848
    %v2851 = vrot.slane %v2632, 2
    %v2852 = vrot.slane %v2633, 1
    %v2853 = vsel %vm2641, %v2852, %v2851
    %v2854 = vsel %vm2644, %v2634, %v2853
    %v2855 = vrot.slane %v2635, 7
    %v2856 = vsel %vm2647, %v2855, %v2854
    %v2857 = vrot.slane %v2636, 6
    %v2858 = vsel %vm2650, %v2857, %v2856
    %v2859 = vrot.slane %v2637, 5
    %v2860 = vsel %vm2653, %v2859, %v2858
    %v2861 = vrot.slane %v2638, 4
    %v2862 = vsel %vm2656, %v2861, %v2860
    %v2863 = vrot.slane %v2639, 3
    %v2864 = vsel %vm2659, %v2863, %v2862
    %v2865 = vpack.c.b16 %v2864, %v2850
    %v2870 = vunpack.c.l.b16 %v2833
    %v2871 = vunpack.c.l.b16 %v2834
    %v2872 = vunpack.c.l.b16 %v2835
    %v2873 = vunpack.c.l.b16 %v2836
    %v2874 = vpack.c.b16 %v2871, %v2870
    %v2875 = vpack.c.b16 %v2873, %v2872
    %v2879 = vsel %vm420, %v2865, 0
    %2881 = vmatprep.subr.bf16.mxu0 0
    %2882 = vmatpush1.bf16.msra.mxu0 %v2874
    %2883 = vmatprep.subr.bf16.mxu0 0
    %2884 = vmatpush1.bf16.msra.mxu0 %v2875
    %2885 = vmatprep.subr.bf16.mxu0 0
    %2886 = vmatpush1.bf16.msra.mxu0 0
    %2887 = vmatprep.subr.bf16.mxu0 0
    %2888 = vmatpush1.bf16.msra.mxu0 0
    %2889 = vmatprep.subr.bf16.mxu0 0
    %2890 = vmatpush1.bf16.msra.mxu0 0
    %2891 = vmatprep.subr.bf16.mxu0 0
    %2892 = vmatpush1.bf16.msra.mxu0 0
    %2893 = vmatprep.subr.bf16.mxu0 0
    %2894 = vmatpush1.bf16.msra.mxu0 0
    %2895 = vmatprep.subr.bf16.mxu0 0
    %2896 = vmatpush1.bf16.msra.mxu0 0
    %2897 = vmatprep.subr.bf16.mxu0 0
    %2898 = vmatpush1.bf16.msra.mxu0 0
    %2899 = vmatprep.subr.bf16.mxu0 0
    %2900 = vmatpush1.bf16.msra.mxu0 0
    %2901 = vmatprep.subr.bf16.mxu0 0
    %2902 = vmatpush1.bf16.msra.mxu0 0
    %2903 = vmatprep.subr.bf16.mxu0 0
    %2904 = vmatpush1.bf16.msra.mxu0 0
    %2905 = vmatprep.subr.bf16.mxu0 0
    %2906 = vmatpush1.bf16.msra.mxu0 0
    %2907 = vmatprep.subr.bf16.mxu0 0
    %2908 = vmatpush1.bf16.msra.mxu0 0
    %2909 = vmatprep.subr.bf16.mxu0 0
    %2910 = vmatpush1.bf16.msra.mxu0 0
    %2911 = vmatprep.subr.bf16.mxu0 0
    %2912 = vmatpush1.bf16.msra.mxu0 0
    %2913 = vmatprep.mubr.bf16.mxu0 0
    %2914 = vmatmul.mubr.bf16.gmra.mrb[0].mxu0 %v2879
    %v2915 = vpop.f32.mrb[0].mxu0
    %v2916 = vadd.f32 0.0, %v2915
    %v2917 = vpop.f32.mrb[0].mxu0
    %v2918 = vpop.f32.mrb[0].mxu0
    %v2919 = vadd.f32 0.0, %v2918
    %v2920 = vpop.f32.mrb[0].mxu0
    %2921 = vdwg.mxu0
    %v2922 = vadd.f32 %v2830, %v2916
    %v2923 = vadd.f32 %v2831, %v2919
    %s2924 = scalar_lea.vmem [#allocation16], 48
    %v2925 = vld [vmem:[%s2924] sm:$0xf]
    %v2926 = vld [vmem:[%s2924 + $0x4] sm:$0xf]
    %v2927 = vld [vmem:[%s2924 + $0x8] sm:$0xf]
    %v2928 = vld [vmem:[%s2924 + $0xc] sm:$0xf]
    %v2929 = vrot.slane %v2624, 3
    %v2930 = vrot.slane %v2625, 2
    %v2931 = vsel %vm2641, %v2930, %v2929
    %v2932 = vrot.slane %v2626, 1
    %v2933 = vsel %vm2644, %v2932, %v2931
    %v2934 = vsel %vm2647, %v2627, %v2933
    %v2935 = vrot.slane %v2628, 7
    %v2936 = vsel %vm2650, %v2935, %v2934
    %v2937 = vrot.slane %v2629, 6
    %v2938 = vsel %vm2653, %v2937, %v2936
    %v2939 = vrot.slane %v2630, 5
    %v2940 = vsel %vm2656, %v2939, %v2938
    %v2941 = vrot.slane %v2631, 4
    %v2942 = vsel %vm2659, %v2941, %v2940
    %v2943 = vrot.slane %v2632, 3
    %v2944 = vrot.slane %v2633, 2
    %v2945 = vsel %vm2641, %v2944, %v2943
    %v2946 = vrot.slane %v2634, 1
    %v2947 = vsel %vm2644, %v2946, %v2945
    %v2948 = vsel %vm2647, %v2635, %v2947
    %v2949 = vrot.slane %v2636, 7
    %v2950 = vsel %vm2650, %v2949, %v2948
    %v2951 = vrot.slane %v2637, 6
    %v2952 = vsel %vm2653, %v2951, %v2950
    %v2953 = vrot.slane %v2638, 5
    %v2954 = vsel %vm2656, %v2953, %v2952
    %v2955 = vrot.slane %v2639, 4
    %v2956 = vsel %vm2659, %v2955, %v2954
    %v2957 = vpack.c.b16 %v2956, %v2942
    %v2962 = vunpack.c.l.b16 %v2925
    %v2963 = vunpack.c.l.b16 %v2926
    %v2964 = vunpack.c.l.b16 %v2927
    %v2965 = vunpack.c.l.b16 %v2928
    %v2966 = vpack.c.b16 %v2963, %v2962
    %v2967 = vpack.c.b16 %v2965, %v2964
    %v2971 = vsel %vm420, %v2957, 0
    %2973 = vmatprep.subr.bf16.mxu0 0
    %2974 = vmatpush1.bf16.msra.mxu0 %v2966
    %2975 = vmatprep.subr.bf16.mxu0 0
    %2976 = vmatpush1.bf16.msra.mxu0 %v2967
    %2977 = vmatprep.subr.bf16.mxu0 0
    %2978 = vmatpush1.bf16.msra.mxu0 0
    %2979 = vmatprep.subr.bf16.mxu0 0
    %2980 = vmatpush1.bf16.msra.mxu0 0
    %2981 = vmatprep.subr.bf16.mxu0 0
    %2982 = vmatpush1.bf16.msra.mxu0 0
    %2983 = vmatprep.subr.bf16.mxu0 0
    %2984 = vmatpush1.bf16.msra.mxu0 0
    %2985 = vmatprep.subr.bf16.mxu0 0
    %2986 = vmatpush1.bf16.msra.mxu0 0
    %2987 = vmatprep.subr.bf16.mxu0 0
    %2988 = vmatpush1.bf16.msra.mxu0 0
    %2989 = vmatprep.subr.bf16.mxu0 0
    %2990 = vmatpush1.bf16.msra.mxu0 0
    %2991 = vmatprep.subr.bf16.mxu0 0
    %2992 = vmatpush1.bf16.msra.mxu0 0
    %2993 = vmatprep.subr.bf16.mxu0 0
    %2994 = vmatpush1.bf16.msra.mxu0 0
    %2995 = vmatprep.subr.bf16.mxu0 0
    %2996 = vmatpush1.bf16.msra.mxu0 0
    %2997 = vmatprep.subr.bf16.mxu0 0
    %2998 = vmatpush1.bf16.msra.mxu0 0
    %2999 = vmatprep.subr.bf16.mxu0 0
    %3000 = vmatpush1.bf16.msra.mxu0 0
    %3001 = vmatprep.subr.bf16.mxu0 0
    %3002 = vmatpush1.bf16.msra.mxu0 0
    %3003 = vmatprep.subr.bf16.mxu0 0
    %3004 = vmatpush1.bf16.msra.mxu0 0
    %3005 = vmatprep.mubr.bf16.mxu0 0
    %3006 = vmatmul.mubr.bf16.gmra.mrb[0].mxu0 %v2971
    %v3007 = vpop.f32.mrb[0].mxu0
    %v3008 = vadd.f32 0.0, %v3007
    %v3009 = vpop.f32.mrb[0].mxu0
    %v3010 = vpop.f32.mrb[0].mxu0
    %v3011 = vadd.f32 0.0, %v3010
    %v3012 = vpop.f32.mrb[0].mxu0
    %3013 = vdwg.mxu0
    %v3014 = vadd.f32 %v2922, %v3008
    %v3015 = vadd.f32 %v2923, %v3011
    %v3016 = vld [vmem:[#allocation19] sm:$0x1]
    %v3017 = vld [vmem:[#allocation20] sm:$0x1]
    %v3018 = vsel %vm420, %v3014, 0.0
    %3019 = vadd.xlane.f32.xlu0 %v3018
    %v3020 = vpop.xlane.xlu0 %3019
    %v3021 = vsel %vm420, %v3015, 0.0
    %3022 = vadd.xlane.f32.xlu0 %v3021
    %v3023 = vpop.xlane.xlu0 %3022
    %v3024 = vmul.f32 %v3020, %v2366
    %v3025 = vmul.f32 %v3023, %v2366
    %v3026 = vsub.f32 %v3014, %v3024
    %v3027 = vsub.f32 %v3015, %v3025
    %v3028 = vmul.f32 %v3026, %v3026
    %v3029 = vmul.f32 %v3027, %v3027
    %v3030 = vsel %vm420, %v3028, 0.0
    %3031 = vadd.xlane.f32.xlu0 %v3030
    %v3032 = vpop.xlane.xlu0 %3031
    %v3033 = vsel %vm420, %v3029, 0.0
    %3034 = vadd.xlane.f32.xlu0 %v3033
    %v3035 = vpop.xlane.xlu0 %3034
    %v3036 = vmul.f32 %v3032, %v2366
    %v3037 = vmul.f32 %v3035, %v2366
    %v3038 = vadd.f32 %v3036, 1e-05
    %v3039 = vadd.f32 %v3037, 1e-05
    %v3040 = vrsqrt.pop %v3038
    %v3041 = vrsqrt.pop %v3039
    %v3042 = vmul.f32 %v3026, %v3040
    %v3043 = vmul.f32 %v3027, %v3041
    %v3045 = vlaneseq
    %v3046 = vshrl.u32 %v3045, 7
    %v3047 = vsub.s32 0, %v3046
    %v3048 = vrot.slane %v3016, %v3047
    %v3050 = vmul.f32 %v3042, %v3048
    %v3051 = vmul.f32 %v3043, %v3048
    %v3053 = vlaneseq
    %v3054 = vshrl.u32 %v3053, 7
    %v3055 = vsub.s32 0, %v3054
    %v3056 = vrot.slane %v3017, %v3055
    %v3058 = vadd.f32 %v3050, %v3056
    %v3059 = vadd.f32 %v3051, %v3056
    %v3060 = vmax.f32 %v3058, 0.0
    %v3061 = vmax.f32 %v3059, 0.0
    %v3062 = vld [vmem:[#allocation8] sm:$0xff]
    %v3063 = vld [vmem:[#allocation8 + $0x8] sm:$0xff]
    %v3064 = vadd.f32 %v3062, %v3060
    %v3065 = vadd.f32 %v3063, %v3061
    %v3066 = vld [vmem:[#allocation22] sm:$0x1]
    %v3067 = vld [vmem:[#allocation23] sm:$0x1]
    %v3068 = vsel %vm420, %v3064, 0.0
    %3069 = vadd.xlane.f32.xlu0 %v3068
    %v3070 = vpop.xlane.xlu0 %3069
    %v3071 = vsel %vm420, %v3065, 0.0
    %3072 = vadd.xlane.f32.xlu0 %v3071
    %v3073 = vpop.xlane.xlu0 %3072
    %v3074 = vmul.f32 %v3070, %v2366
    %v3075 = vmul.f32 %v3073, %v2366
    %v3076 = vsub.f32 %v3064, %v3074
    %v3077 = vsub.f32 %v3065, %v3075
    %v3078 = vmul.f32 %v3076, %v3076
    %v3079 = vmul.f32 %v3077, %v3077
    %v3080 = vsel %vm420, %v3078, 0.0
    %3081 = vadd.xlane.f32.xlu0 %v3080
    %v3082 = vpop.xlane.xlu0 %3081
    %v3083 = vsel %vm420, %v3079, 0.0
    %3084 = vadd.xlane.f32.xlu0 %v3083
    %v3085 = vpop.xlane.xlu0 %3084
    %v3086 = vmul.f32 %v3082, %v2366
    %v3087 = vmul.f32 %v3085, %v2366
    %v3088 = vadd.f32 %v3086, 1e-05
    %v3089 = vadd.f32 %v3087, 1e-05
    %v3090 = vrsqrt.pop %v3088
    %v3091 = vrsqrt.pop %v3089
    %v3092 = vmul.f32 %v3076, %v3090
    %v3093 = vmul.f32 %v3077, %v3091
    %v3095 = vlaneseq
    %v3096 = vshrl.u32 %v3095, 7
    %v3097 = vsub.s32 0, %v3096
    %v3098 = vrot.slane %v3066, %v3097
    %v3100 = vmul.f32 %v3092, %v3098
    %v3101 = vmul.f32 %v3093, %v3098
    %v3103 = vlaneseq
    %v3104 = vshrl.u32 %v3103, 7
    %v3105 = vsub.s32 0, %v3104
    %v3106 = vrot.slane %v3067, %v3105
    %v3108 = vadd.f32 %v3100, %v3106
    %v3109 = vadd.f32 %v3101, %v3106
    %v3110 = vpack.c.bf16 %v3109, %v3108
    %v3111 = vld [vmem:[#allocation25] sm:$0xf]
    %v3112 = vld [vmem:[#allocation25 + $0x4] sm:$0xf]
    %v3113 = vld [vmem:[#allocation25 + $0x8] sm:$0xf]
    %v3114 = vld [vmem:[#allocation25 + $0xc] sm:$0xf]
    %v3115 = vld [vmem:[#allocation26] sm:$0x1]
    %v3117 = vlaneseq
    %v3118 = vshrl.u32 %v3117, 7
    %v3119 = vsub.s32 0, %v3118
    %v3120 = vrot.slane %v3115, %v3119
    %v3126 = vunpack.c.l.b16 %v3111
    %v3127 = vunpack.c.l.b16 %v3112
    %v3128 = vunpack.c.l.b16 %v3113
    %v3129 = vunpack.c.l.b16 %v3114
    %v3130 = vpack.c.b16 %v3127, %v3126
    %v3131 = vpack.c.b16 %v3129, %v3128
    %v3135 = vsel %vm420, %v3110, 0
    %3137 = vmatprep.subr.bf16.mxu0 0
    %3138 = vmatpush1.bf16.msra.mxu0 %v3130
    %3139 = vmatprep.subr.bf16.mxu0 0
    %3140 = vmatpush1.bf16.msra.mxu0 %v3131
    %3141 = vmatprep.subr.bf16.mxu0 0
    %3142 = vmatpush1.bf16.msra.mxu0 0
    %3143 = vmatprep.subr.bf16.mxu0 0
    %3144 = vmatpush1.bf16.msra.mxu0 0
    %3145 = vmatprep.subr.bf16.mxu0 0
    %3146 = vmatpush1.bf16.msra.mxu0 0
    %3147 = vmatprep.subr.bf16.mxu0 0
    %3148 = vmatpush1.bf16.msra.mxu0 0
    %3149 = vmatprep.subr.bf16.mxu0 0
    %3150 = vmatpush1.bf16.msra.mxu0 0
    %3151 = vmatprep.subr.bf16.mxu0 0
    %3152 = vmatpush1.bf16.msra.mxu0 0
    %3153 = vmatprep.subr.bf16.mxu0 0
    %3154 = vmatpush1.bf16.msra.mxu0 0
    %3155 = vmatprep.subr.bf16.mxu0 0
    %3156 = vmatpush1.bf16.msra.mxu0 0
    %3157 = vmatprep.subr.bf16.mxu0 0
    %3158 = vmatpush1.bf16.msra.mxu0 0
    %3159 = vmatprep.subr.bf16.mxu0 0
    %3160 = vmatpush1.bf16.msra.mxu0 0
    %3161 = vmatprep.subr.bf16.mxu0 0
    %3162 = vmatpush1.bf16.msra.mxu0 0
    %3163 = vmatprep.subr.bf16.mxu0 0
    %3164 = vmatpush1.bf16.msra.mxu0 0
    %3165 = vmatprep.subr.bf16.mxu0 0
    %3166 = vmatpush1.bf16.msra.mxu0 0
    %3167 = vmatprep.subr.bf16.mxu0 0
    %3168 = vmatpush1.bf16.msra.mxu0 0
    %3169 = vmatprep.mubr.bf16.mxu0 0
    %3170 = vmatmul.mubr.bf16.gmra.mrb[0].mxu0 %v3135
    %v3171 = vpop.f32.mrb[0].mxu0
    %v3172 = vadd.f32 %v3120, %v3171
    %v3173 = vpop.f32.mrb[0].mxu0
    %v3174 = vpop.f32.mrb[0].mxu0
    %v3175 = vadd.f32 %v3120, %v3174
    %v3176 = vpop.f32.mrb[0].mxu0
    %3177 = vdwg.mxu0
    %v3178 = vmax.f32 %v3172, 0.0
    %v3179 = vmax.f32 %v3175, 0.0
    %v3180 = vpack.c.bf16 %v3179, %v3178
    %v3181 = vld [vmem:[#allocation28] sm:$0xf]
    %v3182 = vld [vmem:[#allocation28 + $0x4] sm:$0xf]
    %v3183 = vld [vmem:[#allocation28 + $0x8] sm:$0xf]
    %v3184 = vld [vmem:[#allocation28 + $0xc] sm:$0xf]
    %v3185 = vld [vmem:[#allocation28 + $0x10] sm:$0xf]
    %v3186 = vld [vmem:[#allocation28 + $0x14] sm:$0xf]
    %v3187 = vld [vmem:[#allocation28 + $0x18] sm:$0xf]
    %v3188 = vld [vmem:[#allocation28 + $0x1c] sm:$0xf]
    %v3189 = vld [vmem:[#allocation29] sm:$0x1]
    %v3191 = vlaneseq
    %v3192 = vshrl.u32 %v3191, 7
    %v3193 = vsub.s32 0, %v3192
    %v3194 = vrot.slane %v3189, %v3193
    %v3204 = vunpack.c.l.b16 %v3181
    %v3205 = vunpack.c.l.b16 %v3182
    %v3206 = vunpack.c.l.b16 %v3183
    %v3207 = vunpack.c.l.b16 %v3184
    %v3208 = vunpack.c.l.b16 %v3185
    %v3209 = vunpack.c.l.b16 %v3186
    %v3210 = vunpack.c.l.b16 %v3187
    %v3211 = vunpack.c.l.b16 %v3188
    %v3212 = vpack.c.b16 %v3205, %v3204
    %v3213 = vpack.c.b16 %v3207, %v3206
    %v3214 = vpack.c.b16 %v3209, %v3208
    %v3215 = vpack.c.b16 %v3211, %v3210
    %vm3220 = vcmask 523264
    %v3222 = vsel %vm3220, %v3180, 0
    %3224 = vmatprep.subr.bf16.mxu0 0
    %3225 = vmatpush1.bf16.msra.mxu0 %v3212
    %3226 = vmatprep.subr.bf16.mxu0 0
    %3227 = vmatpush1.bf16.msra.mxu0 %v3213
    %3228 = vmatprep.subr.bf16.mxu0 0
    %3229 = vmatpush1.bf16.msra.mxu0 %v3214
    %3230 = vmatprep.subr.bf16.mxu0 0
    %3231 = vmatpush1.bf16.msra.mxu0 %v3215
    %3232 = vmatprep.subr.bf16.mxu0 0
    %3233 = vmatpush1.bf16.msra.mxu0 0
    %3234 = vmatprep.subr.bf16.mxu0 0
    %3235 = vmatpush1.bf16.msra.mxu0 0
    %3236 = vmatprep.subr.bf16.mxu0 0
    %3237 = vmatpush1.bf16.msra.mxu0 0
    %3238 = vmatprep.subr.bf16.mxu0 0
    %3239 = vmatpush1.bf16.msra.mxu0 0
    %3240 = vmatprep.subr.bf16.mxu0 0
    %3241 = vmatpush1.bf16.msra.mxu0 0
    %3242 = vmatprep.subr.bf16.mxu0 0
    %3243 = vmatpush1.bf16.msra.mxu0 0
    %3244 = vmatprep.subr.bf16.mxu0 0
    %3245 = vmatpush1.bf16.msra.mxu0 0
    %3246 = vmatprep.subr.bf16.mxu0 0
    %3247 = vmatpush1.bf16.msra.mxu0 0
    %3248 = vmatprep.subr.bf16.mxu0 0
    %3249 = vmatpush1.bf16.msra.mxu0 0
    %3250 = vmatprep.subr.bf16.mxu0 0
    %3251 = vmatpush1.bf16.msra.mxu0 0
    %3252 = vmatprep.subr.bf16.mxu0 0
    %3253 = vmatpush1.bf16.msra.mxu0 0
    %3254 = vmatprep.subr.bf16.mxu0 0
    %3255 = vmatpush1.bf16.msra.mxu0 0
    %3256 = vmatprep.mubr.bf16.mxu0 0
    %3257 = vmatmul.mubr.bf16.gmra.mrb[0].mxu0 %v3222
    %v3258 = vpop.f32.mrb[0].mxu0
    %v3259 = vadd.f32 %v3194, %v3258
    %v3260 = vpop.f32.mrb[0].mxu0
    %v3261 = vpop.f32.mrb[0].mxu0
    %v3262 = vadd.f32 %v3194, %v3261
    %v3263 = vpop.f32.mrb[0].mxu0
    %3264 = vdwg.mxu0
    %v3265 = vadd.f32 %v3108, %v3259
    %v3266 = vadd.f32 %v3109, %v3262
    %v3267 = vld [vmem:[#allocation31] sm:$0x1]
    %v3268 = vld [vmem:[#allocation32] sm:$0x1]
    %v3269 = vsel %vm420, %v3265, 0.0
    %3270 = vadd.xlane.f32.xlu0 %v3269
    %v3271 = vpop.xlane.xlu0 %3270
    %v3272 = vsel %vm420, %v3266, 0.0
    %3273 = vadd.xlane.f32.xlu0 %v3272
    %v3274 = vpop.xlane.xlu0 %3273
    %v3275 = vmul.f32 %v3271, %v2366
    %v3276 = vmul.f32 %v3274, %v2366
    %v3277 = vsub.f32 %v3265, %v3275
    %v3278 = vsub.f32 %v3266, %v3276
    %v3279 = vmul.f32 %v3277, %v3277
    %v3280 = vmul.f32 %v3278, %v3278
    %v3281 = vsel %vm420, %v3279, 0.0
    %3282 = vadd.xlane.f32.xlu0 %v3281
    %v3283 = vpop.xlane.xlu0 %3282
    %v3284 = vsel %vm420, %v3280, 0.0
    %3285 = vadd.xlane.f32.xlu0 %v3284
    %v3286 = vpop.xlane.xlu0 %3285
    %v3287 = vmul.f32 %v3283, %v2366
    %v3288 = vmul.f32 %v3286, %v2366
    %v3289 = vadd.f32 %v3287, 1e-05
    %v3290 = vadd.f32 %v3288, 1e-05
    %v3291 = vrsqrt.pop %v3289
    %v3292 = vrsqrt.pop %v3290
    %v3293 = vmul.f32 %v3277, %v3291
    %v3294 = vmul.f32 %v3278, %v3292
    %v3296 = vlaneseq
    %v3297 = vshrl.u32 %v3296, 7
    %v3298 = vsub.s32 0, %v3297
    %v3299 = vrot.slane %v3267, %v3298
    %v3301 = vmul.f32 %v3293, %v3299
    %v3302 = vmul.f32 %v3294, %v3299
    %v3304 = vlaneseq
    %v3305 = vshrl.u32 %v3304, 7
    %v3306 = vsub.s32 0, %v3305
    %v3307 = vrot.slane %v3268, %v3306
    %v3309 = vadd.f32 %v3301, %v3307
    %v3310 = vadd.f32 %v3302, %v3307
    %3311 = vst.msk [vmem:[#allocation34] sm:$0xff] %vm420, %v3309
    %3312 = vst.msk [vmem:[#allocation34 + $0x8] sm:$0xff] %vm420, %v3310
    // Predicated region
    $region162: #{_lambda_.8} parent=1 // pred_check
      _
    $region163: #{_lambda_.8} parent=1 // pred_check_branch
      %3314 = sbr.rel (0) target = $region165
    $region164: #{_lambda_.8} parent=1 // pred_region
      %s3316 = ssub.s32 256, 256
      %3317 = vsyncadd [#allocation4], %s3316
      %s3318 = sshll.u32 [#allocation34], 4
      %s3319 = int_to_ptr.vmem [resolvable:$true] %s3318
      %3324 = dma.vmem_to_hbm [thread:$0]  %s3319, 256, %s20, [#allocation4], 128, 128, 8
    $region165: #{_lambda_.8} parent=1 // pred_fallthru
      _
    // Predicated region
    $region166: #{_lambda_.8} parent=1 // pred_check
      _
    $region167: #{_lambda_.8} parent=1 // pred_check_branch
      %3326 = sbr.rel (0) target = $region169
    $region168: #{_lambda_.8} parent=1 // pred_region
      %3327 = dma.done [#allocation4], 256
    $region169: #{_lambda_.8} parent=1 // pred_fallthru
      _
    %3328 = vsyncpa [#allocation3], 1
    %3329 = vsyncpa [#allocation6], 1
    %3330 = vsyncpa [#allocation9], 1
    %3331 = vsyncpa [#allocation12], 1
    %3332 = vsyncpa [#allocation15], 1
    %3333 = vsyncpa [#allocation18], 1
    %3334 = vsyncpa [#allocation21], 1
    %3335 = vsyncpa [#allocation24], 1
    %3336 = vsyncpa [#allocation27], 1
    %3337 = vsyncpa [#allocation30], 1
    %3338 = vsyncpa [#allocation33], 1
    %3339 = vsyncpa [#allocation4], 1

</llo_original>
